<compile_context>
chip_gen: v5e
topology: v5e:2x2
jax: 0.10.0
libtpu: 0.0.40
codegen_flags: <defaults>
</compile_context>

<pallas_src>
import functools

import numpy as np
import jax
import jax.numpy as jnp
from jax.experimental import pallas as pl
from jax.experimental.pallas import tpu as pltpu


# -----------------------------------------------------------------------------
# Epilogue: shift-add the per-tap 1x1 products into the ASPP branches, concat,
# bottleneck matmul + shift-add, write the output.  Runs once per batch tile.
# -----------------------------------------------------------------------------
def _aspp_epilogue(prod_ref, wbot_ref, bias_ref, o_ref, *, B, H, W, D, dilations):
    M = B * H * W
    f32 = jnp.float32

    # Hoisted zero fills: one constant per distinct |shift| (JAX does not CSE
    # broadcast_in_dim, so building these inside the tap loops would emit ~24 copies).
    shift_set = sorted(set(dilations) | {1})                 # bottleneck uses d=1
    zeros_h = {s: jnp.zeros((B, s, W, 3 * D), f32) for s in shift_set}
    zeros_w = {s: jnp.zeros((B, H, s, D), f32) for s in shift_set}

    def shift_h(a, off):
        """b[:, y] = a[:, y + off], zero outside.  a: (B, H, W, 3D).  H is an
        untiled outer axis, so this is a cheap slice + concat of whole tiles."""
        if off == 0:
            return a
        z = zeros_h[abs(off)]
        if off > 0:
            return jnp.concatenate([a[:, off:], z], axis=1)
        return jnp.concatenate([z, a[:, :H + off]], axis=1)

    def shift_w(a, off):
        """b[:, :, x] = a[:, :, x + off], zero outside.  a: (B, H, W, D).
        Value-level sublane slice + concat -- no scratch read-modify-write."""
        if off == 0:
            return a
        z = zeros_w[abs(off)]
        if off > 0:
            return jnp.concatenate([a[:, :, off:], z], axis=2)
        return jnp.concatenate([z, a[:, :, :W + off]], axis=2)

    def conv3x3_from(src, col0, d):
        """Output-stationary 3x3 conv with padding == dilation == d.

        src[:, col0 + (3*ky + kx)*D : ...] holds the per-tap 1x1 products P_t (f32);
        taps sharing a ky are contiguous, so the row (y) shift is applied once per ky
        to the whole 3-tap slab; column (x) shifts are per-kx value-level W shifts.
        out[y, x] = sum_t P_t[y + (ky-1)d, x + (kx-1)d], zero outside the image.
        `src` may be a Ref (static slices load) or a value."""
        slab = None
        for ky in range(3):
            s = src[:, col0 + 3 * ky * D:col0 + 3 * (ky + 1) * D]
            s = shift_h(s.reshape(B, H, W, 3 * D), (ky - 1) * d)
            slab = s if slab is None else slab + s
        acc = None
        for kx in range(3):
            piece = shift_w(slab[..., kx * D:(kx + 1) * D], (kx - 1) * d)
            acc = piece if acc is None else acc + piece
        return acc.reshape(M, D)

    # ---- image-level branch: pooling folded through the (linear) 1x1 conv --------
    # mean_hw(x) @ wx == mean_hw(x @ wx); the per-pixel products already sit in
    # prod[:, 28D:29D], so only a per-batch-element spatial mean remains.
    img = jnp.mean(prod_ref[:, 28 * D:29 * D].reshape(B, H * W, D),
                   axis=1, keepdims=True)                              # (B, 1, D)
    img = jnp.maximum(img + bias_ref[0:1, :].reshape(1, 1, D), 0.0)
    img = jnp.broadcast_to(img, (B, H * W, D)).reshape(M, D)

    # ---- 1x1 branch ---------------------------------------------------------------
    out0 = jnp.maximum(prod_ref[:, 0:D] + bias_ref[1:2, :], 0.0)       # (M, D)

    # ---- three dilated 3x3 branches -------------------------------------------------
    branches = []
    for i, d in enumerate(dilations):
        acc = conv3x3_from(prod_ref, D * (1 + 9 * i), d)
        branches.append(jnp.maximum(acc + bias_ref[2 + i:3 + i, :], 0.0))

    # ---- concat (channel axis); zero-padded 5D -> 6D = 128-aligned matmul K dim ----
    cat = jnp.concatenate([img, out0] + branches
                          + [jnp.zeros((M, D), f32)], axis=1)          # (M, 6D)

    # ---- bottleneck 3x3 conv (padding=1), no BN / ReLU ------------------------------
    prod_b = jnp.dot(cat.astype(wbot_ref.dtype), wbot_ref[...],
                     preferred_element_type=f32)                       # (M, 9D)
    out = conv3x3_from(prod_b, 0, 1) + bias_ref[5:6, :]                # (M, D)
    o_ref[...] = out.reshape(B, H, W, D)


# -----------------------------------------------------------------------------
# Pallas kernel: one batch tile x one Cin chunk per grid step.
# -----------------------------------------------------------------------------
def _aspp_kernel(x_ref, wbig_ref, wbot_ref, bias_ref, o_ref, prod_ref,
                 *, B, H, W, D, dilations):
    f32 = jnp.float32
    k = pl.program_id(1)
    M = B * H * W

    xc = x_ref[...].reshape(M, x_ref.shape[-1])                        # (M, Ck) bf16

    @pl.when(k == 0)
    def _():
        prod_ref[...] = jnp.zeros(prod_ref.shape, prod_ref.dtype)

    # One fused MXU matmul per Cin chunk: 1x1 branch + all 27 dilated-conv taps +
    # image-branch 1x1 (folded), streamed over the reduction axis to hide the
    # weight DMA behind the MXU.
    prod_ref[...] += jnp.dot(xc, wbig_ref[...], preferred_element_type=f32)

    @pl.when(k == pl.num_programs(1) - 1)
    def _():
        _aspp_epilogue(prod_ref, wbot_ref, bias_ref, o_ref,
                       B=B, H=H, W=W, D=D, dilations=dilations)


# -----------------------------------------------------------------------------
# Weight packing: BN already folded; fused, lane-aligned bf16 matrices.
# -----------------------------------------------------------------------------
def _pack_params(params, D):
    def taps_to_mat(w):                                   # (9, K, D) -> (K, 9*D)
        return jnp.transpose(w, (1, 0, 2)).reshape(w.shape[1], 9 * w.shape[2])

    # wbig columns: [ w0 (D) | conv1 taps (9D) | conv2 taps (9D) | conv3 taps (9D)
    #               | wx (D, image branch, folded) | zero pad (D) ]   -> 30D = 15*128
    w_big = jnp.concatenate(
        [params["w0"],
         taps_to_mat(params["w1"]), taps_to_mat(params["w2"]), taps_to_mat(params["w3"]),
         params["wx"], jnp.zeros_like(params["wx"])],
        axis=1).astype(jnp.bfloat16)                                   # (Cin, 30D)
    wbot = jnp.concatenate(
        [taps_to_mat(params["wb"]),
         jnp.zeros((D, 9 * D), params["wb"].dtype)], axis=0).astype(jnp.bfloat16)  # (6D,9D)
    bias = jnp.concatenate(
        [params["bx"], params["b0"], params["b1"], params["b2"],
         params["b3"], params["bb"]], axis=0).astype(jnp.float32)      # (6, D)
    return w_big, wbot, bias


# -----------------------------------------------------------------------------
# Wrapper
# -----------------------------------------------------------------------------
@functools.partial(jax.jit, static_argnums=(2, 3, 4))
def _aspp_forward_impl(x_nchw, params, dilations, B, kt):
    N, Cin, H, W = x_nchw.shape
    D = params["wx"].shape[-1]

    x = jnp.transpose(x_nchw, (0, 2, 3, 1)).astype(jnp.bfloat16)       # NHWC, bf16
    w_big, wbot, bias = _pack_params(params, D)

    kernel = functools.partial(_aspp_kernel, B=B, H=H, W=W, D=D, dilations=dilations)

    out_nhwc = pl.pallas_call(
        kernel,
        out_shape=jax.ShapeDtypeStruct((N, H, W, D), jnp.float32),
        grid_spec=pltpu.PrefetchScalarGridSpec(
            num_scalar_prefetch=0,
            grid=(N // B, Cin // kt),                    # (batch tiles, Cin chunks)
            in_specs=[
                pl.BlockSpec((B, H, W, kt), lambda n, k: (n, 0, 0, k)),   # x (bf16)
                pl.BlockSpec((kt, 30 * D), lambda n, k: (k, 0)),          # fused weights
                pl.BlockSpec((6 * D, 9 * D), lambda n, k: (0, 0)),        # bottleneck w
                pl.BlockSpec((6, D), lambda n, k: (0, 0)),                # biases (f32)
            ],
            out_specs=pl.BlockSpec((B, H, W, D), lambda n, k: (n, 0, 0, 0)),
            scratch_shapes=[pltpu.VMEM((B * H * W, 30 * D), jnp.float32)],  # prod acc
        ),
        compiler_params=pltpu.CompilerParams(
            dimension_semantics=("parallel", "arbitrary"),
            vmem_limit_bytes=32 << 20,
        ),
    )(x, w_big, wbot, bias)

    return jnp.transpose(out_nhwc, (0, 3, 1, 2))                       # NHWC -> NCHW


def aspp_forward(x_nchw, params, dilation_series, padding_series,
                 batch_tile=None, k_tile=None):
    dilation_series = tuple(int(d) for d in dilation_series)
    padding_series = tuple(int(p) for p in padding_series)
    assert dilation_series == padding_series, \
        "padding must equal dilation for 'same' spatial outputs (DeepLab ASPP)"
    N, Cin, H, W = x_nchw.shape
    D = params["wx"].shape[-1]
    assert D % 64 == 0, \
        "depth must be a multiple of 64 so the packed matmul widths stay 128-lane aligned"
    assert max(dilation_series) < min(H, W), "dilation must be < spatial size"

    # Batch tile: grow the matmul M dim (B*HW) toward 128-256 MXU rows.
    # (v7x: pass batch_tile=N//2 to keep >= 2 parallel grid steps for its 2 TCs.)
    if batch_tile is None:
        batch_tile = 1
        for b in range(1, N + 1):
            if N % b == 0 and b * H * W <= 256:
                batch_tile = b
    B = batch_tile
    assert N % B == 0, "batch_tile must divide batch size"

    # Cin (reduction) tile: split when the batch grid is short (weight-DMA-bound
    # regime) so the fused weight stream overlaps the MXU; keep weights resident
    # (k_tile = Cin, constant index map) when enough batch steps amortize the load.
    if k_tile is None:
        if (N // B) <= 2 and Cin > 512 and Cin % 512 == 0:
            k_tile = 512
        else:
            k_tile = Cin
    assert Cin % k_tile == 0, "k_tile must divide Cin"

    return _aspp_forward_impl(x_nchw, params, dilation_series, B, k_tile)


# -----------------------------------------------------------------------------
# Deterministic parameter construction (mirrors the module's __init__ shapes).
# Conv weights ~ N(0, 0.01); inference-mode BN (gamma=1, beta=0, stats (0,1)) folded.
# -----------------------------------------------------------------------------
def make_params(key, Cin, D, eps=1e-5):
    ks = jax.random.split(key, 12)
    bn_scale = 1.0 / jnp.sqrt(1.0 + eps)

    def conv1x1(kw, kb, fold_bn):
        w = jax.random.normal(kw, (Cin, D), jnp.float32) * 0.01
        b = (jax.random.uniform(kb, (1, D), jnp.float32) - 0.5) * 0.02
        if fold_bn:
            w, b = w * bn_scale, b * bn_scale
        return w, b

    def conv3x3(kw, kb, cin, fold_bn):
        w = jax.random.normal(kw, (9, cin, D), jnp.float32) * 0.01
        b = (jax.random.uniform(kb, (1, D), jnp.float32) - 0.5) * 0.02
        if fold_bn:
            w, b = w * bn_scale, b * bn_scale
        return w, b

    wx, bx = conv1x1(ks[0], ks[1], True)        # self.conv + bn_x
    w0, b0 = conv1x1(ks[2], ks[3], True)        # conv2d_0 + bn_0
    w1, b1 = conv3x3(ks[4], ks[5], Cin, True)   # conv2d_1 + bn_1
    w2, b2 = conv3x3(ks[6], ks[7], Cin, True)   # conv2d_2 + bn_2
    w3, b3 = conv3x3(ks[8], ks[9], Cin, True)   # conv2d_3 + bn_3
    wb, bb = conv3x3(ks[10], ks[11], 5 * D, False)   # bottleneck (no BN)
    return dict(wx=wx, bx=bx, w0=w0, b0=b0, w1=w1, b1=b1,
                w2=w2, b2=b2, w3=w3, b3=b3, wb=wb, bb=bb)


# -----------------------------------------------------------------------------
# Pure-JAX reference (lax conv).  compute_dtype=bfloat16 mirrors the kernel's
# MXU precision (bf16 operands, f32 accumulation); float32 is the exact module.
# -----------------------------------------------------------------------------
def aspp_reference(x_nchw, params, dilation_series, padding_series,
                   compute_dtype=jnp.float32):
    x = jnp.transpose(x_nchw, (0, 2, 3, 1))                  # NHWC
    N, H, W, Cin = x.shape
    D = params["wx"].shape[-1]
    xc = x.astype(compute_dtype)

    def conv(inp, w_hwio, b, dil, pad):
        y = jax.lax.conv_general_dilated(
            inp.astype(compute_dtype), w_hwio.astype(compute_dtype),
            window_strides=(1, 1), padding=((pad, pad), (pad, pad)),
            rhs_dilation=(dil, dil),
            dimension_numbers=("NHWC", "HWIO", "NHWC"),
            preferred_element_type=jnp.float32)
        return y + b.reshape(1, 1, 1, -1)

    relu = jax.nn.relu
    pooled = jnp.mean(xc.astype(jnp.float32), axis=(1, 2), keepdims=True)
    img = relu(conv(pooled, params["wx"].reshape(1, 1, Cin, D), params["bx"], 1, 0))
    img = jnp.broadcast_to(img, (N, H, W, D))                # bilinear 1x1 -> HxW
    out0 = relu(conv(xc, params["w0"].reshape(1, 1, Cin, D), params["b0"], 1, 0))
    outs = [img, out0]
    for w, b, d, p in zip((params["w1"], params["w2"], params["w3"]),
                          (params["b1"], params["b2"], params["b3"]),
                          dilation_series, padding_series):
        outs.append(relu(conv(xc, w.reshape(3, 3, Cin, D), b, d, p)))
    cat = jnp.concatenate(outs, axis=-1)
    out = conv(cat, params["wb"].reshape(3, 3, 5 * D, D), params["bb"], 1, 1)
    return jnp.transpose(out, (0, 3, 1, 2))                  # NCHW


if __name__ == "__main__":
    N, Cin, H, W = 2, 1024, 8, 8          # Cin=1024 is hard-coded by the module
    depth = 64
    dilation_series = (1, 2, 3)
    padding_series = (1, 2, 3)

    key = jax.random.PRNGKey(0)
    k_x, k_p = jax.random.split(key)
    x = jax.random.normal(k_x, (N, Cin, H, W), jnp.float32)   # NCHW, like PyTorch
    params = make_params(k_p, Cin, depth)

    out = jax.block_until_ready(
        aspp_forward(x, params, dilation_series, padding_series))
    assert out.shape == (N, depth, H, W), out.shape

    # Strict check against a precision-matched reference (bf16 operands,
    # f32 accumulation -- same configuration as the kernel's MXU matmuls).
    ref_bf16 = jax.block_until_ready(aspp_reference(
        x, params, dilation_series, padding_series, compute_dtype=jnp.bfloat16))
    np.testing.assert_allclose(np.asarray(out), np.asarray(ref_bf16),
                               rtol=2e-3, atol=2e-3)

    # Loose sanity check against the full-f32 reference (bf16 rounding noise only).
    ref_f32 = jax.block_until_ready(aspp_reference(
        x, params, dilation_series, padding_series, compute_dtype=jnp.float32))
    np.testing.assert_allclose(np.asarray(out), np.asarray(ref_f32),
                               rtol=1e-2, atol=1e-2)

    print("KERNEL_OK")
</pallas_src>

<mosaic_0001>
module attributes {stable_mosaic.version = 11 : i64} {
  func.func @_aspp_kernel(%arg0: i32, %arg1: i32, %arg2: memref<2x8x8x512xbf16, #tpu.memory_space<vmem>>, %arg3: memref<512x1920xbf16, #tpu.memory_space<vmem>>, %arg4: memref<384x576xbf16, #tpu.memory_space<vmem>>, %arg5: memref<6x64xf32, #tpu.memory_space<vmem>>, %arg6: memref<2x8x8x64xf32, #tpu.memory_space<vmem>>, %arg7: memref<128x1920xf32, #tpu.memory_space<vmem>>) attributes {dimension_semantics = [#tpu.dimension_semantics<parallel>, #tpu.dimension_semantics<arbitrary>], iteration_bounds = array<i64: 1, 2>, scalar_prefetch = 0 : i64, scratch_operands = 1 : i64, tpu.core_type = #tpu.core_type<tc>, window_params = [{transform_indices = @transform_0, window_bounds = array<i64: 2, 8, 8, 512>}, {transform_indices = @transform_1, window_bounds = array<i64: 512, 1920>}, {pipeline_mode = #tpu.pipeline_mode<synchronous>, transform_indices = @transform_2, window_bounds = array<i64: 384, 576>}, {pipeline_mode = #tpu.pipeline_mode<synchronous>, transform_indices = @transform_3, window_bounds = array<i64: 6, 64>}, {transform_indices = @transform_4, window_bounds = array<i64: 2, 8, 8, 64>}]} {
    %c0 = arith.constant 0 : index
    %c0_0 = arith.constant 0 : index
    %c0_1 = arith.constant 0 : index
    %c0_2 = arith.constant 0 : index
    %0 = vector.load %arg2[%c0, %c0_0, %c0_1, %c0_2] : memref<2x8x8x512xbf16, #tpu.memory_space<vmem>>, vector<2x8x8x512xbf16>
    %1 = vector.shape_cast %0 : vector<2x8x8x512xbf16> to vector<128x512xbf16>
    %c0_i32 = arith.constant 0 : i32
    %2 = arith.cmpi eq, %arg1, %c0_i32 : i32
    %3 = arith.extui %2 : i1 to i32
    %c0_i32_3 = arith.constant 0 : i32
    %4 = arith.cmpi ne, %3, %c0_i32_3 : i32
    scf.if %4 {
      %cst_11 = arith.constant 0.000000e+00 : f32
      %13 = vector.broadcast %cst_11 : f32 to vector<128x1920xf32>
      %c0_12 = arith.constant 0 : index
      %c0_13 = arith.constant 0 : index
      %14 = vector.load %arg7[%c0_12, %c0_13] : memref<128x1920xf32, #tpu.memory_space<vmem>>, vector<128x1920xf32>
      tpu.vector_store %arg7[%c0_12, %c0_13], %13 {strides = array<i32>} : memref<128x1920xf32, #tpu.memory_space<vmem>>, vector<128x1920xf32>,
    } else {
    }
    %c0_4 = arith.constant 0 : index
    %c0_5 = arith.constant 0 : index
    %5 = vector.load %arg7[%c0_4, %c0_5] : memref<128x1920xf32, #tpu.memory_space<vmem>>, vector<128x1920xf32>
    %c0_6 = arith.constant 0 : index
    %c0_7 = arith.constant 0 : index
    %6 = vector.load %arg3[%c0_6, %c0_7] : memref<512x1920xbf16, #tpu.memory_space<vmem>>, vector<512x1920xbf16>
    %cst = arith.constant dense<0.000000e+00> : vector<128x1920xf32>
    %7 = tpu.matmul %1, %6, %cst {dimension_numbers = #tpu.dot_dimension_numbers<[1], [0], [0], [1], [0, 0, 1, 1], [], []>} : vector<128x512xbf16>, vector<512x1920xbf16>, vector<128x1920xf32> -> vector<128x1920xf32>
    %8 = arith.addf %5, %7 : vector<128x1920xf32>
    %c0_8 = arith.constant 0 : index
    %c0_9 = arith.constant 0 : index
    %9 = vector.load %arg7[%c0_8, %c0_9] : memref<128x1920xf32, #tpu.memory_space<vmem>>, vector<128x1920xf32>
    tpu.vector_store %arg7[%c0_8, %c0_9], %8 {strides = array<i32>} : memref<128x1920xf32, #tpu.memory_space<vmem>>, vector<128x1920xf32>,
    %c1_i32 = arith.constant 1 : i32
    %10 = arith.cmpi eq, %arg1, %c1_i32 : i32
    %11 = arith.extui %10 : i1 to i32
    %c0_i32_10 = arith.constant 0 : i32
    %12 = arith.cmpi ne, %11, %c0_i32_10 : i32
    scf.if %12 {
      %cst_11 = arith.constant 0.000000e+00 : f32
      %13 = vector.broadcast %cst_11 : f32 to vector<2x1x8x192xf32>
      %cst_12 = arith.constant 0.000000e+00 : f32
      %14 = vector.broadcast %cst_12 : f32 to vector<2x2x8x192xf32>
      %cst_13 = arith.constant 0.000000e+00 : f32
      %15 = vector.broadcast %cst_13 : f32 to vector<2x3x8x192xf32>
      %cst_14 = arith.constant 0.000000e+00 : f32
      %16 = vector.broadcast %cst_14 : f32 to vector<2x8x1x64xf32>
      %cst_15 = arith.constant 0.000000e+00 : f32
      %17 = vector.broadcast %cst_15 : f32 to vector<2x8x2x64xf32>
      %cst_16 = arith.constant 0.000000e+00 : f32
      %18 = vector.broadcast %cst_16 : f32 to vector<2x8x3x64xf32>
      %c0_17 = arith.constant 0 : index
      %c1792 = arith.constant 1792 : index
      %19 = vector.load %arg7[%c0_17, %c1792] : memref<128x1920xf32, #tpu.memory_space<vmem>>, vector<128x64xf32>
      %20 = vector.shape_cast %19 : vector<128x64xf32> to vector<2x64x64xf32>
      %cst_18 = arith.constant dense<0.000000e+00> : vector<2x64xf32>
      %21 = vector.multi_reduction <add>, %20, %cst_18 [1] : vector<2x64x64xf32> to vector<2x64xf32>
      %22 = vector.shape_cast %21 : vector<2x64xf32> to vector<2x1x64xf32>
      %cst_19 = arith.constant 6.400000e+01 : f32
      %23 = vector.broadcast %cst_19 : f32 to vector<2x1x64xf32>
      %24 = arith.divf %22, %23 : vector<2x1x64xf32>
      %c0_20 = arith.constant 0 : index
      %c0_21 = arith.constant 0 : index
      %25 = vector.load %arg5[%c0_20, %c0_21] : memref<6x64xf32, #tpu.memory_space<vmem>>, vector<1x64xf32>
      %26 = vector.shape_cast %25 : vector<1x64xf32> to vector<1x1x64xf32>
      %27 = vector.broadcast %26 : vector<1x1x64xf32> to vector<2x1x64xf32>
      %28 = arith.addf %24, %27 : vector<2x1x64xf32>
      %cst_22 = arith.constant 0.000000e+00 : f32
      %29 = vector.broadcast %cst_22 : f32 to vector<2x1x64xf32>
      %30 = arith.maximumf %28, %29 : vector<2x1x64xf32>
      %31 = vector.shape_cast %30 : vector<2x1x64xf32> to vector<2x1x64xf32>
      %32 = vector.broadcast %31 : vector<2x1x64xf32> to vector<2x64x64xf32>
      %33 = vector.shape_cast %32 : vector<2x64x64xf32> to vector<128x64xf32>
      %c0_23 = arith.constant 0 : index
      %c0_24 = arith.constant 0 : index
      %34 = vector.load %arg7[%c0_23, %c0_24] : memref<128x1920xf32, #tpu.memory_space<vmem>>, vector<128x64xf32>
      %c1 = arith.constant 1 : index
      %c0_25 = arith.constant 0 : index
      %35 = vector.load %arg5[%c1, %c0_25] : memref<6x64xf32, #tpu.memory_space<vmem>>, vector<1x64xf32>
      %36 = vector.broadcast %35 : vector<1x64xf32> to vector<128x64xf32>
      %37 = arith.addf %34, %36 : vector<128x64xf32>
      %cst_26 = arith.constant 0.000000e+00 : f32
      %38 = vector.broadcast %cst_26 : f32 to vector<128x64xf32>
      %39 = arith.maximumf %37, %38 : vector<128x64xf32>
      %c0_27 = arith.constant 0 : index
      %c64 = arith.constant 64 : index
      %40 = vector.load %arg7[%c0_27, %c64] : memref<128x1920xf32, #tpu.memory_space<vmem>>, vector<128x192xf32>
      %41 = vector.shape_cast %40 : vector<128x192xf32> to vector<2x8x8x192xf32>
      %42 = vector.extract_strided_slice %41 {offsets = [0, 0, 0, 0], sizes = [2, 7, 8, 192], strides = [1, 1, 1, 1]} : vector<2x8x8x192xf32> to vector<2x7x8x192xf32>
      %43 = tpu.concatenate %13, %42 in 1 : vector<2x1x8x192xf32>, vector<2x7x8x192xf32> -> vector<2x8x8x192xf32>
      %c0_28 = arith.constant 0 : index
      %c256 = arith.constant 256 : index
      %44 = vector.load %arg7[%c0_28, %c256] : memref<128x1920xf32, #tpu.memory_space<vmem>>, vector<128x192xf32>
      %45 = vector.shape_cast %44 : vector<128x192xf32> to vector<2x8x8x192xf32>
      %46 = arith.addf %43, %45 : vector<2x8x8x192xf32>
      %c0_29 = arith.constant 0 : index
      %c448 = arith.constant 448 : index
      %47 = vector.load %arg7[%c0_29, %c448] : memref<128x1920xf32, #tpu.memory_space<vmem>>, vector<128x192xf32>
      %48 = vector.shape_cast %47 : vector<128x192xf32> to vector<2x8x8x192xf32>
      %49 = vector.extract_strided_slice %48 {offsets = [0, 1, 0, 0], sizes = [2, 7, 8, 192], strides = [1, 1, 1, 1]} : vector<2x8x8x192xf32> to vector<2x7x8x192xf32>
      %50 = tpu.concatenate %49, %13 in 1 : vector<2x7x8x192xf32>, vector<2x1x8x192xf32> -> vector<2x8x8x192xf32>
      %51 = arith.addf %46, %50 : vector<2x8x8x192xf32>
      %52 = vector.extract_strided_slice %51 {offsets = [0, 0, 0, 0], sizes = [2, 8, 8, 64], strides = [1, 1, 1, 1]} : vector<2x8x8x192xf32> to vector<2x8x8x64xf32>
      %53 = vector.extract_strided_slice %52 {offsets = [0, 0, 0, 0], sizes = [2, 8, 7, 64], strides = [1, 1, 1, 1]} : vector<2x8x8x64xf32> to vector<2x8x7x64xf32>
      %54 = tpu.concatenate %16, %53 in 2 : vector<2x8x1x64xf32>, vector<2x8x7x64xf32> -> vector<2x8x8x64xf32>
      %55 = vector.extract_strided_slice %51 {offsets = [0, 0, 0, 64], sizes = [2, 8, 8, 64], strides = [1, 1, 1, 1]} : vector<2x8x8x192xf32> to vector<2x8x8x64xf32>
      %56 = arith.addf %54, %55 : vector<2x8x8x64xf32>
      %57 = vector.extract_strided_slice %51 {offsets = [0, 0, 0, 128], sizes = [2, 8, 8, 64], strides = [1, 1, 1, 1]} : vector<2x8x8x192xf32> to vector<2x8x8x64xf32>
      %58 = vector.extract_strided_slice %57 {offsets = [0, 0, 1, 0], sizes = [2, 8, 7, 64], strides = [1, 1, 1, 1]} : vector<2x8x8x64xf32> to vector<2x8x7x64xf32>
      %59 = tpu.concatenate %58, %16 in 2 : vector<2x8x7x64xf32>, vector<2x8x1x64xf32> -> vector<2x8x8x64xf32>
      %60 = arith.addf %56, %59 : vector<2x8x8x64xf32>
      %61 = vector.shape_cast %60 : vector<2x8x8x64xf32> to vector<128x64xf32>
      %c2 = arith.constant 2 : index
      %c0_30 = arith.constant 0 : index
      %62 = vector.load %arg5[%c2, %c0_30] : memref<6x64xf32, #tpu.memory_space<vmem>>, vector<1x64xf32>
      %63 = vector.broadcast %62 : vector<1x64xf32> to vector<128x64xf32>
      %64 = arith.addf %61, %63 : vector<128x64xf32>
      %cst_31 = arith.constant 0.000000e+00 : f32
      %65 = vector.broadcast %cst_31 : f32 to vector<128x64xf32>
      %66 = arith.maximumf %64, %65 : vector<128x64xf32>
      %c0_32 = arith.constant 0 : index
      %c640 = arith.constant 640 : index
      %67 = vector.load %arg7[%c0_32, %c640] : memref<128x1920xf32, #tpu.memory_space<vmem>>, vector<128x192xf32>
      %68 = vector.shape_cast %67 : vector<128x192xf32> to vector<2x8x8x192xf32>
      %69 = vector.extract_strided_slice %68 {offsets = [0, 0, 0, 0], sizes = [2, 6, 8, 192], strides = [1, 1, 1, 1]} : vector<2x8x8x192xf32> to vector<2x6x8x192xf32>
      %70 = tpu.concatenate %14, %69 in 1 : vector<2x2x8x192xf32>, vector<2x6x8x192xf32> -> vector<2x8x8x192xf32>
      %c0_33 = arith.constant 0 : index
      %c832 = arith.constant 832 : index
      %71 = vector.load %arg7[%c0_33, %c832] : memref<128x1920xf32, #tpu.memory_space<vmem>>, vector<128x192xf32>
      %72 = vector.shape_cast %71 : vector<128x192xf32> to vector<2x8x8x192xf32>
      %73 = arith.addf %70, %72 : vector<2x8x8x192xf32>
      %c0_34 = arith.constant 0 : index
      %c1024 = arith.constant 1024 : index
      %74 = vector.load %arg7[%c0_34, %c1024] : memref<128x1920xf32, #tpu.memory_space<vmem>>, vector<128x192xf32>
      %75 = vector.shape_cast %74 : vector<128x192xf32> to vector<2x8x8x192xf32>
      %76 = vector.extract_strided_slice %75 {offsets = [0, 2, 0, 0], sizes = [2, 6, 8, 192], strides = [1, 1, 1, 1]} : vector<2x8x8x192xf32> to vector<2x6x8x192xf32>
      %77 = tpu.concatenate %76, %14 in 1 : vector<2x6x8x192xf32>, vector<2x2x8x192xf32> -> vector<2x8x8x192xf32>
      %78 = arith.addf %73, %77 : vector<2x8x8x192xf32>
      %79 = vector.extract_strided_slice %78 {offsets = [0, 0, 0, 0], sizes = [2, 8, 8, 64], strides = [1, 1, 1, 1]} : vector<2x8x8x192xf32> to vector<2x8x8x64xf32>
      %80 = vector.extract_strided_slice %79 {offsets = [0, 0, 0, 0], sizes = [2, 8, 6, 64], strides = [1, 1, 1, 1]} : vector<2x8x8x64xf32> to vector<2x8x6x64xf32>
      %81 = tpu.concatenate %17, %80 in 2 : vector<2x8x2x64xf32>, vector<2x8x6x64xf32> -> vector<2x8x8x64xf32>
      %82 = vector.extract_strided_slice %78 {offsets = [0, 0, 0, 64], sizes = [2, 8, 8, 64], strides = [1, 1, 1, 1]} : vector<2x8x8x192xf32> to vector<2x8x8x64xf32>
      %83 = arith.addf %81, %82 : vector<2x8x8x64xf32>
      %84 = vector.extract_strided_slice %78 {offsets = [0, 0, 0, 128], sizes = [2, 8, 8, 64], strides = [1, 1, 1, 1]} : vector<2x8x8x192xf32> to vector<2x8x8x64xf32>
      %85 = vector.extract_strided_slice %84 {offsets = [0, 0, 2, 0], sizes = [2, 8, 6, 64], strides = [1, 1, 1, 1]} : vector<2x8x8x64xf32> to vector<2x8x6x64xf32>
      %86 = tpu.concatenate %85, %17 in 2 : vector<2x8x6x64xf32>, vector<2x8x2x64xf32> -> vector<2x8x8x64xf32>
      %87 = arith.addf %83, %86 : vector<2x8x8x64xf32>
      %88 = vector.shape_cast %87 : vector<2x8x8x64xf32> to vector<128x64xf32>
      %c3 = arith.constant 3 : index
      %c0_35 = arith.constant 0 : index
      %89 = vector.load %arg5[%c3, %c0_35] : memref<6x64xf32, #tpu.memory_space<vmem>>, vector<1x64xf32>
      %90 = vector.broadcast %89 : vector<1x64xf32> to vector<128x64xf32>
      %91 = arith.addf %88, %90 : vector<128x64xf32>
      %cst_36 = arith.constant 0.000000e+00 : f32
      %92 = vector.broadcast %cst_36 : f32 to vector<128x64xf32>
      %93 = arith.maximumf %91, %92 : vector<128x64xf32>
      %c0_37 = arith.constant 0 : index
      %c1216 = arith.constant 1216 : index
      %94 = vector.load %arg7[%c0_37, %c1216] : memref<128x1920xf32, #tpu.memory_space<vmem>>, vector<128x192xf32>
      %95 = vector.shape_cast %94 : vector<128x192xf32> to vector<2x8x8x192xf32>
      %96 = vector.extract_strided_slice %95 {offsets = [0, 0, 0, 0], sizes = [2, 5, 8, 192], strides = [1, 1, 1, 1]} : vector<2x8x8x192xf32> to vector<2x5x8x192xf32>
      %97 = tpu.concatenate %15, %96 in 1 : vector<2x3x8x192xf32>, vector<2x5x8x192xf32> -> vector<2x8x8x192xf32>
      %c0_38 = arith.constant 0 : index
      %c1408 = arith.constant 1408 : index
      %98 = vector.load %arg7[%c0_38, %c1408] : memref<128x1920xf32, #tpu.memory_space<vmem>>, vector<128x192xf32>
      %99 = vector.shape_cast %98 : vector<128x192xf32> to vector<2x8x8x192xf32>
      %100 = arith.addf %97, %99 : vector<2x8x8x192xf32>
      %c0_39 = arith.constant 0 : index
      %c1600 = arith.constant 1600 : index
      %101 = vector.load %arg7[%c0_39, %c1600] : memref<128x1920xf32, #tpu.memory_space<vmem>>, vector<128x192xf32>
      %102 = vector.shape_cast %101 : vector<128x192xf32> to vector<2x8x8x192xf32>
      %103 = vector.extract_strided_slice %102 {offsets = [0, 3, 0, 0], sizes = [2, 5, 8, 192], strides = [1, 1, 1, 1]} : vector<2x8x8x192xf32> to vector<2x5x8x192xf32>
      %104 = tpu.concatenate %103, %15 in 1 : vector<2x5x8x192xf32>, vector<2x3x8x192xf32> -> vector<2x8x8x192xf32>
      %105 = arith.addf %100, %104 : vector<2x8x8x192xf32>
      %106 = vector.extract_strided_slice %105 {offsets = [0, 0, 0, 0], sizes = [2, 8, 8, 64], strides = [1, 1, 1, 1]} : vector<2x8x8x192xf32> to vector<2x8x8x64xf32>
      %107 = vector.extract_strided_slice %106 {offsets = [0, 0, 0, 0], sizes = [2, 8, 5, 64], strides = [1, 1, 1, 1]} : vector<2x8x8x64xf32> to vector<2x8x5x64xf32>
      %108 = tpu.concatenate %18, %107 in 2 : vector<2x8x3x64xf32>, vector<2x8x5x64xf32> -> vector<2x8x8x64xf32>
      %109 = vector.extract_strided_slice %105 {offsets = [0, 0, 0, 64], sizes = [2, 8, 8, 64], strides = [1, 1, 1, 1]} : vector<2x8x8x192xf32> to vector<2x8x8x64xf32>
      %110 = arith.addf %108, %109 : vector<2x8x8x64xf32>
      %111 = vector.extract_strided_slice %105 {offsets = [0, 0, 0, 128], sizes = [2, 8, 8, 64], strides = [1, 1, 1, 1]} : vector<2x8x8x192xf32> to vector<2x8x8x64xf32>
      %112 = vector.extract_strided_slice %111 {offsets = [0, 0, 3, 0], sizes = [2, 8, 5, 64], strides = [1, 1, 1, 1]} : vector<2x8x8x64xf32> to vector<2x8x5x64xf32>
      %113 = tpu.concatenate %112, %18 in 2 : vector<2x8x5x64xf32>, vector<2x8x3x64xf32> -> vector<2x8x8x64xf32>
      %114 = arith.addf %110, %113 : vector<2x8x8x64xf32>
      %115 = vector.shape_cast %114 : vector<2x8x8x64xf32> to vector<128x64xf32>
      %c4 = arith.constant 4 : index
      %c0_40 = arith.constant 0 : index
      %116 = vector.load %arg5[%c4, %c0_40] : memref<6x64xf32, #tpu.memory_space<vmem>>, vector<1x64xf32>
      %117 = vector.broadcast %116 : vector<1x64xf32> to vector<128x64xf32>
      %118 = arith.addf %115, %117 : vector<128x64xf32>
      %cst_41 = arith.constant 0.000000e+00 : f32
      %119 = vector.broadcast %cst_41 : f32 to vector<128x64xf32>
      %120 = arith.maximumf %118, %119 : vector<128x64xf32>
      %cst_42 = arith.constant 0.000000e+00 : f32
      %121 = vector.broadcast %cst_42 : f32 to vector<128x64xf32>
      %122 = tpu.concatenate %33, %39, %66, %93, %120, %121 in 1 : vector<128x64xf32>, vector<128x64xf32>, vector<128x64xf32>, vector<128x64xf32>, vector<128x64xf32>, vector<128x64xf32> -> vector<128x384xf32>
      %123 = arith.truncf %122 : vector<128x384xf32> to vector<128x384xbf16>
      %c0_43 = arith.constant 0 : index
      %c0_44 = arith.constant 0 : index
      %124 = vector.load %arg4[%c0_43, %c0_44] : memref<384x576xbf16, #tpu.memory_space<vmem>>, vector<384x576xbf16>
      %cst_45 = arith.constant dense<0.000000e+00> : vector<128x576xf32>
      %125 = tpu.matmul %123, %124, %cst_45 {dimension_numbers = #tpu.dot_dimension_numbers<[1], [0], [0], [1], [0, 0, 1, 1], [], []>} : vector<128x384xbf16>, vector<384x576xbf16>, vector<128x576xf32> -> vector<128x576xf32>
      %126 = vector.extract_strided_slice %125 {offsets = [0, 0], sizes = [128, 192], strides = [1, 1]} : vector<128x576xf32> to vector<128x192xf32>
      %127 = vector.shape_cast %126 : vector<128x192xf32> to vector<2x8x8x192xf32>
      %128 = vector.extract_strided_slice %127 {offsets = [0, 0, 0, 0], sizes = [2, 7, 8, 192], strides = [1, 1, 1, 1]} : vector<2x8x8x192xf32> to vector<2x7x8x192xf32>
      %129 = tpu.concatenate %13, %128 in 1 : vector<2x1x8x192xf32>, vector<2x7x8x192xf32> -> vector<2x8x8x192xf32>
      %130 = vector.extract_strided_slice %125 {offsets = [0, 192], sizes = [128, 192], strides = [1, 1]} : vector<128x576xf32> to vector<128x192xf32>
      %131 = vector.shape_cast %130 : vector<128x192xf32> to vector<2x8x8x192xf32>
      %132 = arith.addf %129, %131 : vector<2x8x8x192xf32>
      %133 = vector.extract_strided_slice %125 {offsets = [0, 384], sizes = [128, 192], strides = [1, 1]} : vector<128x576xf32> to vector<128x192xf32>
      %134 = vector.shape_cast %133 : vector<128x192xf32> to vector<2x8x8x192xf32>
      %135 = vector.extract_strided_slice %134 {offsets = [0, 1, 0, 0], sizes = [2, 7, 8, 192], strides = [1, 1, 1, 1]} : vector<2x8x8x192xf32> to vector<2x7x8x192xf32>
      %136 = tpu.concatenate %135, %13 in 1 : vector<2x7x8x192xf32>, vector<2x1x8x192xf32> -> vector<2x8x8x192xf32>
      %137 = arith.addf %132, %136 : vector<2x8x8x192xf32>
      %138 = vector.extract_strided_slice %137 {offsets = [0, 0, 0, 0], sizes = [2, 8, 8, 64], strides = [1, 1, 1, 1]} : vector<2x8x8x192xf32> to vector<2x8x8x64xf32>
      %139 = vector.extract_strided_slice %138 {offsets = [0, 0, 0, 0], sizes = [2, 8, 7, 64], strides = [1, 1, 1, 1]} : vector<2x8x8x64xf32> to vector<2x8x7x64xf32>
      %140 = tpu.concatenate %16, %139 in 2 : vector<2x8x1x64xf32>, vector<2x8x7x64xf32> -> vector<2x8x8x64xf32>
      %141 = vector.extract_strided_slice %137 {offsets = [0, 0, 0, 64], sizes = [2, 8, 8, 64], strides = [1, 1, 1, 1]} : vector<2x8x8x192xf32> to vector<2x8x8x64xf32>
      %142 = arith.addf %140, %141 : vector<2x8x8x64xf32>
      %143 = vector.extract_strided_slice %137 {offsets = [0, 0, 0, 128], sizes = [2, 8, 8, 64], strides = [1, 1, 1, 1]} : vector<2x8x8x192xf32> to vector<2x8x8x64xf32>
      %144 = vector.extract_strided_slice %143 {offsets = [0, 0, 1, 0], sizes = [2, 8, 7, 64], strides = [1, 1, 1, 1]} : vector<2x8x8x64xf32> to vector<2x8x7x64xf32>
      %145 = tpu.concatenate %144, %16 in 2 : vector<2x8x7x64xf32>, vector<2x8x1x64xf32> -> vector<2x8x8x64xf32>
      %146 = arith.addf %142, %145 : vector<2x8x8x64xf32>
      %147 = vector.shape_cast %146 : vector<2x8x8x64xf32> to vector<128x64xf32>
      %c5 = arith.constant 5 : index
      %c0_46 = arith.constant 0 : index
      %148 = vector.load %arg5[%c5, %c0_46] : memref<6x64xf32, #tpu.memory_space<vmem>>, vector<1x64xf32>
      %149 = vector.broadcast %148 : vector<1x64xf32> to vector<128x64xf32>
      %150 = arith.addf %147, %149 : vector<128x64xf32>
      %151 = vector.shape_cast %150 : vector<128x64xf32> to vector<2x8x8x64xf32>
      %c0_47 = arith.constant 0 : index
      %c0_48 = arith.constant 0 : index
      %c0_49 = arith.constant 0 : index
      %c0_50 = arith.constant 0 : index
      %152 = vector.load %arg6[%c0_47, %c0_48, %c0_49, %c0_50] : memref<2x8x8x64xf32, #tpu.memory_space<vmem>>, vector<2x8x8x64xf32>
      tpu.vector_store %arg6[%c0_47, %c0_48, %c0_49, %c0_50], %151 {strides = array<i32>} : memref<2x8x8x64xf32, #tpu.memory_space<vmem>>, vector<2x8x8x64xf32>,
    } else {
    }
    return
  }
  func.func @transform_0(%arg0: i32, %arg1: i32) -> (i32, i32, i32, i32) {
    %c0_i32 = arith.constant 0 : i32
    %c0_i32_0 = arith.constant 0 : i32
    %c0_i32_1 = arith.constant 0 : i32
    return %arg0, %c0_i32, %c0_i32_0, %arg1 : i32, i32, i32, i32
  }
  func.func @transform_1(%arg0: i32, %arg1: i32) -> (i32, i32) {
    %c0_i32 = arith.constant 0 : i32
    %c0_i32_0 = arith.constant 0 : i32
    return %arg1, %c0_i32 : i32, i32
  }
  func.func @transform_2(%arg0: i32, %arg1: i32) -> (i32, i32) {
    %c0_i32 = arith.constant 0 : i32
    %c0_i32_0 = arith.constant 0 : i32
    %c0_i32_1 = arith.constant 0 : i32
    return %c0_i32, %c0_i32_0 : i32, i32
  }
  func.func @transform_3(%arg0: i32, %arg1: i32) -> (i32, i32) {
    %c0_i32 = arith.constant 0 : i32
    %c0_i32_0 = arith.constant 0 : i32
    %c0_i32_1 = arith.constant 0 : i32
    return %c0_i32, %c0_i32_0 : i32, i32
  }
  func.func @transform_4(%arg0: i32, %arg1: i32) -> (i32, i32, i32, i32) {
    %c0_i32 = arith.constant 0 : i32
    %c0_i32_0 = arith.constant 0 : i32
    %c0_i32_1 = arith.constant 0 : i32
    %c0_i32_2 = arith.constant 0 : i32
    return %arg0, %c0_i32, %c0_i32_0, %c0_i32_1 : i32, i32, i32, i32
  }
}

</mosaic_0001>

<llo_original>
// kernel: _aspp_forward_impl.1
$region0: #{_aspp_forward_impl.1}
  #allocation0 [shape = 'u32[]', space=smem, size = 0x4, offset = 0x4, fixed_abs, tag = 'smem constant byte address 0x4 - core index']
  #allocation1 [shape = 'u32[72,128]{1,0:T(1,128)}', space=vmem, size = 0x9000, scoped, tag = 'internal scratch']
  #allocation2 [shape = 'f32[128,1920]{1,0:T(8,128)}', space=vmem, size = 0xf0000, scoped, tag = 'scratch operand']
  %s0 = inlined_call_operand.vmem [shape: bf16[2,8,8,1024], index: 0, kind: input, shape index: {}]
  %s1 = inlined_call_operand.vmem [shape: bf16[1024,1920], index: 1, kind: input, shape index: {}]
  %s2 = inlined_call_operand.vmem [shape: bf16[384,576], index: 2, kind: input, shape index: {}]
  %s3 = inlined_call_operand.vmem [shape: f32[6,64], index: 3, kind: input, shape index: {}]
  %s4 = inlined_call_operand.hbm [shape: f32[2,8,8,64], index: 4, kind: output, shape index: {}]
  %s5 = sld [smem:[#allocation0]]
  $region80: #{_aspp_forward_impl.1} parent=0
    _
  %s7 = ssub.s32 1, %s5
  %s8 = scalar_select 0, %s7, %s5
  $region1: #{_aspp_forward_impl.1} parent=0
    #allocation3 [shape = 'u8[262144]{0}', space=vmem, size = 0x40000, scoped, tag = 'input window, operand 0']
    #allocation4 [shape = 'u8[65536]{0}', space=vmem, size = 0x10000, scoped, tag = 'output window, operand 0, single buffered']
    #allocation5 [shape = 's32[2]{0}', space=sflag, size = 0x8, scoped, tag = 'scoped memory for _aspp_forward_impl.1']
    %9 = vsyncpa [#allocation5], 0
    loop: start=0, step=1, limit=4
    $region2: #{_aspp_forward_impl.1} parent=1 // loop_pre_header
      _
    $region3: #{_aspp_forward_impl.1} parent=1 // loop_header
      %s11 = sphi 0, %s15
      %p12 = scmp.ge.s32.totalorder %s11, 4
      %s18 = sphi 0, %s30
      %s19 = sphi 0, %s26
      %s20 = sphi 0, %s18
      %s21 = sphi 0, %s19
      %s22 = sphi 0, %s20
      %s23 = sphi 0, %s21
      %s35 = sphi 0, %s37
      %s38 = sphi 0, %s35
      %s39 = sphi 0, %s38
      %s55 = sphi 0, %s39
      %s61 = sphi 0, %s63
      %s64 = sphi 0, %s61
      %s65 = sphi 0, %s64
      %s81 = sphi 0, %s65
      %s85 = sphi 0, %s85
      %s87 = sphi 0, %s85
      %s88 = sphi 0, %s87
      %s102 = sphi 0, %s88
      %s106 = sphi 0, %s106
      %s108 = sphi 0, %s106
      %s109 = sphi 0, %s108
      %s123 = sphi 0, %s109
      %s129 = sphi 0, %s131
      %s132 = sphi 0, %s129
      %s133 = sphi 0, %s132
      %s149 = sphi 0, %s133
    $region4: #{_aspp_forward_impl.1} parent=1 // loop_header_branch
      %14 = sbr.rel (%p12) target = $region8
    $region5: #{_aspp_forward_impl.1} parent=1 // loop_body
      %s16 = ssub.s32 %s11, 1
      %s17 = ssub.s32 %s11, 2
      %s24 = sadd.s32 1, %s19
      %p25 = scmp.ge.s32.totalorder %s24, 2
      %s26 = scalar_select %p25, 0, %s24
      %s27 = sadd.s32 1, %s18
      %s28 = scalar_select %p25, %s27, %s18
      %p29 = scmp.ge.s32.totalorder %s28, 1
      %s30 = scalar_select %p29, 0, %s28
      %s31 = ssub.s32 %s18, %s30
      %s32 = ssub.s32 %s19, %s26
      %s33 = sor.u32 %s31, %s32
      %p34 = scmp.eq.s32.totalorder %s33, 0
      %s36 = sadd.s32 %s35, 1
      %s37 = scalar_select %p34, %s35, %s36
      %p40 = pneg %p34
      %p41 = scmp.eq.s32.totalorder %s11, 1
      %p42 = por %p40, %p41
      %p43 = scmp.ne.s32.totalorder %s35, %s38
      %p44 = scmp.eq.s32.totalorder %s11, 0
      %p45 = por %p43, %p44
      %p46 = scmp.ne.s32.totalorder %s35, %s38
      %p47 = scmp.eq.s32.totalorder %s16, 1
      %p48 = por %p46, %p47
      %p49 = scmp.ne.s32.totalorder %s38, %s39
      %p50 = scmp.eq.s32.totalorder %s16, 0
      %p51 = por %p49, %p50
      %p52 = scmp.ne.s32.totalorder %s38, %s39
      %p53 = scmp.eq.s32.totalorder %s17, 1
      %p54 = por %p52, %p53
      %p56 = scmp.ne.s32.totalorder %s39, %s55
      %p57 = scmp.eq.s32.totalorder %s17, 0
      %p58 = por %p56, %p57
      %s59 = ssub.s32 %s19, %s26
      %p60 = scmp.eq.s32.totalorder %s59, 0
      %s62 = sadd.s32 %s61, 1
      %s63 = scalar_select %p60, %s61, %s62
      %p66 = pneg %p60
      %p67 = scmp.eq.s32.totalorder %s11, 1
      %p68 = por %p66, %p67
      %p69 = scmp.ne.s32.totalorder %s61, %s64
      %p70 = scmp.eq.s32.totalorder %s11, 0
      %p71 = por %p69, %p70
      %p72 = scmp.ne.s32.totalorder %s61, %s64
      %p73 = scmp.eq.s32.totalorder %s16, 1
      %p74 = por %p72, %p73
      %p75 = scmp.ne.s32.totalorder %s64, %s65
      %p76 = scmp.eq.s32.totalorder %s16, 0
      %p77 = por %p75, %p76
      %p78 = scmp.ne.s32.totalorder %s64, %s65
      %p79 = scmp.eq.s32.totalorder %s17, 1
      %p80 = por %p78, %p79
      %p82 = scmp.ne.s32.totalorder %s65, %s81
      %p83 = scmp.eq.s32.totalorder %s17, 0
      %p84 = por %p82, %p83
      %s86 = sadd.s32 %s85, 1
      %p89 = scmp.eq.s32.totalorder %s11, 1
      %p90 = scmp.ne.s32.totalorder %s85, %s87
      %p91 = scmp.eq.s32.totalorder %s11, 0
      %p92 = por %p90, %p91
      %p93 = scmp.ne.s32.totalorder %s85, %s87
      %p94 = scmp.eq.s32.totalorder %s16, 1
      %p95 = por %p93, %p94
      %p96 = scmp.ne.s32.totalorder %s87, %s88
      %p97 = scmp.eq.s32.totalorder %s16, 0
      %p98 = por %p96, %p97
      %p99 = scmp.ne.s32.totalorder %s87, %s88
      %p100 = scmp.eq.s32.totalorder %s17, 1
      %p101 = por %p99, %p100
      %p103 = scmp.ne.s32.totalorder %s88, %s102
      %p104 = scmp.eq.s32.totalorder %s17, 0
      %p105 = por %p103, %p104
      %s107 = sadd.s32 %s106, 1
      %p110 = scmp.eq.s32.totalorder %s11, 1
      %p111 = scmp.ne.s32.totalorder %s106, %s108
      %p112 = scmp.eq.s32.totalorder %s11, 0
      %p113 = por %p111, %p112
      %p114 = scmp.ne.s32.totalorder %s106, %s108
      %p115 = scmp.eq.s32.totalorder %s16, 1
      %p116 = por %p114, %p115
      %p117 = scmp.ne.s32.totalorder %s108, %s109
      %p118 = scmp.eq.s32.totalorder %s16, 0
      %p119 = por %p117, %p118
      %p120 = scmp.ne.s32.totalorder %s108, %s109
      %p121 = scmp.eq.s32.totalorder %s17, 1
      %p122 = por %p120, %p121
      %p124 = scmp.ne.s32.totalorder %s109, %s123
      %p125 = scmp.eq.s32.totalorder %s17, 0
      %p126 = por %p124, %p125
      %s127 = ssub.s32 %s18, %s30
      %p128 = scmp.eq.s32.totalorder %s127, 0
      %s130 = sadd.s32 %s129, 1
      %s131 = scalar_select %p128, %s129, %s130
      %p134 = pneg %p128
      %p135 = scmp.eq.s32.totalorder %s11, 1
      %p136 = por %p134, %p135
      %p137 = scmp.ne.s32.totalorder %s129, %s132
      %p138 = scmp.eq.s32.totalorder %s11, 0
      %p139 = por %p137, %p138
      %p140 = scmp.ne.s32.totalorder %s129, %s132
      %p141 = scmp.eq.s32.totalorder %s16, 1
      %p142 = por %p140, %p141
      %p143 = scmp.ne.s32.totalorder %s132, %s133
      %p144 = scmp.eq.s32.totalorder %s16, 0
      %p145 = por %p143, %p144
      %p146 = scmp.ne.s32.totalorder %s132, %s133
      %p147 = scmp.eq.s32.totalorder %s17, 1
      %p148 = por %p146, %p147
      %p150 = scmp.ne.s32.totalorder %s133, %s149
      %p151 = scmp.eq.s32.totalorder %s17, 0
      %p152 = por %p150, %p151
      %p153 = scmp.le.s32.totalorder 1, %s11
      %p154 = scmp.lt.s32.totalorder %s11, 3
      %p155 = pnand %p153, %p154
      %p156 = pneg %p155
      // Predicated region
      $region9: #{_aspp_forward_impl.1} parent=5 // pred_check
        _
      $region10: #{_aspp_forward_impl.1} parent=5 // pred_check_branch
        %158 = sbr.rel (%p155) target = $region12
      $region11: #{_aspp_forward_impl.1} parent=5 // pred_region
        %s159 = ssub.s32 %s11, 1
        // Predicated region
        $region13: #{_aspp_forward_impl.1} parent=11 // pred_check
          %p160 = pneg %p98
        $region14: #{_aspp_forward_impl.1} parent=11 // pred_check_branch
          %162 = sbr.rel (%p160) target = $region16
        $region15: #{_aspp_forward_impl.1} parent=11 // pred_region
          _
        $region16: #{_aspp_forward_impl.1} parent=11 // pred_fallthru
          _
        // Predicated region
        $region17: #{_aspp_forward_impl.1} parent=11 // pred_check
          %p163 = pneg %p119
        $region18: #{_aspp_forward_impl.1} parent=11 // pred_check_branch
          %165 = sbr.rel (%p163) target = $region20
        $region19: #{_aspp_forward_impl.1} parent=11 // pred_region
          _
        $region20: #{_aspp_forward_impl.1} parent=11 // pred_fallthru
          _
      $region12: #{_aspp_forward_impl.1} parent=5 // pred_fallthru
        _
      %p166 = scmp.lt.s32.totalorder %s11, 2
      // Predicated region
      $region21: #{_aspp_forward_impl.1} parent=5 // pred_check
        %p167 = pneg %p166
      $region22: #{_aspp_forward_impl.1} parent=5 // pred_check_branch
        %169 = sbr.rel (%p167) target = $region24
      $region23: #{_aspp_forward_impl.1} parent=5 // pred_region
        // Predicated region
        $region25: #{_aspp_forward_impl.1} parent=23 // pred_check
          %p170 = pneg %p45
        $region26: #{_aspp_forward_impl.1} parent=23 // pred_check_branch
          %172 = sbr.rel (%p170) target = $region28
        $region27: #{_aspp_forward_impl.1} parent=23 // pred_region
          %s173 = sand.u32 %s35, 1
          %s174 = sand.u32 %s35, 1
          %s175 = smul.addr %s174, 256
          %s176 = scalar_lea.vmem [#allocation3], %s175
          %s177 = smul.u32 2, %s18
          %s178 = smul.u32 4, %s19
          %s179 = smul.addr %s177, 64
          %s180 = sadd.s32 %s178, %s179
          %s181 = smul.addr %s180, 4
          %s182 = scalar_lea.vmem %s0, %s181
          // Predicated region
          $region29: #{_aspp_forward_impl.1} parent=27 // pred_check
            _
          $region30: #{_aspp_forward_impl.1} parent=27 // pred_check_branch
            %184 = sbr.rel (0) target = $region32
          $region31: #{_aspp_forward_impl.1} parent=27 // pred_region
            // Predicated region
            $region33: #{_aspp_forward_impl.1} parent=31 // pred_check
              _
            $region34: #{_aspp_forward_impl.1} parent=31 // pred_check_branch
              %186 = sbr.rel (0) target = $region36
            $region35: #{_aspp_forward_impl.1} parent=31 // pred_region
              loop: start=0, step=1, limit=1
              $region37: #{_aspp_forward_impl.1} parent=35 // loop_pre_header
                _
              $region38: #{_aspp_forward_impl.1} parent=35 // loop_header
                %s188 = sphi 0, %s192
                %p189 = scmp.ge.s32.totalorder %s188, 1
                %s193 = sphi %s182, %s182
                %s194 = sphi %s176, %s176
              $region39: #{_aspp_forward_impl.1} parent=35 // loop_header_branch
                %191 = sbr.rel (%p189) target = $region43
              $region40: #{_aspp_forward_impl.1} parent=35 // loop_body
                %v195 = vld [vmem:[%s193] sm:$0xff]
                %196 = vst [vmem:[%s194] sm:$0xff] %v195
                %v197 = vld [vmem:[%s193 + $0x8] sm:$0xff]
                %198 = vst [vmem:[%s194 + $0x8] sm:$0xff] %v197
                %v199 = vld [vmem:[%s193 + $0x20] sm:$0xff]
                %200 = vst [vmem:[%s194 + $0x10] sm:$0xff] %v199
                %v201 = vld [vmem:[%s193 + $0x28] sm:$0xff]
                %202 = vst [vmem:[%s194 + $0x18] sm:$0xff] %v201
                %v203 = vld [vmem:[%s193 + $0x40] sm:$0xff]
                %204 = vst [vmem:[%s194 + $0x20] sm:$0xff] %v203
                %v205 = vld [vmem:[%s193 + $0x48] sm:$0xff]
                %206 = vst [vmem:[%s194 + $0x28] sm:$0xff] %v205
                %v207 = vld [vmem:[%s193 + $0x60] sm:$0xff]
                %208 = vst [vmem:[%s194 + $0x30] sm:$0xff] %v207
                %v209 = vld [vmem:[%s193 + $0x68] sm:$0xff]
                %210 = vst [vmem:[%s194 + $0x38] sm:$0xff] %v209
                %v211 = vld [vmem:[%s193 + $0x80] sm:$0xff]
                %212 = vst [vmem:[%s194 + $0x40] sm:$0xff] %v211
                %v213 = vld [vmem:[%s193 + $0x88] sm:$0xff]
                %214 = vst [vmem:[%s194 + $0x48] sm:$0xff] %v213
                %v215 = vld [vmem:[%s193 + $0xa0] sm:$0xff]
                %216 = vst [vmem:[%s194 + $0x50] sm:$0xff] %v215
                %v217 = vld [vmem:[%s193 + $0xa8] sm:$0xff]
                %218 = vst [vmem:[%s194 + $0x58] sm:$0xff] %v217
                %v219 = vld [vmem:[%s193 + $0xc0] sm:$0xff]
                %220 = vst [vmem:[%s194 + $0x60] sm:$0xff] %v219
                %v221 = vld [vmem:[%s193 + $0xc8] sm:$0xff]
                %222 = vst [vmem:[%s194 + $0x68] sm:$0xff] %v221
                %v223 = vld [vmem:[%s193 + $0xe0] sm:$0xff]
                %224 = vst [vmem:[%s194 + $0x70] sm:$0xff] %v223
                %v225 = vld [vmem:[%s193 + $0xe8] sm:$0xff]
                %226 = vst [vmem:[%s194 + $0x78] sm:$0xff] %v225
                %v227 = vld [vmem:[%s193 + $0x100] sm:$0xff]
                %228 = vst [vmem:[%s194 + $0x80] sm:$0xff] %v227
                %v229 = vld [vmem:[%s193 + $0x108] sm:$0xff]
                %230 = vst [vmem:[%s194 + $0x88] sm:$0xff] %v229
                %v231 = vld [vmem:[%s193 + $0x120] sm:$0xff]
                %232 = vst [vmem:[%s194 + $0x90] sm:$0xff] %v231
                %v233 = vld [vmem:[%s193 + $0x128] sm:$0xff]
                %234 = vst [vmem:[%s194 + $0x98] sm:$0xff] %v233
                %v235 = vld [vmem:[%s193 + $0x140] sm:$0xff]
                %236 = vst [vmem:[%s194 + $0xa0] sm:$0xff] %v235
                %v237 = vld [vmem:[%s193 + $0x148] sm:$0xff]
                %238 = vst [vmem:[%s194 + $0xa8] sm:$0xff] %v237
                %v239 = vld [vmem:[%s193 + $0x160] sm:$0xff]
                %240 = vst [vmem:[%s194 + $0xb0] sm:$0xff] %v239
                %v241 = vld [vmem:[%s193 + $0x168] sm:$0xff]
                %242 = vst [vmem:[%s194 + $0xb8] sm:$0xff] %v241
                %v243 = vld [vmem:[%s193 + $0x180] sm:$0xff]
                %244 = vst [vmem:[%s194 + $0xc0] sm:$0xff] %v243
                %v245 = vld [vmem:[%s193 + $0x188] sm:$0xff]
                %246 = vst [vmem:[%s194 + $0xc8] sm:$0xff] %v245
                %v247 = vld [vmem:[%s193 + $0x1a0] sm:$0xff]
                %248 = vst [vmem:[%s194 + $0xd0] sm:$0xff] %v247
                %v249 = vld [vmem:[%s193 + $0x1a8] sm:$0xff]
                %250 = vst [vmem:[%s194 + $0xd8] sm:$0xff] %v249
                %v251 = vld [vmem:[%s193 + $0x1c0] sm:$0xff]
                %252 = vst [vmem:[%s194 + $0xe0] sm:$0xff] %v251
                %v253 = vld [vmem:[%s193 + $0x1c8] sm:$0xff]
                %254 = vst [vmem:[%s194 + $0xe8] sm:$0xff] %v253
                %v255 = vld [vmem:[%s193 + $0x1e0] sm:$0xff]
                %256 = vst [vmem:[%s194 + $0xf0] sm:$0xff] %v255
                %v257 = vld [vmem:[%s193 + $0x1e8] sm:$0xff]
                %258 = vst [vmem:[%s194 + $0xf8] sm:$0xff] %v257
              $region41: #{_aspp_forward_impl.1} parent=35 // loop_footer
                %s192 = sadd.s32 1, %s188
              $region42: #{_aspp_forward_impl.1} parent=35 // loop_footer_branch
                %187 = sbr.rel target = $region38
              $region43: #{_aspp_forward_impl.1} parent=35 // loop_exit
                _
            $region36: #{_aspp_forward_impl.1} parent=31 // pred_fallthru
              _
            // Predicated region
            $region44: #{_aspp_forward_impl.1} parent=31 // pred_check
              _
            $region45: #{_aspp_forward_impl.1} parent=31 // pred_check_branch
              %260 = sbr.rel target = $region47
            $region46: #{_aspp_forward_impl.1} parent=31 // pred_region
              _
            $region47: #{_aspp_forward_impl.1} parent=31 // pred_fallthru
              _
          $region32: #{_aspp_forward_impl.1} parent=27 // pred_fallthru
            _
          %261 = vnop
        $region28: #{_aspp_forward_impl.1} parent=23 // pred_fallthru
          _
        // Predicated region
        $region48: #{_aspp_forward_impl.1} parent=23 // pred_check
          %p262 = pneg %p71
        $region49: #{_aspp_forward_impl.1} parent=23 // pred_check_branch
          %264 = sbr.rel (%p262) target = $region51
        $region50: #{_aspp_forward_impl.1} parent=23 // pred_region
          %s265 = smul.u32 64, %s19
          %p266 = scmp.lt.s32.totalorder %s265, 127
          %s267 = scalar_select %p266, %s265, 127
          %s268 = smul.addr %s267, 15
          %s269 = smul.addr %s268, 4
          %s270 = scalar_lea.vmem %s1, %s269
          %s271 = smul.u32 64, %s19
        $region51: #{_aspp_forward_impl.1} parent=23 // pred_fallthru
          _
      $region24: #{_aspp_forward_impl.1} parent=5 // pred_fallthru
        _
      %p272 = scmp.le.s32.totalorder 1, %s11
      %p273 = scmp.lt.s32.totalorder %s11, 3
      %p274 = pnand %p272, %p273
      %p275 = pneg %p274
      // Predicated region
      $region52: #{_aspp_forward_impl.1} parent=5 // pred_check
        _
      $region53: #{_aspp_forward_impl.1} parent=5 // pred_check_branch
        %277 = sbr.rel (%p274) target = $region55
      $region54: #{_aspp_forward_impl.1} parent=5 // pred_region
        %s278 = ssub.s32 %s11, 1
        %s279 = sand.u32 %s38, 1
        %s280 = sand.u32 %s38, 1
        %s281 = smul.addr %s280, 256
        %s282 = scalar_lea.vmem [#allocation3], %s281
        // Predicated region
        $region56: #{_aspp_forward_impl.1} parent=54 // pred_check
          %p283 = pneg %p51
        $region57: #{_aspp_forward_impl.1} parent=54 // pred_check_branch
          %285 = sbr.rel (%p283) target = $region59
        $region58: #{_aspp_forward_impl.1} parent=54 // pred_region
          _
        $region59: #{_aspp_forward_impl.1} parent=54 // pred_fallthru
          _
        %s286 = sand.u32 %s38, 1
        %s287 = sand.u32 %s38, 1
        %s288 = smul.addr %s287, 256
        %s289 = scalar_lea.vmem [#allocation3], %s288
        %p290 = pneg %p51
        %p291 = pneg %p48
        %s292 = smul.u32 64, %s21
        %p293 = scmp.lt.s32.totalorder %s292, 127
        %s294 = scalar_select %p293, %s292, 127
        %s295 = smul.addr %s294, 15
        %s296 = smul.addr %s295, 4
        %s297 = scalar_lea.vmem %s1, %s296
        %p298 = pneg %p77
        %p299 = pneg %p74
        %p300 = pneg %p98
        %p301 = pneg %p95
        %p302 = pneg %p119
        %p303 = pneg %p116
        %p304 = pneg %p145
        %p305 = pneg %p142
        %s306 = smul.u32 2, %s20
        %s307 = smul.u32 4, %s21
        %s308 = smul.u32 64, %s21
        %p309 = scmp.lt.s32.totalorder %s308, 127
        %s310 = scalar_select %p309, %s308, 127
        %s311 = smul.addr %s310, 15
        %s312 = smul.addr %s311, 4
        %s313 = scalar_lea.vmem %s1, %s312
        %s314 = smul.u32 64, %s21
        %s315 = smul.u32 2, %s20
        %v316 = vld [vmem:[%s282] sm:$0xff]
        %v317 = vld [vmem:[%s282 + $0x8] sm:$0xff]
        %v318 = vld [vmem:[%s282 + $0x10] sm:$0xff]
        %v319 = vld [vmem:[%s282 + $0x18] sm:$0xff]
        %v320 = vld [vmem:[%s282 + $0x20] sm:$0xff]
        %v321 = vld [vmem:[%s282 + $0x28] sm:$0xff]
        %v322 = vld [vmem:[%s282 + $0x30] sm:$0xff]
        %v323 = vld [vmem:[%s282 + $0x38] sm:$0xff]
        %v324 = vld [vmem:[%s282 + $0x40] sm:$0xff]
        %v325 = vld [vmem:[%s282 + $0x48] sm:$0xff]
        %v326 = vld [vmem:[%s282 + $0x50] sm:$0xff]
        %v327 = vld [vmem:[%s282 + $0x58] sm:$0xff]
        %v328 = vld [vmem:[%s282 + $0x60] sm:$0xff]
        %v329 = vld [vmem:[%s282 + $0x68] sm:$0xff]
        %v330 = vld [vmem:[%s282 + $0x70] sm:$0xff]
        %v331 = vld [vmem:[%s282 + $0x78] sm:$0xff]
        %v332 = vld [vmem:[%s282 + $0x80] sm:$0xff]
        %v333 = vld [vmem:[%s282 + $0x88] sm:$0xff]
        %v334 = vld [vmem:[%s282 + $0x90] sm:$0xff]
        %v335 = vld [vmem:[%s282 + $0x98] sm:$0xff]
        %v336 = vld [vmem:[%s282 + $0xa0] sm:$0xff]
        %v337 = vld [vmem:[%s282 + $0xa8] sm:$0xff]
        %v338 = vld [vmem:[%s282 + $0xb0] sm:$0xff]
        %v339 = vld [vmem:[%s282 + $0xb8] sm:$0xff]
        %v340 = vld [vmem:[%s282 + $0xc0] sm:$0xff]
        %v341 = vld [vmem:[%s282 + $0xc8] sm:$0xff]
        %v342 = vld [vmem:[%s282 + $0xd0] sm:$0xff]
        %v343 = vld [vmem:[%s282 + $0xd8] sm:$0xff]
        %v344 = vld [vmem:[%s282 + $0xe0] sm:$0xff]
        %v345 = vld [vmem:[%s282 + $0xe8] sm:$0xff]
        %v346 = vld [vmem:[%s282 + $0xf0] sm:$0xff]
        %v347 = vld [vmem:[%s282 + $0xf8] sm:$0xff]
        %p348 = scmp.eq.s32.totalorder %s21, 0
        // Predicated region
        $region60: #{_aspp_forward_impl.1} parent=54 // pred_check
          %p349 = pneg %p348
        $region61: #{_aspp_forward_impl.1} parent=54 // pred_check_branch
          %351 = sbr.rel (%p349) target = $region63
        $region62: #{_aspp_forward_impl.1} parent=54 // pred_region
          %352 = vst [vmem:[#allocation2] sm:$0xff] 0.0
          %353 = vst [vmem:[#allocation2 + $0x8] sm:$0xff] 0.0
          %354 = vst [vmem:[#allocation2 + $0x10] sm:$0xff] 0.0
          %355 = vst [vmem:[#allocation2 + $0x18] sm:$0xff] 0.0
          %356 = vst [vmem:[#allocation2 + $0x20] sm:$0xff] 0.0
          %357 = vst [vmem:[#allocation2 + $0x28] sm:$0xff] 0.0
          %358 = vst [vmem:[#allocation2 + $0x30] sm:$0xff] 0.0
          %359 = vst [vmem:[#allocation2 + $0x38] sm:$0xff] 0.0
          %360 = vst [vmem:[#allocation2 + $0x40] sm:$0xff] 0.0
          %361 = vst [vmem:[#allocation2 + $0x48] sm:$0xff] 0.0
          %362 = vst [vmem:[#allocation2 + $0x50] sm:$0xff] 0.0
          %363 = vst [vmem:[#allocation2 + $0x58] sm:$0xff] 0.0
          %364 = vst [vmem:[#allocation2 + $0x60] sm:$0xff] 0.0
          %365 = vst [vmem:[#allocation2 + $0x68] sm:$0xff] 0.0
          %366 = vst [vmem:[#allocation2 + $0x70] sm:$0xff] 0.0
          %367 = vst [vmem:[#allocation2 + $0x78] sm:$0xff] 0.0
          %368 = vst [vmem:[#allocation2 + $0x80] sm:$0xff] 0.0
          %369 = vst [vmem:[#allocation2 + $0x88] sm:$0xff] 0.0
          %370 = vst [vmem:[#allocation2 + $0x90] sm:$0xff] 0.0
          %371 = vst [vmem:[#allocation2 + $0x98] sm:$0xff] 0.0
          %372 = vst [vmem:[#allocation2 + $0xa0] sm:$0xff] 0.0
          %373 = vst [vmem:[#allocation2 + $0xa8] sm:$0xff] 0.0
          %374 = vst [vmem:[#allocation2 + $0xb0] sm:$0xff] 0.0
          %375 = vst [vmem:[#allocation2 + $0xb8] sm:$0xff] 0.0
          %376 = vst [vmem:[#allocation2 + $0xc0] sm:$0xff] 0.0
          %377 = vst [vmem:[#allocation2 + $0xc8] sm:$0xff] 0.0
          %378 = vst [vmem:[#allocation2 + $0xd0] sm:$0xff] 0.0
          %379 = vst [vmem:[#allocation2 + $0xd8] sm:$0xff] 0.0
          %380 = vst [vmem:[#allocation2 + $0xe0] sm:$0xff] 0.0
          %381 = vst [vmem:[#allocation2 + $0xe8] sm:$0xff] 0.0
          %382 = vst [vmem:[#allocation2 + $0xf0] sm:$0xff] 0.0
          %383 = vst [vmem:[#allocation2 + $0xf8] sm:$0xff] 0.0
          %384 = vst [vmem:[#allocation2 + $0x100] sm:$0xff] 0.0
          %385 = vst [vmem:[#allocation2 + $0x108] sm:$0xff] 0.0
          %386 = vst [vmem:[#allocation2 + $0x110] sm:$0xff] 0.0
          %387 = vst [vmem:[#allocation2 + $0x118] sm:$0xff] 0.0
          %388 = vst [vmem:[#allocation2 + $0x120] sm:$0xff] 0.0
          %389 = vst [vmem:[#allocation2 + $0x128] sm:$0xff] 0.0
          %390 = vst [vmem:[#allocation2 + $0x130] sm:$0xff] 0.0
          %391 = vst [vmem:[#allocation2 + $0x138] sm:$0xff] 0.0
          %392 = vst [vmem:[#allocation2 + $0x140] sm:$0xff] 0.0
          %393 = vst [vmem:[#allocation2 + $0x148] sm:$0xff] 0.0
          %394 = vst [vmem:[#allocation2 + $0x150] sm:$0xff] 0.0
          %395 = vst [vmem:[#allocation2 + $0x158] sm:$0xff] 0.0
          %396 = vst [vmem:[#allocation2 + $0x160] sm:$0xff] 0.0
          %397 = vst [vmem:[#allocation2 + $0x168] sm:$0xff] 0.0
          %398 = vst [vmem:[#allocation2 + $0x170] sm:$0xff] 0.0
          %399 = vst [vmem:[#allocation2 + $0x178] sm:$0xff] 0.0
          %400 = vst [vmem:[#allocation2 + $0x180] sm:$0xff] 0.0
          %401 = vst [vmem:[#allocation2 + $0x188] sm:$0xff] 0.0
          %402 = vst [vmem:[#allocation2 + $0x190] sm:$0xff] 0.0
          %403 = vst [vmem:[#allocation2 + $0x198] sm:$0xff] 0.0
          %404 = vst [vmem:[#allocation2 + $0x1a0] sm:$0xff] 0.0
          %405 = vst [vmem:[#allocation2 + $0x1a8] sm:$0xff] 0.0
          %406 = vst [vmem:[#allocation2 + $0x1b0] sm:$0xff] 0.0
          %407 = vst [vmem:[#allocation2 + $0x1b8] sm:$0xff] 0.0
          %408 = vst [vmem:[#allocation2 + $0x1c0] sm:$0xff] 0.0
          %409 = vst [vmem:[#allocation2 + $0x1c8] sm:$0xff] 0.0
          %410 = vst [vmem:[#allocation2 + $0x1d0] sm:$0xff] 0.0
          %411 = vst [vmem:[#allocation2 + $0x1d8] sm:$0xff] 0.0
          %412 = vst [vmem:[#allocation2 + $0x1e0] sm:$0xff] 0.0
          %413 = vst [vmem:[#allocation2 + $0x1e8] sm:$0xff] 0.0
          %414 = vst [vmem:[#allocation2 + $0x1f0] sm:$0xff] 0.0
          %415 = vst [vmem:[#allocation2 + $0x1f8] sm:$0xff] 0.0
          %416 = vst [vmem:[#allocation2 + $0x200] sm:$0xff] 0.0
          %417 = vst [vmem:[#allocation2 + $0x208] sm:$0xff] 0.0
          %418 = vst [vmem:[#allocation2 + $0x210] sm:$0xff] 0.0
          %419 = vst [vmem:[#allocation2 + $0x218] sm:$0xff] 0.0
          %420 = vst [vmem:[#allocation2 + $0x220] sm:$0xff] 0.0
          %421 = vst [vmem:[#allocation2 + $0x228] sm:$0xff] 0.0
          %422 = vst [vmem:[#allocation2 + $0x230] sm:$0xff] 0.0
          %423 = vst [vmem:[#allocation2 + $0x238] sm:$0xff] 0.0
          %424 = vst [vmem:[#allocation2 + $0x240] sm:$0xff] 0.0
          %425 = vst [vmem:[#allocation2 + $0x248] sm:$0xff] 0.0
          %426 = vst [vmem:[#allocation2 + $0x250] sm:$0xff] 0.0
          %427 = vst [vmem:[#allocation2 + $0x258] sm:$0xff] 0.0
          %428 = vst [vmem:[#allocation2 + $0x260] sm:$0xff] 0.0
          %429 = vst [vmem:[#allocation2 + $0x268] sm:$0xff] 0.0
          %430 = vst [vmem:[#allocation2 + $0x270] sm:$0xff] 0.0
          %431 = vst [vmem:[#allocation2 + $0x278] sm:$0xff] 0.0
          %432 = vst [vmem:[#allocation2 + $0x280] sm:$0xff] 0.0
          %433 = vst [vmem:[#allocation2 + $0x288] sm:$0xff] 0.0
          %434 = vst [vmem:[#allocation2 + $0x290] sm:$0xff] 0.0
          %435 = vst [vmem:[#allocation2 + $0x298] sm:$0xff] 0.0
          %436 = vst [vmem:[#allocation2 + $0x2a0] sm:$0xff] 0.0
          %437 = vst [vmem:[#allocation2 + $0x2a8] sm:$0xff] 0.0
          %438 = vst [vmem:[#allocation2 + $0x2b0] sm:$0xff] 0.0
          %439 = vst [vmem:[#allocation2 + $0x2b8] sm:$0xff] 0.0
          %440 = vst [vmem:[#allocation2 + $0x2c0] sm:$0xff] 0.0
          %441 = vst [vmem:[#allocation2 + $0x2c8] sm:$0xff] 0.0
          %442 = vst [vmem:[#allocation2 + $0x2d0] sm:$0xff] 0.0
          %443 = vst [vmem:[#allocation2 + $0x2d8] sm:$0xff] 0.0
          %444 = vst [vmem:[#allocation2 + $0x2e0] sm:$0xff] 0.0
          %445 = vst [vmem:[#allocation2 + $0x2e8] sm:$0xff] 0.0
          %446 = vst [vmem:[#allocation2 + $0x2f0] sm:$0xff] 0.0
          %447 = vst [vmem:[#allocation2 + $0x2f8] sm:$0xff] 0.0
          %448 = vst [vmem:[#allocation2 + $0x300] sm:$0xff] 0.0
          %449 = vst [vmem:[#allocation2 + $0x308] sm:$0xff] 0.0
          %450 = vst [vmem:[#allocation2 + $0x310] sm:$0xff] 0.0
          %451 = vst [vmem:[#allocation2 + $0x318] sm:$0xff] 0.0
          %452 = vst [vmem:[#allocation2 + $0x320] sm:$0xff] 0.0
          %453 = vst [vmem:[#allocation2 + $0x328] sm:$0xff] 0.0
          %454 = vst [vmem:[#allocation2 + $0x330] sm:$0xff] 0.0
          %455 = vst [vmem:[#allocation2 + $0x338] sm:$0xff] 0.0
          %456 = vst [vmem:[#allocation2 + $0x340] sm:$0xff] 0.0
          %457 = vst [vmem:[#allocation2 + $0x348] sm:$0xff] 0.0
          %458 = vst [vmem:[#allocation2 + $0x350] sm:$0xff] 0.0
          %459 = vst [vmem:[#allocation2 + $0x358] sm:$0xff] 0.0
          %460 = vst [vmem:[#allocation2 + $0x360] sm:$0xff] 0.0
          %461 = vst [vmem:[#allocation2 + $0x368] sm:$0xff] 0.0
          %462 = vst [vmem:[#allocation2 + $0x370] sm:$0xff] 0.0
          %463 = vst [vmem:[#allocation2 + $0x378] sm:$0xff] 0.0
          %464 = vst [vmem:[#allocation2 + $0x380] sm:$0xff] 0.0
          %465 = vst [vmem:[#allocation2 + $0x388] sm:$0xff] 0.0
          %466 = vst [vmem:[#allocation2 + $0x390] sm:$0xff] 0.0
          %467 = vst [vmem:[#allocation2 + $0x398] sm:$0xff] 0.0
          %468 = vst [vmem:[#allocation2 + $0x3a0] sm:$0xff] 0.0
          %469 = vst [vmem:[#allocation2 + $0x3a8] sm:$0xff] 0.0
          %470 = vst [vmem:[#allocation2 + $0x3b0] sm:$0xff] 0.0
          %471 = vst [vmem:[#allocation2 + $0x3b8] sm:$0xff] 0.0
          %472 = vst [vmem:[#allocation2 + $0x3c0] sm:$0xff] 0.0
          %473 = vst [vmem:[#allocation2 + $0x3c8] sm:$0xff] 0.0
          %474 = vst [vmem:[#allocation2 + $0x3d0] sm:$0xff] 0.0
          %475 = vst [vmem:[#allocation2 + $0x3d8] sm:$0xff] 0.0
          %476 = vst [vmem:[#allocation2 + $0x3e0] sm:$0xff] 0.0
          %477 = vst [vmem:[#allocation2 + $0x3e8] sm:$0xff] 0.0
          %478 = vst [vmem:[#allocation2 + $0x3f0] sm:$0xff] 0.0
          %479 = vst [vmem:[#allocation2 + $0x3f8] sm:$0xff] 0.0
          %480 = vst [vmem:[#allocation2 + $0x400] sm:$0xff] 0.0
          %481 = vst [vmem:[#allocation2 + $0x408] sm:$0xff] 0.0
          %482 = vst [vmem:[#allocation2 + $0x410] sm:$0xff] 0.0
          %483 = vst [vmem:[#allocation2 + $0x418] sm:$0xff] 0.0
          %484 = vst [vmem:[#allocation2 + $0x420] sm:$0xff] 0.0
          %485 = vst [vmem:[#allocation2 + $0x428] sm:$0xff] 0.0
          %486 = vst [vmem:[#allocation2 + $0x430] sm:$0xff] 0.0
          %487 = vst [vmem:[#allocation2 + $0x438] sm:$0xff] 0.0
          %488 = vst [vmem:[#allocation2 + $0x440] sm:$0xff] 0.0
          %489 = vst [vmem:[#allocation2 + $0x448] sm:$0xff] 0.0
          %490 = vst [vmem:[#allocation2 + $0x450] sm:$0xff] 0.0
          %491 = vst [vmem:[#allocation2 + $0x458] sm:$0xff] 0.0
          %492 = vst [vmem:[#allocation2 + $0x460] sm:$0xff] 0.0
          %493 = vst [vmem:[#allocation2 + $0x468] sm:$0xff] 0.0
          %494 = vst [vmem:[#allocation2 + $0x470] sm:$0xff] 0.0
          %495 = vst [vmem:[#allocation2 + $0x478] sm:$0xff] 0.0
          %496 = vst [vmem:[#allocation2 + $0x480] sm:$0xff] 0.0
          %497 = vst [vmem:[#allocation2 + $0x488] sm:$0xff] 0.0
          %498 = vst [vmem:[#allocation2 + $0x490] sm:$0xff] 0.0
          %499 = vst [vmem:[#allocation2 + $0x498] sm:$0xff] 0.0
          %500 = vst [vmem:[#allocation2 + $0x4a0] sm:$0xff] 0.0
          %501 = vst [vmem:[#allocation2 + $0x4a8] sm:$0xff] 0.0
          %502 = vst [vmem:[#allocation2 + $0x4b0] sm:$0xff] 0.0
          %503 = vst [vmem:[#allocation2 + $0x4b8] sm:$0xff] 0.0
          %504 = vst [vmem:[#allocation2 + $0x4c0] sm:$0xff] 0.0
          %505 = vst [vmem:[#allocation2 + $0x4c8] sm:$0xff] 0.0
          %506 = vst [vmem:[#allocation2 + $0x4d0] sm:$0xff] 0.0
          %507 = vst [vmem:[#allocation2 + $0x4d8] sm:$0xff] 0.0
          %508 = vst [vmem:[#allocation2 + $0x4e0] sm:$0xff] 0.0
          %509 = vst [vmem:[#allocation2 + $0x4e8] sm:$0xff] 0.0
          %510 = vst [vmem:[#allocation2 + $0x4f0] sm:$0xff] 0.0
          %511 = vst [vmem:[#allocation2 + $0x4f8] sm:$0xff] 0.0
          %512 = vst [vmem:[#allocation2 + $0x500] sm:$0xff] 0.0
          %513 = vst [vmem:[#allocation2 + $0x508] sm:$0xff] 0.0
          %514 = vst [vmem:[#allocation2 + $0x510] sm:$0xff] 0.0
          %515 = vst [vmem:[#allocation2 + $0x518] sm:$0xff] 0.0
          %516 = vst [vmem:[#allocation2 + $0x520] sm:$0xff] 0.0
          %517 = vst [vmem:[#allocation2 + $0x528] sm:$0xff] 0.0
          %518 = vst [vmem:[#allocation2 + $0x530] sm:$0xff] 0.0
          %519 = vst [vmem:[#allocation2 + $0x538] sm:$0xff] 0.0
          %520 = vst [vmem:[#allocation2 + $0x540] sm:$0xff] 0.0
          %521 = vst [vmem:[#allocation2 + $0x548] sm:$0xff] 0.0
          %522 = vst [vmem:[#allocation2 + $0x550] sm:$0xff] 0.0
          %523 = vst [vmem:[#allocation2 + $0x558] sm:$0xff] 0.0
          %524 = vst [vmem:[#allocation2 + $0x560] sm:$0xff] 0.0
          %525 = vst [vmem:[#allocation2 + $0x568] sm:$0xff] 0.0
          %526 = vst [vmem:[#allocation2 + $0x570] sm:$0xff] 0.0
          %527 = vst [vmem:[#allocation2 + $0x578] sm:$0xff] 0.0
          %528 = vst [vmem:[#allocation2 + $0x580] sm:$0xff] 0.0
          %529 = vst [vmem:[#allocation2 + $0x588] sm:$0xff] 0.0
          %530 = vst [vmem:[#allocation2 + $0x590] sm:$0xff] 0.0
          %531 = vst [vmem:[#allocation2 + $0x598] sm:$0xff] 0.0
          %532 = vst [vmem:[#allocation2 + $0x5a0] sm:$0xff] 0.0
          %533 = vst [vmem:[#allocation2 + $0x5a8] sm:$0xff] 0.0
          %534 = vst [vmem:[#allocation2 + $0x5b0] sm:$0xff] 0.0
          %535 = vst [vmem:[#allocation2 + $0x5b8] sm:$0xff] 0.0
          %536 = vst [vmem:[#allocation2 + $0x5c0] sm:$0xff] 0.0
          %537 = vst [vmem:[#allocation2 + $0x5c8] sm:$0xff] 0.0
          %538 = vst [vmem:[#allocation2 + $0x5d0] sm:$0xff] 0.0
          %539 = vst [vmem:[#allocation2 + $0x5d8] sm:$0xff] 0.0
          %540 = vst [vmem:[#allocation2 + $0x5e0] sm:$0xff] 0.0
          %541 = vst [vmem:[#allocation2 + $0x5e8] sm:$0xff] 0.0
          %542 = vst [vmem:[#allocation2 + $0x5f0] sm:$0xff] 0.0
          %543 = vst [vmem:[#allocation2 + $0x5f8] sm:$0xff] 0.0
          %544 = vst [vmem:[#allocation2 + $0x600] sm:$0xff] 0.0
          %545 = vst [vmem:[#allocation2 + $0x608] sm:$0xff] 0.0
          %546 = vst [vmem:[#allocation2 + $0x610] sm:$0xff] 0.0
          %547 = vst [vmem:[#allocation2 + $0x618] sm:$0xff] 0.0
          %548 = vst [vmem:[#allocation2 + $0x620] sm:$0xff] 0.0
          %549 = vst [vmem:[#allocation2 + $0x628] sm:$0xff] 0.0
          %550 = vst [vmem:[#allocation2 + $0x630] sm:$0xff] 0.0
          %551 = vst [vmem:[#allocation2 + $0x638] sm:$0xff] 0.0
          %552 = vst [vmem:[#allocation2 + $0x640] sm:$0xff] 0.0
          %553 = vst [vmem:[#allocation2 + $0x648] sm:$0xff] 0.0
          %554 = vst [vmem:[#allocation2 + $0x650] sm:$0xff] 0.0
          %555 = vst [vmem:[#allocation2 + $0x658] sm:$0xff] 0.0
          %556 = vst [vmem:[#allocation2 + $0x660] sm:$0xff] 0.0
          %557 = vst [vmem:[#allocation2 + $0x668] sm:$0xff] 0.0
          %558 = vst [vmem:[#allocation2 + $0x670] sm:$0xff] 0.0
          %559 = vst [vmem:[#allocation2 + $0x678] sm:$0xff] 0.0
          %560 = vst [vmem:[#allocation2 + $0x680] sm:$0xff] 0.0
          %561 = vst [vmem:[#allocation2 + $0x688] sm:$0xff] 0.0
          %562 = vst [vmem:[#allocation2 + $0x690] sm:$0xff] 0.0
          %563 = vst [vmem:[#allocation2 + $0x698] sm:$0xff] 0.0
          %564 = vst [vmem:[#allocation2 + $0x6a0] sm:$0xff] 0.0
          %565 = vst [vmem:[#allocation2 + $0x6a8] sm:$0xff] 0.0
          %566 = vst [vmem:[#allocation2 + $0x6b0] sm:$0xff] 0.0
          %567 = vst [vmem:[#allocation2 + $0x6b8] sm:$0xff] 0.0
          %568 = vst [vmem:[#allocation2 + $0x6c0] sm:$0xff] 0.0
          %569 = vst [vmem:[#allocation2 + $0x6c8] sm:$0xff] 0.0
          %570 = vst [vmem:[#allocation2 + $0x6d0] sm:$0xff] 0.0
          %571 = vst [vmem:[#allocation2 + $0x6d8] sm:$0xff] 0.0
          %572 = vst [vmem:[#allocation2 + $0x6e0] sm:$0xff] 0.0
          %573 = vst [vmem:[#allocation2 + $0x6e8] sm:$0xff] 0.0
          %574 = vst [vmem:[#allocation2 + $0x6f0] sm:$0xff] 0.0
          %575 = vst [vmem:[#allocation2 + $0x6f8] sm:$0xff] 0.0
          %576 = vst [vmem:[#allocation2 + $0x700] sm:$0xff] 0.0
          %577 = vst [vmem:[#allocation2 + $0x708] sm:$0xff] 0.0
          %578 = vst [vmem:[#allocation2 + $0x710] sm:$0xff] 0.0
          %579 = vst [vmem:[#allocation2 + $0x718] sm:$0xff] 0.0
          %580 = vst [vmem:[#allocation2 + $0x720] sm:$0xff] 0.0
          %581 = vst [vmem:[#allocation2 + $0x728] sm:$0xff] 0.0
          %582 = vst [vmem:[#allocation2 + $0x730] sm:$0xff] 0.0
          %583 = vst [vmem:[#allocation2 + $0x738] sm:$0xff] 0.0
          %584 = vst [vmem:[#allocation2 + $0x740] sm:$0xff] 0.0
          %585 = vst [vmem:[#allocation2 + $0x748] sm:$0xff] 0.0
          %586 = vst [vmem:[#allocation2 + $0x750] sm:$0xff] 0.0
          %587 = vst [vmem:[#allocation2 + $0x758] sm:$0xff] 0.0
          %588 = vst [vmem:[#allocation2 + $0x760] sm:$0xff] 0.0
          %589 = vst [vmem:[#allocation2 + $0x768] sm:$0xff] 0.0
          %590 = vst [vmem:[#allocation2 + $0x770] sm:$0xff] 0.0
          %591 = vst [vmem:[#allocation2 + $0x778] sm:$0xff] 0.0
        $region63: #{_aspp_forward_impl.1} parent=54 // pred_fallthru
          _
        %v592 = vld [vmem:[#allocation2] sm:$0xff]
        %v593 = vld [vmem:[#allocation2 + $0x8] sm:$0xff]
        %v594 = vld [vmem:[#allocation2 + $0x10] sm:$0xff]
        %v595 = vld [vmem:[#allocation2 + $0x18] sm:$0xff]
        %v596 = vld [vmem:[#allocation2 + $0x20] sm:$0xff]
        %v597 = vld [vmem:[#allocation2 + $0x28] sm:$0xff]
        %v598 = vld [vmem:[#allocation2 + $0x30] sm:$0xff]
        %v599 = vld [vmem:[#allocation2 + $0x38] sm:$0xff]
        %v600 = vld [vmem:[#allocation2 + $0x40] sm:$0xff]
        %v601 = vld [vmem:[#allocation2 + $0x48] sm:$0xff]
        %v602 = vld [vmem:[#allocation2 + $0x50] sm:$0xff]
        %v603 = vld [vmem:[#allocation2 + $0x58] sm:$0xff]
        %v604 = vld [vmem:[#allocation2 + $0x60] sm:$0xff]
        %v605 = vld [vmem:[#allocation2 + $0x68] sm:$0xff]
        %v606 = vld [vmem:[#allocation2 + $0x70] sm:$0xff]
        %v607 = vld [vmem:[#allocation2 + $0x78] sm:$0xff]
        %v608 = vld [vmem:[#allocation2 + $0x80] sm:$0xff]
        %v609 = vld [vmem:[#allocation2 + $0x88] sm:$0xff]
        %v610 = vld [vmem:[#allocation2 + $0x90] sm:$0xff]
        %v611 = vld [vmem:[#allocation2 + $0x98] sm:$0xff]
        %v612 = vld [vmem:[#allocation2 + $0xa0] sm:$0xff]
        %v613 = vld [vmem:[#allocation2 + $0xa8] sm:$0xff]
        %v614 = vld [vmem:[#allocation2 + $0xb0] sm:$0xff]
        %v615 = vld [vmem:[#allocation2 + $0xb8] sm:$0xff]
        %v616 = vld [vmem:[#allocation2 + $0xc0] sm:$0xff]
        %v617 = vld [vmem:[#allocation2 + $0xc8] sm:$0xff]
        %v618 = vld [vmem:[#allocation2 + $0xd0] sm:$0xff]
        %v619 = vld [vmem:[#allocation2 + $0xd8] sm:$0xff]
        %v620 = vld [vmem:[#allocation2 + $0xe0] sm:$0xff]
        %v621 = vld [vmem:[#allocation2 + $0xe8] sm:$0xff]
        %v622 = vld [vmem:[#allocation2 + $0xf0] sm:$0xff]
        %v623 = vld [vmem:[#allocation2 + $0xf8] sm:$0xff]
        %v624 = vld [vmem:[#allocation2 + $0x100] sm:$0xff]
        %v625 = vld [vmem:[#allocation2 + $0x108] sm:$0xff]
        %v626 = vld [vmem:[#allocation2 + $0x110] sm:$0xff]
        %v627 = vld [vmem:[#allocation2 + $0x118] sm:$0xff]
        %v628 = vld [vmem:[#allocation2 + $0x120] sm:$0xff]
        %v629 = vld [vmem:[#allocation2 + $0x128] sm:$0xff]
        %v630 = vld [vmem:[#allocation2 + $0x130] sm:$0xff]
        %v631 = vld [vmem:[#allocation2 + $0x138] sm:$0xff]
        %v632 = vld [vmem:[#allocation2 + $0x140] sm:$0xff]
        %v633 = vld [vmem:[#allocation2 + $0x148] sm:$0xff]
        %v634 = vld [vmem:[#allocation2 + $0x150] sm:$0xff]
        %v635 = vld [vmem:[#allocation2 + $0x158] sm:$0xff]
        %v636 = vld [vmem:[#allocation2 + $0x160] sm:$0xff]
        %v637 = vld [vmem:[#allocation2 + $0x168] sm:$0xff]
        %v638 = vld [vmem:[#allocation2 + $0x170] sm:$0xff]
        %v639 = vld [vmem:[#allocation2 + $0x178] sm:$0xff]
        %v640 = vld [vmem:[#allocation2 + $0x180] sm:$0xff]
        %v641 = vld [vmem:[#allocation2 + $0x188] sm:$0xff]
        %v642 = vld [vmem:[#allocation2 + $0x190] sm:$0xff]
        %v643 = vld [vmem:[#allocation2 + $0x198] sm:$0xff]
        %v644 = vld [vmem:[#allocation2 + $0x1a0] sm:$0xff]
        %v645 = vld [vmem:[#allocation2 + $0x1a8] sm:$0xff]
        %v646 = vld [vmem:[#allocation2 + $0x1b0] sm:$0xff]
        %v647 = vld [vmem:[#allocation2 + $0x1b8] sm:$0xff]
        %v648 = vld [vmem:[#allocation2 + $0x1c0] sm:$0xff]
        %v649 = vld [vmem:[#allocation2 + $0x1c8] sm:$0xff]
        %v650 = vld [vmem:[#allocation2 + $0x1d0] sm:$0xff]
        %v651 = vld [vmem:[#allocation2 + $0x1d8] sm:$0xff]
        %v652 = vld [vmem:[#allocation2 + $0x1e0] sm:$0xff]
        %v653 = vld [vmem:[#allocation2 + $0x1e8] sm:$0xff]
        %v654 = vld [vmem:[#allocation2 + $0x1f0] sm:$0xff]
        %v655 = vld [vmem:[#allocation2 + $0x1f8] sm:$0xff]
        %v656 = vld [vmem:[#allocation2 + $0x200] sm:$0xff]
        %v657 = vld [vmem:[#allocation2 + $0x208] sm:$0xff]
        %v658 = vld [vmem:[#allocation2 + $0x210] sm:$0xff]
        %v659 = vld [vmem:[#allocation2 + $0x218] sm:$0xff]
        %v660 = vld [vmem:[#allocation2 + $0x220] sm:$0xff]
        %v661 = vld [vmem:[#allocation2 + $0x228] sm:$0xff]
        %v662 = vld [vmem:[#allocation2 + $0x230] sm:$0xff]
        %v663 = vld [vmem:[#allocation2 + $0x238] sm:$0xff]
        %v664 = vld [vmem:[#allocation2 + $0x240] sm:$0xff]
        %v665 = vld [vmem:[#allocation2 + $0x248] sm:$0xff]
        %v666 = vld [vmem:[#allocation2 + $0x250] sm:$0xff]
        %v667 = vld [vmem:[#allocation2 + $0x258] sm:$0xff]
        %v668 = vld [vmem:[#allocation2 + $0x260] sm:$0xff]
        %v669 = vld [vmem:[#allocation2 + $0x268] sm:$0xff]
        %v670 = vld [vmem:[#allocation2 + $0x270] sm:$0xff]
        %v671 = vld [vmem:[#allocation2 + $0x278] sm:$0xff]
        %v672 = vld [vmem:[#allocation2 + $0x280] sm:$0xff]
        %v673 = vld [vmem:[#allocation2 + $0x288] sm:$0xff]
        %v674 = vld [vmem:[#allocation2 + $0x290] sm:$0xff]
        %v675 = vld [vmem:[#allocation2 + $0x298] sm:$0xff]
        %v676 = vld [vmem:[#allocation2 + $0x2a0] sm:$0xff]
        %v677 = vld [vmem:[#allocation2 + $0x2a8] sm:$0xff]
        %v678 = vld [vmem:[#allocation2 + $0x2b0] sm:$0xff]
        %v679 = vld [vmem:[#allocation2 + $0x2b8] sm:$0xff]
        %v680 = vld [vmem:[#allocation2 + $0x2c0] sm:$0xff]
        %v681 = vld [vmem:[#allocation2 + $0x2c8] sm:$0xff]
        %v682 = vld [vmem:[#allocation2 + $0x2d0] sm:$0xff]
        %v683 = vld [vmem:[#allocation2 + $0x2d8] sm:$0xff]
        %v684 = vld [vmem:[#allocation2 + $0x2e0] sm:$0xff]
        %v685 = vld [vmem:[#allocation2 + $0x2e8] sm:$0xff]
        %v686 = vld [vmem:[#allocation2 + $0x2f0] sm:$0xff]
        %v687 = vld [vmem:[#allocation2 + $0x2f8] sm:$0xff]
        %v688 = vld [vmem:[#allocation2 + $0x300] sm:$0xff]
        %v689 = vld [vmem:[#allocation2 + $0x308] sm:$0xff]
        %v690 = vld [vmem:[#allocation2 + $0x310] sm:$0xff]
        %v691 = vld [vmem:[#allocation2 + $0x318] sm:$0xff]
        %v692 = vld [vmem:[#allocation2 + $0x320] sm:$0xff]
        %v693 = vld [vmem:[#allocation2 + $0x328] sm:$0xff]
        %v694 = vld [vmem:[#allocation2 + $0x330] sm:$0xff]
        %v695 = vld [vmem:[#allocation2 + $0x338] sm:$0xff]
        %v696 = vld [vmem:[#allocation2 + $0x340] sm:$0xff]
        %v697 = vld [vmem:[#allocation2 + $0x348] sm:$0xff]
        %v698 = vld [vmem:[#allocation2 + $0x350] sm:$0xff]
        %v699 = vld [vmem:[#allocation2 + $0x358] sm:$0xff]
        %v700 = vld [vmem:[#allocation2 + $0x360] sm:$0xff]
        %v701 = vld [vmem:[#allocation2 + $0x368] sm:$0xff]
        %v702 = vld [vmem:[#allocation2 + $0x370] sm:$0xff]
        %v703 = vld [vmem:[#allocation2 + $0x378] sm:$0xff]
        %v704 = vld [vmem:[#allocation2 + $0x380] sm:$0xff]
        %v705 = vld [vmem:[#allocation2 + $0x388] sm:$0xff]
        %v706 = vld [vmem:[#allocation2 + $0x390] sm:$0xff]
        %v707 = vld [vmem:[#allocation2 + $0x398] sm:$0xff]
        %v708 = vld [vmem:[#allocation2 + $0x3a0] sm:$0xff]
        %v709 = vld [vmem:[#allocation2 + $0x3a8] sm:$0xff]
        %v710 = vld [vmem:[#allocation2 + $0x3b0] sm:$0xff]
        %v711 = vld [vmem:[#allocation2 + $0x3b8] sm:$0xff]
        %v712 = vld [vmem:[#allocation2 + $0x3c0] sm:$0xff]
        %v713 = vld [vmem:[#allocation2 + $0x3c8] sm:$0xff]
        %v714 = vld [vmem:[#allocation2 + $0x3d0] sm:$0xff]
        %v715 = vld [vmem:[#allocation2 + $0x3d8] sm:$0xff]
        %v716 = vld [vmem:[#allocation2 + $0x3e0] sm:$0xff]
        %v717 = vld [vmem:[#allocation2 + $0x3e8] sm:$0xff]
        %v718 = vld [vmem:[#allocation2 + $0x3f0] sm:$0xff]
        %v719 = vld [vmem:[#allocation2 + $0x3f8] sm:$0xff]
        %v720 = vld [vmem:[#allocation2 + $0x400] sm:$0xff]
        %v721 = vld [vmem:[#allocation2 + $0x408] sm:$0xff]
        %v722 = vld [vmem:[#allocation2 + $0x410] sm:$0xff]
        %v723 = vld [vmem:[#allocation2 + $0x418] sm:$0xff]
        %v724 = vld [vmem:[#allocation2 + $0x420] sm:$0xff]
        %v725 = vld [vmem:[#allocation2 + $0x428] sm:$0xff]
        %v726 = vld [vmem:[#allocation2 + $0x430] sm:$0xff]
        %v727 = vld [vmem:[#allocation2 + $0x438] sm:$0xff]
        %v728 = vld [vmem:[#allocation2 + $0x440] sm:$0xff]
        %v729 = vld [vmem:[#allocation2 + $0x448] sm:$0xff]
        %v730 = vld [vmem:[#allocation2 + $0x450] sm:$0xff]
        %v731 = vld [vmem:[#allocation2 + $0x458] sm:$0xff]
        %v732 = vld [vmem:[#allocation2 + $0x460] sm:$0xff]
        %v733 = vld [vmem:[#allocation2 + $0x468] sm:$0xff]
        %v734 = vld [vmem:[#allocation2 + $0x470] sm:$0xff]
        %v735 = vld [vmem:[#allocation2 + $0x478] sm:$0xff]
        %v736 = vld [vmem:[#allocation2 + $0x480] sm:$0xff]
        %v737 = vld [vmem:[#allocation2 + $0x488] sm:$0xff]
        %v738 = vld [vmem:[#allocation2 + $0x490] sm:$0xff]
        %v739 = vld [vmem:[#allocation2 + $0x498] sm:$0xff]
        %v740 = vld [vmem:[#allocation2 + $0x4a0] sm:$0xff]
        %v741 = vld [vmem:[#allocation2 + $0x4a8] sm:$0xff]
        %v742 = vld [vmem:[#allocation2 + $0x4b0] sm:$0xff]
        %v743 = vld [vmem:[#allocation2 + $0x4b8] sm:$0xff]
        %v744 = vld [vmem:[#allocation2 + $0x4c0] sm:$0xff]
        %v745 = vld [vmem:[#allocation2 + $0x4c8] sm:$0xff]
        %v746 = vld [vmem:[#allocation2 + $0x4d0] sm:$0xff]
        %v747 = vld [vmem:[#allocation2 + $0x4d8] sm:$0xff]
        %v748 = vld [vmem:[#allocation2 + $0x4e0] sm:$0xff]
        %v749 = vld [vmem:[#allocation2 + $0x4e8] sm:$0xff]
        %v750 = vld [vmem:[#allocation2 + $0x4f0] sm:$0xff]
        %v751 = vld [vmem:[#allocation2 + $0x4f8] sm:$0xff]
        %v752 = vld [vmem:[#allocation2 + $0x500] sm:$0xff]
        %v753 = vld [vmem:[#allocation2 + $0x508] sm:$0xff]
        %v754 = vld [vmem:[#allocation2 + $0x510] sm:$0xff]
        %v755 = vld [vmem:[#allocation2 + $0x518] sm:$0xff]
        %v756 = vld [vmem:[#allocation2 + $0x520] sm:$0xff]
        %v757 = vld [vmem:[#allocation2 + $0x528] sm:$0xff]
        %v758 = vld [vmem:[#allocation2 + $0x530] sm:$0xff]
        %v759 = vld [vmem:[#allocation2 + $0x538] sm:$0xff]
        %v760 = vld [vmem:[#allocation2 + $0x540] sm:$0xff]
        %v761 = vld [vmem:[#allocation2 + $0x548] sm:$0xff]
        %v762 = vld [vmem:[#allocation2 + $0x550] sm:$0xff]
        %v763 = vld [vmem:[#allocation2 + $0x558] sm:$0xff]
        %v764 = vld [vmem:[#allocation2 + $0x560] sm:$0xff]
        %v765 = vld [vmem:[#allocation2 + $0x568] sm:$0xff]
        %v766 = vld [vmem:[#allocation2 + $0x570] sm:$0xff]
        %v767 = vld [vmem:[#allocation2 + $0x578] sm:$0xff]
        %v768 = vld [vmem:[#allocation2 + $0x580] sm:$0xff]
        %v769 = vld [vmem:[#allocation2 + $0x588] sm:$0xff]
        %v770 = vld [vmem:[#allocation2 + $0x590] sm:$0xff]
        %v771 = vld [vmem:[#allocation2 + $0x598] sm:$0xff]
        %v772 = vld [vmem:[#allocation2 + $0x5a0] sm:$0xff]
        %v773 = vld [vmem:[#allocation2 + $0x5a8] sm:$0xff]
        %v774 = vld [vmem:[#allocation2 + $0x5b0] sm:$0xff]
        %v775 = vld [vmem:[#allocation2 + $0x5b8] sm:$0xff]
        %v776 = vld [vmem:[#allocation2 + $0x5c0] sm:$0xff]
        %v777 = vld [vmem:[#allocation2 + $0x5c8] sm:$0xff]
        %v778 = vld [vmem:[#allocation2 + $0x5d0] sm:$0xff]
        %v779 = vld [vmem:[#allocation2 + $0x5d8] sm:$0xff]
        %v780 = vld [vmem:[#allocation2 + $0x5e0] sm:$0xff]
        %v781 = vld [vmem:[#allocation2 + $0x5e8] sm:$0xff]
        %v782 = vld [vmem:[#allocation2 + $0x5f0] sm:$0xff]
        %v783 = vld [vmem:[#allocation2 + $0x5f8] sm:$0xff]
        %v784 = vld [vmem:[#allocation2 + $0x600] sm:$0xff]
        %v785 = vld [vmem:[#allocation2 + $0x608] sm:$0xff]
        %v786 = vld [vmem:[#allocation2 + $0x610] sm:$0xff]
        %v787 = vld [vmem:[#allocation2 + $0x618] sm:$0xff]
        %v788 = vld [vmem:[#allocation2 + $0x620] sm:$0xff]
        %v789 = vld [vmem:[#allocation2 + $0x628] sm:$0xff]
        %v790 = vld [vmem:[#allocation2 + $0x630] sm:$0xff]
        %v791 = vld [vmem:[#allocation2 + $0x638] sm:$0xff]
        %v792 = vld [vmem:[#allocation2 + $0x640] sm:$0xff]
        %v793 = vld [vmem:[#allocation2 + $0x648] sm:$0xff]
        %v794 = vld [vmem:[#allocation2 + $0x650] sm:$0xff]
        %v795 = vld [vmem:[#allocation2 + $0x658] sm:$0xff]
        %v796 = vld [vmem:[#allocation2 + $0x660] sm:$0xff]
        %v797 = vld [vmem:[#allocation2 + $0x668] sm:$0xff]
        %v798 = vld [vmem:[#allocation2 + $0x670] sm:$0xff]
        %v799 = vld [vmem:[#allocation2 + $0x678] sm:$0xff]
        %v800 = vld [vmem:[#allocation2 + $0x680] sm:$0xff]
        %v801 = vld [vmem:[#allocation2 + $0x688] sm:$0xff]
        %v802 = vld [vmem:[#allocation2 + $0x690] sm:$0xff]
        %v803 = vld [vmem:[#allocation2 + $0x698] sm:$0xff]
        %v804 = vld [vmem:[#allocation2 + $0x6a0] sm:$0xff]
        %v805 = vld [vmem:[#allocation2 + $0x6a8] sm:$0xff]
        %v806 = vld [vmem:[#allocation2 + $0x6b0] sm:$0xff]
        %v807 = vld [vmem:[#allocation2 + $0x6b8] sm:$0xff]
        %v808 = vld [vmem:[#allocation2 + $0x6c0] sm:$0xff]
        %v809 = vld [vmem:[#allocation2 + $0x6c8] sm:$0xff]
        %v810 = vld [vmem:[#allocation2 + $0x6d0] sm:$0xff]
        %v811 = vld [vmem:[#allocation2 + $0x6d8] sm:$0xff]
        %v812 = vld [vmem:[#allocation2 + $0x6e0] sm:$0xff]
        %v813 = vld [vmem:[#allocation2 + $0x6e8] sm:$0xff]
        %v814 = vld [vmem:[#allocation2 + $0x6f0] sm:$0xff]
        %v815 = vld [vmem:[#allocation2 + $0x6f8] sm:$0xff]
        %v816 = vld [vmem:[#allocation2 + $0x700] sm:$0xff]
        %v817 = vld [vmem:[#allocation2 + $0x708] sm:$0xff]
        %v818 = vld [vmem:[#allocation2 + $0x710] sm:$0xff]
        %v819 = vld [vmem:[#allocation2 + $0x718] sm:$0xff]
        %v820 = vld [vmem:[#allocation2 + $0x720] sm:$0xff]
        %v821 = vld [vmem:[#allocation2 + $0x728] sm:$0xff]
        %v822 = vld [vmem:[#allocation2 + $0x730] sm:$0xff]
        %v823 = vld [vmem:[#allocation2 + $0x738] sm:$0xff]
        %v824 = vld [vmem:[#allocation2 + $0x740] sm:$0xff]
        %v825 = vld [vmem:[#allocation2 + $0x748] sm:$0xff]
        %v826 = vld [vmem:[#allocation2 + $0x750] sm:$0xff]
        %v827 = vld [vmem:[#allocation2 + $0x758] sm:$0xff]
        %v828 = vld [vmem:[#allocation2 + $0x760] sm:$0xff]
        %v829 = vld [vmem:[#allocation2 + $0x768] sm:$0xff]
        %v830 = vld [vmem:[#allocation2 + $0x770] sm:$0xff]
        %v831 = vld [vmem:[#allocation2 + $0x778] sm:$0xff]
        %v832 = vld [vmem:[%s313] sm:$0xff]
        %v833 = vld [vmem:[%s313 + $0x8] sm:$0xff]
        %v834 = vld [vmem:[%s313 + $0x10] sm:$0xff]
        %v835 = vld [vmem:[%s313 + $0x18] sm:$0xff]
        %v836 = vld [vmem:[%s313 + $0x20] sm:$0xff]
        %v837 = vld [vmem:[%s313 + $0x28] sm:$0xff]
        %v838 = vld [vmem:[%s313 + $0x30] sm:$0xff]
        %v839 = vld [vmem:[%s313 + $0x38] sm:$0xf]
        %v840 = vld [vmem:[%s313 + $0x3c] sm:$0xff]
        %v841 = vld [vmem:[%s313 + $0x44] sm:$0xff]
        %v842 = vld [vmem:[%s313 + $0x4c] sm:$0xff]
        %v843 = vld [vmem:[%s313 + $0x54] sm:$0xff]
        %v844 = vld [vmem:[%s313 + $0x5c] sm:$0xff]
        %v845 = vld [vmem:[%s313 + $0x64] sm:$0xff]
        %v846 = vld [vmem:[%s313 + $0x6c] sm:$0xff]
        %v847 = vld [vmem:[%s313 + $0x74] sm:$0xf]
        %v848 = vld [vmem:[%s313 + $0x78] sm:$0xff]
        %v849 = vld [vmem:[%s313 + $0x80] sm:$0xff]
        %v850 = vld [vmem:[%s313 + $0x88] sm:$0xff]
        %v851 = vld [vmem:[%s313 + $0x90] sm:$0xff]
        %v852 = vld [vmem:[%s313 + $0x98] sm:$0xff]
        %v853 = vld [vmem:[%s313 + $0xa0] sm:$0xff]
        %v854 = vld [vmem:[%s313 + $0xa8] sm:$0xff]
        %v855 = vld [vmem:[%s313 + $0xb0] sm:$0xf]
        %v856 = vld [vmem:[%s313 + $0xb4] sm:$0xff]
        %v857 = vld [vmem:[%s313 + $0xbc] sm:$0xff]
        %v858 = vld [vmem:[%s313 + $0xc4] sm:$0xff]
        %v859 = vld [vmem:[%s313 + $0xcc] sm:$0xff]
        %v860 = vld [vmem:[%s313 + $0xd4] sm:$0xff]
        %v861 = vld [vmem:[%s313 + $0xdc] sm:$0xff]
        %v862 = vld [vmem:[%s313 + $0xe4] sm:$0xff]
        %v863 = vld [vmem:[%s313 + $0xec] sm:$0xf]
        %v864 = vld [vmem:[%s313 + $0xf0] sm:$0xff]
        %v865 = vld [vmem:[%s313 + $0xf8] sm:$0xff]
        %v866 = vld [vmem:[%s313 + $0x100] sm:$0xff]
        %v867 = vld [vmem:[%s313 + $0x108] sm:$0xff]
        %v868 = vld [vmem:[%s313 + $0x110] sm:$0xff]
        %v869 = vld [vmem:[%s313 + $0x118] sm:$0xff]
        %v870 = vld [vmem:[%s313 + $0x120] sm:$0xff]
        %v871 = vld [vmem:[%s313 + $0x128] sm:$0xf]
        %v872 = vld [vmem:[%s313 + $0x12c] sm:$0xff]
        %v873 = vld [vmem:[%s313 + $0x134] sm:$0xff]
        %v874 = vld [vmem:[%s313 + $0x13c] sm:$0xff]
        %v875 = vld [vmem:[%s313 + $0x144] sm:$0xff]
        %v876 = vld [vmem:[%s313 + $0x14c] sm:$0xff]
        %v877 = vld [vmem:[%s313 + $0x154] sm:$0xff]
        %v878 = vld [vmem:[%s313 + $0x15c] sm:$0xff]
        %v879 = vld [vmem:[%s313 + $0x164] sm:$0xf]
        %v880 = vld [vmem:[%s313 + $0x168] sm:$0xff]
        %v881 = vld [vmem:[%s313 + $0x170] sm:$0xff]
        %v882 = vld [vmem:[%s313 + $0x178] sm:$0xff]
        %v883 = vld [vmem:[%s313 + $0x180] sm:$0xff]
        %v884 = vld [vmem:[%s313 + $0x188] sm:$0xff]
        %v885 = vld [vmem:[%s313 + $0x190] sm:$0xff]
        %v886 = vld [vmem:[%s313 + $0x198] sm:$0xff]
        %v887 = vld [vmem:[%s313 + $0x1a0] sm:$0xf]
        %v888 = vld [vmem:[%s313 + $0x1a4] sm:$0xff]
        %v889 = vld [vmem:[%s313 + $0x1ac] sm:$0xff]
        %v890 = vld [vmem:[%s313 + $0x1b4] sm:$0xff]
        %v891 = vld [vmem:[%s313 + $0x1bc] sm:$0xff]
        %v892 = vld [vmem:[%s313 + $0x1c4] sm:$0xff]
        %v893 = vld [vmem:[%s313 + $0x1cc] sm:$0xff]
        %v894 = vld [vmem:[%s313 + $0x1d4] sm:$0xff]
        %v895 = vld [vmem:[%s313 + $0x1dc] sm:$0xf]
        %v896 = vld [vmem:[%s313 + $0x1e0] sm:$0xff]
        %v897 = vld [vmem:[%s313 + $0x1e8] sm:$0xff]
        %v898 = vld [vmem:[%s313 + $0x1f0] sm:$0xff]
        %v899 = vld [vmem:[%s313 + $0x1f8] sm:$0xff]
        %v900 = vld [vmem:[%s313 + $0x200] sm:$0xff]
        %v901 = vld [vmem:[%s313 + $0x208] sm:$0xff]
        %v902 = vld [vmem:[%s313 + $0x210] sm:$0xff]
        %v903 = vld [vmem:[%s313 + $0x218] sm:$0xf]
        %v904 = vld [vmem:[%s313 + $0x21c] sm:$0xff]
        %v905 = vld [vmem:[%s313 + $0x224] sm:$0xff]
        %v906 = vld [vmem:[%s313 + $0x22c] sm:$0xff]
        %v907 = vld [vmem:[%s313 + $0x234] sm:$0xff]
        %v908 = vld [vmem:[%s313 + $0x23c] sm:$0xff]
        %v909 = vld [vmem:[%s313 + $0x244] sm:$0xff]
        %v910 = vld [vmem:[%s313 + $0x24c] sm:$0xff]
        %v911 = vld [vmem:[%s313 + $0x254] sm:$0xf]
        %v912 = vld [vmem:[%s313 + $0x258] sm:$0xff]
        %v913 = vld [vmem:[%s313 + $0x260] sm:$0xff]
        %v914 = vld [vmem:[%s313 + $0x268] sm:$0xff]
        %v915 = vld [vmem:[%s313 + $0x270] sm:$0xff]
        %v916 = vld [vmem:[%s313 + $0x278] sm:$0xff]
        %v917 = vld [vmem:[%s313 + $0x280] sm:$0xff]
        %v918 = vld [vmem:[%s313 + $0x288] sm:$0xff]
        %v919 = vld [vmem:[%s313 + $0x290] sm:$0xf]
        %v920 = vld [vmem:[%s313 + $0x294] sm:$0xff]
        %v921 = vld [vmem:[%s313 + $0x29c] sm:$0xff]
        %v922 = vld [vmem:[%s313 + $0x2a4] sm:$0xff]
        %v923 = vld [vmem:[%s313 + $0x2ac] sm:$0xff]
        %v924 = vld [vmem:[%s313 + $0x2b4] sm:$0xff]
        %v925 = vld [vmem:[%s313 + $0x2bc] sm:$0xff]
        %v926 = vld [vmem:[%s313 + $0x2c4] sm:$0xff]
        %v927 = vld [vmem:[%s313 + $0x2cc] sm:$0xf]
        %v928 = vld [vmem:[%s313 + $0x2d0] sm:$0xff]
        %v929 = vld [vmem:[%s313 + $0x2d8] sm:$0xff]
        %v930 = vld [vmem:[%s313 + $0x2e0] sm:$0xff]
        %v931 = vld [vmem:[%s313 + $0x2e8] sm:$0xff]
        %v932 = vld [vmem:[%s313 + $0x2f0] sm:$0xff]
        %v933 = vld [vmem:[%s313 + $0x2f8] sm:$0xff]
        %v934 = vld [vmem:[%s313 + $0x300] sm:$0xff]
        %v935 = vld [vmem:[%s313 + $0x308] sm:$0xf]
        %v936 = vld [vmem:[%s313 + $0x30c] sm:$0xff]
        %v937 = vld [vmem:[%s313 + $0x314] sm:$0xff]
        %v938 = vld [vmem:[%s313 + $0x31c] sm:$0xff]
        %v939 = vld [vmem:[%s313 + $0x324] sm:$0xff]
        %v940 = vld [vmem:[%s313 + $0x32c] sm:$0xff]
        %v941 = vld [vmem:[%s313 + $0x334] sm:$0xff]
        %v942 = vld [vmem:[%s313 + $0x33c] sm:$0xff]
        %v943 = vld [vmem:[%s313 + $0x344] sm:$0xf]
        %v944 = vld [vmem:[%s313 + $0x348] sm:$0xff]
        %v945 = vld [vmem:[%s313 + $0x350] sm:$0xff]
        %v946 = vld [vmem:[%s313 + $0x358] sm:$0xff]
        %v947 = vld [vmem:[%s313 + $0x360] sm:$0xff]
        %v948 = vld [vmem:[%s313 + $0x368] sm:$0xff]
        %v949 = vld [vmem:[%s313 + $0x370] sm:$0xff]
        %v950 = vld [vmem:[%s313 + $0x378] sm:$0xff]
        %v951 = vld [vmem:[%s313 + $0x380] sm:$0xf]
        %v952 = vld [vmem:[%s313 + $0x384] sm:$0xff]
        %v953 = vld [vmem:[%s313 + $0x38c] sm:$0xff]
        %v954 = vld [vmem:[%s313 + $0x394] sm:$0xff]
        %v955 = vld [vmem:[%s313 + $0x39c] sm:$0xff]
        %v956 = vld [vmem:[%s313 + $0x3a4] sm:$0xff]
        %v957 = vld [vmem:[%s313 + $0x3ac] sm:$0xff]
        %v958 = vld [vmem:[%s313 + $0x3b4] sm:$0xff]
        %v959 = vld [vmem:[%s313 + $0x3bc] sm:$0xf]
        %v960 = vld [vmem:[%s313 + $0x3c0] sm:$0xff]
        %v961 = vld [vmem:[%s313 + $0x3c8] sm:$0xff]
        %v962 = vld [vmem:[%s313 + $0x3d0] sm:$0xff]
        %v963 = vld [vmem:[%s313 + $0x3d8] sm:$0xff]
        %v964 = vld [vmem:[%s313 + $0x3e0] sm:$0xff]
        %v965 = vld [vmem:[%s313 + $0x3e8] sm:$0xff]
        %v966 = vld [vmem:[%s313 + $0x3f0] sm:$0xff]
        %v967 = vld [vmem:[%s313 + $0x3f8] sm:$0xf]
        %v968 = vld [vmem:[%s313 + $0x3fc] sm:$0xff]
        %v969 = vld [vmem:[%s313 + $0x404] sm:$0xff]
        %v970 = vld [vmem:[%s313 + $0x40c] sm:$0xff]
        %v971 = vld [vmem:[%s313 + $0x414] sm:$0xff]
        %v972 = vld [vmem:[%s313 + $0x41c] sm:$0xff]
        %v973 = vld [vmem:[%s313 + $0x424] sm:$0xff]
        %v974 = vld [vmem:[%s313 + $0x42c] sm:$0xff]
        %v975 = vld [vmem:[%s313 + $0x434] sm:$0xf]
        %v976 = vld [vmem:[%s313 + $0x438] sm:$0xff]
        %v977 = vld [vmem:[%s313 + $0x440] sm:$0xff]
        %v978 = vld [vmem:[%s313 + $0x448] sm:$0xff]
        %v979 = vld [vmem:[%s313 + $0x450] sm:$0xff]
        %v980 = vld [vmem:[%s313 + $0x458] sm:$0xff]
        %v981 = vld [vmem:[%s313 + $0x460] sm:$0xff]
        %v982 = vld [vmem:[%s313 + $0x468] sm:$0xff]
        %v983 = vld [vmem:[%s313 + $0x470] sm:$0xf]
        %v984 = vld [vmem:[%s313 + $0x474] sm:$0xff]
        %v985 = vld [vmem:[%s313 + $0x47c] sm:$0xff]
        %v986 = vld [vmem:[%s313 + $0x484] sm:$0xff]
        %v987 = vld [vmem:[%s313 + $0x48c] sm:$0xff]
        %v988 = vld [vmem:[%s313 + $0x494] sm:$0xff]
        %v989 = vld [vmem:[%s313 + $0x49c] sm:$0xff]
        %v990 = vld [vmem:[%s313 + $0x4a4] sm:$0xff]
        %v991 = vld [vmem:[%s313 + $0x4ac] sm:$0xf]
        %v992 = vld [vmem:[%s313 + $0x4b0] sm:$0xff]
        %v993 = vld [vmem:[%s313 + $0x4b8] sm:$0xff]
        %v994 = vld [vmem:[%s313 + $0x4c0] sm:$0xff]
        %v995 = vld [vmem:[%s313 + $0x4c8] sm:$0xff]
        %v996 = vld [vmem:[%s313 + $0x4d0] sm:$0xff]
        %v997 = vld [vmem:[%s313 + $0x4d8] sm:$0xff]
        %v998 = vld [vmem:[%s313 + $0x4e0] sm:$0xff]
        %v999 = vld [vmem:[%s313 + $0x4e8] sm:$0xf]
        %v1000 = vld [vmem:[%s313 + $0x4ec] sm:$0xff]
        %v1001 = vld [vmem:[%s313 + $0x4f4] sm:$0xff]
        %v1002 = vld [vmem:[%s313 + $0x4fc] sm:$0xff]
        %v1003 = vld [vmem:[%s313 + $0x504] sm:$0xff]
        %v1004 = vld [vmem:[%s313 + $0x50c] sm:$0xff]
        %v1005 = vld [vmem:[%s313 + $0x514] sm:$0xff]
        %v1006 = vld [vmem:[%s313 + $0x51c] sm:$0xff]
        %v1007 = vld [vmem:[%s313 + $0x524] sm:$0xf]
        %v1008 = vld [vmem:[%s313 + $0x528] sm:$0xff]
        %v1009 = vld [vmem:[%s313 + $0x530] sm:$0xff]
        %v1010 = vld [vmem:[%s313 + $0x538] sm:$0xff]
        %v1011 = vld [vmem:[%s313 + $0x540] sm:$0xff]
        %v1012 = vld [vmem:[%s313 + $0x548] sm:$0xff]
        %v1013 = vld [vmem:[%s313 + $0x550] sm:$0xff]
        %v1014 = vld [vmem:[%s313 + $0x558] sm:$0xff]
        %v1015 = vld [vmem:[%s313 + $0x560] sm:$0xf]
        %v1016 = vld [vmem:[%s313 + $0x564] sm:$0xff]
        %v1017 = vld [vmem:[%s313 + $0x56c] sm:$0xff]
        %v1018 = vld [vmem:[%s313 + $0x574] sm:$0xff]
        %v1019 = vld [vmem:[%s313 + $0x57c] sm:$0xff]
        %v1020 = vld [vmem:[%s313 + $0x584] sm:$0xff]
        %v1021 = vld [vmem:[%s313 + $0x58c] sm:$0xff]
        %v1022 = vld [vmem:[%s313 + $0x594] sm:$0xff]
        %v1023 = vld [vmem:[%s313 + $0x59c] sm:$0xf]
        %v1024 = vld [vmem:[%s313 + $0x5a0] sm:$0xff]
        %v1025 = vld [vmem:[%s313 + $0x5a8] sm:$0xff]
        %v1026 = vld [vmem:[%s313 + $0x5b0] sm:$0xff]
        %v1027 = vld [vmem:[%s313 + $0x5b8] sm:$0xff]
        %v1028 = vld [vmem:[%s313 + $0x5c0] sm:$0xff]
        %v1029 = vld [vmem:[%s313 + $0x5c8] sm:$0xff]
        %v1030 = vld [vmem:[%s313 + $0x5d0] sm:$0xff]
        %v1031 = vld [vmem:[%s313 + $0x5d8] sm:$0xf]
        %v1032 = vld [vmem:[%s313 + $0x5dc] sm:$0xff]
        %v1033 = vld [vmem:[%s313 + $0x5e4] sm:$0xff]
        %v1034 = vld [vmem:[%s313 + $0x5ec] sm:$0xff]
        %v1035 = vld [vmem:[%s313 + $0x5f4] sm:$0xff]
        %v1036 = vld [vmem:[%s313 + $0x5fc] sm:$0xff]
        %v1037 = vld [vmem:[%s313 + $0x604] sm:$0xff]
        %v1038 = vld [vmem:[%s313 + $0x60c] sm:$0xff]
        %v1039 = vld [vmem:[%s313 + $0x614] sm:$0xf]
        %v1040 = vld [vmem:[%s313 + $0x618] sm:$0xff]
        %v1041 = vld [vmem:[%s313 + $0x620] sm:$0xff]
        %v1042 = vld [vmem:[%s313 + $0x628] sm:$0xff]
        %v1043 = vld [vmem:[%s313 + $0x630] sm:$0xff]
        %v1044 = vld [vmem:[%s313 + $0x638] sm:$0xff]
        %v1045 = vld [vmem:[%s313 + $0x640] sm:$0xff]
        %v1046 = vld [vmem:[%s313 + $0x648] sm:$0xff]
        %v1047 = vld [vmem:[%s313 + $0x650] sm:$0xf]
        %v1048 = vld [vmem:[%s313 + $0x654] sm:$0xff]
        %v1049 = vld [vmem:[%s313 + $0x65c] sm:$0xff]
        %v1050 = vld [vmem:[%s313 + $0x664] sm:$0xff]
        %v1051 = vld [vmem:[%s313 + $0x66c] sm:$0xff]
        %v1052 = vld [vmem:[%s313 + $0x674] sm:$0xff]
        %v1053 = vld [vmem:[%s313 + $0x67c] sm:$0xff]
        %v1054 = vld [vmem:[%s313 + $0x684] sm:$0xff]
        %v1055 = vld [vmem:[%s313 + $0x68c] sm:$0xf]
        %v1056 = vld [vmem:[%s313 + $0x690] sm:$0xff]
        %v1057 = vld [vmem:[%s313 + $0x698] sm:$0xff]
        %v1058 = vld [vmem:[%s313 + $0x6a0] sm:$0xff]
        %v1059 = vld [vmem:[%s313 + $0x6a8] sm:$0xff]
        %v1060 = vld [vmem:[%s313 + $0x6b0] sm:$0xff]
        %v1061 = vld [vmem:[%s313 + $0x6b8] sm:$0xff]
        %v1062 = vld [vmem:[%s313 + $0x6c0] sm:$0xff]
        %v1063 = vld [vmem:[%s313 + $0x6c8] sm:$0xf]
        %v1064 = vld [vmem:[%s313 + $0x6cc] sm:$0xff]
        %v1065 = vld [vmem:[%s313 + $0x6d4] sm:$0xff]
        %v1066 = vld [vmem:[%s313 + $0x6dc] sm:$0xff]
        %v1067 = vld [vmem:[%s313 + $0x6e4] sm:$0xff]
        %v1068 = vld [vmem:[%s313 + $0x6ec] sm:$0xff]
        %v1069 = vld [vmem:[%s313 + $0x6f4] sm:$0xff]
        %v1070 = vld [vmem:[%s313 + $0x6fc] sm:$0xff]
        %v1071 = vld [vmem:[%s313 + $0x704] sm:$0xf]
        %v1072 = vld [vmem:[%s313 + $0x708] sm:$0xff]
        %v1073 = vld [vmem:[%s313 + $0x710] sm:$0xff]
        %v1074 = vld [vmem:[%s313 + $0x718] sm:$0xff]
        %v1075 = vld [vmem:[%s313 + $0x720] sm:$0xff]
        %v1076 = vld [vmem:[%s313 + $0x728] sm:$0xff]
        %v1077 = vld [vmem:[%s313 + $0x730] sm:$0xff]
        %v1078 = vld [vmem:[%s313 + $0x738] sm:$0xff]
        %v1079 = vld [vmem:[%s313 + $0x740] sm:$0xf]
        %v1080 = vld [vmem:[%s313 + $0x744] sm:$0xff]
        %v1081 = vld [vmem:[%s313 + $0x74c] sm:$0xff]
        %v1082 = vld [vmem:[%s313 + $0x754] sm:$0xff]
        %v1083 = vld [vmem:[%s313 + $0x75c] sm:$0xff]
        %v1084 = vld [vmem:[%s313 + $0x764] sm:$0xff]
        %v1085 = vld [vmem:[%s313 + $0x76c] sm:$0xff]
        %v1086 = vld [vmem:[%s313 + $0x774] sm:$0xff]
        %v1087 = vld [vmem:[%s313 + $0x77c] sm:$0xf]
        %v1088 = vld [vmem:[%s313 + $0x780] sm:$0xff]
        %v1089 = vld [vmem:[%s313 + $0x788] sm:$0xff]
        %v1090 = vld [vmem:[%s313 + $0x790] sm:$0xff]
        %v1091 = vld [vmem:[%s313 + $0x798] sm:$0xff]
        %v1092 = vld [vmem:[%s313 + $0x7a0] sm:$0xff]
        %v1093 = vld [vmem:[%s313 + $0x7a8] sm:$0xff]
        %v1094 = vld [vmem:[%s313 + $0x7b0] sm:$0xff]
        %v1095 = vld [vmem:[%s313 + $0x7b8] sm:$0xf]
        %v1096 = vld [vmem:[%s313 + $0x7bc] sm:$0xff]
        %v1097 = vld [vmem:[%s313 + $0x7c4] sm:$0xff]
        %v1098 = vld [vmem:[%s313 + $0x7cc] sm:$0xff]
        %v1099 = vld [vmem:[%s313 + $0x7d4] sm:$0xff]
        %v1100 = vld [vmem:[%s313 + $0x7dc] sm:$0xff]
        %v1101 = vld [vmem:[%s313 + $0x7e4] sm:$0xff]
        %v1102 = vld [vmem:[%s313 + $0x7ec] sm:$0xff]
        %v1103 = vld [vmem:[%s313 + $0x7f4] sm:$0xf]
        %v1104 = vld [vmem:[%s313 + $0x7f8] sm:$0xff]
        %v1105 = vld [vmem:[%s313 + $0x800] sm:$0xff]
        %v1106 = vld [vmem:[%s313 + $0x808] sm:$0xff]
        %v1107 = vld [vmem:[%s313 + $0x810] sm:$0xff]
        %v1108 = vld [vmem:[%s313 + $0x818] sm:$0xff]
        %v1109 = vld [vmem:[%s313 + $0x820] sm:$0xff]
        %v1110 = vld [vmem:[%s313 + $0x828] sm:$0xff]
        %v1111 = vld [vmem:[%s313 + $0x830] sm:$0xf]
        %v1112 = vld [vmem:[%s313 + $0x834] sm:$0xff]
        %v1113 = vld [vmem:[%s313 + $0x83c] sm:$0xff]
        %v1114 = vld [vmem:[%s313 + $0x844] sm:$0xff]
        %v1115 = vld [vmem:[%s313 + $0x84c] sm:$0xff]
        %v1116 = vld [vmem:[%s313 + $0x854] sm:$0xff]
        %v1117 = vld [vmem:[%s313 + $0x85c] sm:$0xff]
        %v1118 = vld [vmem:[%s313 + $0x864] sm:$0xff]
        %v1119 = vld [vmem:[%s313 + $0x86c] sm:$0xf]
        %v1120 = vld [vmem:[%s313 + $0x870] sm:$0xff]
        %v1121 = vld [vmem:[%s313 + $0x878] sm:$0xff]
        %v1122 = vld [vmem:[%s313 + $0x880] sm:$0xff]
        %v1123 = vld [vmem:[%s313 + $0x888] sm:$0xff]
        %v1124 = vld [vmem:[%s313 + $0x890] sm:$0xff]
        %v1125 = vld [vmem:[%s313 + $0x898] sm:$0xff]
        %v1126 = vld [vmem:[%s313 + $0x8a0] sm:$0xff]
        %v1127 = vld [vmem:[%s313 + $0x8a8] sm:$0xf]
        %v1128 = vld [vmem:[%s313 + $0x8ac] sm:$0xff]
        %v1129 = vld [vmem:[%s313 + $0x8b4] sm:$0xff]
        %v1130 = vld [vmem:[%s313 + $0x8bc] sm:$0xff]
        %v1131 = vld [vmem:[%s313 + $0x8c4] sm:$0xff]
        %v1132 = vld [vmem:[%s313 + $0x8cc] sm:$0xff]
        %v1133 = vld [vmem:[%s313 + $0x8d4] sm:$0xff]
        %v1134 = vld [vmem:[%s313 + $0x8dc] sm:$0xff]
        %v1135 = vld [vmem:[%s313 + $0x8e4] sm:$0xf]
        %v1136 = vld [vmem:[%s313 + $0x8e8] sm:$0xff]
        %v1137 = vld [vmem:[%s313 + $0x8f0] sm:$0xff]
        %v1138 = vld [vmem:[%s313 + $0x8f8] sm:$0xff]
        %v1139 = vld [vmem:[%s313 + $0x900] sm:$0xff]
        %v1140 = vld [vmem:[%s313 + $0x908] sm:$0xff]
        %v1141 = vld [vmem:[%s313 + $0x910] sm:$0xff]
        %v1142 = vld [vmem:[%s313 + $0x918] sm:$0xff]
        %v1143 = vld [vmem:[%s313 + $0x920] sm:$0xf]
        %v1144 = vld [vmem:[%s313 + $0x924] sm:$0xff]
        %v1145 = vld [vmem:[%s313 + $0x92c] sm:$0xff]
        %v1146 = vld [vmem:[%s313 + $0x934] sm:$0xff]
        %v1147 = vld [vmem:[%s313 + $0x93c] sm:$0xff]
        %v1148 = vld [vmem:[%s313 + $0x944] sm:$0xff]
        %v1149 = vld [vmem:[%s313 + $0x94c] sm:$0xff]
        %v1150 = vld [vmem:[%s313 + $0x954] sm:$0xff]
        %v1151 = vld [vmem:[%s313 + $0x95c] sm:$0xf]
        %v1152 = vld [vmem:[%s313 + $0x960] sm:$0xff]
        %v1153 = vld [vmem:[%s313 + $0x968] sm:$0xff]
        %v1154 = vld [vmem:[%s313 + $0x970] sm:$0xff]
        %v1155 = vld [vmem:[%s313 + $0x978] sm:$0xff]
        %v1156 = vld [vmem:[%s313 + $0x980] sm:$0xff]
        %v1157 = vld [vmem:[%s313 + $0x988] sm:$0xff]
        %v1158 = vld [vmem:[%s313 + $0x990] sm:$0xff]
        %v1159 = vld [vmem:[%s313 + $0x998] sm:$0xf]
        %v1160 = vld [vmem:[%s313 + $0x99c] sm:$0xff]
        %v1161 = vld [vmem:[%s313 + $0x9a4] sm:$0xff]
        %v1162 = vld [vmem:[%s313 + $0x9ac] sm:$0xff]
        %v1163 = vld [vmem:[%s313 + $0x9b4] sm:$0xff]
        %v1164 = vld [vmem:[%s313 + $0x9bc] sm:$0xff]
        %v1165 = vld [vmem:[%s313 + $0x9c4] sm:$0xff]
        %v1166 = vld [vmem:[%s313 + $0x9cc] sm:$0xff]
        %v1167 = vld [vmem:[%s313 + $0x9d4] sm:$0xf]
        %v1168 = vld [vmem:[%s313 + $0x9d8] sm:$0xff]
        %v1169 = vld [vmem:[%s313 + $0x9e0] sm:$0xff]
        %v1170 = vld [vmem:[%s313 + $0x9e8] sm:$0xff]
        %v1171 = vld [vmem:[%s313 + $0x9f0] sm:$0xff]
        %v1172 = vld [vmem:[%s313 + $0x9f8] sm:$0xff]
        %v1173 = vld [vmem:[%s313 + $0xa00] sm:$0xff]
        %v1174 = vld [vmem:[%s313 + $0xa08] sm:$0xff]
        %v1175 = vld [vmem:[%s313 + $0xa10] sm:$0xf]
        %v1176 = vld [vmem:[%s313 + $0xa14] sm:$0xff]
        %v1177 = vld [vmem:[%s313 + $0xa1c] sm:$0xff]
        %v1178 = vld [vmem:[%s313 + $0xa24] sm:$0xff]
        %v1179 = vld [vmem:[%s313 + $0xa2c] sm:$0xff]
        %v1180 = vld [vmem:[%s313 + $0xa34] sm:$0xff]
        %v1181 = vld [vmem:[%s313 + $0xa3c] sm:$0xff]
        %v1182 = vld [vmem:[%s313 + $0xa44] sm:$0xff]
        %v1183 = vld [vmem:[%s313 + $0xa4c] sm:$0xf]
        %v1184 = vld [vmem:[%s313 + $0xa50] sm:$0xff]
        %v1185 = vld [vmem:[%s313 + $0xa58] sm:$0xff]
        %v1186 = vld [vmem:[%s313 + $0xa60] sm:$0xff]
        %v1187 = vld [vmem:[%s313 + $0xa68] sm:$0xff]
        %v1188 = vld [vmem:[%s313 + $0xa70] sm:$0xff]
        %v1189 = vld [vmem:[%s313 + $0xa78] sm:$0xff]
        %v1190 = vld [vmem:[%s313 + $0xa80] sm:$0xff]
        %v1191 = vld [vmem:[%s313 + $0xa88] sm:$0xf]
        %v1192 = vld [vmem:[%s313 + $0xa8c] sm:$0xff]
        %v1193 = vld [vmem:[%s313 + $0xa94] sm:$0xff]
        %v1194 = vld [vmem:[%s313 + $0xa9c] sm:$0xff]
        %v1195 = vld [vmem:[%s313 + $0xaa4] sm:$0xff]
        %v1196 = vld [vmem:[%s313 + $0xaac] sm:$0xff]
        %v1197 = vld [vmem:[%s313 + $0xab4] sm:$0xff]
        %v1198 = vld [vmem:[%s313 + $0xabc] sm:$0xff]
        %v1199 = vld [vmem:[%s313 + $0xac4] sm:$0xf]
        %v1200 = vld [vmem:[%s313 + $0xac8] sm:$0xff]
        %v1201 = vld [vmem:[%s313 + $0xad0] sm:$0xff]
        %v1202 = vld [vmem:[%s313 + $0xad8] sm:$0xff]
        %v1203 = vld [vmem:[%s313 + $0xae0] sm:$0xff]
        %v1204 = vld [vmem:[%s313 + $0xae8] sm:$0xff]
        %v1205 = vld [vmem:[%s313 + $0xaf0] sm:$0xff]
        %v1206 = vld [vmem:[%s313 + $0xaf8] sm:$0xff]
        %v1207 = vld [vmem:[%s313 + $0xb00] sm:$0xf]
        %v1208 = vld [vmem:[%s313 + $0xb04] sm:$0xff]
        %v1209 = vld [vmem:[%s313 + $0xb0c] sm:$0xff]
        %v1210 = vld [vmem:[%s313 + $0xb14] sm:$0xff]
        %v1211 = vld [vmem:[%s313 + $0xb1c] sm:$0xff]
        %v1212 = vld [vmem:[%s313 + $0xb24] sm:$0xff]
        %v1213 = vld [vmem:[%s313 + $0xb2c] sm:$0xff]
        %v1214 = vld [vmem:[%s313 + $0xb34] sm:$0xff]
        %v1215 = vld [vmem:[%s313 + $0xb3c] sm:$0xf]
        %v1216 = vld [vmem:[%s313 + $0xb40] sm:$0xff]
        %v1217 = vld [vmem:[%s313 + $0xb48] sm:$0xff]
        %v1218 = vld [vmem:[%s313 + $0xb50] sm:$0xff]
        %v1219 = vld [vmem:[%s313 + $0xb58] sm:$0xff]
        %v1220 = vld [vmem:[%s313 + $0xb60] sm:$0xff]
        %v1221 = vld [vmem:[%s313 + $0xb68] sm:$0xff]
        %v1222 = vld [vmem:[%s313 + $0xb70] sm:$0xff]
        %v1223 = vld [vmem:[%s313 + $0xb78] sm:$0xf]
        %v1224 = vld [vmem:[%s313 + $0xb7c] sm:$0xff]
        %v1225 = vld [vmem:[%s313 + $0xb84] sm:$0xff]
        %v1226 = vld [vmem:[%s313 + $0xb8c] sm:$0xff]
        %v1227 = vld [vmem:[%s313 + $0xb94] sm:$0xff]
        %v1228 = vld [vmem:[%s313 + $0xb9c] sm:$0xff]
        %v1229 = vld [vmem:[%s313 + $0xba4] sm:$0xff]
        %v1230 = vld [vmem:[%s313 + $0xbac] sm:$0xff]
        %v1231 = vld [vmem:[%s313 + $0xbb4] sm:$0xf]
        %v1232 = vld [vmem:[%s313 + $0xbb8] sm:$0xff]
        %v1233 = vld [vmem:[%s313 + $0xbc0] sm:$0xff]
        %v1234 = vld [vmem:[%s313 + $0xbc8] sm:$0xff]
        %v1235 = vld [vmem:[%s313 + $0xbd0] sm:$0xff]
        %v1236 = vld [vmem:[%s313 + $0xbd8] sm:$0xff]
        %v1237 = vld [vmem:[%s313 + $0xbe0] sm:$0xff]
        %v1238 = vld [vmem:[%s313 + $0xbe8] sm:$0xff]
        %v1239 = vld [vmem:[%s313 + $0xbf0] sm:$0xf]
        %v1240 = vld [vmem:[%s313 + $0xbf4] sm:$0xff]
        %v1241 = vld [vmem:[%s313 + $0xbfc] sm:$0xff]
        %v1242 = vld [vmem:[%s313 + $0xc04] sm:$0xff]
        %v1243 = vld [vmem:[%s313 + $0xc0c] sm:$0xff]
        %v1244 = vld [vmem:[%s313 + $0xc14] sm:$0xff]
        %v1245 = vld [vmem:[%s313 + $0xc1c] sm:$0xff]
        %v1246 = vld [vmem:[%s313 + $0xc24] sm:$0xff]
        %v1247 = vld [vmem:[%s313 + $0xc2c] sm:$0xf]
        %v1248 = vld [vmem:[%s313 + $0xc30] sm:$0xff]
        %v1249 = vld [vmem:[%s313 + $0xc38] sm:$0xff]
        %v1250 = vld [vmem:[%s313 + $0xc40] sm:$0xff]
        %v1251 = vld [vmem:[%s313 + $0xc48] sm:$0xff]
        %v1252 = vld [vmem:[%s313 + $0xc50] sm:$0xff]
        %v1253 = vld [vmem:[%s313 + $0xc58] sm:$0xff]
        %v1254 = vld [vmem:[%s313 + $0xc60] sm:$0xff]
        %v1255 = vld [vmem:[%s313 + $0xc68] sm:$0xf]
        %v1256 = vld [vmem:[%s313 + $0xc6c] sm:$0xff]
        %v1257 = vld [vmem:[%s313 + $0xc74] sm:$0xff]
        %v1258 = vld [vmem:[%s313 + $0xc7c] sm:$0xff]
        %v1259 = vld [vmem:[%s313 + $0xc84] sm:$0xff]
        %v1260 = vld [vmem:[%s313 + $0xc8c] sm:$0xff]
        %v1261 = vld [vmem:[%s313 + $0xc94] sm:$0xff]
        %v1262 = vld [vmem:[%s313 + $0xc9c] sm:$0xff]
        %v1263 = vld [vmem:[%s313 + $0xca4] sm:$0xf]
        %v1264 = vld [vmem:[%s313 + $0xca8] sm:$0xff]
        %v1265 = vld [vmem:[%s313 + $0xcb0] sm:$0xff]
        %v1266 = vld [vmem:[%s313 + $0xcb8] sm:$0xff]
        %v1267 = vld [vmem:[%s313 + $0xcc0] sm:$0xff]
        %v1268 = vld [vmem:[%s313 + $0xcc8] sm:$0xff]
        %v1269 = vld [vmem:[%s313 + $0xcd0] sm:$0xff]
        %v1270 = vld [vmem:[%s313 + $0xcd8] sm:$0xff]
        %v1271 = vld [vmem:[%s313 + $0xce0] sm:$0xf]
        %v1272 = vld [vmem:[%s313 + $0xce4] sm:$0xff]
        %v1273 = vld [vmem:[%s313 + $0xcec] sm:$0xff]
        %v1274 = vld [vmem:[%s313 + $0xcf4] sm:$0xff]
        %v1275 = vld [vmem:[%s313 + $0xcfc] sm:$0xff]
        %v1276 = vld [vmem:[%s313 + $0xd04] sm:$0xff]
        %v1277 = vld [vmem:[%s313 + $0xd0c] sm:$0xff]
        %v1278 = vld [vmem:[%s313 + $0xd14] sm:$0xff]
        %v1279 = vld [vmem:[%s313 + $0xd1c] sm:$0xf]
        %v1280 = vld [vmem:[%s313 + $0xd20] sm:$0xff]
        %v1281 = vld [vmem:[%s313 + $0xd28] sm:$0xff]
        %v1282 = vld [vmem:[%s313 + $0xd30] sm:$0xff]
        %v1283 = vld [vmem:[%s313 + $0xd38] sm:$0xff]
        %v1284 = vld [vmem:[%s313 + $0xd40] sm:$0xff]
        %v1285 = vld [vmem:[%s313 + $0xd48] sm:$0xff]
        %v1286 = vld [vmem:[%s313 + $0xd50] sm:$0xff]
        %v1287 = vld [vmem:[%s313 + $0xd58] sm:$0xf]
        %v1288 = vld [vmem:[%s313 + $0xd5c] sm:$0xff]
        %v1289 = vld [vmem:[%s313 + $0xd64] sm:$0xff]
        %v1290 = vld [vmem:[%s313 + $0xd6c] sm:$0xff]
        %v1291 = vld [vmem:[%s313 + $0xd74] sm:$0xff]
        %v1292 = vld [vmem:[%s313 + $0xd7c] sm:$0xff]
        %v1293 = vld [vmem:[%s313 + $0xd84] sm:$0xff]
        %v1294 = vld [vmem:[%s313 + $0xd8c] sm:$0xff]
        %v1295 = vld [vmem:[%s313 + $0xd94] sm:$0xf]
        %v1296 = vld [vmem:[%s313 + $0xd98] sm:$0xff]
        %v1297 = vld [vmem:[%s313 + $0xda0] sm:$0xff]
        %v1298 = vld [vmem:[%s313 + $0xda8] sm:$0xff]
        %v1299 = vld [vmem:[%s313 + $0xdb0] sm:$0xff]
        %v1300 = vld [vmem:[%s313 + $0xdb8] sm:$0xff]
        %v1301 = vld [vmem:[%s313 + $0xdc0] sm:$0xff]
        %v1302 = vld [vmem:[%s313 + $0xdc8] sm:$0xff]
        %v1303 = vld [vmem:[%s313 + $0xdd0] sm:$0xf]
        %v1304 = vld [vmem:[%s313 + $0xdd4] sm:$0xff]
        %v1305 = vld [vmem:[%s313 + $0xddc] sm:$0xff]
        %v1306 = vld [vmem:[%s313 + $0xde4] sm:$0xff]
        %v1307 = vld [vmem:[%s313 + $0xdec] sm:$0xff]
        %v1308 = vld [vmem:[%s313 + $0xdf4] sm:$0xff]
        %v1309 = vld [vmem:[%s313 + $0xdfc] sm:$0xff]
        %v1310 = vld [vmem:[%s313 + $0xe04] sm:$0xff]
        %v1311 = vld [vmem:[%s313 + $0xe0c] sm:$0xf]
        %v1312 = vld [vmem:[%s313 + $0xe10] sm:$0xff]
        %v1313 = vld [vmem:[%s313 + $0xe18] sm:$0xff]
        %v1314 = vld [vmem:[%s313 + $0xe20] sm:$0xff]
        %v1315 = vld [vmem:[%s313 + $0xe28] sm:$0xff]
        %v1316 = vld [vmem:[%s313 + $0xe30] sm:$0xff]
        %v1317 = vld [vmem:[%s313 + $0xe38] sm:$0xff]
        %v1318 = vld [vmem:[%s313 + $0xe40] sm:$0xff]
        %v1319 = vld [vmem:[%s313 + $0xe48] sm:$0xf]
        %v1320 = vld [vmem:[%s313 + $0xe4c] sm:$0xff]
        %v1321 = vld [vmem:[%s313 + $0xe54] sm:$0xff]
        %v1322 = vld [vmem:[%s313 + $0xe5c] sm:$0xff]
        %v1323 = vld [vmem:[%s313 + $0xe64] sm:$0xff]
        %v1324 = vld [vmem:[%s313 + $0xe6c] sm:$0xff]
        %v1325 = vld [vmem:[%s313 + $0xe74] sm:$0xff]
        %v1326 = vld [vmem:[%s313 + $0xe7c] sm:$0xff]
        %v1327 = vld [vmem:[%s313 + $0xe84] sm:$0xf]
        %v1328 = vld [vmem:[%s313 + $0xe88] sm:$0xff]
        %v1329 = vld [vmem:[%s313 + $0xe90] sm:$0xff]
        %v1330 = vld [vmem:[%s313 + $0xe98] sm:$0xff]
        %v1331 = vld [vmem:[%s313 + $0xea0] sm:$0xff]
        %v1332 = vld [vmem:[%s313 + $0xea8] sm:$0xff]
        %v1333 = vld [vmem:[%s313 + $0xeb0] sm:$0xff]
        %v1334 = vld [vmem:[%s313 + $0xeb8] sm:$0xff]
        %v1335 = vld [vmem:[%s313 + $0xec0] sm:$0xf]
        %v1336 = vld [vmem:[%s313 + $0xec4] sm:$0xff]
        %v1337 = vld [vmem:[%s313 + $0xecc] sm:$0xff]
        %v1338 = vld [vmem:[%s313 + $0xed4] sm:$0xff]
        %v1339 = vld [vmem:[%s313 + $0xedc] sm:$0xff]
        %v1340 = vld [vmem:[%s313 + $0xee4] sm:$0xff]
        %v1341 = vld [vmem:[%s313 + $0xeec] sm:$0xff]
        %v1342 = vld [vmem:[%s313 + $0xef4] sm:$0xff]
        %v1343 = vld [vmem:[%s313 + $0xefc] sm:$0xf]
        %v1376 = vunpack.c.l.b16 %v316
        %v1377 = vunpack.c.h.b16 %v316
        %v1378 = vunpack.c.l.b16 %v317
        %v1379 = vunpack.c.h.b16 %v317
        %v1380 = vunpack.c.l.b16 %v318
        %v1381 = vunpack.c.h.b16 %v318
        %v1382 = vunpack.c.l.b16 %v319
        %v1383 = vunpack.c.h.b16 %v319
        %v1384 = vunpack.c.l.b16 %v320
        %v1385 = vunpack.c.h.b16 %v320
        %v1386 = vunpack.c.l.b16 %v321
        %v1387 = vunpack.c.h.b16 %v321
        %v1388 = vunpack.c.l.b16 %v322
        %v1389 = vunpack.c.h.b16 %v322
        %v1390 = vunpack.c.l.b16 %v323
        %v1391 = vunpack.c.h.b16 %v323
        %v1392 = vunpack.c.l.b16 %v324
        %v1393 = vunpack.c.h.b16 %v324
        %v1394 = vunpack.c.l.b16 %v325
        %v1395 = vunpack.c.h.b16 %v325
        %v1396 = vunpack.c.l.b16 %v326
        %v1397 = vunpack.c.h.b16 %v326
        %v1398 = vunpack.c.l.b16 %v327
        %v1399 = vunpack.c.h.b16 %v327
        %v1400 = vunpack.c.l.b16 %v328
        %v1401 = vunpack.c.h.b16 %v328
        %v1402 = vunpack.c.l.b16 %v329
        %v1403 = vunpack.c.h.b16 %v329
        %v1404 = vunpack.c.l.b16 %v330
        %v1405 = vunpack.c.h.b16 %v330
        %v1406 = vunpack.c.l.b16 %v331
        %v1407 = vunpack.c.h.b16 %v331
        %v1408 = vunpack.c.l.b16 %v332
        %v1409 = vunpack.c.h.b16 %v332
        %v1410 = vunpack.c.l.b16 %v333
        %v1411 = vunpack.c.h.b16 %v333
        %v1412 = vunpack.c.l.b16 %v334
        %v1413 = vunpack.c.h.b16 %v334
        %v1414 = vunpack.c.l.b16 %v335
        %v1415 = vunpack.c.h.b16 %v335
        %v1416 = vunpack.c.l.b16 %v336
        %v1417 = vunpack.c.h.b16 %v336
        %v1418 = vunpack.c.l.b16 %v337
        %v1419 = vunpack.c.h.b16 %v337
        %v1420 = vunpack.c.l.b16 %v338
        %v1421 = vunpack.c.h.b16 %v338
        %v1422 = vunpack.c.l.b16 %v339
        %v1423 = vunpack.c.h.b16 %v339
        %v1424 = vunpack.c.l.b16 %v340
        %v1425 = vunpack.c.h.b16 %v340
        %v1426 = vunpack.c.l.b16 %v341
        %v1427 = vunpack.c.h.b16 %v341
        %v1428 = vunpack.c.l.b16 %v342
        %v1429 = vunpack.c.h.b16 %v342
        %v1430 = vunpack.c.l.b16 %v343
        %v1431 = vunpack.c.h.b16 %v343
        %v1432 = vunpack.c.l.b16 %v344
        %v1433 = vunpack.c.h.b16 %v344
        %v1434 = vunpack.c.l.b16 %v345
        %v1435 = vunpack.c.h.b16 %v345
        %v1436 = vunpack.c.l.b16 %v346
        %v1437 = vunpack.c.h.b16 %v346
        %v1438 = vunpack.c.l.b16 %v347
        %v1439 = vunpack.c.h.b16 %v347
        %v1440 = vpack.c.b16 %v1380, %v1376
        %v1441 = vpack.c.b16 %v1381, %v1377
        %v1442 = vpack.c.b16 %v1382, %v1378
        %v1443 = vpack.c.b16 %v1383, %v1379
        %v1444 = vpack.c.b16 %v1388, %v1384
        %v1445 = vpack.c.b16 %v1389, %v1385
        %v1446 = vpack.c.b16 %v1390, %v1386
        %v1447 = vpack.c.b16 %v1391, %v1387
        %v1448 = vpack.c.b16 %v1396, %v1392
        %v1449 = vpack.c.b16 %v1397, %v1393
        %v1450 = vpack.c.b16 %v1398, %v1394
        %v1451 = vpack.c.b16 %v1399, %v1395
        %v1452 = vpack.c.b16 %v1404, %v1400
        %v1453 = vpack.c.b16 %v1405, %v1401
        %v1454 = vpack.c.b16 %v1406, %v1402
        %v1455 = vpack.c.b16 %v1407, %v1403
        %v1456 = vpack.c.b16 %v1412, %v1408
        %v1457 = vpack.c.b16 %v1413, %v1409
        %v1458 = vpack.c.b16 %v1414, %v1410
        %v1459 = vpack.c.b16 %v1415, %v1411
        %v1460 = vpack.c.b16 %v1420, %v1416
        %v1461 = vpack.c.b16 %v1421, %v1417
        %v1462 = vpack.c.b16 %v1422, %v1418
        %v1463 = vpack.c.b16 %v1423, %v1419
        %v1464 = vpack.c.b16 %v1428, %v1424
        %v1465 = vpack.c.b16 %v1429, %v1425
        %v1466 = vpack.c.b16 %v1430, %v1426
        %v1467 = vpack.c.b16 %v1431, %v1427
        %v1468 = vpack.c.b16 %v1436, %v1432
        %v1469 = vpack.c.b16 %v1437, %v1433
        %v1470 = vpack.c.b16 %v1438, %v1434
        %v1471 = vpack.c.b16 %v1439, %v1435
        %v2016 = vunpack.c.l.b16 %v832
        %v2017 = vunpack.c.h.b16 %v832
        %v2018 = vunpack.c.l.b16 %v833
        %v2019 = vunpack.c.h.b16 %v833
        %v2020 = vunpack.c.l.b16 %v834
        %v2021 = vunpack.c.h.b16 %v834
        %v2022 = vunpack.c.l.b16 %v835
        %v2023 = vunpack.c.h.b16 %v835
        %v2024 = vunpack.c.l.b16 %v836
        %v2025 = vunpack.c.h.b16 %v836
        %v2026 = vunpack.c.l.b16 %v837
        %v2027 = vunpack.c.h.b16 %v837
        %v2028 = vunpack.c.l.b16 %v838
        %v2029 = vunpack.c.h.b16 %v838
        %v2030 = vunpack.c.l.b16 %v839
        %v2031 = vunpack.c.l.b16 %v840
        %v2032 = vunpack.c.h.b16 %v840
        %v2033 = vunpack.c.l.b16 %v841
        %v2034 = vunpack.c.h.b16 %v841
        %v2035 = vunpack.c.l.b16 %v842
        %v2036 = vunpack.c.h.b16 %v842
        %v2037 = vunpack.c.l.b16 %v843
        %v2038 = vunpack.c.h.b16 %v843
        %v2039 = vunpack.c.l.b16 %v844
        %v2040 = vunpack.c.h.b16 %v844
        %v2041 = vunpack.c.l.b16 %v845
        %v2042 = vunpack.c.h.b16 %v845
        %v2043 = vunpack.c.l.b16 %v846
        %v2044 = vunpack.c.h.b16 %v846
        %v2045 = vunpack.c.l.b16 %v847
        %v2046 = vunpack.c.l.b16 %v848
        %v2047 = vunpack.c.h.b16 %v848
        %v2048 = vunpack.c.l.b16 %v849
        %v2049 = vunpack.c.h.b16 %v849
        %v2050 = vunpack.c.l.b16 %v850
        %v2051 = vunpack.c.h.b16 %v850
        %v2052 = vunpack.c.l.b16 %v851
        %v2053 = vunpack.c.h.b16 %v851
        %v2054 = vunpack.c.l.b16 %v852
        %v2055 = vunpack.c.h.b16 %v852
        %v2056 = vunpack.c.l.b16 %v853
        %v2057 = vunpack.c.h.b16 %v853
        %v2058 = vunpack.c.l.b16 %v854
        %v2059 = vunpack.c.h.b16 %v854
        %v2060 = vunpack.c.l.b16 %v855
        %v2061 = vunpack.c.l.b16 %v856
        %v2062 = vunpack.c.h.b16 %v856
        %v2063 = vunpack.c.l.b16 %v857
        %v2064 = vunpack.c.h.b16 %v857
        %v2065 = vunpack.c.l.b16 %v858
        %v2066 = vunpack.c.h.b16 %v858
        %v2067 = vunpack.c.l.b16 %v859
        %v2068 = vunpack.c.h.b16 %v859
        %v2069 = vunpack.c.l.b16 %v860
        %v2070 = vunpack.c.h.b16 %v860
        %v2071 = vunpack.c.l.b16 %v861
        %v2072 = vunpack.c.h.b16 %v861
        %v2073 = vunpack.c.l.b16 %v862
        %v2074 = vunpack.c.h.b16 %v862
        %v2075 = vunpack.c.l.b16 %v863
        %v2076 = vunpack.c.l.b16 %v864
        %v2077 = vunpack.c.h.b16 %v864
        %v2078 = vunpack.c.l.b16 %v865
        %v2079 = vunpack.c.h.b16 %v865
        %v2080 = vunpack.c.l.b16 %v866
        %v2081 = vunpack.c.h.b16 %v866
        %v2082 = vunpack.c.l.b16 %v867
        %v2083 = vunpack.c.h.b16 %v867
        %v2084 = vunpack.c.l.b16 %v868
        %v2085 = vunpack.c.h.b16 %v868
        %v2086 = vunpack.c.l.b16 %v869
        %v2087 = vunpack.c.h.b16 %v869
        %v2088 = vunpack.c.l.b16 %v870
        %v2089 = vunpack.c.h.b16 %v870
        %v2090 = vunpack.c.l.b16 %v871
        %v2091 = vunpack.c.l.b16 %v872
        %v2092 = vunpack.c.h.b16 %v872
        %v2093 = vunpack.c.l.b16 %v873
        %v2094 = vunpack.c.h.b16 %v873
        %v2095 = vunpack.c.l.b16 %v874
        %v2096 = vunpack.c.h.b16 %v874
        %v2097 = vunpack.c.l.b16 %v875
        %v2098 = vunpack.c.h.b16 %v875
        %v2099 = vunpack.c.l.b16 %v876
        %v2100 = vunpack.c.h.b16 %v876
        %v2101 = vunpack.c.l.b16 %v877
        %v2102 = vunpack.c.h.b16 %v877
        %v2103 = vunpack.c.l.b16 %v878
        %v2104 = vunpack.c.h.b16 %v878
        %v2105 = vunpack.c.l.b16 %v879
        %v2106 = vunpack.c.l.b16 %v880
        %v2107 = vunpack.c.h.b16 %v880
        %v2108 = vunpack.c.l.b16 %v881
        %v2109 = vunpack.c.h.b16 %v881
        %v2110 = vunpack.c.l.b16 %v882
        %v2111 = vunpack.c.h.b16 %v882
        %v2112 = vunpack.c.l.b16 %v883
        %v2113 = vunpack.c.h.b16 %v883
        %v2114 = vunpack.c.l.b16 %v884
        %v2115 = vunpack.c.h.b16 %v884
        %v2116 = vunpack.c.l.b16 %v885
        %v2117 = vunpack.c.h.b16 %v885
        %v2118 = vunpack.c.l.b16 %v886
        %v2119 = vunpack.c.h.b16 %v886
        %v2120 = vunpack.c.l.b16 %v887
        %v2121 = vunpack.c.l.b16 %v888
        %v2122 = vunpack.c.h.b16 %v888
        %v2123 = vunpack.c.l.b16 %v889
        %v2124 = vunpack.c.h.b16 %v889
        %v2125 = vunpack.c.l.b16 %v890
        %v2126 = vunpack.c.h.b16 %v890
        %v2127 = vunpack.c.l.b16 %v891
        %v2128 = vunpack.c.h.b16 %v891
        %v2129 = vunpack.c.l.b16 %v892
        %v2130 = vunpack.c.h.b16 %v892
        %v2131 = vunpack.c.l.b16 %v893
        %v2132 = vunpack.c.h.b16 %v893
        %v2133 = vunpack.c.l.b16 %v894
        %v2134 = vunpack.c.h.b16 %v894
        %v2135 = vunpack.c.l.b16 %v895
        %v2136 = vunpack.c.l.b16 %v896
        %v2137 = vunpack.c.h.b16 %v896
        %v2138 = vunpack.c.l.b16 %v897
        %v2139 = vunpack.c.h.b16 %v897
        %v2140 = vunpack.c.l.b16 %v898
        %v2141 = vunpack.c.h.b16 %v898
        %v2142 = vunpack.c.l.b16 %v899
        %v2143 = vunpack.c.h.b16 %v899
        %v2144 = vunpack.c.l.b16 %v900
        %v2145 = vunpack.c.h.b16 %v900
        %v2146 = vunpack.c.l.b16 %v901
        %v2147 = vunpack.c.h.b16 %v901
        %v2148 = vunpack.c.l.b16 %v902
        %v2149 = vunpack.c.h.b16 %v902
        %v2150 = vunpack.c.l.b16 %v903
        %v2151 = vunpack.c.l.b16 %v904
        %v2152 = vunpack.c.h.b16 %v904
        %v2153 = vunpack.c.l.b16 %v905
        %v2154 = vunpack.c.h.b16 %v905
        %v2155 = vunpack.c.l.b16 %v906
        %v2156 = vunpack.c.h.b16 %v906
        %v2157 = vunpack.c.l.b16 %v907
        %v2158 = vunpack.c.h.b16 %v907
        %v2159 = vunpack.c.l.b16 %v908
        %v2160 = vunpack.c.h.b16 %v908
        %v2161 = vunpack.c.l.b16 %v909
        %v2162 = vunpack.c.h.b16 %v909
        %v2163 = vunpack.c.l.b16 %v910
        %v2164 = vunpack.c.h.b16 %v910
        %v2165 = vunpack.c.l.b16 %v911
        %v2166 = vunpack.c.l.b16 %v912
        %v2167 = vunpack.c.h.b16 %v912
        %v2168 = vunpack.c.l.b16 %v913
        %v2169 = vunpack.c.h.b16 %v913
        %v2170 = vunpack.c.l.b16 %v914
        %v2171 = vunpack.c.h.b16 %v914
        %v2172 = vunpack.c.l.b16 %v915
        %v2173 = vunpack.c.h.b16 %v915
        %v2174 = vunpack.c.l.b16 %v916
        %v2175 = vunpack.c.h.b16 %v916
        %v2176 = vunpack.c.l.b16 %v917
        %v2177 = vunpack.c.h.b16 %v917
        %v2178 = vunpack.c.l.b16 %v918
        %v2179 = vunpack.c.h.b16 %v918
        %v2180 = vunpack.c.l.b16 %v919
        %v2181 = vunpack.c.l.b16 %v920
        %v2182 = vunpack.c.h.b16 %v920
        %v2183 = vunpack.c.l.b16 %v921
        %v2184 = vunpack.c.h.b16 %v921
        %v2185 = vunpack.c.l.b16 %v922
        %v2186 = vunpack.c.h.b16 %v922
        %v2187 = vunpack.c.l.b16 %v923
        %v2188 = vunpack.c.h.b16 %v923
        %v2189 = vunpack.c.l.b16 %v924
        %v2190 = vunpack.c.h.b16 %v924
        %v2191 = vunpack.c.l.b16 %v925
        %v2192 = vunpack.c.h.b16 %v925
        %v2193 = vunpack.c.l.b16 %v926
        %v2194 = vunpack.c.h.b16 %v926
        %v2195 = vunpack.c.l.b16 %v927
        %v2196 = vunpack.c.l.b16 %v928
        %v2197 = vunpack.c.h.b16 %v928
        %v2198 = vunpack.c.l.b16 %v929
        %v2199 = vunpack.c.h.b16 %v929
        %v2200 = vunpack.c.l.b16 %v930
        %v2201 = vunpack.c.h.b16 %v930
        %v2202 = vunpack.c.l.b16 %v931
        %v2203 = vunpack.c.h.b16 %v931
        %v2204 = vunpack.c.l.b16 %v932
        %v2205 = vunpack.c.h.b16 %v932
        %v2206 = vunpack.c.l.b16 %v933
        %v2207 = vunpack.c.h.b16 %v933
        %v2208 = vunpack.c.l.b16 %v934
        %v2209 = vunpack.c.h.b16 %v934
        %v2210 = vunpack.c.l.b16 %v935
        %v2211 = vunpack.c.l.b16 %v936
        %v2212 = vunpack.c.h.b16 %v936
        %v2213 = vunpack.c.l.b16 %v937
        %v2214 = vunpack.c.h.b16 %v937
        %v2215 = vunpack.c.l.b16 %v938
        %v2216 = vunpack.c.h.b16 %v938
        %v2217 = vunpack.c.l.b16 %v939
        %v2218 = vunpack.c.h.b16 %v939
        %v2219 = vunpack.c.l.b16 %v940
        %v2220 = vunpack.c.h.b16 %v940
        %v2221 = vunpack.c.l.b16 %v941
        %v2222 = vunpack.c.h.b16 %v941
        %v2223 = vunpack.c.l.b16 %v942
        %v2224 = vunpack.c.h.b16 %v942
        %v2225 = vunpack.c.l.b16 %v943
        %v2226 = vunpack.c.l.b16 %v944
        %v2227 = vunpack.c.h.b16 %v944
        %v2228 = vunpack.c.l.b16 %v945
        %v2229 = vunpack.c.h.b16 %v945
        %v2230 = vunpack.c.l.b16 %v946
        %v2231 = vunpack.c.h.b16 %v946
        %v2232 = vunpack.c.l.b16 %v947
        %v2233 = vunpack.c.h.b16 %v947
        %v2234 = vunpack.c.l.b16 %v948
        %v2235 = vunpack.c.h.b16 %v948
        %v2236 = vunpack.c.l.b16 %v949
        %v2237 = vunpack.c.h.b16 %v949
        %v2238 = vunpack.c.l.b16 %v950
        %v2239 = vunpack.c.h.b16 %v950
        %v2240 = vunpack.c.l.b16 %v951
        %v2241 = vunpack.c.l.b16 %v952
        %v2242 = vunpack.c.h.b16 %v952
        %v2243 = vunpack.c.l.b16 %v953
        %v2244 = vunpack.c.h.b16 %v953
        %v2245 = vunpack.c.l.b16 %v954
        %v2246 = vunpack.c.h.b16 %v954
        %v2247 = vunpack.c.l.b16 %v955
        %v2248 = vunpack.c.h.b16 %v955
        %v2249 = vunpack.c.l.b16 %v956
        %v2250 = vunpack.c.h.b16 %v956
        %v2251 = vunpack.c.l.b16 %v957
        %v2252 = vunpack.c.h.b16 %v957
        %v2253 = vunpack.c.l.b16 %v958
        %v2254 = vunpack.c.h.b16 %v958
        %v2255 = vunpack.c.l.b16 %v959
        %v2256 = vunpack.c.l.b16 %v960
        %v2257 = vunpack.c.h.b16 %v960
        %v2258 = vunpack.c.l.b16 %v961
        %v2259 = vunpack.c.h.b16 %v961
        %v2260 = vunpack.c.l.b16 %v962
        %v2261 = vunpack.c.h.b16 %v962
        %v2262 = vunpack.c.l.b16 %v963
        %v2263 = vunpack.c.h.b16 %v963
        %v2264 = vunpack.c.l.b16 %v964
        %v2265 = vunpack.c.h.b16 %v964
        %v2266 = vunpack.c.l.b16 %v965
        %v2267 = vunpack.c.h.b16 %v965
        %v2268 = vunpack.c.l.b16 %v966
        %v2269 = vunpack.c.h.b16 %v966
        %v2270 = vunpack.c.l.b16 %v967
        %v2271 = vunpack.c.l.b16 %v968
        %v2272 = vunpack.c.h.b16 %v968
        %v2273 = vunpack.c.l.b16 %v969
        %v2274 = vunpack.c.h.b16 %v969
        %v2275 = vunpack.c.l.b16 %v970
        %v2276 = vunpack.c.h.b16 %v970
        %v2277 = vunpack.c.l.b16 %v971
        %v2278 = vunpack.c.h.b16 %v971
        %v2279 = vunpack.c.l.b16 %v972
        %v2280 = vunpack.c.h.b16 %v972
        %v2281 = vunpack.c.l.b16 %v973
        %v2282 = vunpack.c.h.b16 %v973
        %v2283 = vunpack.c.l.b16 %v974
        %v2284 = vunpack.c.h.b16 %v974
        %v2285 = vunpack.c.l.b16 %v975
        %v2286 = vunpack.c.l.b16 %v976
        %v2287 = vunpack.c.h.b16 %v976
        %v2288 = vunpack.c.l.b16 %v977
        %v2289 = vunpack.c.h.b16 %v977
        %v2290 = vunpack.c.l.b16 %v978
        %v2291 = vunpack.c.h.b16 %v978
        %v2292 = vunpack.c.l.b16 %v979
        %v2293 = vunpack.c.h.b16 %v979
        %v2294 = vunpack.c.l.b16 %v980
        %v2295 = vunpack.c.h.b16 %v980
        %v2296 = vunpack.c.l.b16 %v981
        %v2297 = vunpack.c.h.b16 %v981
        %v2298 = vunpack.c.l.b16 %v982
        %v2299 = vunpack.c.h.b16 %v982
        %v2300 = vunpack.c.l.b16 %v983
        %v2301 = vunpack.c.l.b16 %v984
        %v2302 = vunpack.c.h.b16 %v984
        %v2303 = vunpack.c.l.b16 %v985
        %v2304 = vunpack.c.h.b16 %v985
        %v2305 = vunpack.c.l.b16 %v986
        %v2306 = vunpack.c.h.b16 %v986
        %v2307 = vunpack.c.l.b16 %v987
        %v2308 = vunpack.c.h.b16 %v987
        %v2309 = vunpack.c.l.b16 %v988
        %v2310 = vunpack.c.h.b16 %v988
        %v2311 = vunpack.c.l.b16 %v989
        %v2312 = vunpack.c.h.b16 %v989
        %v2313 = vunpack.c.l.b16 %v990
        %v2314 = vunpack.c.h.b16 %v990
        %v2315 = vunpack.c.l.b16 %v991
        %v2316 = vunpack.c.l.b16 %v992
        %v2317 = vunpack.c.h.b16 %v992
        %v2318 = vunpack.c.l.b16 %v993
        %v2319 = vunpack.c.h.b16 %v993
        %v2320 = vunpack.c.l.b16 %v994
        %v2321 = vunpack.c.h.b16 %v994
        %v2322 = vunpack.c.l.b16 %v995
        %v2323 = vunpack.c.h.b16 %v995
        %v2324 = vunpack.c.l.b16 %v996
        %v2325 = vunpack.c.h.b16 %v996
        %v2326 = vunpack.c.l.b16 %v997
        %v2327 = vunpack.c.h.b16 %v997
        %v2328 = vunpack.c.l.b16 %v998
        %v2329 = vunpack.c.h.b16 %v998
        %v2330 = vunpack.c.l.b16 %v999
        %v2331 = vunpack.c.l.b16 %v1000
        %v2332 = vunpack.c.h.b16 %v1000
        %v2333 = vunpack.c.l.b16 %v1001
        %v2334 = vunpack.c.h.b16 %v1001
        %v2335 = vunpack.c.l.b16 %v1002
        %v2336 = vunpack.c.h.b16 %v1002
        %v2337 = vunpack.c.l.b16 %v1003
        %v2338 = vunpack.c.h.b16 %v1003
        %v2339 = vunpack.c.l.b16 %v1004
        %v2340 = vunpack.c.h.b16 %v1004
        %v2341 = vunpack.c.l.b16 %v1005
        %v2342 = vunpack.c.h.b16 %v1005
        %v2343 = vunpack.c.l.b16 %v1006
        %v2344 = vunpack.c.h.b16 %v1006
        %v2345 = vunpack.c.l.b16 %v1007
        %v2346 = vunpack.c.l.b16 %v1008
        %v2347 = vunpack.c.h.b16 %v1008
        %v2348 = vunpack.c.l.b16 %v1009
        %v2349 = vunpack.c.h.b16 %v1009
        %v2350 = vunpack.c.l.b16 %v1010
        %v2351 = vunpack.c.h.b16 %v1010
        %v2352 = vunpack.c.l.b16 %v1011
        %v2353 = vunpack.c.h.b16 %v1011
        %v2354 = vunpack.c.l.b16 %v1012
        %v2355 = vunpack.c.h.b16 %v1012
        %v2356 = vunpack.c.l.b16 %v1013
        %v2357 = vunpack.c.h.b16 %v1013
        %v2358 = vunpack.c.l.b16 %v1014
        %v2359 = vunpack.c.h.b16 %v1014
        %v2360 = vunpack.c.l.b16 %v1015
        %v2361 = vunpack.c.l.b16 %v1016
        %v2362 = vunpack.c.h.b16 %v1016
        %v2363 = vunpack.c.l.b16 %v1017
        %v2364 = vunpack.c.h.b16 %v1017
        %v2365 = vunpack.c.l.b16 %v1018
        %v2366 = vunpack.c.h.b16 %v1018
        %v2367 = vunpack.c.l.b16 %v1019
        %v2368 = vunpack.c.h.b16 %v1019
        %v2369 = vunpack.c.l.b16 %v1020
        %v2370 = vunpack.c.h.b16 %v1020
        %v2371 = vunpack.c.l.b16 %v1021
        %v2372 = vunpack.c.h.b16 %v1021
        %v2373 = vunpack.c.l.b16 %v1022
        %v2374 = vunpack.c.h.b16 %v1022
        %v2375 = vunpack.c.l.b16 %v1023
        %v2376 = vunpack.c.l.b16 %v1024
        %v2377 = vunpack.c.h.b16 %v1024
        %v2378 = vunpack.c.l.b16 %v1025
        %v2379 = vunpack.c.h.b16 %v1025
        %v2380 = vunpack.c.l.b16 %v1026
        %v2381 = vunpack.c.h.b16 %v1026
        %v2382 = vunpack.c.l.b16 %v1027
        %v2383 = vunpack.c.h.b16 %v1027
        %v2384 = vunpack.c.l.b16 %v1028
        %v2385 = vunpack.c.h.b16 %v1028
        %v2386 = vunpack.c.l.b16 %v1029
        %v2387 = vunpack.c.h.b16 %v1029
        %v2388 = vunpack.c.l.b16 %v1030
        %v2389 = vunpack.c.h.b16 %v1030
        %v2390 = vunpack.c.l.b16 %v1031
        %v2391 = vunpack.c.l.b16 %v1032
        %v2392 = vunpack.c.h.b16 %v1032
        %v2393 = vunpack.c.l.b16 %v1033
        %v2394 = vunpack.c.h.b16 %v1033
        %v2395 = vunpack.c.l.b16 %v1034
        %v2396 = vunpack.c.h.b16 %v1034
        %v2397 = vunpack.c.l.b16 %v1035
        %v2398 = vunpack.c.h.b16 %v1035
        %v2399 = vunpack.c.l.b16 %v1036
        %v2400 = vunpack.c.h.b16 %v1036
        %v2401 = vunpack.c.l.b16 %v1037
        %v2402 = vunpack.c.h.b16 %v1037
        %v2403 = vunpack.c.l.b16 %v1038
        %v2404 = vunpack.c.h.b16 %v1038
        %v2405 = vunpack.c.l.b16 %v1039
        %v2406 = vunpack.c.l.b16 %v1040
        %v2407 = vunpack.c.h.b16 %v1040
        %v2408 = vunpack.c.l.b16 %v1041
        %v2409 = vunpack.c.h.b16 %v1041
        %v2410 = vunpack.c.l.b16 %v1042
        %v2411 = vunpack.c.h.b16 %v1042
        %v2412 = vunpack.c.l.b16 %v1043
        %v2413 = vunpack.c.h.b16 %v1043
        %v2414 = vunpack.c.l.b16 %v1044
        %v2415 = vunpack.c.h.b16 %v1044
        %v2416 = vunpack.c.l.b16 %v1045
        %v2417 = vunpack.c.h.b16 %v1045
        %v2418 = vunpack.c.l.b16 %v1046
        %v2419 = vunpack.c.h.b16 %v1046
        %v2420 = vunpack.c.l.b16 %v1047
        %v2421 = vunpack.c.l.b16 %v1048
        %v2422 = vunpack.c.h.b16 %v1048
        %v2423 = vunpack.c.l.b16 %v1049
        %v2424 = vunpack.c.h.b16 %v1049
        %v2425 = vunpack.c.l.b16 %v1050
        %v2426 = vunpack.c.h.b16 %v1050
        %v2427 = vunpack.c.l.b16 %v1051
        %v2428 = vunpack.c.h.b16 %v1051
        %v2429 = vunpack.c.l.b16 %v1052
        %v2430 = vunpack.c.h.b16 %v1052
        %v2431 = vunpack.c.l.b16 %v1053
        %v2432 = vunpack.c.h.b16 %v1053
        %v2433 = vunpack.c.l.b16 %v1054
        %v2434 = vunpack.c.h.b16 %v1054
        %v2435 = vunpack.c.l.b16 %v1055
        %v2436 = vunpack.c.l.b16 %v1056
        %v2437 = vunpack.c.h.b16 %v1056
        %v2438 = vunpack.c.l.b16 %v1057
        %v2439 = vunpack.c.h.b16 %v1057
        %v2440 = vunpack.c.l.b16 %v1058
        %v2441 = vunpack.c.h.b16 %v1058
        %v2442 = vunpack.c.l.b16 %v1059
        %v2443 = vunpack.c.h.b16 %v1059
        %v2444 = vunpack.c.l.b16 %v1060
        %v2445 = vunpack.c.h.b16 %v1060
        %v2446 = vunpack.c.l.b16 %v1061
        %v2447 = vunpack.c.h.b16 %v1061
        %v2448 = vunpack.c.l.b16 %v1062
        %v2449 = vunpack.c.h.b16 %v1062
        %v2450 = vunpack.c.l.b16 %v1063
        %v2451 = vunpack.c.l.b16 %v1064
        %v2452 = vunpack.c.h.b16 %v1064
        %v2453 = vunpack.c.l.b16 %v1065
        %v2454 = vunpack.c.h.b16 %v1065
        %v2455 = vunpack.c.l.b16 %v1066
        %v2456 = vunpack.c.h.b16 %v1066
        %v2457 = vunpack.c.l.b16 %v1067
        %v2458 = vunpack.c.h.b16 %v1067
        %v2459 = vunpack.c.l.b16 %v1068
        %v2460 = vunpack.c.h.b16 %v1068
        %v2461 = vunpack.c.l.b16 %v1069
        %v2462 = vunpack.c.h.b16 %v1069
        %v2463 = vunpack.c.l.b16 %v1070
        %v2464 = vunpack.c.h.b16 %v1070
        %v2465 = vunpack.c.l.b16 %v1071
        %v2466 = vunpack.c.l.b16 %v1072
        %v2467 = vunpack.c.h.b16 %v1072
        %v2468 = vunpack.c.l.b16 %v1073
        %v2469 = vunpack.c.h.b16 %v1073
        %v2470 = vunpack.c.l.b16 %v1074
        %v2471 = vunpack.c.h.b16 %v1074
        %v2472 = vunpack.c.l.b16 %v1075
        %v2473 = vunpack.c.h.b16 %v1075
        %v2474 = vunpack.c.l.b16 %v1076
        %v2475 = vunpack.c.h.b16 %v1076
        %v2476 = vunpack.c.l.b16 %v1077
        %v2477 = vunpack.c.h.b16 %v1077
        %v2478 = vunpack.c.l.b16 %v1078
        %v2479 = vunpack.c.h.b16 %v1078
        %v2480 = vunpack.c.l.b16 %v1079
        %v2481 = vunpack.c.l.b16 %v1080
        %v2482 = vunpack.c.h.b16 %v1080
        %v2483 = vunpack.c.l.b16 %v1081
        %v2484 = vunpack.c.h.b16 %v1081
        %v2485 = vunpack.c.l.b16 %v1082
        %v2486 = vunpack.c.h.b16 %v1082
        %v2487 = vunpack.c.l.b16 %v1083
        %v2488 = vunpack.c.h.b16 %v1083
        %v2489 = vunpack.c.l.b16 %v1084
        %v2490 = vunpack.c.h.b16 %v1084
        %v2491 = vunpack.c.l.b16 %v1085
        %v2492 = vunpack.c.h.b16 %v1085
        %v2493 = vunpack.c.l.b16 %v1086
        %v2494 = vunpack.c.h.b16 %v1086
        %v2495 = vunpack.c.l.b16 %v1087
        %v2496 = vunpack.c.l.b16 %v1088
        %v2497 = vunpack.c.h.b16 %v1088
        %v2498 = vunpack.c.l.b16 %v1089
        %v2499 = vunpack.c.h.b16 %v1089
        %v2500 = vunpack.c.l.b16 %v1090
        %v2501 = vunpack.c.h.b16 %v1090
        %v2502 = vunpack.c.l.b16 %v1091
        %v2503 = vunpack.c.h.b16 %v1091
        %v2504 = vunpack.c.l.b16 %v1092
        %v2505 = vunpack.c.h.b16 %v1092
        %v2506 = vunpack.c.l.b16 %v1093
        %v2507 = vunpack.c.h.b16 %v1093
        %v2508 = vunpack.c.l.b16 %v1094
        %v2509 = vunpack.c.h.b16 %v1094
        %v2510 = vunpack.c.l.b16 %v1095
        %v2511 = vunpack.c.l.b16 %v1096
        %v2512 = vunpack.c.h.b16 %v1096
        %v2513 = vunpack.c.l.b16 %v1097
        %v2514 = vunpack.c.h.b16 %v1097
        %v2515 = vunpack.c.l.b16 %v1098
        %v2516 = vunpack.c.h.b16 %v1098
        %v2517 = vunpack.c.l.b16 %v1099
        %v2518 = vunpack.c.h.b16 %v1099
        %v2519 = vunpack.c.l.b16 %v1100
        %v2520 = vunpack.c.h.b16 %v1100
        %v2521 = vunpack.c.l.b16 %v1101
        %v2522 = vunpack.c.h.b16 %v1101
        %v2523 = vunpack.c.l.b16 %v1102
        %v2524 = vunpack.c.h.b16 %v1102
        %v2525 = vunpack.c.l.b16 %v1103
        %v2526 = vunpack.c.l.b16 %v1104
        %v2527 = vunpack.c.h.b16 %v1104
        %v2528 = vunpack.c.l.b16 %v1105
        %v2529 = vunpack.c.h.b16 %v1105
        %v2530 = vunpack.c.l.b16 %v1106
        %v2531 = vunpack.c.h.b16 %v1106
        %v2532 = vunpack.c.l.b16 %v1107
        %v2533 = vunpack.c.h.b16 %v1107
        %v2534 = vunpack.c.l.b16 %v1108
        %v2535 = vunpack.c.h.b16 %v1108
        %v2536 = vunpack.c.l.b16 %v1109
        %v2537 = vunpack.c.h.b16 %v1109
        %v2538 = vunpack.c.l.b16 %v1110
        %v2539 = vunpack.c.h.b16 %v1110
        %v2540 = vunpack.c.l.b16 %v1111
        %v2541 = vunpack.c.l.b16 %v1112
        %v2542 = vunpack.c.h.b16 %v1112
        %v2543 = vunpack.c.l.b16 %v1113
        %v2544 = vunpack.c.h.b16 %v1113
        %v2545 = vunpack.c.l.b16 %v1114
        %v2546 = vunpack.c.h.b16 %v1114
        %v2547 = vunpack.c.l.b16 %v1115
        %v2548 = vunpack.c.h.b16 %v1115
        %v2549 = vunpack.c.l.b16 %v1116
        %v2550 = vunpack.c.h.b16 %v1116
        %v2551 = vunpack.c.l.b16 %v1117
        %v2552 = vunpack.c.h.b16 %v1117
        %v2553 = vunpack.c.l.b16 %v1118
        %v2554 = vunpack.c.h.b16 %v1118
        %v2555 = vunpack.c.l.b16 %v1119
        %v2556 = vunpack.c.l.b16 %v1120
        %v2557 = vunpack.c.h.b16 %v1120
        %v2558 = vunpack.c.l.b16 %v1121
        %v2559 = vunpack.c.h.b16 %v1121
        %v2560 = vunpack.c.l.b16 %v1122
        %v2561 = vunpack.c.h.b16 %v1122
        %v2562 = vunpack.c.l.b16 %v1123
        %v2563 = vunpack.c.h.b16 %v1123
        %v2564 = vunpack.c.l.b16 %v1124
        %v2565 = vunpack.c.h.b16 %v1124
        %v2566 = vunpack.c.l.b16 %v1125
        %v2567 = vunpack.c.h.b16 %v1125
        %v2568 = vunpack.c.l.b16 %v1126
        %v2569 = vunpack.c.h.b16 %v1126
        %v2570 = vunpack.c.l.b16 %v1127
        %v2571 = vunpack.c.l.b16 %v1128
        %v2572 = vunpack.c.h.b16 %v1128
        %v2573 = vunpack.c.l.b16 %v1129
        %v2574 = vunpack.c.h.b16 %v1129
        %v2575 = vunpack.c.l.b16 %v1130
        %v2576 = vunpack.c.h.b16 %v1130
        %v2577 = vunpack.c.l.b16 %v1131
        %v2578 = vunpack.c.h.b16 %v1131
        %v2579 = vunpack.c.l.b16 %v1132
        %v2580 = vunpack.c.h.b16 %v1132
        %v2581 = vunpack.c.l.b16 %v1133
        %v2582 = vunpack.c.h.b16 %v1133
        %v2583 = vunpack.c.l.b16 %v1134
        %v2584 = vunpack.c.h.b16 %v1134
        %v2585 = vunpack.c.l.b16 %v1135
        %v2586 = vunpack.c.l.b16 %v1136
        %v2587 = vunpack.c.h.b16 %v1136
        %v2588 = vunpack.c.l.b16 %v1137
        %v2589 = vunpack.c.h.b16 %v1137
        %v2590 = vunpack.c.l.b16 %v1138
        %v2591 = vunpack.c.h.b16 %v1138
        %v2592 = vunpack.c.l.b16 %v1139
        %v2593 = vunpack.c.h.b16 %v1139
        %v2594 = vunpack.c.l.b16 %v1140
        %v2595 = vunpack.c.h.b16 %v1140
        %v2596 = vunpack.c.l.b16 %v1141
        %v2597 = vunpack.c.h.b16 %v1141
        %v2598 = vunpack.c.l.b16 %v1142
        %v2599 = vunpack.c.h.b16 %v1142
        %v2600 = vunpack.c.l.b16 %v1143
        %v2601 = vunpack.c.l.b16 %v1144
        %v2602 = vunpack.c.h.b16 %v1144
        %v2603 = vunpack.c.l.b16 %v1145
        %v2604 = vunpack.c.h.b16 %v1145
        %v2605 = vunpack.c.l.b16 %v1146
        %v2606 = vunpack.c.h.b16 %v1146
        %v2607 = vunpack.c.l.b16 %v1147
        %v2608 = vunpack.c.h.b16 %v1147
        %v2609 = vunpack.c.l.b16 %v1148
        %v2610 = vunpack.c.h.b16 %v1148
        %v2611 = vunpack.c.l.b16 %v1149
        %v2612 = vunpack.c.h.b16 %v1149
        %v2613 = vunpack.c.l.b16 %v1150
        %v2614 = vunpack.c.h.b16 %v1150
        %v2615 = vunpack.c.l.b16 %v1151
        %v2616 = vunpack.c.l.b16 %v1152
        %v2617 = vunpack.c.h.b16 %v1152
        %v2618 = vunpack.c.l.b16 %v1153
        %v2619 = vunpack.c.h.b16 %v1153
        %v2620 = vunpack.c.l.b16 %v1154
        %v2621 = vunpack.c.h.b16 %v1154
        %v2622 = vunpack.c.l.b16 %v1155
        %v2623 = vunpack.c.h.b16 %v1155
        %v2624 = vunpack.c.l.b16 %v1156
        %v2625 = vunpack.c.h.b16 %v1156
        %v2626 = vunpack.c.l.b16 %v1157
        %v2627 = vunpack.c.h.b16 %v1157
        %v2628 = vunpack.c.l.b16 %v1158
        %v2629 = vunpack.c.h.b16 %v1158
        %v2630 = vunpack.c.l.b16 %v1159
        %v2631 = vunpack.c.l.b16 %v1160
        %v2632 = vunpack.c.h.b16 %v1160
        %v2633 = vunpack.c.l.b16 %v1161
        %v2634 = vunpack.c.h.b16 %v1161
        %v2635 = vunpack.c.l.b16 %v1162
        %v2636 = vunpack.c.h.b16 %v1162
        %v2637 = vunpack.c.l.b16 %v1163
        %v2638 = vunpack.c.h.b16 %v1163
        %v2639 = vunpack.c.l.b16 %v1164
        %v2640 = vunpack.c.h.b16 %v1164
        %v2641 = vunpack.c.l.b16 %v1165
        %v2642 = vunpack.c.h.b16 %v1165
        %v2643 = vunpack.c.l.b16 %v1166
        %v2644 = vunpack.c.h.b16 %v1166
        %v2645 = vunpack.c.l.b16 %v1167
        %v2646 = vunpack.c.l.b16 %v1168
        %v2647 = vunpack.c.h.b16 %v1168
        %v2648 = vunpack.c.l.b16 %v1169
        %v2649 = vunpack.c.h.b16 %v1169
        %v2650 = vunpack.c.l.b16 %v1170
        %v2651 = vunpack.c.h.b16 %v1170
        %v2652 = vunpack.c.l.b16 %v1171
        %v2653 = vunpack.c.h.b16 %v1171
        %v2654 = vunpack.c.l.b16 %v1172
        %v2655 = vunpack.c.h.b16 %v1172
        %v2656 = vunpack.c.l.b16 %v1173
        %v2657 = vunpack.c.h.b16 %v1173
        %v2658 = vunpack.c.l.b16 %v1174
        %v2659 = vunpack.c.h.b16 %v1174
        %v2660 = vunpack.c.l.b16 %v1175
        %v2661 = vunpack.c.l.b16 %v1176
        %v2662 = vunpack.c.h.b16 %v1176
        %v2663 = vunpack.c.l.b16 %v1177
        %v2664 = vunpack.c.h.b16 %v1177
        %v2665 = vunpack.c.l.b16 %v1178
        %v2666 = vunpack.c.h.b16 %v1178
        %v2667 = vunpack.c.l.b16 %v1179
        %v2668 = vunpack.c.h.b16 %v1179
        %v2669 = vunpack.c.l.b16 %v1180
        %v2670 = vunpack.c.h.b16 %v1180
        %v2671 = vunpack.c.l.b16 %v1181
        %v2672 = vunpack.c.h.b16 %v1181
        %v2673 = vunpack.c.l.b16 %v1182
        %v2674 = vunpack.c.h.b16 %v1182
        %v2675 = vunpack.c.l.b16 %v1183
        %v2676 = vunpack.c.l.b16 %v1184
        %v2677 = vunpack.c.h.b16 %v1184
        %v2678 = vunpack.c.l.b16 %v1185
        %v2679 = vunpack.c.h.b16 %v1185
        %v2680 = vunpack.c.l.b16 %v1186
        %v2681 = vunpack.c.h.b16 %v1186
        %v2682 = vunpack.c.l.b16 %v1187
        %v2683 = vunpack.c.h.b16 %v1187
        %v2684 = vunpack.c.l.b16 %v1188
        %v2685 = vunpack.c.h.b16 %v1188
        %v2686 = vunpack.c.l.b16 %v1189
        %v2687 = vunpack.c.h.b16 %v1189
        %v2688 = vunpack.c.l.b16 %v1190
        %v2689 = vunpack.c.h.b16 %v1190
        %v2690 = vunpack.c.l.b16 %v1191
        %v2691 = vunpack.c.l.b16 %v1192
        %v2692 = vunpack.c.h.b16 %v1192
        %v2693 = vunpack.c.l.b16 %v1193
        %v2694 = vunpack.c.h.b16 %v1193
        %v2695 = vunpack.c.l.b16 %v1194
        %v2696 = vunpack.c.h.b16 %v1194
        %v2697 = vunpack.c.l.b16 %v1195
        %v2698 = vunpack.c.h.b16 %v1195
        %v2699 = vunpack.c.l.b16 %v1196
        %v2700 = vunpack.c.h.b16 %v1196
        %v2701 = vunpack.c.l.b16 %v1197
        %v2702 = vunpack.c.h.b16 %v1197
        %v2703 = vunpack.c.l.b16 %v1198
        %v2704 = vunpack.c.h.b16 %v1198
        %v2705 = vunpack.c.l.b16 %v1199
        %v2706 = vunpack.c.l.b16 %v1200
        %v2707 = vunpack.c.h.b16 %v1200
        %v2708 = vunpack.c.l.b16 %v1201
        %v2709 = vunpack.c.h.b16 %v1201
        %v2710 = vunpack.c.l.b16 %v1202
        %v2711 = vunpack.c.h.b16 %v1202
        %v2712 = vunpack.c.l.b16 %v1203
        %v2713 = vunpack.c.h.b16 %v1203
        %v2714 = vunpack.c.l.b16 %v1204
        %v2715 = vunpack.c.h.b16 %v1204
        %v2716 = vunpack.c.l.b16 %v1205
        %v2717 = vunpack.c.h.b16 %v1205
        %v2718 = vunpack.c.l.b16 %v1206
        %v2719 = vunpack.c.h.b16 %v1206
        %v2720 = vunpack.c.l.b16 %v1207
        %v2721 = vunpack.c.l.b16 %v1208
        %v2722 = vunpack.c.h.b16 %v1208
        %v2723 = vunpack.c.l.b16 %v1209
        %v2724 = vunpack.c.h.b16 %v1209
        %v2725 = vunpack.c.l.b16 %v1210
        %v2726 = vunpack.c.h.b16 %v1210
        %v2727 = vunpack.c.l.b16 %v1211
        %v2728 = vunpack.c.h.b16 %v1211
        %v2729 = vunpack.c.l.b16 %v1212
        %v2730 = vunpack.c.h.b16 %v1212
        %v2731 = vunpack.c.l.b16 %v1213
        %v2732 = vunpack.c.h.b16 %v1213
        %v2733 = vunpack.c.l.b16 %v1214
        %v2734 = vunpack.c.h.b16 %v1214
        %v2735 = vunpack.c.l.b16 %v1215
        %v2736 = vunpack.c.l.b16 %v1216
        %v2737 = vunpack.c.h.b16 %v1216
        %v2738 = vunpack.c.l.b16 %v1217
        %v2739 = vunpack.c.h.b16 %v1217
        %v2740 = vunpack.c.l.b16 %v1218
        %v2741 = vunpack.c.h.b16 %v1218
        %v2742 = vunpack.c.l.b16 %v1219
        %v2743 = vunpack.c.h.b16 %v1219
        %v2744 = vunpack.c.l.b16 %v1220
        %v2745 = vunpack.c.h.b16 %v1220
        %v2746 = vunpack.c.l.b16 %v1221
        %v2747 = vunpack.c.h.b16 %v1221
        %v2748 = vunpack.c.l.b16 %v1222
        %v2749 = vunpack.c.h.b16 %v1222
        %v2750 = vunpack.c.l.b16 %v1223
        %v2751 = vunpack.c.l.b16 %v1224
        %v2752 = vunpack.c.h.b16 %v1224
        %v2753 = vunpack.c.l.b16 %v1225
        %v2754 = vunpack.c.h.b16 %v1225
        %v2755 = vunpack.c.l.b16 %v1226
        %v2756 = vunpack.c.h.b16 %v1226
        %v2757 = vunpack.c.l.b16 %v1227
        %v2758 = vunpack.c.h.b16 %v1227
        %v2759 = vunpack.c.l.b16 %v1228
        %v2760 = vunpack.c.h.b16 %v1228
        %v2761 = vunpack.c.l.b16 %v1229
        %v2762 = vunpack.c.h.b16 %v1229
        %v2763 = vunpack.c.l.b16 %v1230
        %v2764 = vunpack.c.h.b16 %v1230
        %v2765 = vunpack.c.l.b16 %v1231
        %v2766 = vunpack.c.l.b16 %v1232
        %v2767 = vunpack.c.h.b16 %v1232
        %v2768 = vunpack.c.l.b16 %v1233
        %v2769 = vunpack.c.h.b16 %v1233
        %v2770 = vunpack.c.l.b16 %v1234
        %v2771 = vunpack.c.h.b16 %v1234
        %v2772 = vunpack.c.l.b16 %v1235
        %v2773 = vunpack.c.h.b16 %v1235
        %v2774 = vunpack.c.l.b16 %v1236
        %v2775 = vunpack.c.h.b16 %v1236
        %v2776 = vunpack.c.l.b16 %v1237
        %v2777 = vunpack.c.h.b16 %v1237
        %v2778 = vunpack.c.l.b16 %v1238
        %v2779 = vunpack.c.h.b16 %v1238
        %v2780 = vunpack.c.l.b16 %v1239
        %v2781 = vunpack.c.l.b16 %v1240
        %v2782 = vunpack.c.h.b16 %v1240
        %v2783 = vunpack.c.l.b16 %v1241
        %v2784 = vunpack.c.h.b16 %v1241
        %v2785 = vunpack.c.l.b16 %v1242
        %v2786 = vunpack.c.h.b16 %v1242
        %v2787 = vunpack.c.l.b16 %v1243
        %v2788 = vunpack.c.h.b16 %v1243
        %v2789 = vunpack.c.l.b16 %v1244
        %v2790 = vunpack.c.h.b16 %v1244
        %v2791 = vunpack.c.l.b16 %v1245
        %v2792 = vunpack.c.h.b16 %v1245
        %v2793 = vunpack.c.l.b16 %v1246
        %v2794 = vunpack.c.h.b16 %v1246
        %v2795 = vunpack.c.l.b16 %v1247
        %v2796 = vunpack.c.l.b16 %v1248
        %v2797 = vunpack.c.h.b16 %v1248
        %v2798 = vunpack.c.l.b16 %v1249
        %v2799 = vunpack.c.h.b16 %v1249
        %v2800 = vunpack.c.l.b16 %v1250
        %v2801 = vunpack.c.h.b16 %v1250
        %v2802 = vunpack.c.l.b16 %v1251
        %v2803 = vunpack.c.h.b16 %v1251
        %v2804 = vunpack.c.l.b16 %v1252
        %v2805 = vunpack.c.h.b16 %v1252
        %v2806 = vunpack.c.l.b16 %v1253
        %v2807 = vunpack.c.h.b16 %v1253
        %v2808 = vunpack.c.l.b16 %v1254
        %v2809 = vunpack.c.h.b16 %v1254
        %v2810 = vunpack.c.l.b16 %v1255
        %v2811 = vunpack.c.l.b16 %v1256
        %v2812 = vunpack.c.h.b16 %v1256
        %v2813 = vunpack.c.l.b16 %v1257
        %v2814 = vunpack.c.h.b16 %v1257
        %v2815 = vunpack.c.l.b16 %v1258
        %v2816 = vunpack.c.h.b16 %v1258
        %v2817 = vunpack.c.l.b16 %v1259
        %v2818 = vunpack.c.h.b16 %v1259
        %v2819 = vunpack.c.l.b16 %v1260
        %v2820 = vunpack.c.h.b16 %v1260
        %v2821 = vunpack.c.l.b16 %v1261
        %v2822 = vunpack.c.h.b16 %v1261
        %v2823 = vunpack.c.l.b16 %v1262
        %v2824 = vunpack.c.h.b16 %v1262
        %v2825 = vunpack.c.l.b16 %v1263
        %v2826 = vunpack.c.l.b16 %v1264
        %v2827 = vunpack.c.h.b16 %v1264
        %v2828 = vunpack.c.l.b16 %v1265
        %v2829 = vunpack.c.h.b16 %v1265
        %v2830 = vunpack.c.l.b16 %v1266
        %v2831 = vunpack.c.h.b16 %v1266
        %v2832 = vunpack.c.l.b16 %v1267
        %v2833 = vunpack.c.h.b16 %v1267
        %v2834 = vunpack.c.l.b16 %v1268
        %v2835 = vunpack.c.h.b16 %v1268
        %v2836 = vunpack.c.l.b16 %v1269
        %v2837 = vunpack.c.h.b16 %v1269
        %v2838 = vunpack.c.l.b16 %v1270
        %v2839 = vunpack.c.h.b16 %v1270
        %v2840 = vunpack.c.l.b16 %v1271
        %v2841 = vunpack.c.l.b16 %v1272
        %v2842 = vunpack.c.h.b16 %v1272
        %v2843 = vunpack.c.l.b16 %v1273
        %v2844 = vunpack.c.h.b16 %v1273
        %v2845 = vunpack.c.l.b16 %v1274
        %v2846 = vunpack.c.h.b16 %v1274
        %v2847 = vunpack.c.l.b16 %v1275
        %v2848 = vunpack.c.h.b16 %v1275
        %v2849 = vunpack.c.l.b16 %v1276
        %v2850 = vunpack.c.h.b16 %v1276
        %v2851 = vunpack.c.l.b16 %v1277
        %v2852 = vunpack.c.h.b16 %v1277
        %v2853 = vunpack.c.l.b16 %v1278
        %v2854 = vunpack.c.h.b16 %v1278
        %v2855 = vunpack.c.l.b16 %v1279
        %v2856 = vunpack.c.l.b16 %v1280
        %v2857 = vunpack.c.h.b16 %v1280
        %v2858 = vunpack.c.l.b16 %v1281
        %v2859 = vunpack.c.h.b16 %v1281
        %v2860 = vunpack.c.l.b16 %v1282
        %v2861 = vunpack.c.h.b16 %v1282
        %v2862 = vunpack.c.l.b16 %v1283
        %v2863 = vunpack.c.h.b16 %v1283
        %v2864 = vunpack.c.l.b16 %v1284
        %v2865 = vunpack.c.h.b16 %v1284
        %v2866 = vunpack.c.l.b16 %v1285
        %v2867 = vunpack.c.h.b16 %v1285
        %v2868 = vunpack.c.l.b16 %v1286
        %v2869 = vunpack.c.h.b16 %v1286
        %v2870 = vunpack.c.l.b16 %v1287
        %v2871 = vunpack.c.l.b16 %v1288
        %v2872 = vunpack.c.h.b16 %v1288
        %v2873 = vunpack.c.l.b16 %v1289
        %v2874 = vunpack.c.h.b16 %v1289
        %v2875 = vunpack.c.l.b16 %v1290
        %v2876 = vunpack.c.h.b16 %v1290
        %v2877 = vunpack.c.l.b16 %v1291
        %v2878 = vunpack.c.h.b16 %v1291
        %v2879 = vunpack.c.l.b16 %v1292
        %v2880 = vunpack.c.h.b16 %v1292
        %v2881 = vunpack.c.l.b16 %v1293
        %v2882 = vunpack.c.h.b16 %v1293
        %v2883 = vunpack.c.l.b16 %v1294
        %v2884 = vunpack.c.h.b16 %v1294
        %v2885 = vunpack.c.l.b16 %v1295
        %v2886 = vunpack.c.l.b16 %v1296
        %v2887 = vunpack.c.h.b16 %v1296
        %v2888 = vunpack.c.l.b16 %v1297
        %v2889 = vunpack.c.h.b16 %v1297
        %v2890 = vunpack.c.l.b16 %v1298
        %v2891 = vunpack.c.h.b16 %v1298
        %v2892 = vunpack.c.l.b16 %v1299
        %v2893 = vunpack.c.h.b16 %v1299
        %v2894 = vunpack.c.l.b16 %v1300
        %v2895 = vunpack.c.h.b16 %v1300
        %v2896 = vunpack.c.l.b16 %v1301
        %v2897 = vunpack.c.h.b16 %v1301
        %v2898 = vunpack.c.l.b16 %v1302
        %v2899 = vunpack.c.h.b16 %v1302
        %v2900 = vunpack.c.l.b16 %v1303
        %v2901 = vunpack.c.l.b16 %v1304
        %v2902 = vunpack.c.h.b16 %v1304
        %v2903 = vunpack.c.l.b16 %v1305
        %v2904 = vunpack.c.h.b16 %v1305
        %v2905 = vunpack.c.l.b16 %v1306
        %v2906 = vunpack.c.h.b16 %v1306
        %v2907 = vunpack.c.l.b16 %v1307
        %v2908 = vunpack.c.h.b16 %v1307
        %v2909 = vunpack.c.l.b16 %v1308
        %v2910 = vunpack.c.h.b16 %v1308
        %v2911 = vunpack.c.l.b16 %v1309
        %v2912 = vunpack.c.h.b16 %v1309
        %v2913 = vunpack.c.l.b16 %v1310
        %v2914 = vunpack.c.h.b16 %v1310
        %v2915 = vunpack.c.l.b16 %v1311
        %v2916 = vunpack.c.l.b16 %v1312
        %v2917 = vunpack.c.h.b16 %v1312
        %v2918 = vunpack.c.l.b16 %v1313
        %v2919 = vunpack.c.h.b16 %v1313
        %v2920 = vunpack.c.l.b16 %v1314
        %v2921 = vunpack.c.h.b16 %v1314
        %v2922 = vunpack.c.l.b16 %v1315
        %v2923 = vunpack.c.h.b16 %v1315
        %v2924 = vunpack.c.l.b16 %v1316
        %v2925 = vunpack.c.h.b16 %v1316
        %v2926 = vunpack.c.l.b16 %v1317
        %v2927 = vunpack.c.h.b16 %v1317
        %v2928 = vunpack.c.l.b16 %v1318
        %v2929 = vunpack.c.h.b16 %v1318
        %v2930 = vunpack.c.l.b16 %v1319
        %v2931 = vunpack.c.l.b16 %v1320
        %v2932 = vunpack.c.h.b16 %v1320
        %v2933 = vunpack.c.l.b16 %v1321
        %v2934 = vunpack.c.h.b16 %v1321
        %v2935 = vunpack.c.l.b16 %v1322
        %v2936 = vunpack.c.h.b16 %v1322
        %v2937 = vunpack.c.l.b16 %v1323
        %v2938 = vunpack.c.h.b16 %v1323
        %v2939 = vunpack.c.l.b16 %v1324
        %v2940 = vunpack.c.h.b16 %v1324
        %v2941 = vunpack.c.l.b16 %v1325
        %v2942 = vunpack.c.h.b16 %v1325
        %v2943 = vunpack.c.l.b16 %v1326
        %v2944 = vunpack.c.h.b16 %v1326
        %v2945 = vunpack.c.l.b16 %v1327
        %v2946 = vunpack.c.l.b16 %v1328
        %v2947 = vunpack.c.h.b16 %v1328
        %v2948 = vunpack.c.l.b16 %v1329
        %v2949 = vunpack.c.h.b16 %v1329
        %v2950 = vunpack.c.l.b16 %v1330
        %v2951 = vunpack.c.h.b16 %v1330
        %v2952 = vunpack.c.l.b16 %v1331
        %v2953 = vunpack.c.h.b16 %v1331
        %v2954 = vunpack.c.l.b16 %v1332
        %v2955 = vunpack.c.h.b16 %v1332
        %v2956 = vunpack.c.l.b16 %v1333
        %v2957 = vunpack.c.h.b16 %v1333
        %v2958 = vunpack.c.l.b16 %v1334
        %v2959 = vunpack.c.h.b16 %v1334
        %v2960 = vunpack.c.l.b16 %v1335
        %v2961 = vunpack.c.l.b16 %v1336
        %v2962 = vunpack.c.h.b16 %v1336
        %v2963 = vunpack.c.l.b16 %v1337
        %v2964 = vunpack.c.h.b16 %v1337
        %v2965 = vunpack.c.l.b16 %v1338
        %v2966 = vunpack.c.h.b16 %v1338
        %v2967 = vunpack.c.l.b16 %v1339
        %v2968 = vunpack.c.h.b16 %v1339
        %v2969 = vunpack.c.l.b16 %v1340
        %v2970 = vunpack.c.h.b16 %v1340
        %v2971 = vunpack.c.l.b16 %v1341
        %v2972 = vunpack.c.h.b16 %v1341
        %v2973 = vunpack.c.l.b16 %v1342
        %v2974 = vunpack.c.h.b16 %v1342
        %v2975 = vunpack.c.l.b16 %v1343
        %v2976 = vpack.c.b16 %v2031, %v2016
        %v2977 = vpack.c.b16 %v2032, %v2017
        %v2978 = vpack.c.b16 %v2033, %v2018
        %v2979 = vpack.c.b16 %v2034, %v2019
        %v2980 = vpack.c.b16 %v2035, %v2020
        %v2981 = vpack.c.b16 %v2036, %v2021
        %v2982 = vpack.c.b16 %v2037, %v2022
        %v2983 = vpack.c.b16 %v2038, %v2023
        %v2984 = vpack.c.b16 %v2039, %v2024
        %v2985 = vpack.c.b16 %v2040, %v2025
        %v2986 = vpack.c.b16 %v2041, %v2026
        %v2987 = vpack.c.b16 %v2042, %v2027
        %v2988 = vpack.c.b16 %v2043, %v2028
        %v2989 = vpack.c.b16 %v2044, %v2029
        %v2990 = vpack.c.b16 %v2045, %v2030
        %v2991 = vpack.c.b16 %v2061, %v2046
        %v2992 = vpack.c.b16 %v2062, %v2047
        %v2993 = vpack.c.b16 %v2063, %v2048
        %v2994 = vpack.c.b16 %v2064, %v2049
        %v2995 = vpack.c.b16 %v2065, %v2050
        %v2996 = vpack.c.b16 %v2066, %v2051
        %v2997 = vpack.c.b16 %v2067, %v2052
        %v2998 = vpack.c.b16 %v2068, %v2053
        %v2999 = vpack.c.b16 %v2069, %v2054
        %v3000 = vpack.c.b16 %v2070, %v2055
        %v3001 = vpack.c.b16 %v2071, %v2056
        %v3002 = vpack.c.b16 %v2072, %v2057
        %v3003 = vpack.c.b16 %v2073, %v2058
        %v3004 = vpack.c.b16 %v2074, %v2059
        %v3005 = vpack.c.b16 %v2075, %v2060
        %v3006 = vpack.c.b16 %v2091, %v2076
        %v3007 = vpack.c.b16 %v2092, %v2077
        %v3008 = vpack.c.b16 %v2093, %v2078
        %v3009 = vpack.c.b16 %v2094, %v2079
        %v3010 = vpack.c.b16 %v2095, %v2080
        %v3011 = vpack.c.b16 %v2096, %v2081
        %v3012 = vpack.c.b16 %v2097, %v2082
        %v3013 = vpack.c.b16 %v2098, %v2083
        %v3014 = vpack.c.b16 %v2099, %v2084
        %v3015 = vpack.c.b16 %v2100, %v2085
        %v3016 = vpack.c.b16 %v2101, %v2086
        %v3017 = vpack.c.b16 %v2102, %v2087
        %v3018 = vpack.c.b16 %v2103, %v2088
        %v3019 = vpack.c.b16 %v2104, %v2089
        %v3020 = vpack.c.b16 %v2105, %v2090
        %v3021 = vpack.c.b16 %v2121, %v2106
        %v3022 = vpack.c.b16 %v2122, %v2107
        %v3023 = vpack.c.b16 %v2123, %v2108
        %v3024 = vpack.c.b16 %v2124, %v2109
        %v3025 = vpack.c.b16 %v2125, %v2110
        %v3026 = vpack.c.b16 %v2126, %v2111
        %v3027 = vpack.c.b16 %v2127, %v2112
        %v3028 = vpack.c.b16 %v2128, %v2113
        %v3029 = vpack.c.b16 %v2129, %v2114
        %v3030 = vpack.c.b16 %v2130, %v2115
        %v3031 = vpack.c.b16 %v2131, %v2116
        %v3032 = vpack.c.b16 %v2132, %v2117
        %v3033 = vpack.c.b16 %v2133, %v2118
        %v3034 = vpack.c.b16 %v2134, %v2119
        %v3035 = vpack.c.b16 %v2135, %v2120
        %v3036 = vpack.c.b16 %v2151, %v2136
        %v3037 = vpack.c.b16 %v2152, %v2137
        %v3038 = vpack.c.b16 %v2153, %v2138
        %v3039 = vpack.c.b16 %v2154, %v2139
        %v3040 = vpack.c.b16 %v2155, %v2140
        %v3041 = vpack.c.b16 %v2156, %v2141
        %v3042 = vpack.c.b16 %v2157, %v2142
        %v3043 = vpack.c.b16 %v2158, %v2143
        %v3044 = vpack.c.b16 %v2159, %v2144
        %v3045 = vpack.c.b16 %v2160, %v2145
        %v3046 = vpack.c.b16 %v2161, %v2146
        %v3047 = vpack.c.b16 %v2162, %v2147
        %v3048 = vpack.c.b16 %v2163, %v2148
        %v3049 = vpack.c.b16 %v2164, %v2149
        %v3050 = vpack.c.b16 %v2165, %v2150
        %v3051 = vpack.c.b16 %v2181, %v2166
        %v3052 = vpack.c.b16 %v2182, %v2167
        %v3053 = vpack.c.b16 %v2183, %v2168
        %v3054 = vpack.c.b16 %v2184, %v2169
        %v3055 = vpack.c.b16 %v2185, %v2170
        %v3056 = vpack.c.b16 %v2186, %v2171
        %v3057 = vpack.c.b16 %v2187, %v2172
        %v3058 = vpack.c.b16 %v2188, %v2173
        %v3059 = vpack.c.b16 %v2189, %v2174
        %v3060 = vpack.c.b16 %v2190, %v2175
        %v3061 = vpack.c.b16 %v2191, %v2176
        %v3062 = vpack.c.b16 %v2192, %v2177
        %v3063 = vpack.c.b16 %v2193, %v2178
        %v3064 = vpack.c.b16 %v2194, %v2179
        %v3065 = vpack.c.b16 %v2195, %v2180
        %v3066 = vpack.c.b16 %v2211, %v2196
        %v3067 = vpack.c.b16 %v2212, %v2197
        %v3068 = vpack.c.b16 %v2213, %v2198
        %v3069 = vpack.c.b16 %v2214, %v2199
        %v3070 = vpack.c.b16 %v2215, %v2200
        %v3071 = vpack.c.b16 %v2216, %v2201
        %v3072 = vpack.c.b16 %v2217, %v2202
        %v3073 = vpack.c.b16 %v2218, %v2203
        %v3074 = vpack.c.b16 %v2219, %v2204
        %v3075 = vpack.c.b16 %v2220, %v2205
        %v3076 = vpack.c.b16 %v2221, %v2206
        %v3077 = vpack.c.b16 %v2222, %v2207
        %v3078 = vpack.c.b16 %v2223, %v2208
        %v3079 = vpack.c.b16 %v2224, %v2209
        %v3080 = vpack.c.b16 %v2225, %v2210
        %v3081 = vpack.c.b16 %v2241, %v2226
        %v3082 = vpack.c.b16 %v2242, %v2227
        %v3083 = vpack.c.b16 %v2243, %v2228
        %v3084 = vpack.c.b16 %v2244, %v2229
        %v3085 = vpack.c.b16 %v2245, %v2230
        %v3086 = vpack.c.b16 %v2246, %v2231
        %v3087 = vpack.c.b16 %v2247, %v2232
        %v3088 = vpack.c.b16 %v2248, %v2233
        %v3089 = vpack.c.b16 %v2249, %v2234
        %v3090 = vpack.c.b16 %v2250, %v2235
        %v3091 = vpack.c.b16 %v2251, %v2236
        %v3092 = vpack.c.b16 %v2252, %v2237
        %v3093 = vpack.c.b16 %v2253, %v2238
        %v3094 = vpack.c.b16 %v2254, %v2239
        %v3095 = vpack.c.b16 %v2255, %v2240
        %v3096 = vpack.c.b16 %v2271, %v2256
        %v3097 = vpack.c.b16 %v2272, %v2257
        %v3098 = vpack.c.b16 %v2273, %v2258
        %v3099 = vpack.c.b16 %v2274, %v2259
        %v3100 = vpack.c.b16 %v2275, %v2260
        %v3101 = vpack.c.b16 %v2276, %v2261
        %v3102 = vpack.c.b16 %v2277, %v2262
        %v3103 = vpack.c.b16 %v2278, %v2263
        %v3104 = vpack.c.b16 %v2279, %v2264
        %v3105 = vpack.c.b16 %v2280, %v2265
        %v3106 = vpack.c.b16 %v2281, %v2266
        %v3107 = vpack.c.b16 %v2282, %v2267
        %v3108 = vpack.c.b16 %v2283, %v2268
        %v3109 = vpack.c.b16 %v2284, %v2269
        %v3110 = vpack.c.b16 %v2285, %v2270
        %v3111 = vpack.c.b16 %v2301, %v2286
        %v3112 = vpack.c.b16 %v2302, %v2287
        %v3113 = vpack.c.b16 %v2303, %v2288
        %v3114 = vpack.c.b16 %v2304, %v2289
        %v3115 = vpack.c.b16 %v2305, %v2290
        %v3116 = vpack.c.b16 %v2306, %v2291
        %v3117 = vpack.c.b16 %v2307, %v2292
        %v3118 = vpack.c.b16 %v2308, %v2293
        %v3119 = vpack.c.b16 %v2309, %v2294
        %v3120 = vpack.c.b16 %v2310, %v2295
        %v3121 = vpack.c.b16 %v2311, %v2296
        %v3122 = vpack.c.b16 %v2312, %v2297
        %v3123 = vpack.c.b16 %v2313, %v2298
        %v3124 = vpack.c.b16 %v2314, %v2299
        %v3125 = vpack.c.b16 %v2315, %v2300
        %v3126 = vpack.c.b16 %v2331, %v2316
        %v3127 = vpack.c.b16 %v2332, %v2317
        %v3128 = vpack.c.b16 %v2333, %v2318
        %v3129 = vpack.c.b16 %v2334, %v2319
        %v3130 = vpack.c.b16 %v2335, %v2320
        %v3131 = vpack.c.b16 %v2336, %v2321
        %v3132 = vpack.c.b16 %v2337, %v2322
        %v3133 = vpack.c.b16 %v2338, %v2323
        %v3134 = vpack.c.b16 %v2339, %v2324
        %v3135 = vpack.c.b16 %v2340, %v2325
        %v3136 = vpack.c.b16 %v2341, %v2326
        %v3137 = vpack.c.b16 %v2342, %v2327
        %v3138 = vpack.c.b16 %v2343, %v2328
        %v3139 = vpack.c.b16 %v2344, %v2329
        %v3140 = vpack.c.b16 %v2345, %v2330
        %v3141 = vpack.c.b16 %v2361, %v2346
        %v3142 = vpack.c.b16 %v2362, %v2347
        %v3143 = vpack.c.b16 %v2363, %v2348
        %v3144 = vpack.c.b16 %v2364, %v2349
        %v3145 = vpack.c.b16 %v2365, %v2350
        %v3146 = vpack.c.b16 %v2366, %v2351
        %v3147 = vpack.c.b16 %v2367, %v2352
        %v3148 = vpack.c.b16 %v2368, %v2353
        %v3149 = vpack.c.b16 %v2369, %v2354
        %v3150 = vpack.c.b16 %v2370, %v2355
        %v3151 = vpack.c.b16 %v2371, %v2356
        %v3152 = vpack.c.b16 %v2372, %v2357
        %v3153 = vpack.c.b16 %v2373, %v2358
        %v3154 = vpack.c.b16 %v2374, %v2359
        %v3155 = vpack.c.b16 %v2375, %v2360
        %v3156 = vpack.c.b16 %v2391, %v2376
        %v3157 = vpack.c.b16 %v2392, %v2377
        %v3158 = vpack.c.b16 %v2393, %v2378
        %v3159 = vpack.c.b16 %v2394, %v2379
        %v3160 = vpack.c.b16 %v2395, %v2380
        %v3161 = vpack.c.b16 %v2396, %v2381
        %v3162 = vpack.c.b16 %v2397, %v2382
        %v3163 = vpack.c.b16 %v2398, %v2383
        %v3164 = vpack.c.b16 %v2399, %v2384
        %v3165 = vpack.c.b16 %v2400, %v2385
        %v3166 = vpack.c.b16 %v2401, %v2386
        %v3167 = vpack.c.b16 %v2402, %v2387
        %v3168 = vpack.c.b16 %v2403, %v2388
        %v3169 = vpack.c.b16 %v2404, %v2389
        %v3170 = vpack.c.b16 %v2405, %v2390
        %v3171 = vpack.c.b16 %v2421, %v2406
        %v3172 = vpack.c.b16 %v2422, %v2407
        %v3173 = vpack.c.b16 %v2423, %v2408
        %v3174 = vpack.c.b16 %v2424, %v2409
        %v3175 = vpack.c.b16 %v2425, %v2410
        %v3176 = vpack.c.b16 %v2426, %v2411
        %v3177 = vpack.c.b16 %v2427, %v2412
        %v3178 = vpack.c.b16 %v2428, %v2413
        %v3179 = vpack.c.b16 %v2429, %v2414
        %v3180 = vpack.c.b16 %v2430, %v2415
        %v3181 = vpack.c.b16 %v2431, %v2416
        %v3182 = vpack.c.b16 %v2432, %v2417
        %v3183 = vpack.c.b16 %v2433, %v2418
        %v3184 = vpack.c.b16 %v2434, %v2419
        %v3185 = vpack.c.b16 %v2435, %v2420
        %v3186 = vpack.c.b16 %v2451, %v2436
        %v3187 = vpack.c.b16 %v2452, %v2437
        %v3188 = vpack.c.b16 %v2453, %v2438
        %v3189 = vpack.c.b16 %v2454, %v2439
        %v3190 = vpack.c.b16 %v2455, %v2440
        %v3191 = vpack.c.b16 %v2456, %v2441
        %v3192 = vpack.c.b16 %v2457, %v2442
        %v3193 = vpack.c.b16 %v2458, %v2443
        %v3194 = vpack.c.b16 %v2459, %v2444
        %v3195 = vpack.c.b16 %v2460, %v2445
        %v3196 = vpack.c.b16 %v2461, %v2446
        %v3197 = vpack.c.b16 %v2462, %v2447
        %v3198 = vpack.c.b16 %v2463, %v2448
        %v3199 = vpack.c.b16 %v2464, %v2449
        %v3200 = vpack.c.b16 %v2465, %v2450
        %v3201 = vpack.c.b16 %v2481, %v2466
        %v3202 = vpack.c.b16 %v2482, %v2467
        %v3203 = vpack.c.b16 %v2483, %v2468
        %v3204 = vpack.c.b16 %v2484, %v2469
        %v3205 = vpack.c.b16 %v2485, %v2470
        %v3206 = vpack.c.b16 %v2486, %v2471
        %v3207 = vpack.c.b16 %v2487, %v2472
        %v3208 = vpack.c.b16 %v2488, %v2473
        %v3209 = vpack.c.b16 %v2489, %v2474
        %v3210 = vpack.c.b16 %v2490, %v2475
        %v3211 = vpack.c.b16 %v2491, %v2476
        %v3212 = vpack.c.b16 %v2492, %v2477
        %v3213 = vpack.c.b16 %v2493, %v2478
        %v3214 = vpack.c.b16 %v2494, %v2479
        %v3215 = vpack.c.b16 %v2495, %v2480
        %v3216 = vpack.c.b16 %v2511, %v2496
        %v3217 = vpack.c.b16 %v2512, %v2497
        %v3218 = vpack.c.b16 %v2513, %v2498
        %v3219 = vpack.c.b16 %v2514, %v2499
        %v3220 = vpack.c.b16 %v2515, %v2500
        %v3221 = vpack.c.b16 %v2516, %v2501
        %v3222 = vpack.c.b16 %v2517, %v2502
        %v3223 = vpack.c.b16 %v2518, %v2503
        %v3224 = vpack.c.b16 %v2519, %v2504
        %v3225 = vpack.c.b16 %v2520, %v2505
        %v3226 = vpack.c.b16 %v2521, %v2506
        %v3227 = vpack.c.b16 %v2522, %v2507
        %v3228 = vpack.c.b16 %v2523, %v2508
        %v3229 = vpack.c.b16 %v2524, %v2509
        %v3230 = vpack.c.b16 %v2525, %v2510
        %v3231 = vpack.c.b16 %v2541, %v2526
        %v3232 = vpack.c.b16 %v2542, %v2527
        %v3233 = vpack.c.b16 %v2543, %v2528
        %v3234 = vpack.c.b16 %v2544, %v2529
        %v3235 = vpack.c.b16 %v2545, %v2530
        %v3236 = vpack.c.b16 %v2546, %v2531
        %v3237 = vpack.c.b16 %v2547, %v2532
        %v3238 = vpack.c.b16 %v2548, %v2533
        %v3239 = vpack.c.b16 %v2549, %v2534
        %v3240 = vpack.c.b16 %v2550, %v2535
        %v3241 = vpack.c.b16 %v2551, %v2536
        %v3242 = vpack.c.b16 %v2552, %v2537
        %v3243 = vpack.c.b16 %v2553, %v2538
        %v3244 = vpack.c.b16 %v2554, %v2539
        %v3245 = vpack.c.b16 %v2555, %v2540
        %v3246 = vpack.c.b16 %v2571, %v2556
        %v3247 = vpack.c.b16 %v2572, %v2557
        %v3248 = vpack.c.b16 %v2573, %v2558
        %v3249 = vpack.c.b16 %v2574, %v2559
        %v3250 = vpack.c.b16 %v2575, %v2560
        %v3251 = vpack.c.b16 %v2576, %v2561
        %v3252 = vpack.c.b16 %v2577, %v2562
        %v3253 = vpack.c.b16 %v2578, %v2563
        %v3254 = vpack.c.b16 %v2579, %v2564
        %v3255 = vpack.c.b16 %v2580, %v2565
        %v3256 = vpack.c.b16 %v2581, %v2566
        %v3257 = vpack.c.b16 %v2582, %v2567
        %v3258 = vpack.c.b16 %v2583, %v2568
        %v3259 = vpack.c.b16 %v2584, %v2569
        %v3260 = vpack.c.b16 %v2585, %v2570
        %v3261 = vpack.c.b16 %v2601, %v2586
        %v3262 = vpack.c.b16 %v2602, %v2587
        %v3263 = vpack.c.b16 %v2603, %v2588
        %v3264 = vpack.c.b16 %v2604, %v2589
        %v3265 = vpack.c.b16 %v2605, %v2590
        %v3266 = vpack.c.b16 %v2606, %v2591
        %v3267 = vpack.c.b16 %v2607, %v2592
        %v3268 = vpack.c.b16 %v2608, %v2593
        %v3269 = vpack.c.b16 %v2609, %v2594
        %v3270 = vpack.c.b16 %v2610, %v2595
        %v3271 = vpack.c.b16 %v2611, %v2596
        %v3272 = vpack.c.b16 %v2612, %v2597
        %v3273 = vpack.c.b16 %v2613, %v2598
        %v3274 = vpack.c.b16 %v2614, %v2599
        %v3275 = vpack.c.b16 %v2615, %v2600
        %v3276 = vpack.c.b16 %v2631, %v2616
        %v3277 = vpack.c.b16 %v2632, %v2617
        %v3278 = vpack.c.b16 %v2633, %v2618
        %v3279 = vpack.c.b16 %v2634, %v2619
        %v3280 = vpack.c.b16 %v2635, %v2620
        %v3281 = vpack.c.b16 %v2636, %v2621
        %v3282 = vpack.c.b16 %v2637, %v2622
        %v3283 = vpack.c.b16 %v2638, %v2623
        %v3284 = vpack.c.b16 %v2639, %v2624
        %v3285 = vpack.c.b16 %v2640, %v2625
        %v3286 = vpack.c.b16 %v2641, %v2626
        %v3287 = vpack.c.b16 %v2642, %v2627
        %v3288 = vpack.c.b16 %v2643, %v2628
        %v3289 = vpack.c.b16 %v2644, %v2629
        %v3290 = vpack.c.b16 %v2645, %v2630
        %v3291 = vpack.c.b16 %v2661, %v2646
        %v3292 = vpack.c.b16 %v2662, %v2647
        %v3293 = vpack.c.b16 %v2663, %v2648
        %v3294 = vpack.c.b16 %v2664, %v2649
        %v3295 = vpack.c.b16 %v2665, %v2650
        %v3296 = vpack.c.b16 %v2666, %v2651
        %v3297 = vpack.c.b16 %v2667, %v2652
        %v3298 = vpack.c.b16 %v2668, %v2653
        %v3299 = vpack.c.b16 %v2669, %v2654
        %v3300 = vpack.c.b16 %v2670, %v2655
        %v3301 = vpack.c.b16 %v2671, %v2656
        %v3302 = vpack.c.b16 %v2672, %v2657
        %v3303 = vpack.c.b16 %v2673, %v2658
        %v3304 = vpack.c.b16 %v2674, %v2659
        %v3305 = vpack.c.b16 %v2675, %v2660
        %v3306 = vpack.c.b16 %v2691, %v2676
        %v3307 = vpack.c.b16 %v2692, %v2677
        %v3308 = vpack.c.b16 %v2693, %v2678
        %v3309 = vpack.c.b16 %v2694, %v2679
        %v3310 = vpack.c.b16 %v2695, %v2680
        %v3311 = vpack.c.b16 %v2696, %v2681
        %v3312 = vpack.c.b16 %v2697, %v2682
        %v3313 = vpack.c.b16 %v2698, %v2683
        %v3314 = vpack.c.b16 %v2699, %v2684
        %v3315 = vpack.c.b16 %v2700, %v2685
        %v3316 = vpack.c.b16 %v2701, %v2686
        %v3317 = vpack.c.b16 %v2702, %v2687
        %v3318 = vpack.c.b16 %v2703, %v2688
        %v3319 = vpack.c.b16 %v2704, %v2689
        %v3320 = vpack.c.b16 %v2705, %v2690
        %v3321 = vpack.c.b16 %v2721, %v2706
        %v3322 = vpack.c.b16 %v2722, %v2707
        %v3323 = vpack.c.b16 %v2723, %v2708
        %v3324 = vpack.c.b16 %v2724, %v2709
        %v3325 = vpack.c.b16 %v2725, %v2710
        %v3326 = vpack.c.b16 %v2726, %v2711
        %v3327 = vpack.c.b16 %v2727, %v2712
        %v3328 = vpack.c.b16 %v2728, %v2713
        %v3329 = vpack.c.b16 %v2729, %v2714
        %v3330 = vpack.c.b16 %v2730, %v2715
        %v3331 = vpack.c.b16 %v2731, %v2716
        %v3332 = vpack.c.b16 %v2732, %v2717
        %v3333 = vpack.c.b16 %v2733, %v2718
        %v3334 = vpack.c.b16 %v2734, %v2719
        %v3335 = vpack.c.b16 %v2735, %v2720
        %v3336 = vpack.c.b16 %v2751, %v2736
        %v3337 = vpack.c.b16 %v2752, %v2737
        %v3338 = vpack.c.b16 %v2753, %v2738
        %v3339 = vpack.c.b16 %v2754, %v2739
        %v3340 = vpack.c.b16 %v2755, %v2740
        %v3341 = vpack.c.b16 %v2756, %v2741
        %v3342 = vpack.c.b16 %v2757, %v2742
        %v3343 = vpack.c.b16 %v2758, %v2743
        %v3344 = vpack.c.b16 %v2759, %v2744
        %v3345 = vpack.c.b16 %v2760, %v2745
        %v3346 = vpack.c.b16 %v2761, %v2746
        %v3347 = vpack.c.b16 %v2762, %v2747
        %v3348 = vpack.c.b16 %v2763, %v2748
        %v3349 = vpack.c.b16 %v2764, %v2749
        %v3350 = vpack.c.b16 %v2765, %v2750
        %v3351 = vpack.c.b16 %v2781, %v2766
        %v3352 = vpack.c.b16 %v2782, %v2767
        %v3353 = vpack.c.b16 %v2783, %v2768
        %v3354 = vpack.c.b16 %v2784, %v2769
        %v3355 = vpack.c.b16 %v2785, %v2770
        %v3356 = vpack.c.b16 %v2786, %v2771
        %v3357 = vpack.c.b16 %v2787, %v2772
        %v3358 = vpack.c.b16 %v2788, %v2773
        %v3359 = vpack.c.b16 %v2789, %v2774
        %v3360 = vpack.c.b16 %v2790, %v2775
        %v3361 = vpack.c.b16 %v2791, %v2776
        %v3362 = vpack.c.b16 %v2792, %v2777
        %v3363 = vpack.c.b16 %v2793, %v2778
        %v3364 = vpack.c.b16 %v2794, %v2779
        %v3365 = vpack.c.b16 %v2795, %v2780
        %v3366 = vpack.c.b16 %v2811, %v2796
        %v3367 = vpack.c.b16 %v2812, %v2797
        %v3368 = vpack.c.b16 %v2813, %v2798
        %v3369 = vpack.c.b16 %v2814, %v2799
        %v3370 = vpack.c.b16 %v2815, %v2800
        %v3371 = vpack.c.b16 %v2816, %v2801
        %v3372 = vpack.c.b16 %v2817, %v2802
        %v3373 = vpack.c.b16 %v2818, %v2803
        %v3374 = vpack.c.b16 %v2819, %v2804
        %v3375 = vpack.c.b16 %v2820, %v2805
        %v3376 = vpack.c.b16 %v2821, %v2806
        %v3377 = vpack.c.b16 %v2822, %v2807
        %v3378 = vpack.c.b16 %v2823, %v2808
        %v3379 = vpack.c.b16 %v2824, %v2809
        %v3380 = vpack.c.b16 %v2825, %v2810
        %v3381 = vpack.c.b16 %v2841, %v2826
        %v3382 = vpack.c.b16 %v2842, %v2827
        %v3383 = vpack.c.b16 %v2843, %v2828
        %v3384 = vpack.c.b16 %v2844, %v2829
        %v3385 = vpack.c.b16 %v2845, %v2830
        %v3386 = vpack.c.b16 %v2846, %v2831
        %v3387 = vpack.c.b16 %v2847, %v2832
        %v3388 = vpack.c.b16 %v2848, %v2833
        %v3389 = vpack.c.b16 %v2849, %v2834
        %v3390 = vpack.c.b16 %v2850, %v2835
        %v3391 = vpack.c.b16 %v2851, %v2836
        %v3392 = vpack.c.b16 %v2852, %v2837
        %v3393 = vpack.c.b16 %v2853, %v2838
        %v3394 = vpack.c.b16 %v2854, %v2839
        %v3395 = vpack.c.b16 %v2855, %v2840
        %v3396 = vpack.c.b16 %v2871, %v2856
        %v3397 = vpack.c.b16 %v2872, %v2857
        %v3398 = vpack.c.b16 %v2873, %v2858
        %v3399 = vpack.c.b16 %v2874, %v2859
        %v3400 = vpack.c.b16 %v2875, %v2860
        %v3401 = vpack.c.b16 %v2876, %v2861
        %v3402 = vpack.c.b16 %v2877, %v2862
        %v3403 = vpack.c.b16 %v2878, %v2863
        %v3404 = vpack.c.b16 %v2879, %v2864
        %v3405 = vpack.c.b16 %v2880, %v2865
        %v3406 = vpack.c.b16 %v2881, %v2866
        %v3407 = vpack.c.b16 %v2882, %v2867
        %v3408 = vpack.c.b16 %v2883, %v2868
        %v3409 = vpack.c.b16 %v2884, %v2869
        %v3410 = vpack.c.b16 %v2885, %v2870
        %v3411 = vpack.c.b16 %v2901, %v2886
        %v3412 = vpack.c.b16 %v2902, %v2887
        %v3413 = vpack.c.b16 %v2903, %v2888
        %v3414 = vpack.c.b16 %v2904, %v2889
        %v3415 = vpack.c.b16 %v2905, %v2890
        %v3416 = vpack.c.b16 %v2906, %v2891
        %v3417 = vpack.c.b16 %v2907, %v2892
        %v3418 = vpack.c.b16 %v2908, %v2893
        %v3419 = vpack.c.b16 %v2909, %v2894
        %v3420 = vpack.c.b16 %v2910, %v2895
        %v3421 = vpack.c.b16 %v2911, %v2896
        %v3422 = vpack.c.b16 %v2912, %v2897
        %v3423 = vpack.c.b16 %v2913, %v2898
        %v3424 = vpack.c.b16 %v2914, %v2899
        %v3425 = vpack.c.b16 %v2915, %v2900
        %v3426 = vpack.c.b16 %v2931, %v2916
        %v3427 = vpack.c.b16 %v2932, %v2917
        %v3428 = vpack.c.b16 %v2933, %v2918
        %v3429 = vpack.c.b16 %v2934, %v2919
        %v3430 = vpack.c.b16 %v2935, %v2920
        %v3431 = vpack.c.b16 %v2936, %v2921
        %v3432 = vpack.c.b16 %v2937, %v2922
        %v3433 = vpack.c.b16 %v2938, %v2923
        %v3434 = vpack.c.b16 %v2939, %v2924
        %v3435 = vpack.c.b16 %v2940, %v2925
        %v3436 = vpack.c.b16 %v2941, %v2926
        %v3437 = vpack.c.b16 %v2942, %v2927
        %v3438 = vpack.c.b16 %v2943, %v2928
        %v3439 = vpack.c.b16 %v2944, %v2929
        %v3440 = vpack.c.b16 %v2945, %v2930
        %v3441 = vpack.c.b16 %v2961, %v2946
        %v3442 = vpack.c.b16 %v2962, %v2947
        %v3443 = vpack.c.b16 %v2963, %v2948
        %v3444 = vpack.c.b16 %v2964, %v2949
        %v3445 = vpack.c.b16 %v2965, %v2950
        %v3446 = vpack.c.b16 %v2966, %v2951
        %v3447 = vpack.c.b16 %v2967, %v2952
        %v3448 = vpack.c.b16 %v2968, %v2953
        %v3449 = vpack.c.b16 %v2969, %v2954
        %v3450 = vpack.c.b16 %v2970, %v2955
        %v3451 = vpack.c.b16 %v2971, %v2956
        %v3452 = vpack.c.b16 %v2972, %v2957
        %v3453 = vpack.c.b16 %v2973, %v2958
        %v3454 = vpack.c.b16 %v2974, %v2959
        %v3455 = vpack.c.b16 %v2975, %v2960
        %3936 = vmatpush.bf16.msra.mxu0 %v3081
        %3937 = vmatpush.bf16.msra.mxu0 %v3066
        %3938 = vmatpush.bf16.msra.mxu0 %v3051
        %3939 = vmatpush.bf16.msra.mxu0 %v3036
        %3940 = vmatpush.bf16.msra.mxu0 %v3021
        %3941 = vmatpush.bf16.msra.mxu0 %v3006
        %3942 = vmatpush.bf16.msra.mxu0 %v2991
        %3943 = vmatpush.bf16.msra.mxu0 %v2976
        %3944 = vmatmul.bf16.gmra.mxu0 %v1440
        %v3945 = vpop.f32.mrf.mxu0
        %v3946 = vadd.f32 0.0, %v3945
        %v3947 = vpop.f32.mrf.mxu0
        %v3948 = vadd.f32 0.0, %v3947
        %3949 = vmatmul.bf16.gmra.mxu0 %v1444
        %v3950 = vpop.f32.mrf.mxu0
        %v3951 = vadd.f32 0.0, %v3950
        %v3952 = vpop.f32.mrf.mxu0
        %v3953 = vadd.f32 0.0, %v3952
        %3954 = vmatmul.bf16.gmra.mxu0 %v1448
        %v3955 = vpop.f32.mrf.mxu0
        %v3956 = vadd.f32 0.0, %v3955
        %v3957 = vpop.f32.mrf.mxu0
        %v3958 = vadd.f32 0.0, %v3957
        %3959 = vmatmul.bf16.gmra.mxu0 %v1452
        %v3960 = vpop.f32.mrf.mxu0
        %v3961 = vadd.f32 0.0, %v3960
        %v3962 = vpop.f32.mrf.mxu0
        %v3963 = vadd.f32 0.0, %v3962
        %3964 = vmatmul.bf16.gmra.mxu0 %v1456
        %v3965 = vpop.f32.mrf.mxu0
        %v3966 = vadd.f32 0.0, %v3965
        %v3967 = vpop.f32.mrf.mxu0
        %v3968 = vadd.f32 0.0, %v3967
        %3969 = vmatmul.bf16.gmra.mxu0 %v1460
        %v3970 = vpop.f32.mrf.mxu0
        %v3971 = vadd.f32 0.0, %v3970
        %v3972 = vpop.f32.mrf.mxu0
        %v3973 = vadd.f32 0.0, %v3972
        %3974 = vmatmul.bf16.gmra.mxu0 %v1464
        %v3975 = vpop.f32.mrf.mxu0
        %v3976 = vadd.f32 0.0, %v3975
        %v3977 = vpop.f32.mrf.mxu0
        %v3978 = vadd.f32 0.0, %v3977
        %3979 = vmatmul.bf16.gmra.mxu0 %v1468
        %v3980 = vpop.f32.mrf.mxu0
        %v3981 = vadd.f32 0.0, %v3980
        %v3982 = vpop.f32.mrf.mxu0
        %v3983 = vadd.f32 0.0, %v3982
        %3984 = vdwg.mxu0
        %3985 = vmatpush.bf16.msra.mxu0 %v3201
        %3986 = vmatpush.bf16.msra.mxu0 %v3186
        %3987 = vmatpush.bf16.msra.mxu0 %v3171
        %3988 = vmatpush.bf16.msra.mxu0 %v3156
        %3989 = vmatpush.bf16.msra.mxu0 %v3141
        %3990 = vmatpush.bf16.msra.mxu0 %v3126
        %3991 = vmatpush.bf16.msra.mxu0 %v3111
        %3992 = vmatpush.bf16.msra.mxu0 %v3096
        %3993 = vmatmul.bf16.gmra.mxu0 %v1441
        %v3994 = vpop.f32.mrf.mxu0
        %v3995 = vadd.f32 %v3946, %v3994
        %v3996 = vpop.f32.mrf.mxu0
        %v3997 = vadd.f32 %v3948, %v3996
        %3998 = vmatmul.bf16.gmra.mxu0 %v1445
        %v3999 = vpop.f32.mrf.mxu0
        %v4000 = vadd.f32 %v3951, %v3999
        %v4001 = vpop.f32.mrf.mxu0
        %v4002 = vadd.f32 %v3953, %v4001
        %4003 = vmatmul.bf16.gmra.mxu0 %v1449
        %v4004 = vpop.f32.mrf.mxu0
        %v4005 = vadd.f32 %v3956, %v4004
        %v4006 = vpop.f32.mrf.mxu0
        %v4007 = vadd.f32 %v3958, %v4006
        %4008 = vmatmul.bf16.gmra.mxu0 %v1453
        %v4009 = vpop.f32.mrf.mxu0
        %v4010 = vadd.f32 %v3961, %v4009
        %v4011 = vpop.f32.mrf.mxu0
        %v4012 = vadd.f32 %v3963, %v4011
        %4013 = vmatmul.bf16.gmra.mxu0 %v1457
        %v4014 = vpop.f32.mrf.mxu0
        %v4015 = vadd.f32 %v3966, %v4014
        %v4016 = vpop.f32.mrf.mxu0
        %v4017 = vadd.f32 %v3968, %v4016
        %4018 = vmatmul.bf16.gmra.mxu0 %v1461
        %v4019 = vpop.f32.mrf.mxu0
        %v4020 = vadd.f32 %v3971, %v4019
        %v4021 = vpop.f32.mrf.mxu0
        %v4022 = vadd.f32 %v3973, %v4021
        %4023 = vmatmul.bf16.gmra.mxu0 %v1465
        %v4024 = vpop.f32.mrf.mxu0
        %v4025 = vadd.f32 %v3976, %v4024
        %v4026 = vpop.f32.mrf.mxu0
        %v4027 = vadd.f32 %v3978, %v4026
        %4028 = vmatmul.bf16.gmra.mxu0 %v1469
        %v4029 = vpop.f32.mrf.mxu0
        %v4030 = vadd.f32 %v3981, %v4029
        %v4031 = vpop.f32.mrf.mxu0
        %v4032 = vadd.f32 %v3983, %v4031
        %4033 = vdwg.mxu0
        %4034 = vmatpush.bf16.msra.mxu0 %v3321
        %4035 = vmatpush.bf16.msra.mxu0 %v3306
        %4036 = vmatpush.bf16.msra.mxu0 %v3291
        %4037 = vmatpush.bf16.msra.mxu0 %v3276
        %4038 = vmatpush.bf16.msra.mxu0 %v3261
        %4039 = vmatpush.bf16.msra.mxu0 %v3246
        %4040 = vmatpush.bf16.msra.mxu0 %v3231
        %4041 = vmatpush.bf16.msra.mxu0 %v3216
        %4042 = vmatmul.bf16.gmra.mxu0 %v1442
        %v4043 = vpop.f32.mrf.mxu0
        %v4044 = vadd.f32 %v3995, %v4043
        %v4045 = vpop.f32.mrf.mxu0
        %v4046 = vadd.f32 %v3997, %v4045
        %4047 = vmatmul.bf16.gmra.mxu0 %v1446
        %v4048 = vpop.f32.mrf.mxu0
        %v4049 = vadd.f32 %v4000, %v4048
        %v4050 = vpop.f32.mrf.mxu0
        %v4051 = vadd.f32 %v4002, %v4050
        %4052 = vmatmul.bf16.gmra.mxu0 %v1450
        %v4053 = vpop.f32.mrf.mxu0
        %v4054 = vadd.f32 %v4005, %v4053
        %v4055 = vpop.f32.mrf.mxu0
        %v4056 = vadd.f32 %v4007, %v4055
        %4057 = vmatmul.bf16.gmra.mxu0 %v1454
        %v4058 = vpop.f32.mrf.mxu0
        %v4059 = vadd.f32 %v4010, %v4058
        %v4060 = vpop.f32.mrf.mxu0
        %v4061 = vadd.f32 %v4012, %v4060
        %4062 = vmatmul.bf16.gmra.mxu0 %v1458
        %v4063 = vpop.f32.mrf.mxu0
        %v4064 = vadd.f32 %v4015, %v4063
        %v4065 = vpop.f32.mrf.mxu0
        %v4066 = vadd.f32 %v4017, %v4065
        %4067 = vmatmul.bf16.gmra.mxu0 %v1462
        %v4068 = vpop.f32.mrf.mxu0
        %v4069 = vadd.f32 %v4020, %v4068
        %v4070 = vpop.f32.mrf.mxu0
        %v4071 = vadd.f32 %v4022, %v4070
        %4072 = vmatmul.bf16.gmra.mxu0 %v1466
        %v4073 = vpop.f32.mrf.mxu0
        %v4074 = vadd.f32 %v4025, %v4073
        %v4075 = vpop.f32.mrf.mxu0
        %v4076 = vadd.f32 %v4027, %v4075
        %4077 = vmatmul.bf16.gmra.mxu0 %v1470
        %v4078 = vpop.f32.mrf.mxu0
        %v4079 = vadd.f32 %v4030, %v4078
        %v4080 = vpop.f32.mrf.mxu0
        %v4081 = vadd.f32 %v4032, %v4080
        %4082 = vdwg.mxu0
        %4083 = vmatpush.bf16.msra.mxu0 %v3441
        %4084 = vmatpush.bf16.msra.mxu0 %v3426
        %4085 = vmatpush.bf16.msra.mxu0 %v3411
        %4086 = vmatpush.bf16.msra.mxu0 %v3396
        %4087 = vmatpush.bf16.msra.mxu0 %v3381
        %4088 = vmatpush.bf16.msra.mxu0 %v3366
        %4089 = vmatpush.bf16.msra.mxu0 %v3351
        %4090 = vmatpush.bf16.msra.mxu0 %v3336
        %4091 = vmatmul.bf16.gmra.mxu0 %v1443
        %v4092 = vpop.f32.mrf.mxu0
        %v4093 = vadd.f32 %v4044, %v4092
        %v4094 = vpop.f32.mrf.mxu0
        %v4095 = vadd.f32 %v4046, %v4094
        %4096 = vmatmul.bf16.gmra.mxu0 %v1447
        %v4097 = vpop.f32.mrf.mxu0
        %v4098 = vadd.f32 %v4049, %v4097
        %v4099 = vpop.f32.mrf.mxu0
        %v4100 = vadd.f32 %v4051, %v4099
        %4101 = vmatmul.bf16.gmra.mxu0 %v1451
        %v4102 = vpop.f32.mrf.mxu0
        %v4103 = vadd.f32 %v4054, %v4102
        %v4104 = vpop.f32.mrf.mxu0
        %v4105 = vadd.f32 %v4056, %v4104
        %4106 = vmatmul.bf16.gmra.mxu0 %v1455
        %v4107 = vpop.f32.mrf.mxu0
        %v4108 = vadd.f32 %v4059, %v4107
        %v4109 = vpop.f32.mrf.mxu0
        %v4110 = vadd.f32 %v4061, %v4109
        %4111 = vmatmul.bf16.gmra.mxu0 %v1459
        %v4112 = vpop.f32.mrf.mxu0
        %v4113 = vadd.f32 %v4064, %v4112
        %v4114 = vpop.f32.mrf.mxu0
        %v4115 = vadd.f32 %v4066, %v4114
        %4116 = vmatmul.bf16.gmra.mxu0 %v1463
        %v4117 = vpop.f32.mrf.mxu0
        %v4118 = vadd.f32 %v4069, %v4117
        %v4119 = vpop.f32.mrf.mxu0
        %v4120 = vadd.f32 %v4071, %v4119
        %4121 = vmatmul.bf16.gmra.mxu0 %v1467
        %v4122 = vpop.f32.mrf.mxu0
        %v4123 = vadd.f32 %v4074, %v4122
        %v4124 = vpop.f32.mrf.mxu0
        %v4125 = vadd.f32 %v4076, %v4124
        %4126 = vmatmul.bf16.gmra.mxu0 %v1471
        %v4127 = vpop.f32.mrf.mxu0
        %v4128 = vadd.f32 %v4079, %v4127
        %v4129 = vpop.f32.mrf.mxu0
        %v4130 = vadd.f32 %v4081, %v4129
        %4131 = vdwg.mxu0
        %4132 = vmatpush.bf16.msra.mxu0 %v3082
        %4133 = vmatpush.bf16.msra.mxu0 %v3067
        %4134 = vmatpush.bf16.msra.mxu0 %v3052
        %4135 = vmatpush.bf16.msra.mxu0 %v3037
        %4136 = vmatpush.bf16.msra.mxu0 %v3022
        %4137 = vmatpush.bf16.msra.mxu0 %v3007
        %4138 = vmatpush.bf16.msra.mxu0 %v2992
        %4139 = vmatpush.bf16.msra.mxu0 %v2977
        %4140 = vmatmul.bf16.gmra.mxu0 %v1440
        %v4141 = vpop.f32.mrf.mxu0
        %v4142 = vadd.f32 0.0, %v4141
        %v4143 = vpop.f32.mrf.mxu0
        %v4144 = vadd.f32 0.0, %v4143
        %4145 = vmatmul.bf16.gmra.mxu0 %v1444
        %v4146 = vpop.f32.mrf.mxu0
        %v4147 = vadd.f32 0.0, %v4146
        %v4148 = vpop.f32.mrf.mxu0
        %v4149 = vadd.f32 0.0, %v4148
        %4150 = vmatmul.bf16.gmra.mxu0 %v1448
        %v4151 = vpop.f32.mrf.mxu0
        %v4152 = vadd.f32 0.0, %v4151
        %v4153 = vpop.f32.mrf.mxu0
        %v4154 = vadd.f32 0.0, %v4153
        %4155 = vmatmul.bf16.gmra.mxu0 %v1452
        %v4156 = vpop.f32.mrf.mxu0
        %v4157 = vadd.f32 0.0, %v4156
        %v4158 = vpop.f32.mrf.mxu0
        %v4159 = vadd.f32 0.0, %v4158
        %4160 = vmatmul.bf16.gmra.mxu0 %v1456
        %v4161 = vpop.f32.mrf.mxu0
        %v4162 = vadd.f32 0.0, %v4161
        %v4163 = vpop.f32.mrf.mxu0
        %v4164 = vadd.f32 0.0, %v4163
        %4165 = vmatmul.bf16.gmra.mxu0 %v1460
        %v4166 = vpop.f32.mrf.mxu0
        %v4167 = vadd.f32 0.0, %v4166
        %v4168 = vpop.f32.mrf.mxu0
        %v4169 = vadd.f32 0.0, %v4168
        %4170 = vmatmul.bf16.gmra.mxu0 %v1464
        %v4171 = vpop.f32.mrf.mxu0
        %v4172 = vadd.f32 0.0, %v4171
        %v4173 = vpop.f32.mrf.mxu0
        %v4174 = vadd.f32 0.0, %v4173
        %4175 = vmatmul.bf16.gmra.mxu0 %v1468
        %v4176 = vpop.f32.mrf.mxu0
        %v4177 = vadd.f32 0.0, %v4176
        %v4178 = vpop.f32.mrf.mxu0
        %v4179 = vadd.f32 0.0, %v4178
        %4180 = vdwg.mxu0
        %4181 = vmatpush.bf16.msra.mxu0 %v3202
        %4182 = vmatpush.bf16.msra.mxu0 %v3187
        %4183 = vmatpush.bf16.msra.mxu0 %v3172
        %4184 = vmatpush.bf16.msra.mxu0 %v3157
        %4185 = vmatpush.bf16.msra.mxu0 %v3142
        %4186 = vmatpush.bf16.msra.mxu0 %v3127
        %4187 = vmatpush.bf16.msra.mxu0 %v3112
        %4188 = vmatpush.bf16.msra.mxu0 %v3097
        %4189 = vmatmul.bf16.gmra.mxu0 %v1441
        %v4190 = vpop.f32.mrf.mxu0
        %v4191 = vadd.f32 %v4142, %v4190
        %v4192 = vpop.f32.mrf.mxu0
        %v4193 = vadd.f32 %v4144, %v4192
        %4194 = vmatmul.bf16.gmra.mxu0 %v1445
        %v4195 = vpop.f32.mrf.mxu0
        %v4196 = vadd.f32 %v4147, %v4195
        %v4197 = vpop.f32.mrf.mxu0
        %v4198 = vadd.f32 %v4149, %v4197
        %4199 = vmatmul.bf16.gmra.mxu0 %v1449
        %v4200 = vpop.f32.mrf.mxu0
        %v4201 = vadd.f32 %v4152, %v4200
        %v4202 = vpop.f32.mrf.mxu0
        %v4203 = vadd.f32 %v4154, %v4202
        %4204 = vmatmul.bf16.gmra.mxu0 %v1453
        %v4205 = vpop.f32.mrf.mxu0
        %v4206 = vadd.f32 %v4157, %v4205
        %v4207 = vpop.f32.mrf.mxu0
        %v4208 = vadd.f32 %v4159, %v4207
        %4209 = vmatmul.bf16.gmra.mxu0 %v1457
        %v4210 = vpop.f32.mrf.mxu0
        %v4211 = vadd.f32 %v4162, %v4210
        %v4212 = vpop.f32.mrf.mxu0
        %v4213 = vadd.f32 %v4164, %v4212
        %4214 = vmatmul.bf16.gmra.mxu0 %v1461
        %v4215 = vpop.f32.mrf.mxu0
        %v4216 = vadd.f32 %v4167, %v4215
        %v4217 = vpop.f32.mrf.mxu0
        %v4218 = vadd.f32 %v4169, %v4217
        %4219 = vmatmul.bf16.gmra.mxu0 %v1465
        %v4220 = vpop.f32.mrf.mxu0
        %v4221 = vadd.f32 %v4172, %v4220
        %v4222 = vpop.f32.mrf.mxu0
        %v4223 = vadd.f32 %v4174, %v4222
        %4224 = vmatmul.bf16.gmra.mxu0 %v1469
        %v4225 = vpop.f32.mrf.mxu0
        %v4226 = vadd.f32 %v4177, %v4225
        %v4227 = vpop.f32.mrf.mxu0
        %v4228 = vadd.f32 %v4179, %v4227
        %4229 = vdwg.mxu0
        %4230 = vmatpush.bf16.msra.mxu0 %v3322
        %4231 = vmatpush.bf16.msra.mxu0 %v3307
        %4232 = vmatpush.bf16.msra.mxu0 %v3292
        %4233 = vmatpush.bf16.msra.mxu0 %v3277
        %4234 = vmatpush.bf16.msra.mxu0 %v3262
        %4235 = vmatpush.bf16.msra.mxu0 %v3247
        %4236 = vmatpush.bf16.msra.mxu0 %v3232
        %4237 = vmatpush.bf16.msra.mxu0 %v3217
        %4238 = vmatmul.bf16.gmra.mxu0 %v1442
        %v4239 = vpop.f32.mrf.mxu0
        %v4240 = vadd.f32 %v4191, %v4239
        %v4241 = vpop.f32.mrf.mxu0
        %v4242 = vadd.f32 %v4193, %v4241
        %4243 = vmatmul.bf16.gmra.mxu0 %v1446
        %v4244 = vpop.f32.mrf.mxu0
        %v4245 = vadd.f32 %v4196, %v4244
        %v4246 = vpop.f32.mrf.mxu0
        %v4247 = vadd.f32 %v4198, %v4246
        %4248 = vmatmul.bf16.gmra.mxu0 %v1450
        %v4249 = vpop.f32.mrf.mxu0
        %v4250 = vadd.f32 %v4201, %v4249
        %v4251 = vpop.f32.mrf.mxu0
        %v4252 = vadd.f32 %v4203, %v4251
        %4253 = vmatmul.bf16.gmra.mxu0 %v1454
        %v4254 = vpop.f32.mrf.mxu0
        %v4255 = vadd.f32 %v4206, %v4254
        %v4256 = vpop.f32.mrf.mxu0
        %v4257 = vadd.f32 %v4208, %v4256
        %4258 = vmatmul.bf16.gmra.mxu0 %v1458
        %v4259 = vpop.f32.mrf.mxu0
        %v4260 = vadd.f32 %v4211, %v4259
        %v4261 = vpop.f32.mrf.mxu0
        %v4262 = vadd.f32 %v4213, %v4261
        %4263 = vmatmul.bf16.gmra.mxu0 %v1462
        %v4264 = vpop.f32.mrf.mxu0
        %v4265 = vadd.f32 %v4216, %v4264
        %v4266 = vpop.f32.mrf.mxu0
        %v4267 = vadd.f32 %v4218, %v4266
        %4268 = vmatmul.bf16.gmra.mxu0 %v1466
        %v4269 = vpop.f32.mrf.mxu0
        %v4270 = vadd.f32 %v4221, %v4269
        %v4271 = vpop.f32.mrf.mxu0
        %v4272 = vadd.f32 %v4223, %v4271
        %4273 = vmatmul.bf16.gmra.mxu0 %v1470
        %v4274 = vpop.f32.mrf.mxu0
        %v4275 = vadd.f32 %v4226, %v4274
        %v4276 = vpop.f32.mrf.mxu0
        %v4277 = vadd.f32 %v4228, %v4276
        %4278 = vdwg.mxu0
        %4279 = vmatpush.bf16.msra.mxu0 %v3442
        %4280 = vmatpush.bf16.msra.mxu0 %v3427
        %4281 = vmatpush.bf16.msra.mxu0 %v3412
        %4282 = vmatpush.bf16.msra.mxu0 %v3397
        %4283 = vmatpush.bf16.msra.mxu0 %v3382
        %4284 = vmatpush.bf16.msra.mxu0 %v3367
        %4285 = vmatpush.bf16.msra.mxu0 %v3352
        %4286 = vmatpush.bf16.msra.mxu0 %v3337
        %4287 = vmatmul.bf16.gmra.mxu0 %v1443
        %v4288 = vpop.f32.mrf.mxu0
        %v4289 = vadd.f32 %v4240, %v4288
        %v4290 = vpop.f32.mrf.mxu0
        %v4291 = vadd.f32 %v4242, %v4290
        %4292 = vmatmul.bf16.gmra.mxu0 %v1447
        %v4293 = vpop.f32.mrf.mxu0
        %v4294 = vadd.f32 %v4245, %v4293
        %v4295 = vpop.f32.mrf.mxu0
        %v4296 = vadd.f32 %v4247, %v4295
        %4297 = vmatmul.bf16.gmra.mxu0 %v1451
        %v4298 = vpop.f32.mrf.mxu0
        %v4299 = vadd.f32 %v4250, %v4298
        %v4300 = vpop.f32.mrf.mxu0
        %v4301 = vadd.f32 %v4252, %v4300
        %4302 = vmatmul.bf16.gmra.mxu0 %v1455
        %v4303 = vpop.f32.mrf.mxu0
        %v4304 = vadd.f32 %v4255, %v4303
        %v4305 = vpop.f32.mrf.mxu0
        %v4306 = vadd.f32 %v4257, %v4305
        %4307 = vmatmul.bf16.gmra.mxu0 %v1459
        %v4308 = vpop.f32.mrf.mxu0
        %v4309 = vadd.f32 %v4260, %v4308
        %v4310 = vpop.f32.mrf.mxu0
        %v4311 = vadd.f32 %v4262, %v4310
        %4312 = vmatmul.bf16.gmra.mxu0 %v1463
        %v4313 = vpop.f32.mrf.mxu0
        %v4314 = vadd.f32 %v4265, %v4313
        %v4315 = vpop.f32.mrf.mxu0
        %v4316 = vadd.f32 %v4267, %v4315
        %4317 = vmatmul.bf16.gmra.mxu0 %v1467
        %v4318 = vpop.f32.mrf.mxu0
        %v4319 = vadd.f32 %v4270, %v4318
        %v4320 = vpop.f32.mrf.mxu0
        %v4321 = vadd.f32 %v4272, %v4320
        %4322 = vmatmul.bf16.gmra.mxu0 %v1471
        %v4323 = vpop.f32.mrf.mxu0
        %v4324 = vadd.f32 %v4275, %v4323
        %v4325 = vpop.f32.mrf.mxu0
        %v4326 = vadd.f32 %v4277, %v4325
        %4327 = vdwg.mxu0
        %4328 = vmatpush.bf16.msra.mxu0 %v3083
        %4329 = vmatpush.bf16.msra.mxu0 %v3068
        %4330 = vmatpush.bf16.msra.mxu0 %v3053
        %4331 = vmatpush.bf16.msra.mxu0 %v3038
        %4332 = vmatpush.bf16.msra.mxu0 %v3023
        %4333 = vmatpush.bf16.msra.mxu0 %v3008
        %4334 = vmatpush.bf16.msra.mxu0 %v2993
        %4335 = vmatpush.bf16.msra.mxu0 %v2978
        %4336 = vmatmul.bf16.gmra.mxu0 %v1440
        %v4337 = vpop.f32.mrf.mxu0
        %v4338 = vadd.f32 0.0, %v4337
        %v4339 = vpop.f32.mrf.mxu0
        %v4340 = vadd.f32 0.0, %v4339
        %4341 = vmatmul.bf16.gmra.mxu0 %v1444
        %v4342 = vpop.f32.mrf.mxu0
        %v4343 = vadd.f32 0.0, %v4342
        %v4344 = vpop.f32.mrf.mxu0
        %v4345 = vadd.f32 0.0, %v4344
        %4346 = vmatmul.bf16.gmra.mxu0 %v1448
        %v4347 = vpop.f32.mrf.mxu0
        %v4348 = vadd.f32 0.0, %v4347
        %v4349 = vpop.f32.mrf.mxu0
        %v4350 = vadd.f32 0.0, %v4349
        %4351 = vmatmul.bf16.gmra.mxu0 %v1452
        %v4352 = vpop.f32.mrf.mxu0
        %v4353 = vadd.f32 0.0, %v4352
        %v4354 = vpop.f32.mrf.mxu0
        %v4355 = vadd.f32 0.0, %v4354
        %4356 = vmatmul.bf16.gmra.mxu0 %v1456
        %v4357 = vpop.f32.mrf.mxu0
        %v4358 = vadd.f32 0.0, %v4357
        %v4359 = vpop.f32.mrf.mxu0
        %v4360 = vadd.f32 0.0, %v4359
        %4361 = vmatmul.bf16.gmra.mxu0 %v1460
        %v4362 = vpop.f32.mrf.mxu0
        %v4363 = vadd.f32 0.0, %v4362
        %v4364 = vpop.f32.mrf.mxu0
        %v4365 = vadd.f32 0.0, %v4364
        %4366 = vmatmul.bf16.gmra.mxu0 %v1464
        %v4367 = vpop.f32.mrf.mxu0
        %v4368 = vadd.f32 0.0, %v4367
        %v4369 = vpop.f32.mrf.mxu0
        %v4370 = vadd.f32 0.0, %v4369
        %4371 = vmatmul.bf16.gmra.mxu0 %v1468
        %v4372 = vpop.f32.mrf.mxu0
        %v4373 = vadd.f32 0.0, %v4372
        %v4374 = vpop.f32.mrf.mxu0
        %v4375 = vadd.f32 0.0, %v4374
        %4376 = vdwg.mxu0
        %4377 = vmatpush.bf16.msra.mxu0 %v3203
        %4378 = vmatpush.bf16.msra.mxu0 %v3188
        %4379 = vmatpush.bf16.msra.mxu0 %v3173
        %4380 = vmatpush.bf16.msra.mxu0 %v3158
        %4381 = vmatpush.bf16.msra.mxu0 %v3143
        %4382 = vmatpush.bf16.msra.mxu0 %v3128
        %4383 = vmatpush.bf16.msra.mxu0 %v3113
        %4384 = vmatpush.bf16.msra.mxu0 %v3098
        %4385 = vmatmul.bf16.gmra.mxu0 %v1441
        %v4386 = vpop.f32.mrf.mxu0
        %v4387 = vadd.f32 %v4338, %v4386
        %v4388 = vpop.f32.mrf.mxu0
        %v4389 = vadd.f32 %v4340, %v4388
        %4390 = vmatmul.bf16.gmra.mxu0 %v1445
        %v4391 = vpop.f32.mrf.mxu0
        %v4392 = vadd.f32 %v4343, %v4391
        %v4393 = vpop.f32.mrf.mxu0
        %v4394 = vadd.f32 %v4345, %v4393
        %4395 = vmatmul.bf16.gmra.mxu0 %v1449
        %v4396 = vpop.f32.mrf.mxu0
        %v4397 = vadd.f32 %v4348, %v4396
        %v4398 = vpop.f32.mrf.mxu0
        %v4399 = vadd.f32 %v4350, %v4398
        %4400 = vmatmul.bf16.gmra.mxu0 %v1453
        %v4401 = vpop.f32.mrf.mxu0
        %v4402 = vadd.f32 %v4353, %v4401
        %v4403 = vpop.f32.mrf.mxu0
        %v4404 = vadd.f32 %v4355, %v4403
        %4405 = vmatmul.bf16.gmra.mxu0 %v1457
        %v4406 = vpop.f32.mrf.mxu0
        %v4407 = vadd.f32 %v4358, %v4406
        %v4408 = vpop.f32.mrf.mxu0
        %v4409 = vadd.f32 %v4360, %v4408
        %4410 = vmatmul.bf16.gmra.mxu0 %v1461
        %v4411 = vpop.f32.mrf.mxu0
        %v4412 = vadd.f32 %v4363, %v4411
        %v4413 = vpop.f32.mrf.mxu0
        %v4414 = vadd.f32 %v4365, %v4413
        %4415 = vmatmul.bf16.gmra.mxu0 %v1465
        %v4416 = vpop.f32.mrf.mxu0
        %v4417 = vadd.f32 %v4368, %v4416
        %v4418 = vpop.f32.mrf.mxu0
        %v4419 = vadd.f32 %v4370, %v4418
        %4420 = vmatmul.bf16.gmra.mxu0 %v1469
        %v4421 = vpop.f32.mrf.mxu0
        %v4422 = vadd.f32 %v4373, %v4421
        %v4423 = vpop.f32.mrf.mxu0
        %v4424 = vadd.f32 %v4375, %v4423
        %4425 = vdwg.mxu0
        %4426 = vmatpush.bf16.msra.mxu0 %v3323
        %4427 = vmatpush.bf16.msra.mxu0 %v3308
        %4428 = vmatpush.bf16.msra.mxu0 %v3293
        %4429 = vmatpush.bf16.msra.mxu0 %v3278
        %4430 = vmatpush.bf16.msra.mxu0 %v3263
        %4431 = vmatpush.bf16.msra.mxu0 %v3248
        %4432 = vmatpush.bf16.msra.mxu0 %v3233
        %4433 = vmatpush.bf16.msra.mxu0 %v3218
        %4434 = vmatmul.bf16.gmra.mxu0 %v1442
        %v4435 = vpop.f32.mrf.mxu0
        %v4436 = vadd.f32 %v4387, %v4435
        %v4437 = vpop.f32.mrf.mxu0
        %v4438 = vadd.f32 %v4389, %v4437
        %4439 = vmatmul.bf16.gmra.mxu0 %v1446
        %v4440 = vpop.f32.mrf.mxu0
        %v4441 = vadd.f32 %v4392, %v4440
        %v4442 = vpop.f32.mrf.mxu0
        %v4443 = vadd.f32 %v4394, %v4442
        %4444 = vmatmul.bf16.gmra.mxu0 %v1450
        %v4445 = vpop.f32.mrf.mxu0
        %v4446 = vadd.f32 %v4397, %v4445
        %v4447 = vpop.f32.mrf.mxu0
        %v4448 = vadd.f32 %v4399, %v4447
        %4449 = vmatmul.bf16.gmra.mxu0 %v1454
        %v4450 = vpop.f32.mrf.mxu0
        %v4451 = vadd.f32 %v4402, %v4450
        %v4452 = vpop.f32.mrf.mxu0
        %v4453 = vadd.f32 %v4404, %v4452
        %4454 = vmatmul.bf16.gmra.mxu0 %v1458
        %v4455 = vpop.f32.mrf.mxu0
        %v4456 = vadd.f32 %v4407, %v4455
        %v4457 = vpop.f32.mrf.mxu0
        %v4458 = vadd.f32 %v4409, %v4457
        %4459 = vmatmul.bf16.gmra.mxu0 %v1462
        %v4460 = vpop.f32.mrf.mxu0
        %v4461 = vadd.f32 %v4412, %v4460
        %v4462 = vpop.f32.mrf.mxu0
        %v4463 = vadd.f32 %v4414, %v4462
        %4464 = vmatmul.bf16.gmra.mxu0 %v1466
        %v4465 = vpop.f32.mrf.mxu0
        %v4466 = vadd.f32 %v4417, %v4465
        %v4467 = vpop.f32.mrf.mxu0
        %v4468 = vadd.f32 %v4419, %v4467
        %4469 = vmatmul.bf16.gmra.mxu0 %v1470
        %v4470 = vpop.f32.mrf.mxu0
        %v4471 = vadd.f32 %v4422, %v4470
        %v4472 = vpop.f32.mrf.mxu0
        %v4473 = vadd.f32 %v4424, %v4472
        %4474 = vdwg.mxu0
        %4475 = vmatpush.bf16.msra.mxu0 %v3443
        %4476 = vmatpush.bf16.msra.mxu0 %v3428
        %4477 = vmatpush.bf16.msra.mxu0 %v3413
        %4478 = vmatpush.bf16.msra.mxu0 %v3398
        %4479 = vmatpush.bf16.msra.mxu0 %v3383
        %4480 = vmatpush.bf16.msra.mxu0 %v3368
        %4481 = vmatpush.bf16.msra.mxu0 %v3353
        %4482 = vmatpush.bf16.msra.mxu0 %v3338
        %4483 = vmatmul.bf16.gmra.mxu0 %v1443
        %v4484 = vpop.f32.mrf.mxu0
        %v4485 = vadd.f32 %v4436, %v4484
        %v4486 = vpop.f32.mrf.mxu0
        %v4487 = vadd.f32 %v4438, %v4486
        %4488 = vmatmul.bf16.gmra.mxu0 %v1447
        %v4489 = vpop.f32.mrf.mxu0
        %v4490 = vadd.f32 %v4441, %v4489
        %v4491 = vpop.f32.mrf.mxu0
        %v4492 = vadd.f32 %v4443, %v4491
        %4493 = vmatmul.bf16.gmra.mxu0 %v1451
        %v4494 = vpop.f32.mrf.mxu0
        %v4495 = vadd.f32 %v4446, %v4494
        %v4496 = vpop.f32.mrf.mxu0
        %v4497 = vadd.f32 %v4448, %v4496
        %4498 = vmatmul.bf16.gmra.mxu0 %v1455
        %v4499 = vpop.f32.mrf.mxu0
        %v4500 = vadd.f32 %v4451, %v4499
        %v4501 = vpop.f32.mrf.mxu0
        %v4502 = vadd.f32 %v4453, %v4501
        %4503 = vmatmul.bf16.gmra.mxu0 %v1459
        %v4504 = vpop.f32.mrf.mxu0
        %v4505 = vadd.f32 %v4456, %v4504
        %v4506 = vpop.f32.mrf.mxu0
        %v4507 = vadd.f32 %v4458, %v4506
        %4508 = vmatmul.bf16.gmra.mxu0 %v1463
        %v4509 = vpop.f32.mrf.mxu0
        %v4510 = vadd.f32 %v4461, %v4509
        %v4511 = vpop.f32.mrf.mxu0
        %v4512 = vadd.f32 %v4463, %v4511
        %4513 = vmatmul.bf16.gmra.mxu0 %v1467
        %v4514 = vpop.f32.mrf.mxu0
        %v4515 = vadd.f32 %v4466, %v4514
        %v4516 = vpop.f32.mrf.mxu0
        %v4517 = vadd.f32 %v4468, %v4516
        %4518 = vmatmul.bf16.gmra.mxu0 %v1471
        %v4519 = vpop.f32.mrf.mxu0
        %v4520 = vadd.f32 %v4471, %v4519
        %v4521 = vpop.f32.mrf.mxu0
        %v4522 = vadd.f32 %v4473, %v4521
        %4523 = vdwg.mxu0
        %4524 = vmatpush.bf16.msra.mxu0 %v3084
        %4525 = vmatpush.bf16.msra.mxu0 %v3069
        %4526 = vmatpush.bf16.msra.mxu0 %v3054
        %4527 = vmatpush.bf16.msra.mxu0 %v3039
        %4528 = vmatpush.bf16.msra.mxu0 %v3024
        %4529 = vmatpush.bf16.msra.mxu0 %v3009
        %4530 = vmatpush.bf16.msra.mxu0 %v2994
        %4531 = vmatpush.bf16.msra.mxu0 %v2979
        %4532 = vmatmul.bf16.gmra.mxu0 %v1440
        %v4533 = vpop.f32.mrf.mxu0
        %v4534 = vadd.f32 0.0, %v4533
        %v4535 = vpop.f32.mrf.mxu0
        %v4536 = vadd.f32 0.0, %v4535
        %4537 = vmatmul.bf16.gmra.mxu0 %v1444
        %v4538 = vpop.f32.mrf.mxu0
        %v4539 = vadd.f32 0.0, %v4538
        %v4540 = vpop.f32.mrf.mxu0
        %v4541 = vadd.f32 0.0, %v4540
        %4542 = vmatmul.bf16.gmra.mxu0 %v1448
        %v4543 = vpop.f32.mrf.mxu0
        %v4544 = vadd.f32 0.0, %v4543
        %v4545 = vpop.f32.mrf.mxu0
        %v4546 = vadd.f32 0.0, %v4545
        %4547 = vmatmul.bf16.gmra.mxu0 %v1452
        %v4548 = vpop.f32.mrf.mxu0
        %v4549 = vadd.f32 0.0, %v4548
        %v4550 = vpop.f32.mrf.mxu0
        %v4551 = vadd.f32 0.0, %v4550
        %4552 = vmatmul.bf16.gmra.mxu0 %v1456
        %v4553 = vpop.f32.mrf.mxu0
        %v4554 = vadd.f32 0.0, %v4553
        %v4555 = vpop.f32.mrf.mxu0
        %v4556 = vadd.f32 0.0, %v4555
        %4557 = vmatmul.bf16.gmra.mxu0 %v1460
        %v4558 = vpop.f32.mrf.mxu0
        %v4559 = vadd.f32 0.0, %v4558
        %v4560 = vpop.f32.mrf.mxu0
        %v4561 = vadd.f32 0.0, %v4560
        %4562 = vmatmul.bf16.gmra.mxu0 %v1464
        %v4563 = vpop.f32.mrf.mxu0
        %v4564 = vadd.f32 0.0, %v4563
        %v4565 = vpop.f32.mrf.mxu0
        %v4566 = vadd.f32 0.0, %v4565
        %4567 = vmatmul.bf16.gmra.mxu0 %v1468
        %v4568 = vpop.f32.mrf.mxu0
        %v4569 = vadd.f32 0.0, %v4568
        %v4570 = vpop.f32.mrf.mxu0
        %v4571 = vadd.f32 0.0, %v4570
        %4572 = vdwg.mxu0
        %4573 = vmatpush.bf16.msra.mxu0 %v3204
        %4574 = vmatpush.bf16.msra.mxu0 %v3189
        %4575 = vmatpush.bf16.msra.mxu0 %v3174
        %4576 = vmatpush.bf16.msra.mxu0 %v3159
        %4577 = vmatpush.bf16.msra.mxu0 %v3144
        %4578 = vmatpush.bf16.msra.mxu0 %v3129
        %4579 = vmatpush.bf16.msra.mxu0 %v3114
        %4580 = vmatpush.bf16.msra.mxu0 %v3099
        %4581 = vmatmul.bf16.gmra.mxu0 %v1441
        %v4582 = vpop.f32.mrf.mxu0
        %v4583 = vadd.f32 %v4534, %v4582
        %v4584 = vpop.f32.mrf.mxu0
        %v4585 = vadd.f32 %v4536, %v4584
        %4586 = vmatmul.bf16.gmra.mxu0 %v1445
        %v4587 = vpop.f32.mrf.mxu0
        %v4588 = vadd.f32 %v4539, %v4587
        %v4589 = vpop.f32.mrf.mxu0
        %v4590 = vadd.f32 %v4541, %v4589
        %4591 = vmatmul.bf16.gmra.mxu0 %v1449
        %v4592 = vpop.f32.mrf.mxu0
        %v4593 = vadd.f32 %v4544, %v4592
        %v4594 = vpop.f32.mrf.mxu0
        %v4595 = vadd.f32 %v4546, %v4594
        %4596 = vmatmul.bf16.gmra.mxu0 %v1453
        %v4597 = vpop.f32.mrf.mxu0
        %v4598 = vadd.f32 %v4549, %v4597
        %v4599 = vpop.f32.mrf.mxu0
        %v4600 = vadd.f32 %v4551, %v4599
        %4601 = vmatmul.bf16.gmra.mxu0 %v1457
        %v4602 = vpop.f32.mrf.mxu0
        %v4603 = vadd.f32 %v4554, %v4602
        %v4604 = vpop.f32.mrf.mxu0
        %v4605 = vadd.f32 %v4556, %v4604
        %4606 = vmatmul.bf16.gmra.mxu0 %v1461
        %v4607 = vpop.f32.mrf.mxu0
        %v4608 = vadd.f32 %v4559, %v4607
        %v4609 = vpop.f32.mrf.mxu0
        %v4610 = vadd.f32 %v4561, %v4609
        %4611 = vmatmul.bf16.gmra.mxu0 %v1465
        %v4612 = vpop.f32.mrf.mxu0
        %v4613 = vadd.f32 %v4564, %v4612
        %v4614 = vpop.f32.mrf.mxu0
        %v4615 = vadd.f32 %v4566, %v4614
        %4616 = vmatmul.bf16.gmra.mxu0 %v1469
        %v4617 = vpop.f32.mrf.mxu0
        %v4618 = vadd.f32 %v4569, %v4617
        %v4619 = vpop.f32.mrf.mxu0
        %v4620 = vadd.f32 %v4571, %v4619
        %4621 = vdwg.mxu0
        %4622 = vmatpush.bf16.msra.mxu0 %v3324
        %4623 = vmatpush.bf16.msra.mxu0 %v3309
        %4624 = vmatpush.bf16.msra.mxu0 %v3294
        %4625 = vmatpush.bf16.msra.mxu0 %v3279
        %4626 = vmatpush.bf16.msra.mxu0 %v3264
        %4627 = vmatpush.bf16.msra.mxu0 %v3249
        %4628 = vmatpush.bf16.msra.mxu0 %v3234
        %4629 = vmatpush.bf16.msra.mxu0 %v3219
        %4630 = vmatmul.bf16.gmra.mxu0 %v1442
        %v4631 = vpop.f32.mrf.mxu0
        %v4632 = vadd.f32 %v4583, %v4631
        %v4633 = vpop.f32.mrf.mxu0
        %v4634 = vadd.f32 %v4585, %v4633
        %4635 = vmatmul.bf16.gmra.mxu0 %v1446
        %v4636 = vpop.f32.mrf.mxu0
        %v4637 = vadd.f32 %v4588, %v4636
        %v4638 = vpop.f32.mrf.mxu0
        %v4639 = vadd.f32 %v4590, %v4638
        %4640 = vmatmul.bf16.gmra.mxu0 %v1450
        %v4641 = vpop.f32.mrf.mxu0
        %v4642 = vadd.f32 %v4593, %v4641
        %v4643 = vpop.f32.mrf.mxu0
        %v4644 = vadd.f32 %v4595, %v4643
        %4645 = vmatmul.bf16.gmra.mxu0 %v1454
        %v4646 = vpop.f32.mrf.mxu0
        %v4647 = vadd.f32 %v4598, %v4646
        %v4648 = vpop.f32.mrf.mxu0
        %v4649 = vadd.f32 %v4600, %v4648
        %4650 = vmatmul.bf16.gmra.mxu0 %v1458
        %v4651 = vpop.f32.mrf.mxu0
        %v4652 = vadd.f32 %v4603, %v4651
        %v4653 = vpop.f32.mrf.mxu0
        %v4654 = vadd.f32 %v4605, %v4653
        %4655 = vmatmul.bf16.gmra.mxu0 %v1462
        %v4656 = vpop.f32.mrf.mxu0
        %v4657 = vadd.f32 %v4608, %v4656
        %v4658 = vpop.f32.mrf.mxu0
        %v4659 = vadd.f32 %v4610, %v4658
        %4660 = vmatmul.bf16.gmra.mxu0 %v1466
        %v4661 = vpop.f32.mrf.mxu0
        %v4662 = vadd.f32 %v4613, %v4661
        %v4663 = vpop.f32.mrf.mxu0
        %v4664 = vadd.f32 %v4615, %v4663
        %4665 = vmatmul.bf16.gmra.mxu0 %v1470
        %v4666 = vpop.f32.mrf.mxu0
        %v4667 = vadd.f32 %v4618, %v4666
        %v4668 = vpop.f32.mrf.mxu0
        %v4669 = vadd.f32 %v4620, %v4668
        %4670 = vdwg.mxu0
        %4671 = vmatpush.bf16.msra.mxu0 %v3444
        %4672 = vmatpush.bf16.msra.mxu0 %v3429
        %4673 = vmatpush.bf16.msra.mxu0 %v3414
        %4674 = vmatpush.bf16.msra.mxu0 %v3399
        %4675 = vmatpush.bf16.msra.mxu0 %v3384
        %4676 = vmatpush.bf16.msra.mxu0 %v3369
        %4677 = vmatpush.bf16.msra.mxu0 %v3354
        %4678 = vmatpush.bf16.msra.mxu0 %v3339
        %4679 = vmatmul.bf16.gmra.mxu0 %v1443
        %v4680 = vpop.f32.mrf.mxu0
        %v4681 = vadd.f32 %v4632, %v4680
        %v4682 = vpop.f32.mrf.mxu0
        %v4683 = vadd.f32 %v4634, %v4682
        %4684 = vmatmul.bf16.gmra.mxu0 %v1447
        %v4685 = vpop.f32.mrf.mxu0
        %v4686 = vadd.f32 %v4637, %v4685
        %v4687 = vpop.f32.mrf.mxu0
        %v4688 = vadd.f32 %v4639, %v4687
        %4689 = vmatmul.bf16.gmra.mxu0 %v1451
        %v4690 = vpop.f32.mrf.mxu0
        %v4691 = vadd.f32 %v4642, %v4690
        %v4692 = vpop.f32.mrf.mxu0
        %v4693 = vadd.f32 %v4644, %v4692
        %4694 = vmatmul.bf16.gmra.mxu0 %v1455
        %v4695 = vpop.f32.mrf.mxu0
        %v4696 = vadd.f32 %v4647, %v4695
        %v4697 = vpop.f32.mrf.mxu0
        %v4698 = vadd.f32 %v4649, %v4697
        %4699 = vmatmul.bf16.gmra.mxu0 %v1459
        %v4700 = vpop.f32.mrf.mxu0
        %v4701 = vadd.f32 %v4652, %v4700
        %v4702 = vpop.f32.mrf.mxu0
        %v4703 = vadd.f32 %v4654, %v4702
        %4704 = vmatmul.bf16.gmra.mxu0 %v1463
        %v4705 = vpop.f32.mrf.mxu0
        %v4706 = vadd.f32 %v4657, %v4705
        %v4707 = vpop.f32.mrf.mxu0
        %v4708 = vadd.f32 %v4659, %v4707
        %4709 = vmatmul.bf16.gmra.mxu0 %v1467
        %v4710 = vpop.f32.mrf.mxu0
        %v4711 = vadd.f32 %v4662, %v4710
        %v4712 = vpop.f32.mrf.mxu0
        %v4713 = vadd.f32 %v4664, %v4712
        %4714 = vmatmul.bf16.gmra.mxu0 %v1471
        %v4715 = vpop.f32.mrf.mxu0
        %v4716 = vadd.f32 %v4667, %v4715
        %v4717 = vpop.f32.mrf.mxu0
        %v4718 = vadd.f32 %v4669, %v4717
        %4719 = vdwg.mxu0
        %4720 = vmatpush.bf16.msra.mxu0 %v3085
        %4721 = vmatpush.bf16.msra.mxu0 %v3070
        %4722 = vmatpush.bf16.msra.mxu0 %v3055
        %4723 = vmatpush.bf16.msra.mxu0 %v3040
        %4724 = vmatpush.bf16.msra.mxu0 %v3025
        %4725 = vmatpush.bf16.msra.mxu0 %v3010
        %4726 = vmatpush.bf16.msra.mxu0 %v2995
        %4727 = vmatpush.bf16.msra.mxu0 %v2980
        %4728 = vmatmul.bf16.gmra.mxu0 %v1440
        %v4729 = vpop.f32.mrf.mxu0
        %v4730 = vadd.f32 0.0, %v4729
        %v4731 = vpop.f32.mrf.mxu0
        %v4732 = vadd.f32 0.0, %v4731
        %4733 = vmatmul.bf16.gmra.mxu0 %v1444
        %v4734 = vpop.f32.mrf.mxu0
        %v4735 = vadd.f32 0.0, %v4734
        %v4736 = vpop.f32.mrf.mxu0
        %v4737 = vadd.f32 0.0, %v4736
        %4738 = vmatmul.bf16.gmra.mxu0 %v1448
        %v4739 = vpop.f32.mrf.mxu0
        %v4740 = vadd.f32 0.0, %v4739
        %v4741 = vpop.f32.mrf.mxu0
        %v4742 = vadd.f32 0.0, %v4741
        %4743 = vmatmul.bf16.gmra.mxu0 %v1452
        %v4744 = vpop.f32.mrf.mxu0
        %v4745 = vadd.f32 0.0, %v4744
        %v4746 = vpop.f32.mrf.mxu0
        %v4747 = vadd.f32 0.0, %v4746
        %4748 = vmatmul.bf16.gmra.mxu0 %v1456
        %v4749 = vpop.f32.mrf.mxu0
        %v4750 = vadd.f32 0.0, %v4749
        %v4751 = vpop.f32.mrf.mxu0
        %v4752 = vadd.f32 0.0, %v4751
        %4753 = vmatmul.bf16.gmra.mxu0 %v1460
        %v4754 = vpop.f32.mrf.mxu0
        %v4755 = vadd.f32 0.0, %v4754
        %v4756 = vpop.f32.mrf.mxu0
        %v4757 = vadd.f32 0.0, %v4756
        %4758 = vmatmul.bf16.gmra.mxu0 %v1464
        %v4759 = vpop.f32.mrf.mxu0
        %v4760 = vadd.f32 0.0, %v4759
        %v4761 = vpop.f32.mrf.mxu0
        %v4762 = vadd.f32 0.0, %v4761
        %4763 = vmatmul.bf16.gmra.mxu0 %v1468
        %v4764 = vpop.f32.mrf.mxu0
        %v4765 = vadd.f32 0.0, %v4764
        %v4766 = vpop.f32.mrf.mxu0
        %v4767 = vadd.f32 0.0, %v4766
        %4768 = vdwg.mxu0
        %4769 = vmatpush.bf16.msra.mxu0 %v3205
        %4770 = vmatpush.bf16.msra.mxu0 %v3190
        %4771 = vmatpush.bf16.msra.mxu0 %v3175
        %4772 = vmatpush.bf16.msra.mxu0 %v3160
        %4773 = vmatpush.bf16.msra.mxu0 %v3145
        %4774 = vmatpush.bf16.msra.mxu0 %v3130
        %4775 = vmatpush.bf16.msra.mxu0 %v3115
        %4776 = vmatpush.bf16.msra.mxu0 %v3100
        %4777 = vmatmul.bf16.gmra.mxu0 %v1441
        %v4778 = vpop.f32.mrf.mxu0
        %v4779 = vadd.f32 %v4730, %v4778
        %v4780 = vpop.f32.mrf.mxu0
        %v4781 = vadd.f32 %v4732, %v4780
        %4782 = vmatmul.bf16.gmra.mxu0 %v1445
        %v4783 = vpop.f32.mrf.mxu0
        %v4784 = vadd.f32 %v4735, %v4783
        %v4785 = vpop.f32.mrf.mxu0
        %v4786 = vadd.f32 %v4737, %v4785
        %4787 = vmatmul.bf16.gmra.mxu0 %v1449
        %v4788 = vpop.f32.mrf.mxu0
        %v4789 = vadd.f32 %v4740, %v4788
        %v4790 = vpop.f32.mrf.mxu0
        %v4791 = vadd.f32 %v4742, %v4790
        %4792 = vmatmul.bf16.gmra.mxu0 %v1453
        %v4793 = vpop.f32.mrf.mxu0
        %v4794 = vadd.f32 %v4745, %v4793
        %v4795 = vpop.f32.mrf.mxu0
        %v4796 = vadd.f32 %v4747, %v4795
        %4797 = vmatmul.bf16.gmra.mxu0 %v1457
        %v4798 = vpop.f32.mrf.mxu0
        %v4799 = vadd.f32 %v4750, %v4798
        %v4800 = vpop.f32.mrf.mxu0
        %v4801 = vadd.f32 %v4752, %v4800
        %4802 = vmatmul.bf16.gmra.mxu0 %v1461
        %v4803 = vpop.f32.mrf.mxu0
        %v4804 = vadd.f32 %v4755, %v4803
        %v4805 = vpop.f32.mrf.mxu0
        %v4806 = vadd.f32 %v4757, %v4805
        %4807 = vmatmul.bf16.gmra.mxu0 %v1465
        %v4808 = vpop.f32.mrf.mxu0
        %v4809 = vadd.f32 %v4760, %v4808
        %v4810 = vpop.f32.mrf.mxu0
        %v4811 = vadd.f32 %v4762, %v4810
        %4812 = vmatmul.bf16.gmra.mxu0 %v1469
        %v4813 = vpop.f32.mrf.mxu0
        %v4814 = vadd.f32 %v4765, %v4813
        %v4815 = vpop.f32.mrf.mxu0
        %v4816 = vadd.f32 %v4767, %v4815
        %4817 = vdwg.mxu0
        %4818 = vmatpush.bf16.msra.mxu0 %v3325
        %4819 = vmatpush.bf16.msra.mxu0 %v3310
        %4820 = vmatpush.bf16.msra.mxu0 %v3295
        %4821 = vmatpush.bf16.msra.mxu0 %v3280
        %4822 = vmatpush.bf16.msra.mxu0 %v3265
        %4823 = vmatpush.bf16.msra.mxu0 %v3250
        %4824 = vmatpush.bf16.msra.mxu0 %v3235
        %4825 = vmatpush.bf16.msra.mxu0 %v3220
        %4826 = vmatmul.bf16.gmra.mxu0 %v1442
        %v4827 = vpop.f32.mrf.mxu0
        %v4828 = vadd.f32 %v4779, %v4827
        %v4829 = vpop.f32.mrf.mxu0
        %v4830 = vadd.f32 %v4781, %v4829
        %4831 = vmatmul.bf16.gmra.mxu0 %v1446
        %v4832 = vpop.f32.mrf.mxu0
        %v4833 = vadd.f32 %v4784, %v4832
        %v4834 = vpop.f32.mrf.mxu0
        %v4835 = vadd.f32 %v4786, %v4834
        %4836 = vmatmul.bf16.gmra.mxu0 %v1450
        %v4837 = vpop.f32.mrf.mxu0
        %v4838 = vadd.f32 %v4789, %v4837
        %v4839 = vpop.f32.mrf.mxu0
        %v4840 = vadd.f32 %v4791, %v4839
        %4841 = vmatmul.bf16.gmra.mxu0 %v1454
        %v4842 = vpop.f32.mrf.mxu0
        %v4843 = vadd.f32 %v4794, %v4842
        %v4844 = vpop.f32.mrf.mxu0
        %v4845 = vadd.f32 %v4796, %v4844
        %4846 = vmatmul.bf16.gmra.mxu0 %v1458
        %v4847 = vpop.f32.mrf.mxu0
        %v4848 = vadd.f32 %v4799, %v4847
        %v4849 = vpop.f32.mrf.mxu0
        %v4850 = vadd.f32 %v4801, %v4849
        %4851 = vmatmul.bf16.gmra.mxu0 %v1462
        %v4852 = vpop.f32.mrf.mxu0
        %v4853 = vadd.f32 %v4804, %v4852
        %v4854 = vpop.f32.mrf.mxu0
        %v4855 = vadd.f32 %v4806, %v4854
        %4856 = vmatmul.bf16.gmra.mxu0 %v1466
        %v4857 = vpop.f32.mrf.mxu0
        %v4858 = vadd.f32 %v4809, %v4857
        %v4859 = vpop.f32.mrf.mxu0
        %v4860 = vadd.f32 %v4811, %v4859
        %4861 = vmatmul.bf16.gmra.mxu0 %v1470
        %v4862 = vpop.f32.mrf.mxu0
        %v4863 = vadd.f32 %v4814, %v4862
        %v4864 = vpop.f32.mrf.mxu0
        %v4865 = vadd.f32 %v4816, %v4864
        %4866 = vdwg.mxu0
        %4867 = vmatpush.bf16.msra.mxu0 %v3445
        %4868 = vmatpush.bf16.msra.mxu0 %v3430
        %4869 = vmatpush.bf16.msra.mxu0 %v3415
        %4870 = vmatpush.bf16.msra.mxu0 %v3400
        %4871 = vmatpush.bf16.msra.mxu0 %v3385
        %4872 = vmatpush.bf16.msra.mxu0 %v3370
        %4873 = vmatpush.bf16.msra.mxu0 %v3355
        %4874 = vmatpush.bf16.msra.mxu0 %v3340
        %4875 = vmatmul.bf16.gmra.mxu0 %v1443
        %v4876 = vpop.f32.mrf.mxu0
        %v4877 = vadd.f32 %v4828, %v4876
        %v4878 = vpop.f32.mrf.mxu0
        %v4879 = vadd.f32 %v4830, %v4878
        %4880 = vmatmul.bf16.gmra.mxu0 %v1447
        %v4881 = vpop.f32.mrf.mxu0
        %v4882 = vadd.f32 %v4833, %v4881
        %v4883 = vpop.f32.mrf.mxu0
        %v4884 = vadd.f32 %v4835, %v4883
        %4885 = vmatmul.bf16.gmra.mxu0 %v1451
        %v4886 = vpop.f32.mrf.mxu0
        %v4887 = vadd.f32 %v4838, %v4886
        %v4888 = vpop.f32.mrf.mxu0
        %v4889 = vadd.f32 %v4840, %v4888
        %4890 = vmatmul.bf16.gmra.mxu0 %v1455
        %v4891 = vpop.f32.mrf.mxu0
        %v4892 = vadd.f32 %v4843, %v4891
        %v4893 = vpop.f32.mrf.mxu0
        %v4894 = vadd.f32 %v4845, %v4893
        %4895 = vmatmul.bf16.gmra.mxu0 %v1459
        %v4896 = vpop.f32.mrf.mxu0
        %v4897 = vadd.f32 %v4848, %v4896
        %v4898 = vpop.f32.mrf.mxu0
        %v4899 = vadd.f32 %v4850, %v4898
        %4900 = vmatmul.bf16.gmra.mxu0 %v1463
        %v4901 = vpop.f32.mrf.mxu0
        %v4902 = vadd.f32 %v4853, %v4901
        %v4903 = vpop.f32.mrf.mxu0
        %v4904 = vadd.f32 %v4855, %v4903
        %4905 = vmatmul.bf16.gmra.mxu0 %v1467
        %v4906 = vpop.f32.mrf.mxu0
        %v4907 = vadd.f32 %v4858, %v4906
        %v4908 = vpop.f32.mrf.mxu0
        %v4909 = vadd.f32 %v4860, %v4908
        %4910 = vmatmul.bf16.gmra.mxu0 %v1471
        %v4911 = vpop.f32.mrf.mxu0
        %v4912 = vadd.f32 %v4863, %v4911
        %v4913 = vpop.f32.mrf.mxu0
        %v4914 = vadd.f32 %v4865, %v4913
        %4915 = vdwg.mxu0
        %4916 = vmatpush.bf16.msra.mxu0 %v3086
        %4917 = vmatpush.bf16.msra.mxu0 %v3071
        %4918 = vmatpush.bf16.msra.mxu0 %v3056
        %4919 = vmatpush.bf16.msra.mxu0 %v3041
        %4920 = vmatpush.bf16.msra.mxu0 %v3026
        %4921 = vmatpush.bf16.msra.mxu0 %v3011
        %4922 = vmatpush.bf16.msra.mxu0 %v2996
        %4923 = vmatpush.bf16.msra.mxu0 %v2981
        %4924 = vmatmul.bf16.gmra.mxu0 %v1440
        %v4925 = vpop.f32.mrf.mxu0
        %v4926 = vadd.f32 0.0, %v4925
        %v4927 = vpop.f32.mrf.mxu0
        %v4928 = vadd.f32 0.0, %v4927
        %4929 = vmatmul.bf16.gmra.mxu0 %v1444
        %v4930 = vpop.f32.mrf.mxu0
        %v4931 = vadd.f32 0.0, %v4930
        %v4932 = vpop.f32.mrf.mxu0
        %v4933 = vadd.f32 0.0, %v4932
        %4934 = vmatmul.bf16.gmra.mxu0 %v1448
        %v4935 = vpop.f32.mrf.mxu0
        %v4936 = vadd.f32 0.0, %v4935
        %v4937 = vpop.f32.mrf.mxu0
        %v4938 = vadd.f32 0.0, %v4937
        %4939 = vmatmul.bf16.gmra.mxu0 %v1452
        %v4940 = vpop.f32.mrf.mxu0
        %v4941 = vadd.f32 0.0, %v4940
        %v4942 = vpop.f32.mrf.mxu0
        %v4943 = vadd.f32 0.0, %v4942
        %4944 = vmatmul.bf16.gmra.mxu0 %v1456
        %v4945 = vpop.f32.mrf.mxu0
        %v4946 = vadd.f32 0.0, %v4945
        %v4947 = vpop.f32.mrf.mxu0
        %v4948 = vadd.f32 0.0, %v4947
        %4949 = vmatmul.bf16.gmra.mxu0 %v1460
        %v4950 = vpop.f32.mrf.mxu0
        %v4951 = vadd.f32 0.0, %v4950
        %v4952 = vpop.f32.mrf.mxu0
        %v4953 = vadd.f32 0.0, %v4952
        %4954 = vmatmul.bf16.gmra.mxu0 %v1464
        %v4955 = vpop.f32.mrf.mxu0
        %v4956 = vadd.f32 0.0, %v4955
        %v4957 = vpop.f32.mrf.mxu0
        %v4958 = vadd.f32 0.0, %v4957
        %4959 = vmatmul.bf16.gmra.mxu0 %v1468
        %v4960 = vpop.f32.mrf.mxu0
        %v4961 = vadd.f32 0.0, %v4960
        %v4962 = vpop.f32.mrf.mxu0
        %v4963 = vadd.f32 0.0, %v4962
        %4964 = vdwg.mxu0
        %4965 = vmatpush.bf16.msra.mxu0 %v3206
        %4966 = vmatpush.bf16.msra.mxu0 %v3191
        %4967 = vmatpush.bf16.msra.mxu0 %v3176
        %4968 = vmatpush.bf16.msra.mxu0 %v3161
        %4969 = vmatpush.bf16.msra.mxu0 %v3146
        %4970 = vmatpush.bf16.msra.mxu0 %v3131
        %4971 = vmatpush.bf16.msra.mxu0 %v3116
        %4972 = vmatpush.bf16.msra.mxu0 %v3101
        %4973 = vmatmul.bf16.gmra.mxu0 %v1441
        %v4974 = vpop.f32.mrf.mxu0
        %v4975 = vadd.f32 %v4926, %v4974
        %v4976 = vpop.f32.mrf.mxu0
        %v4977 = vadd.f32 %v4928, %v4976
        %4978 = vmatmul.bf16.gmra.mxu0 %v1445
        %v4979 = vpop.f32.mrf.mxu0
        %v4980 = vadd.f32 %v4931, %v4979
        %v4981 = vpop.f32.mrf.mxu0
        %v4982 = vadd.f32 %v4933, %v4981
        %4983 = vmatmul.bf16.gmra.mxu0 %v1449
        %v4984 = vpop.f32.mrf.mxu0
        %v4985 = vadd.f32 %v4936, %v4984
        %v4986 = vpop.f32.mrf.mxu0
        %v4987 = vadd.f32 %v4938, %v4986
        %4988 = vmatmul.bf16.gmra.mxu0 %v1453
        %v4989 = vpop.f32.mrf.mxu0
        %v4990 = vadd.f32 %v4941, %v4989
        %v4991 = vpop.f32.mrf.mxu0
        %v4992 = vadd.f32 %v4943, %v4991
        %4993 = vmatmul.bf16.gmra.mxu0 %v1457
        %v4994 = vpop.f32.mrf.mxu0
        %v4995 = vadd.f32 %v4946, %v4994
        %v4996 = vpop.f32.mrf.mxu0
        %v4997 = vadd.f32 %v4948, %v4996
        %4998 = vmatmul.bf16.gmra.mxu0 %v1461
        %v4999 = vpop.f32.mrf.mxu0
        %v5000 = vadd.f32 %v4951, %v4999
        %v5001 = vpop.f32.mrf.mxu0
        %v5002 = vadd.f32 %v4953, %v5001
        %5003 = vmatmul.bf16.gmra.mxu0 %v1465
        %v5004 = vpop.f32.mrf.mxu0
        %v5005 = vadd.f32 %v4956, %v5004
        %v5006 = vpop.f32.mrf.mxu0
        %v5007 = vadd.f32 %v4958, %v5006
        %5008 = vmatmul.bf16.gmra.mxu0 %v1469
        %v5009 = vpop.f32.mrf.mxu0
        %v5010 = vadd.f32 %v4961, %v5009
        %v5011 = vpop.f32.mrf.mxu0
        %v5012 = vadd.f32 %v4963, %v5011
        %5013 = vdwg.mxu0
        %5014 = vmatpush.bf16.msra.mxu0 %v3326
        %5015 = vmatpush.bf16.msra.mxu0 %v3311
        %5016 = vmatpush.bf16.msra.mxu0 %v3296
        %5017 = vmatpush.bf16.msra.mxu0 %v3281
        %5018 = vmatpush.bf16.msra.mxu0 %v3266
        %5019 = vmatpush.bf16.msra.mxu0 %v3251
        %5020 = vmatpush.bf16.msra.mxu0 %v3236
        %5021 = vmatpush.bf16.msra.mxu0 %v3221
        %5022 = vmatmul.bf16.gmra.mxu0 %v1442
        %v5023 = vpop.f32.mrf.mxu0
        %v5024 = vadd.f32 %v4975, %v5023
        %v5025 = vpop.f32.mrf.mxu0
        %v5026 = vadd.f32 %v4977, %v5025
        %5027 = vmatmul.bf16.gmra.mxu0 %v1446
        %v5028 = vpop.f32.mrf.mxu0
        %v5029 = vadd.f32 %v4980, %v5028
        %v5030 = vpop.f32.mrf.mxu0
        %v5031 = vadd.f32 %v4982, %v5030
        %5032 = vmatmul.bf16.gmra.mxu0 %v1450
        %v5033 = vpop.f32.mrf.mxu0
        %v5034 = vadd.f32 %v4985, %v5033
        %v5035 = vpop.f32.mrf.mxu0
        %v5036 = vadd.f32 %v4987, %v5035
        %5037 = vmatmul.bf16.gmra.mxu0 %v1454
        %v5038 = vpop.f32.mrf.mxu0
        %v5039 = vadd.f32 %v4990, %v5038
        %v5040 = vpop.f32.mrf.mxu0
        %v5041 = vadd.f32 %v4992, %v5040
        %5042 = vmatmul.bf16.gmra.mxu0 %v1458
        %v5043 = vpop.f32.mrf.mxu0
        %v5044 = vadd.f32 %v4995, %v5043
        %v5045 = vpop.f32.mrf.mxu0
        %v5046 = vadd.f32 %v4997, %v5045
        %5047 = vmatmul.bf16.gmra.mxu0 %v1462
        %v5048 = vpop.f32.mrf.mxu0
        %v5049 = vadd.f32 %v5000, %v5048
        %v5050 = vpop.f32.mrf.mxu0
        %v5051 = vadd.f32 %v5002, %v5050
        %5052 = vmatmul.bf16.gmra.mxu0 %v1466
        %v5053 = vpop.f32.mrf.mxu0
        %v5054 = vadd.f32 %v5005, %v5053
        %v5055 = vpop.f32.mrf.mxu0
        %v5056 = vadd.f32 %v5007, %v5055
        %5057 = vmatmul.bf16.gmra.mxu0 %v1470
        %v5058 = vpop.f32.mrf.mxu0
        %v5059 = vadd.f32 %v5010, %v5058
        %v5060 = vpop.f32.mrf.mxu0
        %v5061 = vadd.f32 %v5012, %v5060
        %5062 = vdwg.mxu0
        %5063 = vmatpush.bf16.msra.mxu0 %v3446
        %5064 = vmatpush.bf16.msra.mxu0 %v3431
        %5065 = vmatpush.bf16.msra.mxu0 %v3416
        %5066 = vmatpush.bf16.msra.mxu0 %v3401
        %5067 = vmatpush.bf16.msra.mxu0 %v3386
        %5068 = vmatpush.bf16.msra.mxu0 %v3371
        %5069 = vmatpush.bf16.msra.mxu0 %v3356
        %5070 = vmatpush.bf16.msra.mxu0 %v3341
        %5071 = vmatmul.bf16.gmra.mxu0 %v1443
        %v5072 = vpop.f32.mrf.mxu0
        %v5073 = vadd.f32 %v5024, %v5072
        %v5074 = vpop.f32.mrf.mxu0
        %v5075 = vadd.f32 %v5026, %v5074
        %5076 = vmatmul.bf16.gmra.mxu0 %v1447
        %v5077 = vpop.f32.mrf.mxu0
        %v5078 = vadd.f32 %v5029, %v5077
        %v5079 = vpop.f32.mrf.mxu0
        %v5080 = vadd.f32 %v5031, %v5079
        %5081 = vmatmul.bf16.gmra.mxu0 %v1451
        %v5082 = vpop.f32.mrf.mxu0
        %v5083 = vadd.f32 %v5034, %v5082
        %v5084 = vpop.f32.mrf.mxu0
        %v5085 = vadd.f32 %v5036, %v5084
        %5086 = vmatmul.bf16.gmra.mxu0 %v1455
        %v5087 = vpop.f32.mrf.mxu0
        %v5088 = vadd.f32 %v5039, %v5087
        %v5089 = vpop.f32.mrf.mxu0
        %v5090 = vadd.f32 %v5041, %v5089
        %5091 = vmatmul.bf16.gmra.mxu0 %v1459
        %v5092 = vpop.f32.mrf.mxu0
        %v5093 = vadd.f32 %v5044, %v5092
        %v5094 = vpop.f32.mrf.mxu0
        %v5095 = vadd.f32 %v5046, %v5094
        %5096 = vmatmul.bf16.gmra.mxu0 %v1463
        %v5097 = vpop.f32.mrf.mxu0
        %v5098 = vadd.f32 %v5049, %v5097
        %v5099 = vpop.f32.mrf.mxu0
        %v5100 = vadd.f32 %v5051, %v5099
        %5101 = vmatmul.bf16.gmra.mxu0 %v1467
        %v5102 = vpop.f32.mrf.mxu0
        %v5103 = vadd.f32 %v5054, %v5102
        %v5104 = vpop.f32.mrf.mxu0
        %v5105 = vadd.f32 %v5056, %v5104
        %5106 = vmatmul.bf16.gmra.mxu0 %v1471
        %v5107 = vpop.f32.mrf.mxu0
        %v5108 = vadd.f32 %v5059, %v5107
        %v5109 = vpop.f32.mrf.mxu0
        %v5110 = vadd.f32 %v5061, %v5109
        %5111 = vdwg.mxu0
        %5112 = vmatpush.bf16.msra.mxu0 %v3087
        %5113 = vmatpush.bf16.msra.mxu0 %v3072
        %5114 = vmatpush.bf16.msra.mxu0 %v3057
        %5115 = vmatpush.bf16.msra.mxu0 %v3042
        %5116 = vmatpush.bf16.msra.mxu0 %v3027
        %5117 = vmatpush.bf16.msra.mxu0 %v3012
        %5118 = vmatpush.bf16.msra.mxu0 %v2997
        %5119 = vmatpush.bf16.msra.mxu0 %v2982
        %5120 = vmatmul.bf16.gmra.mxu0 %v1440
        %v5121 = vpop.f32.mrf.mxu0
        %v5122 = vadd.f32 0.0, %v5121
        %v5123 = vpop.f32.mrf.mxu0
        %v5124 = vadd.f32 0.0, %v5123
        %5125 = vmatmul.bf16.gmra.mxu0 %v1444
        %v5126 = vpop.f32.mrf.mxu0
        %v5127 = vadd.f32 0.0, %v5126
        %v5128 = vpop.f32.mrf.mxu0
        %v5129 = vadd.f32 0.0, %v5128
        %5130 = vmatmul.bf16.gmra.mxu0 %v1448
        %v5131 = vpop.f32.mrf.mxu0
        %v5132 = vadd.f32 0.0, %v5131
        %v5133 = vpop.f32.mrf.mxu0
        %v5134 = vadd.f32 0.0, %v5133
        %5135 = vmatmul.bf16.gmra.mxu0 %v1452
        %v5136 = vpop.f32.mrf.mxu0
        %v5137 = vadd.f32 0.0, %v5136
        %v5138 = vpop.f32.mrf.mxu0
        %v5139 = vadd.f32 0.0, %v5138
        %5140 = vmatmul.bf16.gmra.mxu0 %v1456
        %v5141 = vpop.f32.mrf.mxu0
        %v5142 = vadd.f32 0.0, %v5141
        %v5143 = vpop.f32.mrf.mxu0
        %v5144 = vadd.f32 0.0, %v5143
        %5145 = vmatmul.bf16.gmra.mxu0 %v1460
        %v5146 = vpop.f32.mrf.mxu0
        %v5147 = vadd.f32 0.0, %v5146
        %v5148 = vpop.f32.mrf.mxu0
        %v5149 = vadd.f32 0.0, %v5148
        %5150 = vmatmul.bf16.gmra.mxu0 %v1464
        %v5151 = vpop.f32.mrf.mxu0
        %v5152 = vadd.f32 0.0, %v5151
        %v5153 = vpop.f32.mrf.mxu0
        %v5154 = vadd.f32 0.0, %v5153
        %5155 = vmatmul.bf16.gmra.mxu0 %v1468
        %v5156 = vpop.f32.mrf.mxu0
        %v5157 = vadd.f32 0.0, %v5156
        %v5158 = vpop.f32.mrf.mxu0
        %v5159 = vadd.f32 0.0, %v5158
        %5160 = vdwg.mxu0
        %5161 = vmatpush.bf16.msra.mxu0 %v3207
        %5162 = vmatpush.bf16.msra.mxu0 %v3192
        %5163 = vmatpush.bf16.msra.mxu0 %v3177
        %5164 = vmatpush.bf16.msra.mxu0 %v3162
        %5165 = vmatpush.bf16.msra.mxu0 %v3147
        %5166 = vmatpush.bf16.msra.mxu0 %v3132
        %5167 = vmatpush.bf16.msra.mxu0 %v3117
        %5168 = vmatpush.bf16.msra.mxu0 %v3102
        %5169 = vmatmul.bf16.gmra.mxu0 %v1441
        %v5170 = vpop.f32.mrf.mxu0
        %v5171 = vadd.f32 %v5122, %v5170
        %v5172 = vpop.f32.mrf.mxu0
        %v5173 = vadd.f32 %v5124, %v5172
        %5174 = vmatmul.bf16.gmra.mxu0 %v1445
        %v5175 = vpop.f32.mrf.mxu0
        %v5176 = vadd.f32 %v5127, %v5175
        %v5177 = vpop.f32.mrf.mxu0
        %v5178 = vadd.f32 %v5129, %v5177
        %5179 = vmatmul.bf16.gmra.mxu0 %v1449
        %v5180 = vpop.f32.mrf.mxu0
        %v5181 = vadd.f32 %v5132, %v5180
        %v5182 = vpop.f32.mrf.mxu0
        %v5183 = vadd.f32 %v5134, %v5182
        %5184 = vmatmul.bf16.gmra.mxu0 %v1453
        %v5185 = vpop.f32.mrf.mxu0
        %v5186 = vadd.f32 %v5137, %v5185
        %v5187 = vpop.f32.mrf.mxu0
        %v5188 = vadd.f32 %v5139, %v5187
        %5189 = vmatmul.bf16.gmra.mxu0 %v1457
        %v5190 = vpop.f32.mrf.mxu0
        %v5191 = vadd.f32 %v5142, %v5190
        %v5192 = vpop.f32.mrf.mxu0
        %v5193 = vadd.f32 %v5144, %v5192
        %5194 = vmatmul.bf16.gmra.mxu0 %v1461
        %v5195 = vpop.f32.mrf.mxu0
        %v5196 = vadd.f32 %v5147, %v5195
        %v5197 = vpop.f32.mrf.mxu0
        %v5198 = vadd.f32 %v5149, %v5197
        %5199 = vmatmul.bf16.gmra.mxu0 %v1465
        %v5200 = vpop.f32.mrf.mxu0
        %v5201 = vadd.f32 %v5152, %v5200
        %v5202 = vpop.f32.mrf.mxu0
        %v5203 = vadd.f32 %v5154, %v5202
        %5204 = vmatmul.bf16.gmra.mxu0 %v1469
        %v5205 = vpop.f32.mrf.mxu0
        %v5206 = vadd.f32 %v5157, %v5205
        %v5207 = vpop.f32.mrf.mxu0
        %v5208 = vadd.f32 %v5159, %v5207
        %5209 = vdwg.mxu0
        %5210 = vmatpush.bf16.msra.mxu0 %v3327
        %5211 = vmatpush.bf16.msra.mxu0 %v3312
        %5212 = vmatpush.bf16.msra.mxu0 %v3297
        %5213 = vmatpush.bf16.msra.mxu0 %v3282
        %5214 = vmatpush.bf16.msra.mxu0 %v3267
        %5215 = vmatpush.bf16.msra.mxu0 %v3252
        %5216 = vmatpush.bf16.msra.mxu0 %v3237
        %5217 = vmatpush.bf16.msra.mxu0 %v3222
        %5218 = vmatmul.bf16.gmra.mxu0 %v1442
        %v5219 = vpop.f32.mrf.mxu0
        %v5220 = vadd.f32 %v5171, %v5219
        %v5221 = vpop.f32.mrf.mxu0
        %v5222 = vadd.f32 %v5173, %v5221
        %5223 = vmatmul.bf16.gmra.mxu0 %v1446
        %v5224 = vpop.f32.mrf.mxu0
        %v5225 = vadd.f32 %v5176, %v5224
        %v5226 = vpop.f32.mrf.mxu0
        %v5227 = vadd.f32 %v5178, %v5226
        %5228 = vmatmul.bf16.gmra.mxu0 %v1450
        %v5229 = vpop.f32.mrf.mxu0
        %v5230 = vadd.f32 %v5181, %v5229
        %v5231 = vpop.f32.mrf.mxu0
        %v5232 = vadd.f32 %v5183, %v5231
        %5233 = vmatmul.bf16.gmra.mxu0 %v1454
        %v5234 = vpop.f32.mrf.mxu0
        %v5235 = vadd.f32 %v5186, %v5234
        %v5236 = vpop.f32.mrf.mxu0
        %v5237 = vadd.f32 %v5188, %v5236
        %5238 = vmatmul.bf16.gmra.mxu0 %v1458
        %v5239 = vpop.f32.mrf.mxu0
        %v5240 = vadd.f32 %v5191, %v5239
        %v5241 = vpop.f32.mrf.mxu0
        %v5242 = vadd.f32 %v5193, %v5241
        %5243 = vmatmul.bf16.gmra.mxu0 %v1462
        %v5244 = vpop.f32.mrf.mxu0
        %v5245 = vadd.f32 %v5196, %v5244
        %v5246 = vpop.f32.mrf.mxu0
        %v5247 = vadd.f32 %v5198, %v5246
        %5248 = vmatmul.bf16.gmra.mxu0 %v1466
        %v5249 = vpop.f32.mrf.mxu0
        %v5250 = vadd.f32 %v5201, %v5249
        %v5251 = vpop.f32.mrf.mxu0
        %v5252 = vadd.f32 %v5203, %v5251
        %5253 = vmatmul.bf16.gmra.mxu0 %v1470
        %v5254 = vpop.f32.mrf.mxu0
        %v5255 = vadd.f32 %v5206, %v5254
        %v5256 = vpop.f32.mrf.mxu0
        %v5257 = vadd.f32 %v5208, %v5256
        %5258 = vdwg.mxu0
        %5259 = vmatpush.bf16.msra.mxu0 %v3447
        %5260 = vmatpush.bf16.msra.mxu0 %v3432
        %5261 = vmatpush.bf16.msra.mxu0 %v3417
        %5262 = vmatpush.bf16.msra.mxu0 %v3402
        %5263 = vmatpush.bf16.msra.mxu0 %v3387
        %5264 = vmatpush.bf16.msra.mxu0 %v3372
        %5265 = vmatpush.bf16.msra.mxu0 %v3357
        %5266 = vmatpush.bf16.msra.mxu0 %v3342
        %5267 = vmatmul.bf16.gmra.mxu0 %v1443
        %v5268 = vpop.f32.mrf.mxu0
        %v5269 = vadd.f32 %v5220, %v5268
        %v5270 = vpop.f32.mrf.mxu0
        %v5271 = vadd.f32 %v5222, %v5270
        %5272 = vmatmul.bf16.gmra.mxu0 %v1447
        %v5273 = vpop.f32.mrf.mxu0
        %v5274 = vadd.f32 %v5225, %v5273
        %v5275 = vpop.f32.mrf.mxu0
        %v5276 = vadd.f32 %v5227, %v5275
        %5277 = vmatmul.bf16.gmra.mxu0 %v1451
        %v5278 = vpop.f32.mrf.mxu0
        %v5279 = vadd.f32 %v5230, %v5278
        %v5280 = vpop.f32.mrf.mxu0
        %v5281 = vadd.f32 %v5232, %v5280
        %5282 = vmatmul.bf16.gmra.mxu0 %v1455
        %v5283 = vpop.f32.mrf.mxu0
        %v5284 = vadd.f32 %v5235, %v5283
        %v5285 = vpop.f32.mrf.mxu0
        %v5286 = vadd.f32 %v5237, %v5285
        %5287 = vmatmul.bf16.gmra.mxu0 %v1459
        %v5288 = vpop.f32.mrf.mxu0
        %v5289 = vadd.f32 %v5240, %v5288
        %v5290 = vpop.f32.mrf.mxu0
        %v5291 = vadd.f32 %v5242, %v5290
        %5292 = vmatmul.bf16.gmra.mxu0 %v1463
        %v5293 = vpop.f32.mrf.mxu0
        %v5294 = vadd.f32 %v5245, %v5293
        %v5295 = vpop.f32.mrf.mxu0
        %v5296 = vadd.f32 %v5247, %v5295
        %5297 = vmatmul.bf16.gmra.mxu0 %v1467
        %v5298 = vpop.f32.mrf.mxu0
        %v5299 = vadd.f32 %v5250, %v5298
        %v5300 = vpop.f32.mrf.mxu0
        %v5301 = vadd.f32 %v5252, %v5300
        %5302 = vmatmul.bf16.gmra.mxu0 %v1471
        %v5303 = vpop.f32.mrf.mxu0
        %v5304 = vadd.f32 %v5255, %v5303
        %v5305 = vpop.f32.mrf.mxu0
        %v5306 = vadd.f32 %v5257, %v5305
        %5307 = vdwg.mxu0
        %5308 = vmatpush.bf16.msra.mxu0 %v3088
        %5309 = vmatpush.bf16.msra.mxu0 %v3073
        %5310 = vmatpush.bf16.msra.mxu0 %v3058
        %5311 = vmatpush.bf16.msra.mxu0 %v3043
        %5312 = vmatpush.bf16.msra.mxu0 %v3028
        %5313 = vmatpush.bf16.msra.mxu0 %v3013
        %5314 = vmatpush.bf16.msra.mxu0 %v2998
        %5315 = vmatpush.bf16.msra.mxu0 %v2983
        %5316 = vmatmul.bf16.gmra.mxu0 %v1440
        %v5317 = vpop.f32.mrf.mxu0
        %v5318 = vadd.f32 0.0, %v5317
        %v5319 = vpop.f32.mrf.mxu0
        %v5320 = vadd.f32 0.0, %v5319
        %5321 = vmatmul.bf16.gmra.mxu0 %v1444
        %v5322 = vpop.f32.mrf.mxu0
        %v5323 = vadd.f32 0.0, %v5322
        %v5324 = vpop.f32.mrf.mxu0
        %v5325 = vadd.f32 0.0, %v5324
        %5326 = vmatmul.bf16.gmra.mxu0 %v1448
        %v5327 = vpop.f32.mrf.mxu0
        %v5328 = vadd.f32 0.0, %v5327
        %v5329 = vpop.f32.mrf.mxu0
        %v5330 = vadd.f32 0.0, %v5329
        %5331 = vmatmul.bf16.gmra.mxu0 %v1452
        %v5332 = vpop.f32.mrf.mxu0
        %v5333 = vadd.f32 0.0, %v5332
        %v5334 = vpop.f32.mrf.mxu0
        %v5335 = vadd.f32 0.0, %v5334
        %5336 = vmatmul.bf16.gmra.mxu0 %v1456
        %v5337 = vpop.f32.mrf.mxu0
        %v5338 = vadd.f32 0.0, %v5337
        %v5339 = vpop.f32.mrf.mxu0
        %v5340 = vadd.f32 0.0, %v5339
        %5341 = vmatmul.bf16.gmra.mxu0 %v1460
        %v5342 = vpop.f32.mrf.mxu0
        %v5343 = vadd.f32 0.0, %v5342
        %v5344 = vpop.f32.mrf.mxu0
        %v5345 = vadd.f32 0.0, %v5344
        %5346 = vmatmul.bf16.gmra.mxu0 %v1464
        %v5347 = vpop.f32.mrf.mxu0
        %v5348 = vadd.f32 0.0, %v5347
        %v5349 = vpop.f32.mrf.mxu0
        %v5350 = vadd.f32 0.0, %v5349
        %5351 = vmatmul.bf16.gmra.mxu0 %v1468
        %v5352 = vpop.f32.mrf.mxu0
        %v5353 = vadd.f32 0.0, %v5352
        %v5354 = vpop.f32.mrf.mxu0
        %v5355 = vadd.f32 0.0, %v5354
        %5356 = vdwg.mxu0
        %5357 = vmatpush.bf16.msra.mxu0 %v3208
        %5358 = vmatpush.bf16.msra.mxu0 %v3193
        %5359 = vmatpush.bf16.msra.mxu0 %v3178
        %5360 = vmatpush.bf16.msra.mxu0 %v3163
        %5361 = vmatpush.bf16.msra.mxu0 %v3148
        %5362 = vmatpush.bf16.msra.mxu0 %v3133
        %5363 = vmatpush.bf16.msra.mxu0 %v3118
        %5364 = vmatpush.bf16.msra.mxu0 %v3103
        %5365 = vmatmul.bf16.gmra.mxu0 %v1441
        %v5366 = vpop.f32.mrf.mxu0
        %v5367 = vadd.f32 %v5318, %v5366
        %v5368 = vpop.f32.mrf.mxu0
        %v5369 = vadd.f32 %v5320, %v5368
        %5370 = vmatmul.bf16.gmra.mxu0 %v1445
        %v5371 = vpop.f32.mrf.mxu0
        %v5372 = vadd.f32 %v5323, %v5371
        %v5373 = vpop.f32.mrf.mxu0
        %v5374 = vadd.f32 %v5325, %v5373
        %5375 = vmatmul.bf16.gmra.mxu0 %v1449
        %v5376 = vpop.f32.mrf.mxu0
        %v5377 = vadd.f32 %v5328, %v5376
        %v5378 = vpop.f32.mrf.mxu0
        %v5379 = vadd.f32 %v5330, %v5378
        %5380 = vmatmul.bf16.gmra.mxu0 %v1453
        %v5381 = vpop.f32.mrf.mxu0
        %v5382 = vadd.f32 %v5333, %v5381
        %v5383 = vpop.f32.mrf.mxu0
        %v5384 = vadd.f32 %v5335, %v5383
        %5385 = vmatmul.bf16.gmra.mxu0 %v1457
        %v5386 = vpop.f32.mrf.mxu0
        %v5387 = vadd.f32 %v5338, %v5386
        %v5388 = vpop.f32.mrf.mxu0
        %v5389 = vadd.f32 %v5340, %v5388
        %5390 = vmatmul.bf16.gmra.mxu0 %v1461
        %v5391 = vpop.f32.mrf.mxu0
        %v5392 = vadd.f32 %v5343, %v5391
        %v5393 = vpop.f32.mrf.mxu0
        %v5394 = vadd.f32 %v5345, %v5393
        %5395 = vmatmul.bf16.gmra.mxu0 %v1465
        %v5396 = vpop.f32.mrf.mxu0
        %v5397 = vadd.f32 %v5348, %v5396
        %v5398 = vpop.f32.mrf.mxu0
        %v5399 = vadd.f32 %v5350, %v5398
        %5400 = vmatmul.bf16.gmra.mxu0 %v1469
        %v5401 = vpop.f32.mrf.mxu0
        %v5402 = vadd.f32 %v5353, %v5401
        %v5403 = vpop.f32.mrf.mxu0
        %v5404 = vadd.f32 %v5355, %v5403
        %5405 = vdwg.mxu0
        %5406 = vmatpush.bf16.msra.mxu0 %v3328
        %5407 = vmatpush.bf16.msra.mxu0 %v3313
        %5408 = vmatpush.bf16.msra.mxu0 %v3298
        %5409 = vmatpush.bf16.msra.mxu0 %v3283
        %5410 = vmatpush.bf16.msra.mxu0 %v3268
        %5411 = vmatpush.bf16.msra.mxu0 %v3253
        %5412 = vmatpush.bf16.msra.mxu0 %v3238
        %5413 = vmatpush.bf16.msra.mxu0 %v3223
        %5414 = vmatmul.bf16.gmra.mxu0 %v1442
        %v5415 = vpop.f32.mrf.mxu0
        %v5416 = vadd.f32 %v5367, %v5415
        %v5417 = vpop.f32.mrf.mxu0
        %v5418 = vadd.f32 %v5369, %v5417
        %5419 = vmatmul.bf16.gmra.mxu0 %v1446
        %v5420 = vpop.f32.mrf.mxu0
        %v5421 = vadd.f32 %v5372, %v5420
        %v5422 = vpop.f32.mrf.mxu0
        %v5423 = vadd.f32 %v5374, %v5422
        %5424 = vmatmul.bf16.gmra.mxu0 %v1450
        %v5425 = vpop.f32.mrf.mxu0
        %v5426 = vadd.f32 %v5377, %v5425
        %v5427 = vpop.f32.mrf.mxu0
        %v5428 = vadd.f32 %v5379, %v5427
        %5429 = vmatmul.bf16.gmra.mxu0 %v1454
        %v5430 = vpop.f32.mrf.mxu0
        %v5431 = vadd.f32 %v5382, %v5430
        %v5432 = vpop.f32.mrf.mxu0
        %v5433 = vadd.f32 %v5384, %v5432
        %5434 = vmatmul.bf16.gmra.mxu0 %v1458
        %v5435 = vpop.f32.mrf.mxu0
        %v5436 = vadd.f32 %v5387, %v5435
        %v5437 = vpop.f32.mrf.mxu0
        %v5438 = vadd.f32 %v5389, %v5437
        %5439 = vmatmul.bf16.gmra.mxu0 %v1462
        %v5440 = vpop.f32.mrf.mxu0
        %v5441 = vadd.f32 %v5392, %v5440
        %v5442 = vpop.f32.mrf.mxu0
        %v5443 = vadd.f32 %v5394, %v5442
        %5444 = vmatmul.bf16.gmra.mxu0 %v1466
        %v5445 = vpop.f32.mrf.mxu0
        %v5446 = vadd.f32 %v5397, %v5445
        %v5447 = vpop.f32.mrf.mxu0
        %v5448 = vadd.f32 %v5399, %v5447
        %5449 = vmatmul.bf16.gmra.mxu0 %v1470
        %v5450 = vpop.f32.mrf.mxu0
        %v5451 = vadd.f32 %v5402, %v5450
        %v5452 = vpop.f32.mrf.mxu0
        %v5453 = vadd.f32 %v5404, %v5452
        %5454 = vdwg.mxu0
        %5455 = vmatpush.bf16.msra.mxu0 %v3448
        %5456 = vmatpush.bf16.msra.mxu0 %v3433
        %5457 = vmatpush.bf16.msra.mxu0 %v3418
        %5458 = vmatpush.bf16.msra.mxu0 %v3403
        %5459 = vmatpush.bf16.msra.mxu0 %v3388
        %5460 = vmatpush.bf16.msra.mxu0 %v3373
        %5461 = vmatpush.bf16.msra.mxu0 %v3358
        %5462 = vmatpush.bf16.msra.mxu0 %v3343
        %5463 = vmatmul.bf16.gmra.mxu0 %v1443
        %v5464 = vpop.f32.mrf.mxu0
        %v5465 = vadd.f32 %v5416, %v5464
        %v5466 = vpop.f32.mrf.mxu0
        %v5467 = vadd.f32 %v5418, %v5466
        %5468 = vmatmul.bf16.gmra.mxu0 %v1447
        %v5469 = vpop.f32.mrf.mxu0
        %v5470 = vadd.f32 %v5421, %v5469
        %v5471 = vpop.f32.mrf.mxu0
        %v5472 = vadd.f32 %v5423, %v5471
        %5473 = vmatmul.bf16.gmra.mxu0 %v1451
        %v5474 = vpop.f32.mrf.mxu0
        %v5475 = vadd.f32 %v5426, %v5474
        %v5476 = vpop.f32.mrf.mxu0
        %v5477 = vadd.f32 %v5428, %v5476
        %5478 = vmatmul.bf16.gmra.mxu0 %v1455
        %v5479 = vpop.f32.mrf.mxu0
        %v5480 = vadd.f32 %v5431, %v5479
        %v5481 = vpop.f32.mrf.mxu0
        %v5482 = vadd.f32 %v5433, %v5481
        %5483 = vmatmul.bf16.gmra.mxu0 %v1459
        %v5484 = vpop.f32.mrf.mxu0
        %v5485 = vadd.f32 %v5436, %v5484
        %v5486 = vpop.f32.mrf.mxu0
        %v5487 = vadd.f32 %v5438, %v5486
        %5488 = vmatmul.bf16.gmra.mxu0 %v1463
        %v5489 = vpop.f32.mrf.mxu0
        %v5490 = vadd.f32 %v5441, %v5489
        %v5491 = vpop.f32.mrf.mxu0
        %v5492 = vadd.f32 %v5443, %v5491
        %5493 = vmatmul.bf16.gmra.mxu0 %v1467
        %v5494 = vpop.f32.mrf.mxu0
        %v5495 = vadd.f32 %v5446, %v5494
        %v5496 = vpop.f32.mrf.mxu0
        %v5497 = vadd.f32 %v5448, %v5496
        %5498 = vmatmul.bf16.gmra.mxu0 %v1471
        %v5499 = vpop.f32.mrf.mxu0
        %v5500 = vadd.f32 %v5451, %v5499
        %v5501 = vpop.f32.mrf.mxu0
        %v5502 = vadd.f32 %v5453, %v5501
        %5503 = vdwg.mxu0
        %5504 = vmatpush.bf16.msra.mxu0 %v3089
        %5505 = vmatpush.bf16.msra.mxu0 %v3074
        %5506 = vmatpush.bf16.msra.mxu0 %v3059
        %5507 = vmatpush.bf16.msra.mxu0 %v3044
        %5508 = vmatpush.bf16.msra.mxu0 %v3029
        %5509 = vmatpush.bf16.msra.mxu0 %v3014
        %5510 = vmatpush.bf16.msra.mxu0 %v2999
        %5511 = vmatpush.bf16.msra.mxu0 %v2984
        %5512 = vmatmul.bf16.gmra.mxu0 %v1440
        %v5513 = vpop.f32.mrf.mxu0
        %v5514 = vadd.f32 0.0, %v5513
        %v5515 = vpop.f32.mrf.mxu0
        %v5516 = vadd.f32 0.0, %v5515
        %5517 = vmatmul.bf16.gmra.mxu0 %v1444
        %v5518 = vpop.f32.mrf.mxu0
        %v5519 = vadd.f32 0.0, %v5518
        %v5520 = vpop.f32.mrf.mxu0
        %v5521 = vadd.f32 0.0, %v5520
        %5522 = vmatmul.bf16.gmra.mxu0 %v1448
        %v5523 = vpop.f32.mrf.mxu0
        %v5524 = vadd.f32 0.0, %v5523
        %v5525 = vpop.f32.mrf.mxu0
        %v5526 = vadd.f32 0.0, %v5525
        %5527 = vmatmul.bf16.gmra.mxu0 %v1452
        %v5528 = vpop.f32.mrf.mxu0
        %v5529 = vadd.f32 0.0, %v5528
        %v5530 = vpop.f32.mrf.mxu0
        %v5531 = vadd.f32 0.0, %v5530
        %5532 = vmatmul.bf16.gmra.mxu0 %v1456
        %v5533 = vpop.f32.mrf.mxu0
        %v5534 = vadd.f32 0.0, %v5533
        %v5535 = vpop.f32.mrf.mxu0
        %v5536 = vadd.f32 0.0, %v5535
        %5537 = vmatmul.bf16.gmra.mxu0 %v1460
        %v5538 = vpop.f32.mrf.mxu0
        %v5539 = vadd.f32 0.0, %v5538
        %v5540 = vpop.f32.mrf.mxu0
        %v5541 = vadd.f32 0.0, %v5540
        %5542 = vmatmul.bf16.gmra.mxu0 %v1464
        %v5543 = vpop.f32.mrf.mxu0
        %v5544 = vadd.f32 0.0, %v5543
        %v5545 = vpop.f32.mrf.mxu0
        %v5546 = vadd.f32 0.0, %v5545
        %5547 = vmatmul.bf16.gmra.mxu0 %v1468
        %v5548 = vpop.f32.mrf.mxu0
        %v5549 = vadd.f32 0.0, %v5548
        %v5550 = vpop.f32.mrf.mxu0
        %v5551 = vadd.f32 0.0, %v5550
        %5552 = vdwg.mxu0
        %5553 = vmatpush.bf16.msra.mxu0 %v3209
        %5554 = vmatpush.bf16.msra.mxu0 %v3194
        %5555 = vmatpush.bf16.msra.mxu0 %v3179
        %5556 = vmatpush.bf16.msra.mxu0 %v3164
        %5557 = vmatpush.bf16.msra.mxu0 %v3149
        %5558 = vmatpush.bf16.msra.mxu0 %v3134
        %5559 = vmatpush.bf16.msra.mxu0 %v3119
        %5560 = vmatpush.bf16.msra.mxu0 %v3104
        %5561 = vmatmul.bf16.gmra.mxu0 %v1441
        %v5562 = vpop.f32.mrf.mxu0
        %v5563 = vadd.f32 %v5514, %v5562
        %v5564 = vpop.f32.mrf.mxu0
        %v5565 = vadd.f32 %v5516, %v5564
        %5566 = vmatmul.bf16.gmra.mxu0 %v1445
        %v5567 = vpop.f32.mrf.mxu0
        %v5568 = vadd.f32 %v5519, %v5567
        %v5569 = vpop.f32.mrf.mxu0
        %v5570 = vadd.f32 %v5521, %v5569
        %5571 = vmatmul.bf16.gmra.mxu0 %v1449
        %v5572 = vpop.f32.mrf.mxu0
        %v5573 = vadd.f32 %v5524, %v5572
        %v5574 = vpop.f32.mrf.mxu0
        %v5575 = vadd.f32 %v5526, %v5574
        %5576 = vmatmul.bf16.gmra.mxu0 %v1453
        %v5577 = vpop.f32.mrf.mxu0
        %v5578 = vadd.f32 %v5529, %v5577
        %v5579 = vpop.f32.mrf.mxu0
        %v5580 = vadd.f32 %v5531, %v5579
        %5581 = vmatmul.bf16.gmra.mxu0 %v1457
        %v5582 = vpop.f32.mrf.mxu0
        %v5583 = vadd.f32 %v5534, %v5582
        %v5584 = vpop.f32.mrf.mxu0
        %v5585 = vadd.f32 %v5536, %v5584
        %5586 = vmatmul.bf16.gmra.mxu0 %v1461
        %v5587 = vpop.f32.mrf.mxu0
        %v5588 = vadd.f32 %v5539, %v5587
        %v5589 = vpop.f32.mrf.mxu0
        %v5590 = vadd.f32 %v5541, %v5589
        %5591 = vmatmul.bf16.gmra.mxu0 %v1465
        %v5592 = vpop.f32.mrf.mxu0
        %v5593 = vadd.f32 %v5544, %v5592
        %v5594 = vpop.f32.mrf.mxu0
        %v5595 = vadd.f32 %v5546, %v5594
        %5596 = vmatmul.bf16.gmra.mxu0 %v1469
        %v5597 = vpop.f32.mrf.mxu0
        %v5598 = vadd.f32 %v5549, %v5597
        %v5599 = vpop.f32.mrf.mxu0
        %v5600 = vadd.f32 %v5551, %v5599
        %5601 = vdwg.mxu0
        %5602 = vmatpush.bf16.msra.mxu0 %v3329
        %5603 = vmatpush.bf16.msra.mxu0 %v3314
        %5604 = vmatpush.bf16.msra.mxu0 %v3299
        %5605 = vmatpush.bf16.msra.mxu0 %v3284
        %5606 = vmatpush.bf16.msra.mxu0 %v3269
        %5607 = vmatpush.bf16.msra.mxu0 %v3254
        %5608 = vmatpush.bf16.msra.mxu0 %v3239
        %5609 = vmatpush.bf16.msra.mxu0 %v3224
        %5610 = vmatmul.bf16.gmra.mxu0 %v1442
        %v5611 = vpop.f32.mrf.mxu0
        %v5612 = vadd.f32 %v5563, %v5611
        %v5613 = vpop.f32.mrf.mxu0
        %v5614 = vadd.f32 %v5565, %v5613
        %5615 = vmatmul.bf16.gmra.mxu0 %v1446
        %v5616 = vpop.f32.mrf.mxu0
        %v5617 = vadd.f32 %v5568, %v5616
        %v5618 = vpop.f32.mrf.mxu0
        %v5619 = vadd.f32 %v5570, %v5618
        %5620 = vmatmul.bf16.gmra.mxu0 %v1450
        %v5621 = vpop.f32.mrf.mxu0
        %v5622 = vadd.f32 %v5573, %v5621
        %v5623 = vpop.f32.mrf.mxu0
        %v5624 = vadd.f32 %v5575, %v5623
        %5625 = vmatmul.bf16.gmra.mxu0 %v1454
        %v5626 = vpop.f32.mrf.mxu0
        %v5627 = vadd.f32 %v5578, %v5626
        %v5628 = vpop.f32.mrf.mxu0
        %v5629 = vadd.f32 %v5580, %v5628
        %5630 = vmatmul.bf16.gmra.mxu0 %v1458
        %v5631 = vpop.f32.mrf.mxu0
        %v5632 = vadd.f32 %v5583, %v5631
        %v5633 = vpop.f32.mrf.mxu0
        %v5634 = vadd.f32 %v5585, %v5633
        %5635 = vmatmul.bf16.gmra.mxu0 %v1462
        %v5636 = vpop.f32.mrf.mxu0
        %v5637 = vadd.f32 %v5588, %v5636
        %v5638 = vpop.f32.mrf.mxu0
        %v5639 = vadd.f32 %v5590, %v5638
        %5640 = vmatmul.bf16.gmra.mxu0 %v1466
        %v5641 = vpop.f32.mrf.mxu0
        %v5642 = vadd.f32 %v5593, %v5641
        %v5643 = vpop.f32.mrf.mxu0
        %v5644 = vadd.f32 %v5595, %v5643
        %5645 = vmatmul.bf16.gmra.mxu0 %v1470
        %v5646 = vpop.f32.mrf.mxu0
        %v5647 = vadd.f32 %v5598, %v5646
        %v5648 = vpop.f32.mrf.mxu0
        %v5649 = vadd.f32 %v5600, %v5648
        %5650 = vdwg.mxu0
        %5651 = vmatpush.bf16.msra.mxu0 %v3449
        %5652 = vmatpush.bf16.msra.mxu0 %v3434
        %5653 = vmatpush.bf16.msra.mxu0 %v3419
        %5654 = vmatpush.bf16.msra.mxu0 %v3404
        %5655 = vmatpush.bf16.msra.mxu0 %v3389
        %5656 = vmatpush.bf16.msra.mxu0 %v3374
        %5657 = vmatpush.bf16.msra.mxu0 %v3359
        %5658 = vmatpush.bf16.msra.mxu0 %v3344
        %5659 = vmatmul.bf16.gmra.mxu0 %v1443
        %v5660 = vpop.f32.mrf.mxu0
        %v5661 = vadd.f32 %v5612, %v5660
        %v5662 = vpop.f32.mrf.mxu0
        %v5663 = vadd.f32 %v5614, %v5662
        %5664 = vmatmul.bf16.gmra.mxu0 %v1447
        %v5665 = vpop.f32.mrf.mxu0
        %v5666 = vadd.f32 %v5617, %v5665
        %v5667 = vpop.f32.mrf.mxu0
        %v5668 = vadd.f32 %v5619, %v5667
        %5669 = vmatmul.bf16.gmra.mxu0 %v1451
        %v5670 = vpop.f32.mrf.mxu0
        %v5671 = vadd.f32 %v5622, %v5670
        %v5672 = vpop.f32.mrf.mxu0
        %v5673 = vadd.f32 %v5624, %v5672
        %5674 = vmatmul.bf16.gmra.mxu0 %v1455
        %v5675 = vpop.f32.mrf.mxu0
        %v5676 = vadd.f32 %v5627, %v5675
        %v5677 = vpop.f32.mrf.mxu0
        %v5678 = vadd.f32 %v5629, %v5677
        %5679 = vmatmul.bf16.gmra.mxu0 %v1459
        %v5680 = vpop.f32.mrf.mxu0
        %v5681 = vadd.f32 %v5632, %v5680
        %v5682 = vpop.f32.mrf.mxu0
        %v5683 = vadd.f32 %v5634, %v5682
        %5684 = vmatmul.bf16.gmra.mxu0 %v1463
        %v5685 = vpop.f32.mrf.mxu0
        %v5686 = vadd.f32 %v5637, %v5685
        %v5687 = vpop.f32.mrf.mxu0
        %v5688 = vadd.f32 %v5639, %v5687
        %5689 = vmatmul.bf16.gmra.mxu0 %v1467
        %v5690 = vpop.f32.mrf.mxu0
        %v5691 = vadd.f32 %v5642, %v5690
        %v5692 = vpop.f32.mrf.mxu0
        %v5693 = vadd.f32 %v5644, %v5692
        %5694 = vmatmul.bf16.gmra.mxu0 %v1471
        %v5695 = vpop.f32.mrf.mxu0
        %v5696 = vadd.f32 %v5647, %v5695
        %v5697 = vpop.f32.mrf.mxu0
        %v5698 = vadd.f32 %v5649, %v5697
        %5699 = vdwg.mxu0
        %5700 = vmatpush.bf16.msra.mxu0 %v3090
        %5701 = vmatpush.bf16.msra.mxu0 %v3075
        %5702 = vmatpush.bf16.msra.mxu0 %v3060
        %5703 = vmatpush.bf16.msra.mxu0 %v3045
        %5704 = vmatpush.bf16.msra.mxu0 %v3030
        %5705 = vmatpush.bf16.msra.mxu0 %v3015
        %5706 = vmatpush.bf16.msra.mxu0 %v3000
        %5707 = vmatpush.bf16.msra.mxu0 %v2985
        %5708 = vmatmul.bf16.gmra.mxu0 %v1440
        %v5709 = vpop.f32.mrf.mxu0
        %v5710 = vadd.f32 0.0, %v5709
        %v5711 = vpop.f32.mrf.mxu0
        %v5712 = vadd.f32 0.0, %v5711
        %5713 = vmatmul.bf16.gmra.mxu0 %v1444
        %v5714 = vpop.f32.mrf.mxu0
        %v5715 = vadd.f32 0.0, %v5714
        %v5716 = vpop.f32.mrf.mxu0
        %v5717 = vadd.f32 0.0, %v5716
        %5718 = vmatmul.bf16.gmra.mxu0 %v1448
        %v5719 = vpop.f32.mrf.mxu0
        %v5720 = vadd.f32 0.0, %v5719
        %v5721 = vpop.f32.mrf.mxu0
        %v5722 = vadd.f32 0.0, %v5721
        %5723 = vmatmul.bf16.gmra.mxu0 %v1452
        %v5724 = vpop.f32.mrf.mxu0
        %v5725 = vadd.f32 0.0, %v5724
        %v5726 = vpop.f32.mrf.mxu0
        %v5727 = vadd.f32 0.0, %v5726
        %5728 = vmatmul.bf16.gmra.mxu0 %v1456
        %v5729 = vpop.f32.mrf.mxu0
        %v5730 = vadd.f32 0.0, %v5729
        %v5731 = vpop.f32.mrf.mxu0
        %v5732 = vadd.f32 0.0, %v5731
        %5733 = vmatmul.bf16.gmra.mxu0 %v1460
        %v5734 = vpop.f32.mrf.mxu0
        %v5735 = vadd.f32 0.0, %v5734
        %v5736 = vpop.f32.mrf.mxu0
        %v5737 = vadd.f32 0.0, %v5736
        %5738 = vmatmul.bf16.gmra.mxu0 %v1464
        %v5739 = vpop.f32.mrf.mxu0
        %v5740 = vadd.f32 0.0, %v5739
        %v5741 = vpop.f32.mrf.mxu0
        %v5742 = vadd.f32 0.0, %v5741
        %5743 = vmatmul.bf16.gmra.mxu0 %v1468
        %v5744 = vpop.f32.mrf.mxu0
        %v5745 = vadd.f32 0.0, %v5744
        %v5746 = vpop.f32.mrf.mxu0
        %v5747 = vadd.f32 0.0, %v5746
        %5748 = vdwg.mxu0
        %5749 = vmatpush.bf16.msra.mxu0 %v3210
        %5750 = vmatpush.bf16.msra.mxu0 %v3195
        %5751 = vmatpush.bf16.msra.mxu0 %v3180
        %5752 = vmatpush.bf16.msra.mxu0 %v3165
        %5753 = vmatpush.bf16.msra.mxu0 %v3150
        %5754 = vmatpush.bf16.msra.mxu0 %v3135
        %5755 = vmatpush.bf16.msra.mxu0 %v3120
        %5756 = vmatpush.bf16.msra.mxu0 %v3105
        %5757 = vmatmul.bf16.gmra.mxu0 %v1441
        %v5758 = vpop.f32.mrf.mxu0
        %v5759 = vadd.f32 %v5710, %v5758
        %v5760 = vpop.f32.mrf.mxu0
        %v5761 = vadd.f32 %v5712, %v5760
        %5762 = vmatmul.bf16.gmra.mxu0 %v1445
        %v5763 = vpop.f32.mrf.mxu0
        %v5764 = vadd.f32 %v5715, %v5763
        %v5765 = vpop.f32.mrf.mxu0
        %v5766 = vadd.f32 %v5717, %v5765
        %5767 = vmatmul.bf16.gmra.mxu0 %v1449
        %v5768 = vpop.f32.mrf.mxu0
        %v5769 = vadd.f32 %v5720, %v5768
        %v5770 = vpop.f32.mrf.mxu0
        %v5771 = vadd.f32 %v5722, %v5770
        %5772 = vmatmul.bf16.gmra.mxu0 %v1453
        %v5773 = vpop.f32.mrf.mxu0
        %v5774 = vadd.f32 %v5725, %v5773
        %v5775 = vpop.f32.mrf.mxu0
        %v5776 = vadd.f32 %v5727, %v5775
        %5777 = vmatmul.bf16.gmra.mxu0 %v1457
        %v5778 = vpop.f32.mrf.mxu0
        %v5779 = vadd.f32 %v5730, %v5778
        %v5780 = vpop.f32.mrf.mxu0
        %v5781 = vadd.f32 %v5732, %v5780
        %5782 = vmatmul.bf16.gmra.mxu0 %v1461
        %v5783 = vpop.f32.mrf.mxu0
        %v5784 = vadd.f32 %v5735, %v5783
        %v5785 = vpop.f32.mrf.mxu0
        %v5786 = vadd.f32 %v5737, %v5785
        %5787 = vmatmul.bf16.gmra.mxu0 %v1465
        %v5788 = vpop.f32.mrf.mxu0
        %v5789 = vadd.f32 %v5740, %v5788
        %v5790 = vpop.f32.mrf.mxu0
        %v5791 = vadd.f32 %v5742, %v5790
        %5792 = vmatmul.bf16.gmra.mxu0 %v1469
        %v5793 = vpop.f32.mrf.mxu0
        %v5794 = vadd.f32 %v5745, %v5793
        %v5795 = vpop.f32.mrf.mxu0
        %v5796 = vadd.f32 %v5747, %v5795
        %5797 = vdwg.mxu0
        %5798 = vmatpush.bf16.msra.mxu0 %v3330
        %5799 = vmatpush.bf16.msra.mxu0 %v3315
        %5800 = vmatpush.bf16.msra.mxu0 %v3300
        %5801 = vmatpush.bf16.msra.mxu0 %v3285
        %5802 = vmatpush.bf16.msra.mxu0 %v3270
        %5803 = vmatpush.bf16.msra.mxu0 %v3255
        %5804 = vmatpush.bf16.msra.mxu0 %v3240
        %5805 = vmatpush.bf16.msra.mxu0 %v3225
        %5806 = vmatmul.bf16.gmra.mxu0 %v1442
        %v5807 = vpop.f32.mrf.mxu0
        %v5808 = vadd.f32 %v5759, %v5807
        %v5809 = vpop.f32.mrf.mxu0
        %v5810 = vadd.f32 %v5761, %v5809
        %5811 = vmatmul.bf16.gmra.mxu0 %v1446
        %v5812 = vpop.f32.mrf.mxu0
        %v5813 = vadd.f32 %v5764, %v5812
        %v5814 = vpop.f32.mrf.mxu0
        %v5815 = vadd.f32 %v5766, %v5814
        %5816 = vmatmul.bf16.gmra.mxu0 %v1450
        %v5817 = vpop.f32.mrf.mxu0
        %v5818 = vadd.f32 %v5769, %v5817
        %v5819 = vpop.f32.mrf.mxu0
        %v5820 = vadd.f32 %v5771, %v5819
        %5821 = vmatmul.bf16.gmra.mxu0 %v1454
        %v5822 = vpop.f32.mrf.mxu0
        %v5823 = vadd.f32 %v5774, %v5822
        %v5824 = vpop.f32.mrf.mxu0
        %v5825 = vadd.f32 %v5776, %v5824
        %5826 = vmatmul.bf16.gmra.mxu0 %v1458
        %v5827 = vpop.f32.mrf.mxu0
        %v5828 = vadd.f32 %v5779, %v5827
        %v5829 = vpop.f32.mrf.mxu0
        %v5830 = vadd.f32 %v5781, %v5829
        %5831 = vmatmul.bf16.gmra.mxu0 %v1462
        %v5832 = vpop.f32.mrf.mxu0
        %v5833 = vadd.f32 %v5784, %v5832
        %v5834 = vpop.f32.mrf.mxu0
        %v5835 = vadd.f32 %v5786, %v5834
        %5836 = vmatmul.bf16.gmra.mxu0 %v1466
        %v5837 = vpop.f32.mrf.mxu0
        %v5838 = vadd.f32 %v5789, %v5837
        %v5839 = vpop.f32.mrf.mxu0
        %v5840 = vadd.f32 %v5791, %v5839
        %5841 = vmatmul.bf16.gmra.mxu0 %v1470
        %v5842 = vpop.f32.mrf.mxu0
        %v5843 = vadd.f32 %v5794, %v5842
        %v5844 = vpop.f32.mrf.mxu0
        %v5845 = vadd.f32 %v5796, %v5844
        %5846 = vdwg.mxu0
        %5847 = vmatpush.bf16.msra.mxu0 %v3450
        %5848 = vmatpush.bf16.msra.mxu0 %v3435
        %5849 = vmatpush.bf16.msra.mxu0 %v3420
        %5850 = vmatpush.bf16.msra.mxu0 %v3405
        %5851 = vmatpush.bf16.msra.mxu0 %v3390
        %5852 = vmatpush.bf16.msra.mxu0 %v3375
        %5853 = vmatpush.bf16.msra.mxu0 %v3360
        %5854 = vmatpush.bf16.msra.mxu0 %v3345
        %5855 = vmatmul.bf16.gmra.mxu0 %v1443
        %v5856 = vpop.f32.mrf.mxu0
        %v5857 = vadd.f32 %v5808, %v5856
        %v5858 = vpop.f32.mrf.mxu0
        %v5859 = vadd.f32 %v5810, %v5858
        %5860 = vmatmul.bf16.gmra.mxu0 %v1447
        %v5861 = vpop.f32.mrf.mxu0
        %v5862 = vadd.f32 %v5813, %v5861
        %v5863 = vpop.f32.mrf.mxu0
        %v5864 = vadd.f32 %v5815, %v5863
        %5865 = vmatmul.bf16.gmra.mxu0 %v1451
        %v5866 = vpop.f32.mrf.mxu0
        %v5867 = vadd.f32 %v5818, %v5866
        %v5868 = vpop.f32.mrf.mxu0
        %v5869 = vadd.f32 %v5820, %v5868
        %5870 = vmatmul.bf16.gmra.mxu0 %v1455
        %v5871 = vpop.f32.mrf.mxu0
        %v5872 = vadd.f32 %v5823, %v5871
        %v5873 = vpop.f32.mrf.mxu0
        %v5874 = vadd.f32 %v5825, %v5873
        %5875 = vmatmul.bf16.gmra.mxu0 %v1459
        %v5876 = vpop.f32.mrf.mxu0
        %v5877 = vadd.f32 %v5828, %v5876
        %v5878 = vpop.f32.mrf.mxu0
        %v5879 = vadd.f32 %v5830, %v5878
        %5880 = vmatmul.bf16.gmra.mxu0 %v1463
        %v5881 = vpop.f32.mrf.mxu0
        %v5882 = vadd.f32 %v5833, %v5881
        %v5883 = vpop.f32.mrf.mxu0
        %v5884 = vadd.f32 %v5835, %v5883
        %5885 = vmatmul.bf16.gmra.mxu0 %v1467
        %v5886 = vpop.f32.mrf.mxu0
        %v5887 = vadd.f32 %v5838, %v5886
        %v5888 = vpop.f32.mrf.mxu0
        %v5889 = vadd.f32 %v5840, %v5888
        %5890 = vmatmul.bf16.gmra.mxu0 %v1471
        %v5891 = vpop.f32.mrf.mxu0
        %v5892 = vadd.f32 %v5843, %v5891
        %v5893 = vpop.f32.mrf.mxu0
        %v5894 = vadd.f32 %v5845, %v5893
        %5895 = vdwg.mxu0
        %5896 = vmatpush.bf16.msra.mxu0 %v3091
        %5897 = vmatpush.bf16.msra.mxu0 %v3076
        %5898 = vmatpush.bf16.msra.mxu0 %v3061
        %5899 = vmatpush.bf16.msra.mxu0 %v3046
        %5900 = vmatpush.bf16.msra.mxu0 %v3031
        %5901 = vmatpush.bf16.msra.mxu0 %v3016
        %5902 = vmatpush.bf16.msra.mxu0 %v3001
        %5903 = vmatpush.bf16.msra.mxu0 %v2986
        %5904 = vmatmul.bf16.gmra.mxu0 %v1440
        %v5905 = vpop.f32.mrf.mxu0
        %v5906 = vadd.f32 0.0, %v5905
        %v5907 = vpop.f32.mrf.mxu0
        %v5908 = vadd.f32 0.0, %v5907
        %5909 = vmatmul.bf16.gmra.mxu0 %v1444
        %v5910 = vpop.f32.mrf.mxu0
        %v5911 = vadd.f32 0.0, %v5910
        %v5912 = vpop.f32.mrf.mxu0
        %v5913 = vadd.f32 0.0, %v5912
        %5914 = vmatmul.bf16.gmra.mxu0 %v1448
        %v5915 = vpop.f32.mrf.mxu0
        %v5916 = vadd.f32 0.0, %v5915
        %v5917 = vpop.f32.mrf.mxu0
        %v5918 = vadd.f32 0.0, %v5917
        %5919 = vmatmul.bf16.gmra.mxu0 %v1452
        %v5920 = vpop.f32.mrf.mxu0
        %v5921 = vadd.f32 0.0, %v5920
        %v5922 = vpop.f32.mrf.mxu0
        %v5923 = vadd.f32 0.0, %v5922
        %5924 = vmatmul.bf16.gmra.mxu0 %v1456
        %v5925 = vpop.f32.mrf.mxu0
        %v5926 = vadd.f32 0.0, %v5925
        %v5927 = vpop.f32.mrf.mxu0
        %v5928 = vadd.f32 0.0, %v5927
        %5929 = vmatmul.bf16.gmra.mxu0 %v1460
        %v5930 = vpop.f32.mrf.mxu0
        %v5931 = vadd.f32 0.0, %v5930
        %v5932 = vpop.f32.mrf.mxu0
        %v5933 = vadd.f32 0.0, %v5932
        %5934 = vmatmul.bf16.gmra.mxu0 %v1464
        %v5935 = vpop.f32.mrf.mxu0
        %v5936 = vadd.f32 0.0, %v5935
        %v5937 = vpop.f32.mrf.mxu0
        %v5938 = vadd.f32 0.0, %v5937
        %5939 = vmatmul.bf16.gmra.mxu0 %v1468
        %v5940 = vpop.f32.mrf.mxu0
        %v5941 = vadd.f32 0.0, %v5940
        %v5942 = vpop.f32.mrf.mxu0
        %v5943 = vadd.f32 0.0, %v5942
        %5944 = vdwg.mxu0
        %5945 = vmatpush.bf16.msra.mxu0 %v3211
        %5946 = vmatpush.bf16.msra.mxu0 %v3196
        %5947 = vmatpush.bf16.msra.mxu0 %v3181
        %5948 = vmatpush.bf16.msra.mxu0 %v3166
        %5949 = vmatpush.bf16.msra.mxu0 %v3151
        %5950 = vmatpush.bf16.msra.mxu0 %v3136
        %5951 = vmatpush.bf16.msra.mxu0 %v3121
        %5952 = vmatpush.bf16.msra.mxu0 %v3106
        %5953 = vmatmul.bf16.gmra.mxu0 %v1441
        %v5954 = vpop.f32.mrf.mxu0
        %v5955 = vadd.f32 %v5906, %v5954
        %v5956 = vpop.f32.mrf.mxu0
        %v5957 = vadd.f32 %v5908, %v5956
        %5958 = vmatmul.bf16.gmra.mxu0 %v1445
        %v5959 = vpop.f32.mrf.mxu0
        %v5960 = vadd.f32 %v5911, %v5959
        %v5961 = vpop.f32.mrf.mxu0
        %v5962 = vadd.f32 %v5913, %v5961
        %5963 = vmatmul.bf16.gmra.mxu0 %v1449
        %v5964 = vpop.f32.mrf.mxu0
        %v5965 = vadd.f32 %v5916, %v5964
        %v5966 = vpop.f32.mrf.mxu0
        %v5967 = vadd.f32 %v5918, %v5966
        %5968 = vmatmul.bf16.gmra.mxu0 %v1453
        %v5969 = vpop.f32.mrf.mxu0
        %v5970 = vadd.f32 %v5921, %v5969
        %v5971 = vpop.f32.mrf.mxu0
        %v5972 = vadd.f32 %v5923, %v5971
        %5973 = vmatmul.bf16.gmra.mxu0 %v1457
        %v5974 = vpop.f32.mrf.mxu0
        %v5975 = vadd.f32 %v5926, %v5974
        %v5976 = vpop.f32.mrf.mxu0
        %v5977 = vadd.f32 %v5928, %v5976
        %5978 = vmatmul.bf16.gmra.mxu0 %v1461
        %v5979 = vpop.f32.mrf.mxu0
        %v5980 = vadd.f32 %v5931, %v5979
        %v5981 = vpop.f32.mrf.mxu0
        %v5982 = vadd.f32 %v5933, %v5981
        %5983 = vmatmul.bf16.gmra.mxu0 %v1465
        %v5984 = vpop.f32.mrf.mxu0
        %v5985 = vadd.f32 %v5936, %v5984
        %v5986 = vpop.f32.mrf.mxu0
        %v5987 = vadd.f32 %v5938, %v5986
        %5988 = vmatmul.bf16.gmra.mxu0 %v1469
        %v5989 = vpop.f32.mrf.mxu0
        %v5990 = vadd.f32 %v5941, %v5989
        %v5991 = vpop.f32.mrf.mxu0
        %v5992 = vadd.f32 %v5943, %v5991
        %5993 = vdwg.mxu0
        %5994 = vmatpush.bf16.msra.mxu0 %v3331
        %5995 = vmatpush.bf16.msra.mxu0 %v3316
        %5996 = vmatpush.bf16.msra.mxu0 %v3301
        %5997 = vmatpush.bf16.msra.mxu0 %v3286
        %5998 = vmatpush.bf16.msra.mxu0 %v3271
        %5999 = vmatpush.bf16.msra.mxu0 %v3256
        %6000 = vmatpush.bf16.msra.mxu0 %v3241
        %6001 = vmatpush.bf16.msra.mxu0 %v3226
        %6002 = vmatmul.bf16.gmra.mxu0 %v1442
        %v6003 = vpop.f32.mrf.mxu0
        %v6004 = vadd.f32 %v5955, %v6003
        %v6005 = vpop.f32.mrf.mxu0
        %v6006 = vadd.f32 %v5957, %v6005
        %6007 = vmatmul.bf16.gmra.mxu0 %v1446
        %v6008 = vpop.f32.mrf.mxu0
        %v6009 = vadd.f32 %v5960, %v6008
        %v6010 = vpop.f32.mrf.mxu0
        %v6011 = vadd.f32 %v5962, %v6010
        %6012 = vmatmul.bf16.gmra.mxu0 %v1450
        %v6013 = vpop.f32.mrf.mxu0
        %v6014 = vadd.f32 %v5965, %v6013
        %v6015 = vpop.f32.mrf.mxu0
        %v6016 = vadd.f32 %v5967, %v6015
        %6017 = vmatmul.bf16.gmra.mxu0 %v1454
        %v6018 = vpop.f32.mrf.mxu0
        %v6019 = vadd.f32 %v5970, %v6018
        %v6020 = vpop.f32.mrf.mxu0
        %v6021 = vadd.f32 %v5972, %v6020
        %6022 = vmatmul.bf16.gmra.mxu0 %v1458
        %v6023 = vpop.f32.mrf.mxu0
        %v6024 = vadd.f32 %v5975, %v6023
        %v6025 = vpop.f32.mrf.mxu0
        %v6026 = vadd.f32 %v5977, %v6025
        %6027 = vmatmul.bf16.gmra.mxu0 %v1462
        %v6028 = vpop.f32.mrf.mxu0
        %v6029 = vadd.f32 %v5980, %v6028
        %v6030 = vpop.f32.mrf.mxu0
        %v6031 = vadd.f32 %v5982, %v6030
        %6032 = vmatmul.bf16.gmra.mxu0 %v1466
        %v6033 = vpop.f32.mrf.mxu0
        %v6034 = vadd.f32 %v5985, %v6033
        %v6035 = vpop.f32.mrf.mxu0
        %v6036 = vadd.f32 %v5987, %v6035
        %6037 = vmatmul.bf16.gmra.mxu0 %v1470
        %v6038 = vpop.f32.mrf.mxu0
        %v6039 = vadd.f32 %v5990, %v6038
        %v6040 = vpop.f32.mrf.mxu0
        %v6041 = vadd.f32 %v5992, %v6040
        %6042 = vdwg.mxu0
        %6043 = vmatpush.bf16.msra.mxu0 %v3451
        %6044 = vmatpush.bf16.msra.mxu0 %v3436
        %6045 = vmatpush.bf16.msra.mxu0 %v3421
        %6046 = vmatpush.bf16.msra.mxu0 %v3406
        %6047 = vmatpush.bf16.msra.mxu0 %v3391
        %6048 = vmatpush.bf16.msra.mxu0 %v3376
        %6049 = vmatpush.bf16.msra.mxu0 %v3361
        %6050 = vmatpush.bf16.msra.mxu0 %v3346
        %6051 = vmatmul.bf16.gmra.mxu0 %v1443
        %v6052 = vpop.f32.mrf.mxu0
        %v6053 = vadd.f32 %v6004, %v6052
        %v6054 = vpop.f32.mrf.mxu0
        %v6055 = vadd.f32 %v6006, %v6054
        %6056 = vmatmul.bf16.gmra.mxu0 %v1447
        %v6057 = vpop.f32.mrf.mxu0
        %v6058 = vadd.f32 %v6009, %v6057
        %v6059 = vpop.f32.mrf.mxu0
        %v6060 = vadd.f32 %v6011, %v6059
        %6061 = vmatmul.bf16.gmra.mxu0 %v1451
        %v6062 = vpop.f32.mrf.mxu0
        %v6063 = vadd.f32 %v6014, %v6062
        %v6064 = vpop.f32.mrf.mxu0
        %v6065 = vadd.f32 %v6016, %v6064
        %6066 = vmatmul.bf16.gmra.mxu0 %v1455
        %v6067 = vpop.f32.mrf.mxu0
        %v6068 = vadd.f32 %v6019, %v6067
        %v6069 = vpop.f32.mrf.mxu0
        %v6070 = vadd.f32 %v6021, %v6069
        %6071 = vmatmul.bf16.gmra.mxu0 %v1459
        %v6072 = vpop.f32.mrf.mxu0
        %v6073 = vadd.f32 %v6024, %v6072
        %v6074 = vpop.f32.mrf.mxu0
        %v6075 = vadd.f32 %v6026, %v6074
        %6076 = vmatmul.bf16.gmra.mxu0 %v1463
        %v6077 = vpop.f32.mrf.mxu0
        %v6078 = vadd.f32 %v6029, %v6077
        %v6079 = vpop.f32.mrf.mxu0
        %v6080 = vadd.f32 %v6031, %v6079
        %6081 = vmatmul.bf16.gmra.mxu0 %v1467
        %v6082 = vpop.f32.mrf.mxu0
        %v6083 = vadd.f32 %v6034, %v6082
        %v6084 = vpop.f32.mrf.mxu0
        %v6085 = vadd.f32 %v6036, %v6084
        %6086 = vmatmul.bf16.gmra.mxu0 %v1471
        %v6087 = vpop.f32.mrf.mxu0
        %v6088 = vadd.f32 %v6039, %v6087
        %v6089 = vpop.f32.mrf.mxu0
        %v6090 = vadd.f32 %v6041, %v6089
        %6091 = vdwg.mxu0
        %6092 = vmatpush.bf16.msra.mxu0 %v3092
        %6093 = vmatpush.bf16.msra.mxu0 %v3077
        %6094 = vmatpush.bf16.msra.mxu0 %v3062
        %6095 = vmatpush.bf16.msra.mxu0 %v3047
        %6096 = vmatpush.bf16.msra.mxu0 %v3032
        %6097 = vmatpush.bf16.msra.mxu0 %v3017
        %6098 = vmatpush.bf16.msra.mxu0 %v3002
        %6099 = vmatpush.bf16.msra.mxu0 %v2987
        %6100 = vmatmul.bf16.gmra.mxu0 %v1440
        %v6101 = vpop.f32.mrf.mxu0
        %v6102 = vadd.f32 0.0, %v6101
        %v6103 = vpop.f32.mrf.mxu0
        %v6104 = vadd.f32 0.0, %v6103
        %6105 = vmatmul.bf16.gmra.mxu0 %v1444
        %v6106 = vpop.f32.mrf.mxu0
        %v6107 = vadd.f32 0.0, %v6106
        %v6108 = vpop.f32.mrf.mxu0
        %v6109 = vadd.f32 0.0, %v6108
        %6110 = vmatmul.bf16.gmra.mxu0 %v1448
        %v6111 = vpop.f32.mrf.mxu0
        %v6112 = vadd.f32 0.0, %v6111
        %v6113 = vpop.f32.mrf.mxu0
        %v6114 = vadd.f32 0.0, %v6113
        %6115 = vmatmul.bf16.gmra.mxu0 %v1452
        %v6116 = vpop.f32.mrf.mxu0
        %v6117 = vadd.f32 0.0, %v6116
        %v6118 = vpop.f32.mrf.mxu0
        %v6119 = vadd.f32 0.0, %v6118
        %6120 = vmatmul.bf16.gmra.mxu0 %v1456
        %v6121 = vpop.f32.mrf.mxu0
        %v6122 = vadd.f32 0.0, %v6121
        %v6123 = vpop.f32.mrf.mxu0
        %v6124 = vadd.f32 0.0, %v6123
        %6125 = vmatmul.bf16.gmra.mxu0 %v1460
        %v6126 = vpop.f32.mrf.mxu0
        %v6127 = vadd.f32 0.0, %v6126
        %v6128 = vpop.f32.mrf.mxu0
        %v6129 = vadd.f32 0.0, %v6128
        %6130 = vmatmul.bf16.gmra.mxu0 %v1464
        %v6131 = vpop.f32.mrf.mxu0
        %v6132 = vadd.f32 0.0, %v6131
        %v6133 = vpop.f32.mrf.mxu0
        %v6134 = vadd.f32 0.0, %v6133
        %6135 = vmatmul.bf16.gmra.mxu0 %v1468
        %v6136 = vpop.f32.mrf.mxu0
        %v6137 = vadd.f32 0.0, %v6136
        %v6138 = vpop.f32.mrf.mxu0
        %v6139 = vadd.f32 0.0, %v6138
        %6140 = vdwg.mxu0
        %6141 = vmatpush.bf16.msra.mxu0 %v3212
        %6142 = vmatpush.bf16.msra.mxu0 %v3197
        %6143 = vmatpush.bf16.msra.mxu0 %v3182
        %6144 = vmatpush.bf16.msra.mxu0 %v3167
        %6145 = vmatpush.bf16.msra.mxu0 %v3152
        %6146 = vmatpush.bf16.msra.mxu0 %v3137
        %6147 = vmatpush.bf16.msra.mxu0 %v3122
        %6148 = vmatpush.bf16.msra.mxu0 %v3107
        %6149 = vmatmul.bf16.gmra.mxu0 %v1441
        %v6150 = vpop.f32.mrf.mxu0
        %v6151 = vadd.f32 %v6102, %v6150
        %v6152 = vpop.f32.mrf.mxu0
        %v6153 = vadd.f32 %v6104, %v6152
        %6154 = vmatmul.bf16.gmra.mxu0 %v1445
        %v6155 = vpop.f32.mrf.mxu0
        %v6156 = vadd.f32 %v6107, %v6155
        %v6157 = vpop.f32.mrf.mxu0
        %v6158 = vadd.f32 %v6109, %v6157
        %6159 = vmatmul.bf16.gmra.mxu0 %v1449
        %v6160 = vpop.f32.mrf.mxu0
        %v6161 = vadd.f32 %v6112, %v6160
        %v6162 = vpop.f32.mrf.mxu0
        %v6163 = vadd.f32 %v6114, %v6162
        %6164 = vmatmul.bf16.gmra.mxu0 %v1453
        %v6165 = vpop.f32.mrf.mxu0
        %v6166 = vadd.f32 %v6117, %v6165
        %v6167 = vpop.f32.mrf.mxu0
        %v6168 = vadd.f32 %v6119, %v6167
        %6169 = vmatmul.bf16.gmra.mxu0 %v1457
        %v6170 = vpop.f32.mrf.mxu0
        %v6171 = vadd.f32 %v6122, %v6170
        %v6172 = vpop.f32.mrf.mxu0
        %v6173 = vadd.f32 %v6124, %v6172
        %6174 = vmatmul.bf16.gmra.mxu0 %v1461
        %v6175 = vpop.f32.mrf.mxu0
        %v6176 = vadd.f32 %v6127, %v6175
        %v6177 = vpop.f32.mrf.mxu0
        %v6178 = vadd.f32 %v6129, %v6177
        %6179 = vmatmul.bf16.gmra.mxu0 %v1465
        %v6180 = vpop.f32.mrf.mxu0
        %v6181 = vadd.f32 %v6132, %v6180
        %v6182 = vpop.f32.mrf.mxu0
        %v6183 = vadd.f32 %v6134, %v6182
        %6184 = vmatmul.bf16.gmra.mxu0 %v1469
        %v6185 = vpop.f32.mrf.mxu0
        %v6186 = vadd.f32 %v6137, %v6185
        %v6187 = vpop.f32.mrf.mxu0
        %v6188 = vadd.f32 %v6139, %v6187
        %6189 = vdwg.mxu0
        %6190 = vmatpush.bf16.msra.mxu0 %v3332
        %6191 = vmatpush.bf16.msra.mxu0 %v3317
        %6192 = vmatpush.bf16.msra.mxu0 %v3302
        %6193 = vmatpush.bf16.msra.mxu0 %v3287
        %6194 = vmatpush.bf16.msra.mxu0 %v3272
        %6195 = vmatpush.bf16.msra.mxu0 %v3257
        %6196 = vmatpush.bf16.msra.mxu0 %v3242
        %6197 = vmatpush.bf16.msra.mxu0 %v3227
        %6198 = vmatmul.bf16.gmra.mxu0 %v1442
        %v6199 = vpop.f32.mrf.mxu0
        %v6200 = vadd.f32 %v6151, %v6199
        %v6201 = vpop.f32.mrf.mxu0
        %v6202 = vadd.f32 %v6153, %v6201
        %6203 = vmatmul.bf16.gmra.mxu0 %v1446
        %v6204 = vpop.f32.mrf.mxu0
        %v6205 = vadd.f32 %v6156, %v6204
        %v6206 = vpop.f32.mrf.mxu0
        %v6207 = vadd.f32 %v6158, %v6206
        %6208 = vmatmul.bf16.gmra.mxu0 %v1450
        %v6209 = vpop.f32.mrf.mxu0
        %v6210 = vadd.f32 %v6161, %v6209
        %v6211 = vpop.f32.mrf.mxu0
        %v6212 = vadd.f32 %v6163, %v6211
        %6213 = vmatmul.bf16.gmra.mxu0 %v1454
        %v6214 = vpop.f32.mrf.mxu0
        %v6215 = vadd.f32 %v6166, %v6214
        %v6216 = vpop.f32.mrf.mxu0
        %v6217 = vadd.f32 %v6168, %v6216
        %6218 = vmatmul.bf16.gmra.mxu0 %v1458
        %v6219 = vpop.f32.mrf.mxu0
        %v6220 = vadd.f32 %v6171, %v6219
        %v6221 = vpop.f32.mrf.mxu0
        %v6222 = vadd.f32 %v6173, %v6221
        %6223 = vmatmul.bf16.gmra.mxu0 %v1462
        %v6224 = vpop.f32.mrf.mxu0
        %v6225 = vadd.f32 %v6176, %v6224
        %v6226 = vpop.f32.mrf.mxu0
        %v6227 = vadd.f32 %v6178, %v6226
        %6228 = vmatmul.bf16.gmra.mxu0 %v1466
        %v6229 = vpop.f32.mrf.mxu0
        %v6230 = vadd.f32 %v6181, %v6229
        %v6231 = vpop.f32.mrf.mxu0
        %v6232 = vadd.f32 %v6183, %v6231
        %6233 = vmatmul.bf16.gmra.mxu0 %v1470
        %v6234 = vpop.f32.mrf.mxu0
        %v6235 = vadd.f32 %v6186, %v6234
        %v6236 = vpop.f32.mrf.mxu0
        %v6237 = vadd.f32 %v6188, %v6236
        %6238 = vdwg.mxu0
        %6239 = vmatpush.bf16.msra.mxu0 %v3452
        %6240 = vmatpush.bf16.msra.mxu0 %v3437
        %6241 = vmatpush.bf16.msra.mxu0 %v3422
        %6242 = vmatpush.bf16.msra.mxu0 %v3407
        %6243 = vmatpush.bf16.msra.mxu0 %v3392
        %6244 = vmatpush.bf16.msra.mxu0 %v3377
        %6245 = vmatpush.bf16.msra.mxu0 %v3362
        %6246 = vmatpush.bf16.msra.mxu0 %v3347
        %6247 = vmatmul.bf16.gmra.mxu0 %v1443
        %v6248 = vpop.f32.mrf.mxu0
        %v6249 = vadd.f32 %v6200, %v6248
        %v6250 = vpop.f32.mrf.mxu0
        %v6251 = vadd.f32 %v6202, %v6250
        %6252 = vmatmul.bf16.gmra.mxu0 %v1447
        %v6253 = vpop.f32.mrf.mxu0
        %v6254 = vadd.f32 %v6205, %v6253
        %v6255 = vpop.f32.mrf.mxu0
        %v6256 = vadd.f32 %v6207, %v6255
        %6257 = vmatmul.bf16.gmra.mxu0 %v1451
        %v6258 = vpop.f32.mrf.mxu0
        %v6259 = vadd.f32 %v6210, %v6258
        %v6260 = vpop.f32.mrf.mxu0
        %v6261 = vadd.f32 %v6212, %v6260
        %6262 = vmatmul.bf16.gmra.mxu0 %v1455
        %v6263 = vpop.f32.mrf.mxu0
        %v6264 = vadd.f32 %v6215, %v6263
        %v6265 = vpop.f32.mrf.mxu0
        %v6266 = vadd.f32 %v6217, %v6265
        %6267 = vmatmul.bf16.gmra.mxu0 %v1459
        %v6268 = vpop.f32.mrf.mxu0
        %v6269 = vadd.f32 %v6220, %v6268
        %v6270 = vpop.f32.mrf.mxu0
        %v6271 = vadd.f32 %v6222, %v6270
        %6272 = vmatmul.bf16.gmra.mxu0 %v1463
        %v6273 = vpop.f32.mrf.mxu0
        %v6274 = vadd.f32 %v6225, %v6273
        %v6275 = vpop.f32.mrf.mxu0
        %v6276 = vadd.f32 %v6227, %v6275
        %6277 = vmatmul.bf16.gmra.mxu0 %v1467
        %v6278 = vpop.f32.mrf.mxu0
        %v6279 = vadd.f32 %v6230, %v6278
        %v6280 = vpop.f32.mrf.mxu0
        %v6281 = vadd.f32 %v6232, %v6280
        %6282 = vmatmul.bf16.gmra.mxu0 %v1471
        %v6283 = vpop.f32.mrf.mxu0
        %v6284 = vadd.f32 %v6235, %v6283
        %v6285 = vpop.f32.mrf.mxu0
        %v6286 = vadd.f32 %v6237, %v6285
        %6287 = vdwg.mxu0
        %6288 = vmatpush.bf16.msra.mxu0 %v3093
        %6289 = vmatpush.bf16.msra.mxu0 %v3078
        %6290 = vmatpush.bf16.msra.mxu0 %v3063
        %6291 = vmatpush.bf16.msra.mxu0 %v3048
        %6292 = vmatpush.bf16.msra.mxu0 %v3033
        %6293 = vmatpush.bf16.msra.mxu0 %v3018
        %6294 = vmatpush.bf16.msra.mxu0 %v3003
        %6295 = vmatpush.bf16.msra.mxu0 %v2988
        %6296 = vmatmul.bf16.gmra.mxu0 %v1440
        %v6297 = vpop.f32.mrf.mxu0
        %v6298 = vadd.f32 0.0, %v6297
        %v6299 = vpop.f32.mrf.mxu0
        %v6300 = vadd.f32 0.0, %v6299
        %6301 = vmatmul.bf16.gmra.mxu0 %v1444
        %v6302 = vpop.f32.mrf.mxu0
        %v6303 = vadd.f32 0.0, %v6302
        %v6304 = vpop.f32.mrf.mxu0
        %v6305 = vadd.f32 0.0, %v6304
        %6306 = vmatmul.bf16.gmra.mxu0 %v1448
        %v6307 = vpop.f32.mrf.mxu0
        %v6308 = vadd.f32 0.0, %v6307
        %v6309 = vpop.f32.mrf.mxu0
        %v6310 = vadd.f32 0.0, %v6309
        %6311 = vmatmul.bf16.gmra.mxu0 %v1452
        %v6312 = vpop.f32.mrf.mxu0
        %v6313 = vadd.f32 0.0, %v6312
        %v6314 = vpop.f32.mrf.mxu0
        %v6315 = vadd.f32 0.0, %v6314
        %6316 = vmatmul.bf16.gmra.mxu0 %v1456
        %v6317 = vpop.f32.mrf.mxu0
        %v6318 = vadd.f32 0.0, %v6317
        %v6319 = vpop.f32.mrf.mxu0
        %v6320 = vadd.f32 0.0, %v6319
        %6321 = vmatmul.bf16.gmra.mxu0 %v1460
        %v6322 = vpop.f32.mrf.mxu0
        %v6323 = vadd.f32 0.0, %v6322
        %v6324 = vpop.f32.mrf.mxu0
        %v6325 = vadd.f32 0.0, %v6324
        %6326 = vmatmul.bf16.gmra.mxu0 %v1464
        %v6327 = vpop.f32.mrf.mxu0
        %v6328 = vadd.f32 0.0, %v6327
        %v6329 = vpop.f32.mrf.mxu0
        %v6330 = vadd.f32 0.0, %v6329
        %6331 = vmatmul.bf16.gmra.mxu0 %v1468
        %v6332 = vpop.f32.mrf.mxu0
        %v6333 = vadd.f32 0.0, %v6332
        %v6334 = vpop.f32.mrf.mxu0
        %v6335 = vadd.f32 0.0, %v6334
        %6336 = vdwg.mxu0
        %6337 = vmatpush.bf16.msra.mxu0 %v3213
        %6338 = vmatpush.bf16.msra.mxu0 %v3198
        %6339 = vmatpush.bf16.msra.mxu0 %v3183
        %6340 = vmatpush.bf16.msra.mxu0 %v3168
        %6341 = vmatpush.bf16.msra.mxu0 %v3153
        %6342 = vmatpush.bf16.msra.mxu0 %v3138
        %6343 = vmatpush.bf16.msra.mxu0 %v3123
        %6344 = vmatpush.bf16.msra.mxu0 %v3108
        %6345 = vmatmul.bf16.gmra.mxu0 %v1441
        %v6346 = vpop.f32.mrf.mxu0
        %v6347 = vadd.f32 %v6298, %v6346
        %v6348 = vpop.f32.mrf.mxu0
        %v6349 = vadd.f32 %v6300, %v6348
        %6350 = vmatmul.bf16.gmra.mxu0 %v1445
        %v6351 = vpop.f32.mrf.mxu0
        %v6352 = vadd.f32 %v6303, %v6351
        %v6353 = vpop.f32.mrf.mxu0
        %v6354 = vadd.f32 %v6305, %v6353
        %6355 = vmatmul.bf16.gmra.mxu0 %v1449
        %v6356 = vpop.f32.mrf.mxu0
        %v6357 = vadd.f32 %v6308, %v6356
        %v6358 = vpop.f32.mrf.mxu0
        %v6359 = vadd.f32 %v6310, %v6358
        %6360 = vmatmul.bf16.gmra.mxu0 %v1453
        %v6361 = vpop.f32.mrf.mxu0
        %v6362 = vadd.f32 %v6313, %v6361
        %v6363 = vpop.f32.mrf.mxu0
        %v6364 = vadd.f32 %v6315, %v6363
        %6365 = vmatmul.bf16.gmra.mxu0 %v1457
        %v6366 = vpop.f32.mrf.mxu0
        %v6367 = vadd.f32 %v6318, %v6366
        %v6368 = vpop.f32.mrf.mxu0
        %v6369 = vadd.f32 %v6320, %v6368
        %6370 = vmatmul.bf16.gmra.mxu0 %v1461
        %v6371 = vpop.f32.mrf.mxu0
        %v6372 = vadd.f32 %v6323, %v6371
        %v6373 = vpop.f32.mrf.mxu0
        %v6374 = vadd.f32 %v6325, %v6373
        %6375 = vmatmul.bf16.gmra.mxu0 %v1465
        %v6376 = vpop.f32.mrf.mxu0
        %v6377 = vadd.f32 %v6328, %v6376
        %v6378 = vpop.f32.mrf.mxu0
        %v6379 = vadd.f32 %v6330, %v6378
        %6380 = vmatmul.bf16.gmra.mxu0 %v1469
        %v6381 = vpop.f32.mrf.mxu0
        %v6382 = vadd.f32 %v6333, %v6381
        %v6383 = vpop.f32.mrf.mxu0
        %v6384 = vadd.f32 %v6335, %v6383
        %6385 = vdwg.mxu0
        %6386 = vmatpush.bf16.msra.mxu0 %v3333
        %6387 = vmatpush.bf16.msra.mxu0 %v3318
        %6388 = vmatpush.bf16.msra.mxu0 %v3303
        %6389 = vmatpush.bf16.msra.mxu0 %v3288
        %6390 = vmatpush.bf16.msra.mxu0 %v3273
        %6391 = vmatpush.bf16.msra.mxu0 %v3258
        %6392 = vmatpush.bf16.msra.mxu0 %v3243
        %6393 = vmatpush.bf16.msra.mxu0 %v3228
        %6394 = vmatmul.bf16.gmra.mxu0 %v1442
        %v6395 = vpop.f32.mrf.mxu0
        %v6396 = vadd.f32 %v6347, %v6395
        %v6397 = vpop.f32.mrf.mxu0
        %v6398 = vadd.f32 %v6349, %v6397
        %6399 = vmatmul.bf16.gmra.mxu0 %v1446
        %v6400 = vpop.f32.mrf.mxu0
        %v6401 = vadd.f32 %v6352, %v6400
        %v6402 = vpop.f32.mrf.mxu0
        %v6403 = vadd.f32 %v6354, %v6402
        %6404 = vmatmul.bf16.gmra.mxu0 %v1450
        %v6405 = vpop.f32.mrf.mxu0
        %v6406 = vadd.f32 %v6357, %v6405
        %v6407 = vpop.f32.mrf.mxu0
        %v6408 = vadd.f32 %v6359, %v6407
        %6409 = vmatmul.bf16.gmra.mxu0 %v1454
        %v6410 = vpop.f32.mrf.mxu0
        %v6411 = vadd.f32 %v6362, %v6410
        %v6412 = vpop.f32.mrf.mxu0
        %v6413 = vadd.f32 %v6364, %v6412
        %6414 = vmatmul.bf16.gmra.mxu0 %v1458
        %v6415 = vpop.f32.mrf.mxu0
        %v6416 = vadd.f32 %v6367, %v6415
        %v6417 = vpop.f32.mrf.mxu0
        %v6418 = vadd.f32 %v6369, %v6417
        %6419 = vmatmul.bf16.gmra.mxu0 %v1462
        %v6420 = vpop.f32.mrf.mxu0
        %v6421 = vadd.f32 %v6372, %v6420
        %v6422 = vpop.f32.mrf.mxu0
        %v6423 = vadd.f32 %v6374, %v6422
        %6424 = vmatmul.bf16.gmra.mxu0 %v1466
        %v6425 = vpop.f32.mrf.mxu0
        %v6426 = vadd.f32 %v6377, %v6425
        %v6427 = vpop.f32.mrf.mxu0
        %v6428 = vadd.f32 %v6379, %v6427
        %6429 = vmatmul.bf16.gmra.mxu0 %v1470
        %v6430 = vpop.f32.mrf.mxu0
        %v6431 = vadd.f32 %v6382, %v6430
        %v6432 = vpop.f32.mrf.mxu0
        %v6433 = vadd.f32 %v6384, %v6432
        %6434 = vdwg.mxu0
        %6435 = vmatpush.bf16.msra.mxu0 %v3453
        %6436 = vmatpush.bf16.msra.mxu0 %v3438
        %6437 = vmatpush.bf16.msra.mxu0 %v3423
        %6438 = vmatpush.bf16.msra.mxu0 %v3408
        %6439 = vmatpush.bf16.msra.mxu0 %v3393
        %6440 = vmatpush.bf16.msra.mxu0 %v3378
        %6441 = vmatpush.bf16.msra.mxu0 %v3363
        %6442 = vmatpush.bf16.msra.mxu0 %v3348
        %6443 = vmatmul.bf16.gmra.mxu0 %v1443
        %v6444 = vpop.f32.mrf.mxu0
        %v6445 = vadd.f32 %v6396, %v6444
        %v6446 = vpop.f32.mrf.mxu0
        %v6447 = vadd.f32 %v6398, %v6446
        %6448 = vmatmul.bf16.gmra.mxu0 %v1447
        %v6449 = vpop.f32.mrf.mxu0
        %v6450 = vadd.f32 %v6401, %v6449
        %v6451 = vpop.f32.mrf.mxu0
        %v6452 = vadd.f32 %v6403, %v6451
        %6453 = vmatmul.bf16.gmra.mxu0 %v1451
        %v6454 = vpop.f32.mrf.mxu0
        %v6455 = vadd.f32 %v6406, %v6454
        %v6456 = vpop.f32.mrf.mxu0
        %v6457 = vadd.f32 %v6408, %v6456
        %6458 = vmatmul.bf16.gmra.mxu0 %v1455
        %v6459 = vpop.f32.mrf.mxu0
        %v6460 = vadd.f32 %v6411, %v6459
        %v6461 = vpop.f32.mrf.mxu0
        %v6462 = vadd.f32 %v6413, %v6461
        %6463 = vmatmul.bf16.gmra.mxu0 %v1459
        %v6464 = vpop.f32.mrf.mxu0
        %v6465 = vadd.f32 %v6416, %v6464
        %v6466 = vpop.f32.mrf.mxu0
        %v6467 = vadd.f32 %v6418, %v6466
        %6468 = vmatmul.bf16.gmra.mxu0 %v1463
        %v6469 = vpop.f32.mrf.mxu0
        %v6470 = vadd.f32 %v6421, %v6469
        %v6471 = vpop.f32.mrf.mxu0
        %v6472 = vadd.f32 %v6423, %v6471
        %6473 = vmatmul.bf16.gmra.mxu0 %v1467
        %v6474 = vpop.f32.mrf.mxu0
        %v6475 = vadd.f32 %v6426, %v6474
        %v6476 = vpop.f32.mrf.mxu0
        %v6477 = vadd.f32 %v6428, %v6476
        %6478 = vmatmul.bf16.gmra.mxu0 %v1471
        %v6479 = vpop.f32.mrf.mxu0
        %v6480 = vadd.f32 %v6431, %v6479
        %v6481 = vpop.f32.mrf.mxu0
        %v6482 = vadd.f32 %v6433, %v6481
        %6483 = vdwg.mxu0
        %6484 = vmatpush.bf16.msra.mxu0 %v3094
        %6485 = vmatpush.bf16.msra.mxu0 %v3079
        %6486 = vmatpush.bf16.msra.mxu0 %v3064
        %6487 = vmatpush.bf16.msra.mxu0 %v3049
        %6488 = vmatpush.bf16.msra.mxu0 %v3034
        %6489 = vmatpush.bf16.msra.mxu0 %v3019
        %6490 = vmatpush.bf16.msra.mxu0 %v3004
        %6491 = vmatpush.bf16.msra.mxu0 %v2989
        %6492 = vmatmul.bf16.gmra.mxu0 %v1440
        %v6493 = vpop.f32.mrf.mxu0
        %v6494 = vadd.f32 0.0, %v6493
        %v6495 = vpop.f32.mrf.mxu0
        %v6496 = vadd.f32 0.0, %v6495
        %6497 = vmatmul.bf16.gmra.mxu0 %v1444
        %v6498 = vpop.f32.mrf.mxu0
        %v6499 = vadd.f32 0.0, %v6498
        %v6500 = vpop.f32.mrf.mxu0
        %v6501 = vadd.f32 0.0, %v6500
        %6502 = vmatmul.bf16.gmra.mxu0 %v1448
        %v6503 = vpop.f32.mrf.mxu0
        %v6504 = vadd.f32 0.0, %v6503
        %v6505 = vpop.f32.mrf.mxu0
        %v6506 = vadd.f32 0.0, %v6505
        %6507 = vmatmul.bf16.gmra.mxu0 %v1452
        %v6508 = vpop.f32.mrf.mxu0
        %v6509 = vadd.f32 0.0, %v6508
        %v6510 = vpop.f32.mrf.mxu0
        %v6511 = vadd.f32 0.0, %v6510
        %6512 = vmatmul.bf16.gmra.mxu0 %v1456
        %v6513 = vpop.f32.mrf.mxu0
        %v6514 = vadd.f32 0.0, %v6513
        %v6515 = vpop.f32.mrf.mxu0
        %v6516 = vadd.f32 0.0, %v6515
        %6517 = vmatmul.bf16.gmra.mxu0 %v1460
        %v6518 = vpop.f32.mrf.mxu0
        %v6519 = vadd.f32 0.0, %v6518
        %v6520 = vpop.f32.mrf.mxu0
        %v6521 = vadd.f32 0.0, %v6520
        %6522 = vmatmul.bf16.gmra.mxu0 %v1464
        %v6523 = vpop.f32.mrf.mxu0
        %v6524 = vadd.f32 0.0, %v6523
        %v6525 = vpop.f32.mrf.mxu0
        %v6526 = vadd.f32 0.0, %v6525
        %6527 = vmatmul.bf16.gmra.mxu0 %v1468
        %v6528 = vpop.f32.mrf.mxu0
        %v6529 = vadd.f32 0.0, %v6528
        %v6530 = vpop.f32.mrf.mxu0
        %v6531 = vadd.f32 0.0, %v6530
        %6532 = vdwg.mxu0
        %6533 = vmatpush.bf16.msra.mxu0 %v3214
        %6534 = vmatpush.bf16.msra.mxu0 %v3199
        %6535 = vmatpush.bf16.msra.mxu0 %v3184
        %6536 = vmatpush.bf16.msra.mxu0 %v3169
        %6537 = vmatpush.bf16.msra.mxu0 %v3154
        %6538 = vmatpush.bf16.msra.mxu0 %v3139
        %6539 = vmatpush.bf16.msra.mxu0 %v3124
        %6540 = vmatpush.bf16.msra.mxu0 %v3109
        %6541 = vmatmul.bf16.gmra.mxu0 %v1441
        %v6542 = vpop.f32.mrf.mxu0
        %v6543 = vadd.f32 %v6494, %v6542
        %v6544 = vpop.f32.mrf.mxu0
        %v6545 = vadd.f32 %v6496, %v6544
        %6546 = vmatmul.bf16.gmra.mxu0 %v1445
        %v6547 = vpop.f32.mrf.mxu0
        %v6548 = vadd.f32 %v6499, %v6547
        %v6549 = vpop.f32.mrf.mxu0
        %v6550 = vadd.f32 %v6501, %v6549
        %6551 = vmatmul.bf16.gmra.mxu0 %v1449
        %v6552 = vpop.f32.mrf.mxu0
        %v6553 = vadd.f32 %v6504, %v6552
        %v6554 = vpop.f32.mrf.mxu0
        %v6555 = vadd.f32 %v6506, %v6554
        %6556 = vmatmul.bf16.gmra.mxu0 %v1453
        %v6557 = vpop.f32.mrf.mxu0
        %v6558 = vadd.f32 %v6509, %v6557
        %v6559 = vpop.f32.mrf.mxu0
        %v6560 = vadd.f32 %v6511, %v6559
        %6561 = vmatmul.bf16.gmra.mxu0 %v1457
        %v6562 = vpop.f32.mrf.mxu0
        %v6563 = vadd.f32 %v6514, %v6562
        %v6564 = vpop.f32.mrf.mxu0
        %v6565 = vadd.f32 %v6516, %v6564
        %6566 = vmatmul.bf16.gmra.mxu0 %v1461
        %v6567 = vpop.f32.mrf.mxu0
        %v6568 = vadd.f32 %v6519, %v6567
        %v6569 = vpop.f32.mrf.mxu0
        %v6570 = vadd.f32 %v6521, %v6569
        %6571 = vmatmul.bf16.gmra.mxu0 %v1465
        %v6572 = vpop.f32.mrf.mxu0
        %v6573 = vadd.f32 %v6524, %v6572
        %v6574 = vpop.f32.mrf.mxu0
        %v6575 = vadd.f32 %v6526, %v6574
        %6576 = vmatmul.bf16.gmra.mxu0 %v1469
        %v6577 = vpop.f32.mrf.mxu0
        %v6578 = vadd.f32 %v6529, %v6577
        %v6579 = vpop.f32.mrf.mxu0
        %v6580 = vadd.f32 %v6531, %v6579
        %6581 = vdwg.mxu0
        %6582 = vmatpush.bf16.msra.mxu0 %v3334
        %6583 = vmatpush.bf16.msra.mxu0 %v3319
        %6584 = vmatpush.bf16.msra.mxu0 %v3304
        %6585 = vmatpush.bf16.msra.mxu0 %v3289
        %6586 = vmatpush.bf16.msra.mxu0 %v3274
        %6587 = vmatpush.bf16.msra.mxu0 %v3259
        %6588 = vmatpush.bf16.msra.mxu0 %v3244
        %6589 = vmatpush.bf16.msra.mxu0 %v3229
        %6590 = vmatmul.bf16.gmra.mxu0 %v1442
        %v6591 = vpop.f32.mrf.mxu0
        %v6592 = vadd.f32 %v6543, %v6591
        %v6593 = vpop.f32.mrf.mxu0
        %v6594 = vadd.f32 %v6545, %v6593
        %6595 = vmatmul.bf16.gmra.mxu0 %v1446
        %v6596 = vpop.f32.mrf.mxu0
        %v6597 = vadd.f32 %v6548, %v6596
        %v6598 = vpop.f32.mrf.mxu0
        %v6599 = vadd.f32 %v6550, %v6598
        %6600 = vmatmul.bf16.gmra.mxu0 %v1450
        %v6601 = vpop.f32.mrf.mxu0
        %v6602 = vadd.f32 %v6553, %v6601
        %v6603 = vpop.f32.mrf.mxu0
        %v6604 = vadd.f32 %v6555, %v6603
        %6605 = vmatmul.bf16.gmra.mxu0 %v1454
        %v6606 = vpop.f32.mrf.mxu0
        %v6607 = vadd.f32 %v6558, %v6606
        %v6608 = vpop.f32.mrf.mxu0
        %v6609 = vadd.f32 %v6560, %v6608
        %6610 = vmatmul.bf16.gmra.mxu0 %v1458
        %v6611 = vpop.f32.mrf.mxu0
        %v6612 = vadd.f32 %v6563, %v6611
        %v6613 = vpop.f32.mrf.mxu0
        %v6614 = vadd.f32 %v6565, %v6613
        %6615 = vmatmul.bf16.gmra.mxu0 %v1462
        %v6616 = vpop.f32.mrf.mxu0
        %v6617 = vadd.f32 %v6568, %v6616
        %v6618 = vpop.f32.mrf.mxu0
        %v6619 = vadd.f32 %v6570, %v6618
        %6620 = vmatmul.bf16.gmra.mxu0 %v1466
        %v6621 = vpop.f32.mrf.mxu0
        %v6622 = vadd.f32 %v6573, %v6621
        %v6623 = vpop.f32.mrf.mxu0
        %v6624 = vadd.f32 %v6575, %v6623
        %6625 = vmatmul.bf16.gmra.mxu0 %v1470
        %v6626 = vpop.f32.mrf.mxu0
        %v6627 = vadd.f32 %v6578, %v6626
        %v6628 = vpop.f32.mrf.mxu0
        %v6629 = vadd.f32 %v6580, %v6628
        %6630 = vdwg.mxu0
        %6631 = vmatpush.bf16.msra.mxu0 %v3454
        %6632 = vmatpush.bf16.msra.mxu0 %v3439
        %6633 = vmatpush.bf16.msra.mxu0 %v3424
        %6634 = vmatpush.bf16.msra.mxu0 %v3409
        %6635 = vmatpush.bf16.msra.mxu0 %v3394
        %6636 = vmatpush.bf16.msra.mxu0 %v3379
        %6637 = vmatpush.bf16.msra.mxu0 %v3364
        %6638 = vmatpush.bf16.msra.mxu0 %v3349
        %6639 = vmatmul.bf16.gmra.mxu0 %v1443
        %v6640 = vpop.f32.mrf.mxu0
        %v6641 = vadd.f32 %v6592, %v6640
        %v6642 = vpop.f32.mrf.mxu0
        %v6643 = vadd.f32 %v6594, %v6642
        %6644 = vmatmul.bf16.gmra.mxu0 %v1447
        %v6645 = vpop.f32.mrf.mxu0
        %v6646 = vadd.f32 %v6597, %v6645
        %v6647 = vpop.f32.mrf.mxu0
        %v6648 = vadd.f32 %v6599, %v6647
        %6649 = vmatmul.bf16.gmra.mxu0 %v1451
        %v6650 = vpop.f32.mrf.mxu0
        %v6651 = vadd.f32 %v6602, %v6650
        %v6652 = vpop.f32.mrf.mxu0
        %v6653 = vadd.f32 %v6604, %v6652
        %6654 = vmatmul.bf16.gmra.mxu0 %v1455
        %v6655 = vpop.f32.mrf.mxu0
        %v6656 = vadd.f32 %v6607, %v6655
        %v6657 = vpop.f32.mrf.mxu0
        %v6658 = vadd.f32 %v6609, %v6657
        %6659 = vmatmul.bf16.gmra.mxu0 %v1459
        %v6660 = vpop.f32.mrf.mxu0
        %v6661 = vadd.f32 %v6612, %v6660
        %v6662 = vpop.f32.mrf.mxu0
        %v6663 = vadd.f32 %v6614, %v6662
        %6664 = vmatmul.bf16.gmra.mxu0 %v1463
        %v6665 = vpop.f32.mrf.mxu0
        %v6666 = vadd.f32 %v6617, %v6665
        %v6667 = vpop.f32.mrf.mxu0
        %v6668 = vadd.f32 %v6619, %v6667
        %6669 = vmatmul.bf16.gmra.mxu0 %v1467
        %v6670 = vpop.f32.mrf.mxu0
        %v6671 = vadd.f32 %v6622, %v6670
        %v6672 = vpop.f32.mrf.mxu0
        %v6673 = vadd.f32 %v6624, %v6672
        %6674 = vmatmul.bf16.gmra.mxu0 %v1471
        %v6675 = vpop.f32.mrf.mxu0
        %v6676 = vadd.f32 %v6627, %v6675
        %v6677 = vpop.f32.mrf.mxu0
        %v6678 = vadd.f32 %v6629, %v6677
        %6679 = vdwg.mxu0
        %6680 = vmatpush.bf16.msra.mxu0 %v3095
        %6681 = vmatpush.bf16.msra.mxu0 %v3080
        %6682 = vmatpush.bf16.msra.mxu0 %v3065
        %6683 = vmatpush.bf16.msra.mxu0 %v3050
        %6684 = vmatpush.bf16.msra.mxu0 %v3035
        %6685 = vmatpush.bf16.msra.mxu0 %v3020
        %6686 = vmatpush.bf16.msra.mxu0 %v3005
        %6687 = vmatpush.bf16.msra.mxu0 %v2990
        %6688 = vmatmul.bf16.gmra.mxu0 %v1440
        %v6689 = vpop.f32.mrf.mxu0
        %v6690 = vadd.f32 0.0, %v6689
        %v6691 = vpop.f32.mrf.mxu0
        %v6692 = vadd.f32 0.0, %v6691
        %6693 = vmatmul.bf16.gmra.mxu0 %v1444
        %v6694 = vpop.f32.mrf.mxu0
        %v6695 = vadd.f32 0.0, %v6694
        %v6696 = vpop.f32.mrf.mxu0
        %v6697 = vadd.f32 0.0, %v6696
        %6698 = vmatmul.bf16.gmra.mxu0 %v1448
        %v6699 = vpop.f32.mrf.mxu0
        %v6700 = vadd.f32 0.0, %v6699
        %v6701 = vpop.f32.mrf.mxu0
        %v6702 = vadd.f32 0.0, %v6701
        %6703 = vmatmul.bf16.gmra.mxu0 %v1452
        %v6704 = vpop.f32.mrf.mxu0
        %v6705 = vadd.f32 0.0, %v6704
        %v6706 = vpop.f32.mrf.mxu0
        %v6707 = vadd.f32 0.0, %v6706
        %6708 = vmatmul.bf16.gmra.mxu0 %v1456
        %v6709 = vpop.f32.mrf.mxu0
        %v6710 = vadd.f32 0.0, %v6709
        %v6711 = vpop.f32.mrf.mxu0
        %v6712 = vadd.f32 0.0, %v6711
        %6713 = vmatmul.bf16.gmra.mxu0 %v1460
        %v6714 = vpop.f32.mrf.mxu0
        %v6715 = vadd.f32 0.0, %v6714
        %v6716 = vpop.f32.mrf.mxu0
        %v6717 = vadd.f32 0.0, %v6716
        %6718 = vmatmul.bf16.gmra.mxu0 %v1464
        %v6719 = vpop.f32.mrf.mxu0
        %v6720 = vadd.f32 0.0, %v6719
        %v6721 = vpop.f32.mrf.mxu0
        %v6722 = vadd.f32 0.0, %v6721
        %6723 = vmatmul.bf16.gmra.mxu0 %v1468
        %v6724 = vpop.f32.mrf.mxu0
        %v6725 = vadd.f32 0.0, %v6724
        %v6726 = vpop.f32.mrf.mxu0
        %v6727 = vadd.f32 0.0, %v6726
        %6728 = vdwg.mxu0
        %6729 = vmatpush.bf16.msra.mxu0 %v3215
        %6730 = vmatpush.bf16.msra.mxu0 %v3200
        %6731 = vmatpush.bf16.msra.mxu0 %v3185
        %6732 = vmatpush.bf16.msra.mxu0 %v3170
        %6733 = vmatpush.bf16.msra.mxu0 %v3155
        %6734 = vmatpush.bf16.msra.mxu0 %v3140
        %6735 = vmatpush.bf16.msra.mxu0 %v3125
        %6736 = vmatpush.bf16.msra.mxu0 %v3110
        %6737 = vmatmul.bf16.gmra.mxu0 %v1441
        %v6738 = vpop.f32.mrf.mxu0
        %v6739 = vadd.f32 %v6690, %v6738
        %v6740 = vpop.f32.mrf.mxu0
        %v6741 = vadd.f32 %v6692, %v6740
        %6742 = vmatmul.bf16.gmra.mxu0 %v1445
        %v6743 = vpop.f32.mrf.mxu0
        %v6744 = vadd.f32 %v6695, %v6743
        %v6745 = vpop.f32.mrf.mxu0
        %v6746 = vadd.f32 %v6697, %v6745
        %6747 = vmatmul.bf16.gmra.mxu0 %v1449
        %v6748 = vpop.f32.mrf.mxu0
        %v6749 = vadd.f32 %v6700, %v6748
        %v6750 = vpop.f32.mrf.mxu0
        %v6751 = vadd.f32 %v6702, %v6750
        %6752 = vmatmul.bf16.gmra.mxu0 %v1453
        %v6753 = vpop.f32.mrf.mxu0
        %v6754 = vadd.f32 %v6705, %v6753
        %v6755 = vpop.f32.mrf.mxu0
        %v6756 = vadd.f32 %v6707, %v6755
        %6757 = vmatmul.bf16.gmra.mxu0 %v1457
        %v6758 = vpop.f32.mrf.mxu0
        %v6759 = vadd.f32 %v6710, %v6758
        %v6760 = vpop.f32.mrf.mxu0
        %v6761 = vadd.f32 %v6712, %v6760
        %6762 = vmatmul.bf16.gmra.mxu0 %v1461
        %v6763 = vpop.f32.mrf.mxu0
        %v6764 = vadd.f32 %v6715, %v6763
        %v6765 = vpop.f32.mrf.mxu0
        %v6766 = vadd.f32 %v6717, %v6765
        %6767 = vmatmul.bf16.gmra.mxu0 %v1465
        %v6768 = vpop.f32.mrf.mxu0
        %v6769 = vadd.f32 %v6720, %v6768
        %v6770 = vpop.f32.mrf.mxu0
        %v6771 = vadd.f32 %v6722, %v6770
        %6772 = vmatmul.bf16.gmra.mxu0 %v1469
        %v6773 = vpop.f32.mrf.mxu0
        %v6774 = vadd.f32 %v6725, %v6773
        %v6775 = vpop.f32.mrf.mxu0
        %v6776 = vadd.f32 %v6727, %v6775
        %6777 = vdwg.mxu0
        %6778 = vmatpush.bf16.msra.mxu0 %v3335
        %6779 = vmatpush.bf16.msra.mxu0 %v3320
        %6780 = vmatpush.bf16.msra.mxu0 %v3305
        %6781 = vmatpush.bf16.msra.mxu0 %v3290
        %6782 = vmatpush.bf16.msra.mxu0 %v3275
        %6783 = vmatpush.bf16.msra.mxu0 %v3260
        %6784 = vmatpush.bf16.msra.mxu0 %v3245
        %6785 = vmatpush.bf16.msra.mxu0 %v3230
        %6786 = vmatmul.bf16.gmra.mxu0 %v1442
        %v6787 = vpop.f32.mrf.mxu0
        %v6788 = vadd.f32 %v6739, %v6787
        %v6789 = vpop.f32.mrf.mxu0
        %v6790 = vadd.f32 %v6741, %v6789
        %6791 = vmatmul.bf16.gmra.mxu0 %v1446
        %v6792 = vpop.f32.mrf.mxu0
        %v6793 = vadd.f32 %v6744, %v6792
        %v6794 = vpop.f32.mrf.mxu0
        %v6795 = vadd.f32 %v6746, %v6794
        %6796 = vmatmul.bf16.gmra.mxu0 %v1450
        %v6797 = vpop.f32.mrf.mxu0
        %v6798 = vadd.f32 %v6749, %v6797
        %v6799 = vpop.f32.mrf.mxu0
        %v6800 = vadd.f32 %v6751, %v6799
        %6801 = vmatmul.bf16.gmra.mxu0 %v1454
        %v6802 = vpop.f32.mrf.mxu0
        %v6803 = vadd.f32 %v6754, %v6802
        %v6804 = vpop.f32.mrf.mxu0
        %v6805 = vadd.f32 %v6756, %v6804
        %6806 = vmatmul.bf16.gmra.mxu0 %v1458
        %v6807 = vpop.f32.mrf.mxu0
        %v6808 = vadd.f32 %v6759, %v6807
        %v6809 = vpop.f32.mrf.mxu0
        %v6810 = vadd.f32 %v6761, %v6809
        %6811 = vmatmul.bf16.gmra.mxu0 %v1462
        %v6812 = vpop.f32.mrf.mxu0
        %v6813 = vadd.f32 %v6764, %v6812
        %v6814 = vpop.f32.mrf.mxu0
        %v6815 = vadd.f32 %v6766, %v6814
        %6816 = vmatmul.bf16.gmra.mxu0 %v1466
        %v6817 = vpop.f32.mrf.mxu0
        %v6818 = vadd.f32 %v6769, %v6817
        %v6819 = vpop.f32.mrf.mxu0
        %v6820 = vadd.f32 %v6771, %v6819
        %6821 = vmatmul.bf16.gmra.mxu0 %v1470
        %v6822 = vpop.f32.mrf.mxu0
        %v6823 = vadd.f32 %v6774, %v6822
        %v6824 = vpop.f32.mrf.mxu0
        %v6825 = vadd.f32 %v6776, %v6824
        %6826 = vdwg.mxu0
        %6827 = vmatpush.bf16.msra.mxu0 %v3455
        %6828 = vmatpush.bf16.msra.mxu0 %v3440
        %6829 = vmatpush.bf16.msra.mxu0 %v3425
        %6830 = vmatpush.bf16.msra.mxu0 %v3410
        %6831 = vmatpush.bf16.msra.mxu0 %v3395
        %6832 = vmatpush.bf16.msra.mxu0 %v3380
        %6833 = vmatpush.bf16.msra.mxu0 %v3365
        %6834 = vmatpush.bf16.msra.mxu0 %v3350
        %6835 = vmatmul.bf16.gmra.mxu0 %v1443
        %v6836 = vpop.f32.mrf.mxu0
        %v6837 = vadd.f32 %v6788, %v6836
        %v6838 = vpop.f32.mrf.mxu0
        %v6839 = vadd.f32 %v6790, %v6838
        %6840 = vmatmul.bf16.gmra.mxu0 %v1447
        %v6841 = vpop.f32.mrf.mxu0
        %v6842 = vadd.f32 %v6793, %v6841
        %v6843 = vpop.f32.mrf.mxu0
        %v6844 = vadd.f32 %v6795, %v6843
        %6845 = vmatmul.bf16.gmra.mxu0 %v1451
        %v6846 = vpop.f32.mrf.mxu0
        %v6847 = vadd.f32 %v6798, %v6846
        %v6848 = vpop.f32.mrf.mxu0
        %v6849 = vadd.f32 %v6800, %v6848
        %6850 = vmatmul.bf16.gmra.mxu0 %v1455
        %v6851 = vpop.f32.mrf.mxu0
        %v6852 = vadd.f32 %v6803, %v6851
        %v6853 = vpop.f32.mrf.mxu0
        %v6854 = vadd.f32 %v6805, %v6853
        %6855 = vmatmul.bf16.gmra.mxu0 %v1459
        %v6856 = vpop.f32.mrf.mxu0
        %v6857 = vadd.f32 %v6808, %v6856
        %v6858 = vpop.f32.mrf.mxu0
        %v6859 = vadd.f32 %v6810, %v6858
        %6860 = vmatmul.bf16.gmra.mxu0 %v1463
        %v6861 = vpop.f32.mrf.mxu0
        %v6862 = vadd.f32 %v6813, %v6861
        %v6863 = vpop.f32.mrf.mxu0
        %v6864 = vadd.f32 %v6815, %v6863
        %6865 = vmatmul.bf16.gmra.mxu0 %v1467
        %v6866 = vpop.f32.mrf.mxu0
        %v6867 = vadd.f32 %v6818, %v6866
        %v6868 = vpop.f32.mrf.mxu0
        %v6869 = vadd.f32 %v6820, %v6868
        %6870 = vmatmul.bf16.gmra.mxu0 %v1471
        %v6871 = vpop.f32.mrf.mxu0
        %v6872 = vadd.f32 %v6823, %v6871
        %v6873 = vpop.f32.mrf.mxu0
        %v6874 = vadd.f32 %v6825, %v6873
        %6875 = vdwg.mxu0
        %v6876 = vadd.f32 %v592, %v4093
        %v6877 = vadd.f32 %v593, %v4289
        %v6878 = vadd.f32 %v594, %v4485
        %v6879 = vadd.f32 %v595, %v4681
        %v6880 = vadd.f32 %v596, %v4877
        %v6881 = vadd.f32 %v597, %v5073
        %v6882 = vadd.f32 %v598, %v5269
        %v6883 = vadd.f32 %v599, %v5465
        %v6884 = vadd.f32 %v600, %v5661
        %v6885 = vadd.f32 %v601, %v5857
        %v6886 = vadd.f32 %v602, %v6053
        %v6887 = vadd.f32 %v603, %v6249
        %v6888 = vadd.f32 %v604, %v6445
        %v6889 = vadd.f32 %v605, %v6641
        %v6890 = vadd.f32 %v606, %v6837
        %v6891 = vadd.f32 %v607, %v4095
        %v6892 = vadd.f32 %v608, %v4291
        %v6893 = vadd.f32 %v609, %v4487
        %v6894 = vadd.f32 %v610, %v4683
        %v6895 = vadd.f32 %v611, %v4879
        %v6896 = vadd.f32 %v612, %v5075
        %v6897 = vadd.f32 %v613, %v5271
        %v6898 = vadd.f32 %v614, %v5467
        %v6899 = vadd.f32 %v615, %v5663
        %v6900 = vadd.f32 %v616, %v5859
        %v6901 = vadd.f32 %v617, %v6055
        %v6902 = vadd.f32 %v618, %v6251
        %v6903 = vadd.f32 %v619, %v6447
        %v6904 = vadd.f32 %v620, %v6643
        %v6905 = vadd.f32 %v621, %v6839
        %v6906 = vadd.f32 %v622, %v4098
        %v6907 = vadd.f32 %v623, %v4294
        %v6908 = vadd.f32 %v624, %v4490
        %v6909 = vadd.f32 %v625, %v4686
        %v6910 = vadd.f32 %v626, %v4882
        %v6911 = vadd.f32 %v627, %v5078
        %v6912 = vadd.f32 %v628, %v5274
        %v6913 = vadd.f32 %v629, %v5470
        %v6914 = vadd.f32 %v630, %v5666
        %v6915 = vadd.f32 %v631, %v5862
        %v6916 = vadd.f32 %v632, %v6058
        %v6917 = vadd.f32 %v633, %v6254
        %v6918 = vadd.f32 %v634, %v6450
        %v6919 = vadd.f32 %v635, %v6646
        %v6920 = vadd.f32 %v636, %v6842
        %v6921 = vadd.f32 %v637, %v4100
        %v6922 = vadd.f32 %v638, %v4296
        %v6923 = vadd.f32 %v639, %v4492
        %v6924 = vadd.f32 %v640, %v4688
        %v6925 = vadd.f32 %v641, %v4884
        %v6926 = vadd.f32 %v642, %v5080
        %v6927 = vadd.f32 %v643, %v5276
        %v6928 = vadd.f32 %v644, %v5472
        %v6929 = vadd.f32 %v645, %v5668
        %v6930 = vadd.f32 %v646, %v5864
        %v6931 = vadd.f32 %v647, %v6060
        %v6932 = vadd.f32 %v648, %v6256
        %v6933 = vadd.f32 %v649, %v6452
        %v6934 = vadd.f32 %v650, %v6648
        %v6935 = vadd.f32 %v651, %v6844
        %v6936 = vadd.f32 %v652, %v4103
        %v6937 = vadd.f32 %v653, %v4299
        %v6938 = vadd.f32 %v654, %v4495
        %v6939 = vadd.f32 %v655, %v4691
        %v6940 = vadd.f32 %v656, %v4887
        %v6941 = vadd.f32 %v657, %v5083
        %v6942 = vadd.f32 %v658, %v5279
        %v6943 = vadd.f32 %v659, %v5475
        %v6944 = vadd.f32 %v660, %v5671
        %v6945 = vadd.f32 %v661, %v5867
        %v6946 = vadd.f32 %v662, %v6063
        %v6947 = vadd.f32 %v663, %v6259
        %v6948 = vadd.f32 %v664, %v6455
        %v6949 = vadd.f32 %v665, %v6651
        %v6950 = vadd.f32 %v666, %v6847
        %v6951 = vadd.f32 %v667, %v4105
        %v6952 = vadd.f32 %v668, %v4301
        %v6953 = vadd.f32 %v669, %v4497
        %v6954 = vadd.f32 %v670, %v4693
        %v6955 = vadd.f32 %v671, %v4889
        %v6956 = vadd.f32 %v672, %v5085
        %v6957 = vadd.f32 %v673, %v5281
        %v6958 = vadd.f32 %v674, %v5477
        %v6959 = vadd.f32 %v675, %v5673
        %v6960 = vadd.f32 %v676, %v5869
        %v6961 = vadd.f32 %v677, %v6065
        %v6962 = vadd.f32 %v678, %v6261
        %v6963 = vadd.f32 %v679, %v6457
        %v6964 = vadd.f32 %v680, %v6653
        %v6965 = vadd.f32 %v681, %v6849
        %v6966 = vadd.f32 %v682, %v4108
        %v6967 = vadd.f32 %v683, %v4304
        %v6968 = vadd.f32 %v684, %v4500
        %v6969 = vadd.f32 %v685, %v4696
        %v6970 = vadd.f32 %v686, %v4892
        %v6971 = vadd.f32 %v687, %v5088
        %v6972 = vadd.f32 %v688, %v5284
        %v6973 = vadd.f32 %v689, %v5480
        %v6974 = vadd.f32 %v690, %v5676
        %v6975 = vadd.f32 %v691, %v5872
        %v6976 = vadd.f32 %v692, %v6068
        %v6977 = vadd.f32 %v693, %v6264
        %v6978 = vadd.f32 %v694, %v6460
        %v6979 = vadd.f32 %v695, %v6656
        %v6980 = vadd.f32 %v696, %v6852
        %v6981 = vadd.f32 %v697, %v4110
        %v6982 = vadd.f32 %v698, %v4306
        %v6983 = vadd.f32 %v699, %v4502
        %v6984 = vadd.f32 %v700, %v4698
        %v6985 = vadd.f32 %v701, %v4894
        %v6986 = vadd.f32 %v702, %v5090
        %v6987 = vadd.f32 %v703, %v5286
        %v6988 = vadd.f32 %v704, %v5482
        %v6989 = vadd.f32 %v705, %v5678
        %v6990 = vadd.f32 %v706, %v5874
        %v6991 = vadd.f32 %v707, %v6070
        %v6992 = vadd.f32 %v708, %v6266
        %v6993 = vadd.f32 %v709, %v6462
        %v6994 = vadd.f32 %v710, %v6658
        %v6995 = vadd.f32 %v711, %v6854
        %v6996 = vadd.f32 %v712, %v4113
        %v6997 = vadd.f32 %v713, %v4309
        %v6998 = vadd.f32 %v714, %v4505
        %v6999 = vadd.f32 %v715, %v4701
        %v7000 = vadd.f32 %v716, %v4897
        %v7001 = vadd.f32 %v717, %v5093
        %v7002 = vadd.f32 %v718, %v5289
        %v7003 = vadd.f32 %v719, %v5485
        %v7004 = vadd.f32 %v720, %v5681
        %v7005 = vadd.f32 %v721, %v5877
        %v7006 = vadd.f32 %v722, %v6073
        %v7007 = vadd.f32 %v723, %v6269
        %v7008 = vadd.f32 %v724, %v6465
        %v7009 = vadd.f32 %v725, %v6661
        %v7010 = vadd.f32 %v726, %v6857
        %v7011 = vadd.f32 %v727, %v4115
        %v7012 = vadd.f32 %v728, %v4311
        %v7013 = vadd.f32 %v729, %v4507
        %v7014 = vadd.f32 %v730, %v4703
        %v7015 = vadd.f32 %v731, %v4899
        %v7016 = vadd.f32 %v732, %v5095
        %v7017 = vadd.f32 %v733, %v5291
        %v7018 = vadd.f32 %v734, %v5487
        %v7019 = vadd.f32 %v735, %v5683
        %v7020 = vadd.f32 %v736, %v5879
        %v7021 = vadd.f32 %v737, %v6075
        %v7022 = vadd.f32 %v738, %v6271
        %v7023 = vadd.f32 %v739, %v6467
        %v7024 = vadd.f32 %v740, %v6663
        %v7025 = vadd.f32 %v741, %v6859
        %v7026 = vadd.f32 %v742, %v4118
        %v7027 = vadd.f32 %v743, %v4314
        %v7028 = vadd.f32 %v744, %v4510
        %v7029 = vadd.f32 %v745, %v4706
        %v7030 = vadd.f32 %v746, %v4902
        %v7031 = vadd.f32 %v747, %v5098
        %v7032 = vadd.f32 %v748, %v5294
        %v7033 = vadd.f32 %v749, %v5490
        %v7034 = vadd.f32 %v750, %v5686
        %v7035 = vadd.f32 %v751, %v5882
        %v7036 = vadd.f32 %v752, %v6078
        %v7037 = vadd.f32 %v753, %v6274
        %v7038 = vadd.f32 %v754, %v6470
        %v7039 = vadd.f32 %v755, %v6666
        %v7040 = vadd.f32 %v756, %v6862
        %v7041 = vadd.f32 %v757, %v4120
        %v7042 = vadd.f32 %v758, %v4316
        %v7043 = vadd.f32 %v759, %v4512
        %v7044 = vadd.f32 %v760, %v4708
        %v7045 = vadd.f32 %v761, %v4904
        %v7046 = vadd.f32 %v762, %v5100
        %v7047 = vadd.f32 %v763, %v5296
        %v7048 = vadd.f32 %v764, %v5492
        %v7049 = vadd.f32 %v765, %v5688
        %v7050 = vadd.f32 %v766, %v5884
        %v7051 = vadd.f32 %v767, %v6080
        %v7052 = vadd.f32 %v768, %v6276
        %v7053 = vadd.f32 %v769, %v6472
        %v7054 = vadd.f32 %v770, %v6668
        %v7055 = vadd.f32 %v771, %v6864
        %v7056 = vadd.f32 %v772, %v4123
        %v7057 = vadd.f32 %v773, %v4319
        %v7058 = vadd.f32 %v774, %v4515
        %v7059 = vadd.f32 %v775, %v4711
        %v7060 = vadd.f32 %v776, %v4907
        %v7061 = vadd.f32 %v777, %v5103
        %v7062 = vadd.f32 %v778, %v5299
        %v7063 = vadd.f32 %v779, %v5495
        %v7064 = vadd.f32 %v780, %v5691
        %v7065 = vadd.f32 %v781, %v5887
        %v7066 = vadd.f32 %v782, %v6083
        %v7067 = vadd.f32 %v783, %v6279
        %v7068 = vadd.f32 %v784, %v6475
        %v7069 = vadd.f32 %v785, %v6671
        %v7070 = vadd.f32 %v786, %v6867
        %v7071 = vadd.f32 %v787, %v4125
        %v7072 = vadd.f32 %v788, %v4321
        %v7073 = vadd.f32 %v789, %v4517
        %v7074 = vadd.f32 %v790, %v4713
        %v7075 = vadd.f32 %v791, %v4909
        %v7076 = vadd.f32 %v792, %v5105
        %v7077 = vadd.f32 %v793, %v5301
        %v7078 = vadd.f32 %v794, %v5497
        %v7079 = vadd.f32 %v795, %v5693
        %v7080 = vadd.f32 %v796, %v5889
        %v7081 = vadd.f32 %v797, %v6085
        %v7082 = vadd.f32 %v798, %v6281
        %v7083 = vadd.f32 %v799, %v6477
        %v7084 = vadd.f32 %v800, %v6673
        %v7085 = vadd.f32 %v801, %v6869
        %v7086 = vadd.f32 %v802, %v4128
        %v7087 = vadd.f32 %v803, %v4324
        %v7088 = vadd.f32 %v804, %v4520
        %v7089 = vadd.f32 %v805, %v4716
        %v7090 = vadd.f32 %v806, %v4912
        %v7091 = vadd.f32 %v807, %v5108
        %v7092 = vadd.f32 %v808, %v5304
        %v7093 = vadd.f32 %v809, %v5500
        %v7094 = vadd.f32 %v810, %v5696
        %v7095 = vadd.f32 %v811, %v5892
        %v7096 = vadd.f32 %v812, %v6088
        %v7097 = vadd.f32 %v813, %v6284
        %v7098 = vadd.f32 %v814, %v6480
        %v7099 = vadd.f32 %v815, %v6676
        %v7100 = vadd.f32 %v816, %v6872
        %v7101 = vadd.f32 %v817, %v4130
        %v7102 = vadd.f32 %v818, %v4326
        %v7103 = vadd.f32 %v819, %v4522
        %v7104 = vadd.f32 %v820, %v4718
        %v7105 = vadd.f32 %v821, %v4914
        %v7106 = vadd.f32 %v822, %v5110
        %v7107 = vadd.f32 %v823, %v5306
        %v7108 = vadd.f32 %v824, %v5502
        %v7109 = vadd.f32 %v825, %v5698
        %v7110 = vadd.f32 %v826, %v5894
        %v7111 = vadd.f32 %v827, %v6090
        %v7112 = vadd.f32 %v828, %v6286
        %v7113 = vadd.f32 %v829, %v6482
        %v7114 = vadd.f32 %v830, %v6678
        %v7115 = vadd.f32 %v831, %v6874
        %7116 = vst [vmem:[#allocation2] sm:$0xff] %v6876
        %7117 = vst [vmem:[#allocation2 + $0x8] sm:$0xff] %v6877
        %7118 = vst [vmem:[#allocation2 + $0x10] sm:$0xff] %v6878
        %7119 = vst [vmem:[#allocation2 + $0x18] sm:$0xff] %v6879
        %7120 = vst [vmem:[#allocation2 + $0x20] sm:$0xff] %v6880
        %7121 = vst [vmem:[#allocation2 + $0x28] sm:$0xff] %v6881
        %7122 = vst [vmem:[#allocation2 + $0x30] sm:$0xff] %v6882
        %7123 = vst [vmem:[#allocation2 + $0x38] sm:$0xff] %v6883
        %7124 = vst [vmem:[#allocation2 + $0x40] sm:$0xff] %v6884
        %7125 = vst [vmem:[#allocation2 + $0x48] sm:$0xff] %v6885
        %7126 = vst [vmem:[#allocation2 + $0x50] sm:$0xff] %v6886
        %7127 = vst [vmem:[#allocation2 + $0x58] sm:$0xff] %v6887
        %7128 = vst [vmem:[#allocation2 + $0x60] sm:$0xff] %v6888
        %7129 = vst [vmem:[#allocation2 + $0x68] sm:$0xff] %v6889
        %7130 = vst [vmem:[#allocation2 + $0x70] sm:$0xff] %v6890
        %7131 = vst [vmem:[#allocation2 + $0x78] sm:$0xff] %v6891
        %7132 = vst [vmem:[#allocation2 + $0x80] sm:$0xff] %v6892
        %7133 = vst [vmem:[#allocation2 + $0x88] sm:$0xff] %v6893
        %7134 = vst [vmem:[#allocation2 + $0x90] sm:$0xff] %v6894
        %7135 = vst [vmem:[#allocation2 + $0x98] sm:$0xff] %v6895
        %7136 = vst [vmem:[#allocation2 + $0xa0] sm:$0xff] %v6896
        %7137 = vst [vmem:[#allocation2 + $0xa8] sm:$0xff] %v6897
        %7138 = vst [vmem:[#allocation2 + $0xb0] sm:$0xff] %v6898
        %7139 = vst [vmem:[#allocation2 + $0xb8] sm:$0xff] %v6899
        %7140 = vst [vmem:[#allocation2 + $0xc0] sm:$0xff] %v6900
        %7141 = vst [vmem:[#allocation2 + $0xc8] sm:$0xff] %v6901
        %7142 = vst [vmem:[#allocation2 + $0xd0] sm:$0xff] %v6902
        %7143 = vst [vmem:[#allocation2 + $0xd8] sm:$0xff] %v6903
        %7144 = vst [vmem:[#allocation2 + $0xe0] sm:$0xff] %v6904
        %7145 = vst [vmem:[#allocation2 + $0xe8] sm:$0xff] %v6905
        %7146 = vst [vmem:[#allocation2 + $0xf0] sm:$0xff] %v6906
        %7147 = vst [vmem:[#allocation2 + $0xf8] sm:$0xff] %v6907
        %7148 = vst [vmem:[#allocation2 + $0x100] sm:$0xff] %v6908
        %7149 = vst [vmem:[#allocation2 + $0x108] sm:$0xff] %v6909
        %7150 = vst [vmem:[#allocation2 + $0x110] sm:$0xff] %v6910
        %7151 = vst [vmem:[#allocation2 + $0x118] sm:$0xff] %v6911
        %7152 = vst [vmem:[#allocation2 + $0x120] sm:$0xff] %v6912
        %7153 = vst [vmem:[#allocation2 + $0x128] sm:$0xff] %v6913
        %7154 = vst [vmem:[#allocation2 + $0x130] sm:$0xff] %v6914
        %7155 = vst [vmem:[#allocation2 + $0x138] sm:$0xff] %v6915
        %7156 = vst [vmem:[#allocation2 + $0x140] sm:$0xff] %v6916
        %7157 = vst [vmem:[#allocation2 + $0x148] sm:$0xff] %v6917
        %7158 = vst [vmem:[#allocation2 + $0x150] sm:$0xff] %v6918
        %7159 = vst [vmem:[#allocation2 + $0x158] sm:$0xff] %v6919
        %7160 = vst [vmem:[#allocation2 + $0x160] sm:$0xff] %v6920
        %7161 = vst [vmem:[#allocation2 + $0x168] sm:$0xff] %v6921
        %7162 = vst [vmem:[#allocation2 + $0x170] sm:$0xff] %v6922
        %7163 = vst [vmem:[#allocation2 + $0x178] sm:$0xff] %v6923
        %7164 = vst [vmem:[#allocation2 + $0x180] sm:$0xff] %v6924
        %7165 = vst [vmem:[#allocation2 + $0x188] sm:$0xff] %v6925
        %7166 = vst [vmem:[#allocation2 + $0x190] sm:$0xff] %v6926
        %7167 = vst [vmem:[#allocation2 + $0x198] sm:$0xff] %v6927
        %7168 = vst [vmem:[#allocation2 + $0x1a0] sm:$0xff] %v6928
        %7169 = vst [vmem:[#allocation2 + $0x1a8] sm:$0xff] %v6929
        %7170 = vst [vmem:[#allocation2 + $0x1b0] sm:$0xff] %v6930
        %7171 = vst [vmem:[#allocation2 + $0x1b8] sm:$0xff] %v6931
        %7172 = vst [vmem:[#allocation2 + $0x1c0] sm:$0xff] %v6932
        %7173 = vst [vmem:[#allocation2 + $0x1c8] sm:$0xff] %v6933
        %7174 = vst [vmem:[#allocation2 + $0x1d0] sm:$0xff] %v6934
        %7175 = vst [vmem:[#allocation2 + $0x1d8] sm:$0xff] %v6935
        %7176 = vst [vmem:[#allocation2 + $0x1e0] sm:$0xff] %v6936
        %7177 = vst [vmem:[#allocation2 + $0x1e8] sm:$0xff] %v6937
        %7178 = vst [vmem:[#allocation2 + $0x1f0] sm:$0xff] %v6938
        %7179 = vst [vmem:[#allocation2 + $0x1f8] sm:$0xff] %v6939
        %7180 = vst [vmem:[#allocation2 + $0x200] sm:$0xff] %v6940
        %7181 = vst [vmem:[#allocation2 + $0x208] sm:$0xff] %v6941
        %7182 = vst [vmem:[#allocation2 + $0x210] sm:$0xff] %v6942
        %7183 = vst [vmem:[#allocation2 + $0x218] sm:$0xff] %v6943
        %7184 = vst [vmem:[#allocation2 + $0x220] sm:$0xff] %v6944
        %7185 = vst [vmem:[#allocation2 + $0x228] sm:$0xff] %v6945
        %7186 = vst [vmem:[#allocation2 + $0x230] sm:$0xff] %v6946
        %7187 = vst [vmem:[#allocation2 + $0x238] sm:$0xff] %v6947
        %7188 = vst [vmem:[#allocation2 + $0x240] sm:$0xff] %v6948
        %7189 = vst [vmem:[#allocation2 + $0x248] sm:$0xff] %v6949
        %7190 = vst [vmem:[#allocation2 + $0x250] sm:$0xff] %v6950
        %7191 = vst [vmem:[#allocation2 + $0x258] sm:$0xff] %v6951
        %7192 = vst [vmem:[#allocation2 + $0x260] sm:$0xff] %v6952
        %7193 = vst [vmem:[#allocation2 + $0x268] sm:$0xff] %v6953
        %7194 = vst [vmem:[#allocation2 + $0x270] sm:$0xff] %v6954
        %7195 = vst [vmem:[#allocation2 + $0x278] sm:$0xff] %v6955
        %7196 = vst [vmem:[#allocation2 + $0x280] sm:$0xff] %v6956
        %7197 = vst [vmem:[#allocation2 + $0x288] sm:$0xff] %v6957
        %7198 = vst [vmem:[#allocation2 + $0x290] sm:$0xff] %v6958
        %7199 = vst [vmem:[#allocation2 + $0x298] sm:$0xff] %v6959
        %7200 = vst [vmem:[#allocation2 + $0x2a0] sm:$0xff] %v6960
        %7201 = vst [vmem:[#allocation2 + $0x2a8] sm:$0xff] %v6961
        %7202 = vst [vmem:[#allocation2 + $0x2b0] sm:$0xff] %v6962
        %7203 = vst [vmem:[#allocation2 + $0x2b8] sm:$0xff] %v6963
        %7204 = vst [vmem:[#allocation2 + $0x2c0] sm:$0xff] %v6964
        %7205 = vst [vmem:[#allocation2 + $0x2c8] sm:$0xff] %v6965
        %7206 = vst [vmem:[#allocation2 + $0x2d0] sm:$0xff] %v6966
        %7207 = vst [vmem:[#allocation2 + $0x2d8] sm:$0xff] %v6967
        %7208 = vst [vmem:[#allocation2 + $0x2e0] sm:$0xff] %v6968
        %7209 = vst [vmem:[#allocation2 + $0x2e8] sm:$0xff] %v6969
        %7210 = vst [vmem:[#allocation2 + $0x2f0] sm:$0xff] %v6970
        %7211 = vst [vmem:[#allocation2 + $0x2f8] sm:$0xff] %v6971
        %7212 = vst [vmem:[#allocation2 + $0x300] sm:$0xff] %v6972
        %7213 = vst [vmem:[#allocation2 + $0x308] sm:$0xff] %v6973
        %7214 = vst [vmem:[#allocation2 + $0x310] sm:$0xff] %v6974
        %7215 = vst [vmem:[#allocation2 + $0x318] sm:$0xff] %v6975
        %7216 = vst [vmem:[#allocation2 + $0x320] sm:$0xff] %v6976
        %7217 = vst [vmem:[#allocation2 + $0x328] sm:$0xff] %v6977
        %7218 = vst [vmem:[#allocation2 + $0x330] sm:$0xff] %v6978
        %7219 = vst [vmem:[#allocation2 + $0x338] sm:$0xff] %v6979
        %7220 = vst [vmem:[#allocation2 + $0x340] sm:$0xff] %v6980
        %7221 = vst [vmem:[#allocation2 + $0x348] sm:$0xff] %v6981
        %7222 = vst [vmem:[#allocation2 + $0x350] sm:$0xff] %v6982
        %7223 = vst [vmem:[#allocation2 + $0x358] sm:$0xff] %v6983
        %7224 = vst [vmem:[#allocation2 + $0x360] sm:$0xff] %v6984
        %7225 = vst [vmem:[#allocation2 + $0x368] sm:$0xff] %v6985
        %7226 = vst [vmem:[#allocation2 + $0x370] sm:$0xff] %v6986
        %7227 = vst [vmem:[#allocation2 + $0x378] sm:$0xff] %v6987
        %7228 = vst [vmem:[#allocation2 + $0x380] sm:$0xff] %v6988
        %7229 = vst [vmem:[#allocation2 + $0x388] sm:$0xff] %v6989
        %7230 = vst [vmem:[#allocation2 + $0x390] sm:$0xff] %v6990
        %7231 = vst [vmem:[#allocation2 + $0x398] sm:$0xff] %v6991
        %7232 = vst [vmem:[#allocation2 + $0x3a0] sm:$0xff] %v6992
        %7233 = vst [vmem:[#allocation2 + $0x3a8] sm:$0xff] %v6993
        %7234 = vst [vmem:[#allocation2 + $0x3b0] sm:$0xff] %v6994
        %7235 = vst [vmem:[#allocation2 + $0x3b8] sm:$0xff] %v6995
        %7236 = vst [vmem:[#allocation2 + $0x3c0] sm:$0xff] %v6996
        %7237 = vst [vmem:[#allocation2 + $0x3c8] sm:$0xff] %v6997
        %7238 = vst [vmem:[#allocation2 + $0x3d0] sm:$0xff] %v6998
        %7239 = vst [vmem:[#allocation2 + $0x3d8] sm:$0xff] %v6999
        %7240 = vst [vmem:[#allocation2 + $0x3e0] sm:$0xff] %v7000
        %7241 = vst [vmem:[#allocation2 + $0x3e8] sm:$0xff] %v7001
        %7242 = vst [vmem:[#allocation2 + $0x3f0] sm:$0xff] %v7002
        %7243 = vst [vmem:[#allocation2 + $0x3f8] sm:$0xff] %v7003
        %7244 = vst [vmem:[#allocation2 + $0x400] sm:$0xff] %v7004
        %7245 = vst [vmem:[#allocation2 + $0x408] sm:$0xff] %v7005
        %7246 = vst [vmem:[#allocation2 + $0x410] sm:$0xff] %v7006
        %7247 = vst [vmem:[#allocation2 + $0x418] sm:$0xff] %v7007
        %7248 = vst [vmem:[#allocation2 + $0x420] sm:$0xff] %v7008
        %7249 = vst [vmem:[#allocation2 + $0x428] sm:$0xff] %v7009
        %7250 = vst [vmem:[#allocation2 + $0x430] sm:$0xff] %v7010
        %7251 = vst [vmem:[#allocation2 + $0x438] sm:$0xff] %v7011
        %7252 = vst [vmem:[#allocation2 + $0x440] sm:$0xff] %v7012
        %7253 = vst [vmem:[#allocation2 + $0x448] sm:$0xff] %v7013
        %7254 = vst [vmem:[#allocation2 + $0x450] sm:$0xff] %v7014
        %7255 = vst [vmem:[#allocation2 + $0x458] sm:$0xff] %v7015
        %7256 = vst [vmem:[#allocation2 + $0x460] sm:$0xff] %v7016
        %7257 = vst [vmem:[#allocation2 + $0x468] sm:$0xff] %v7017
        %7258 = vst [vmem:[#allocation2 + $0x470] sm:$0xff] %v7018
        %7259 = vst [vmem:[#allocation2 + $0x478] sm:$0xff] %v7019
        %7260 = vst [vmem:[#allocation2 + $0x480] sm:$0xff] %v7020
        %7261 = vst [vmem:[#allocation2 + $0x488] sm:$0xff] %v7021
        %7262 = vst [vmem:[#allocation2 + $0x490] sm:$0xff] %v7022
        %7263 = vst [vmem:[#allocation2 + $0x498] sm:$0xff] %v7023
        %7264 = vst [vmem:[#allocation2 + $0x4a0] sm:$0xff] %v7024
        %7265 = vst [vmem:[#allocation2 + $0x4a8] sm:$0xff] %v7025
        %7266 = vst [vmem:[#allocation2 + $0x4b0] sm:$0xff] %v7026
        %7267 = vst [vmem:[#allocation2 + $0x4b8] sm:$0xff] %v7027
        %7268 = vst [vmem:[#allocation2 + $0x4c0] sm:$0xff] %v7028
        %7269 = vst [vmem:[#allocation2 + $0x4c8] sm:$0xff] %v7029
        %7270 = vst [vmem:[#allocation2 + $0x4d0] sm:$0xff] %v7030
        %7271 = vst [vmem:[#allocation2 + $0x4d8] sm:$0xff] %v7031
        %7272 = vst [vmem:[#allocation2 + $0x4e0] sm:$0xff] %v7032
        %7273 = vst [vmem:[#allocation2 + $0x4e8] sm:$0xff] %v7033
        %7274 = vst [vmem:[#allocation2 + $0x4f0] sm:$0xff] %v7034
        %7275 = vst [vmem:[#allocation2 + $0x4f8] sm:$0xff] %v7035
        %7276 = vst [vmem:[#allocation2 + $0x500] sm:$0xff] %v7036
        %7277 = vst [vmem:[#allocation2 + $0x508] sm:$0xff] %v7037
        %7278 = vst [vmem:[#allocation2 + $0x510] sm:$0xff] %v7038
        %7279 = vst [vmem:[#allocation2 + $0x518] sm:$0xff] %v7039
        %7280 = vst [vmem:[#allocation2 + $0x520] sm:$0xff] %v7040
        %7281 = vst [vmem:[#allocation2 + $0x528] sm:$0xff] %v7041
        %7282 = vst [vmem:[#allocation2 + $0x530] sm:$0xff] %v7042
        %7283 = vst [vmem:[#allocation2 + $0x538] sm:$0xff] %v7043
        %7284 = vst [vmem:[#allocation2 + $0x540] sm:$0xff] %v7044
        %7285 = vst [vmem:[#allocation2 + $0x548] sm:$0xff] %v7045
        %7286 = vst [vmem:[#allocation2 + $0x550] sm:$0xff] %v7046
        %7287 = vst [vmem:[#allocation2 + $0x558] sm:$0xff] %v7047
        %7288 = vst [vmem:[#allocation2 + $0x560] sm:$0xff] %v7048
        %7289 = vst [vmem:[#allocation2 + $0x568] sm:$0xff] %v7049
        %7290 = vst [vmem:[#allocation2 + $0x570] sm:$0xff] %v7050
        %7291 = vst [vmem:[#allocation2 + $0x578] sm:$0xff] %v7051
        %7292 = vst [vmem:[#allocation2 + $0x580] sm:$0xff] %v7052
        %7293 = vst [vmem:[#allocation2 + $0x588] sm:$0xff] %v7053
        %7294 = vst [vmem:[#allocation2 + $0x590] sm:$0xff] %v7054
        %7295 = vst [vmem:[#allocation2 + $0x598] sm:$0xff] %v7055
        %7296 = vst [vmem:[#allocation2 + $0x5a0] sm:$0xff] %v7056
        %7297 = vst [vmem:[#allocation2 + $0x5a8] sm:$0xff] %v7057
        %7298 = vst [vmem:[#allocation2 + $0x5b0] sm:$0xff] %v7058
        %7299 = vst [vmem:[#allocation2 + $0x5b8] sm:$0xff] %v7059
        %7300 = vst [vmem:[#allocation2 + $0x5c0] sm:$0xff] %v7060
        %7301 = vst [vmem:[#allocation2 + $0x5c8] sm:$0xff] %v7061
        %7302 = vst [vmem:[#allocation2 + $0x5d0] sm:$0xff] %v7062
        %7303 = vst [vmem:[#allocation2 + $0x5d8] sm:$0xff] %v7063
        %7304 = vst [vmem:[#allocation2 + $0x5e0] sm:$0xff] %v7064
        %7305 = vst [vmem:[#allocation2 + $0x5e8] sm:$0xff] %v7065
        %7306 = vst [vmem:[#allocation2 + $0x5f0] sm:$0xff] %v7066
        %7307 = vst [vmem:[#allocation2 + $0x5f8] sm:$0xff] %v7067
        %7308 = vst [vmem:[#allocation2 + $0x600] sm:$0xff] %v7068
        %7309 = vst [vmem:[#allocation2 + $0x608] sm:$0xff] %v7069
        %7310 = vst [vmem:[#allocation2 + $0x610] sm:$0xff] %v7070
        %7311 = vst [vmem:[#allocation2 + $0x618] sm:$0xff] %v7071
        %7312 = vst [vmem:[#allocation2 + $0x620] sm:$0xff] %v7072
        %7313 = vst [vmem:[#allocation2 + $0x628] sm:$0xff] %v7073
        %7314 = vst [vmem:[#allocation2 + $0x630] sm:$0xff] %v7074
        %7315 = vst [vmem:[#allocation2 + $0x638] sm:$0xff] %v7075
        %7316 = vst [vmem:[#allocation2 + $0x640] sm:$0xff] %v7076
        %7317 = vst [vmem:[#allocation2 + $0x648] sm:$0xff] %v7077
        %7318 = vst [vmem:[#allocation2 + $0x650] sm:$0xff] %v7078
        %7319 = vst [vmem:[#allocation2 + $0x658] sm:$0xff] %v7079
        %7320 = vst [vmem:[#allocation2 + $0x660] sm:$0xff] %v7080
        %7321 = vst [vmem:[#allocation2 + $0x668] sm:$0xff] %v7081
        %7322 = vst [vmem:[#allocation2 + $0x670] sm:$0xff] %v7082
        %7323 = vst [vmem:[#allocation2 + $0x678] sm:$0xff] %v7083
        %7324 = vst [vmem:[#allocation2 + $0x680] sm:$0xff] %v7084
        %7325 = vst [vmem:[#allocation2 + $0x688] sm:$0xff] %v7085
        %7326 = vst [vmem:[#allocation2 + $0x690] sm:$0xff] %v7086
        %7327 = vst [vmem:[#allocation2 + $0x698] sm:$0xff] %v7087
        %7328 = vst [vmem:[#allocation2 + $0x6a0] sm:$0xff] %v7088
        %7329 = vst [vmem:[#allocation2 + $0x6a8] sm:$0xff] %v7089
        %7330 = vst [vmem:[#allocation2 + $0x6b0] sm:$0xff] %v7090
        %7331 = vst [vmem:[#allocation2 + $0x6b8] sm:$0xff] %v7091
        %7332 = vst [vmem:[#allocation2 + $0x6c0] sm:$0xff] %v7092
        %7333 = vst [vmem:[#allocation2 + $0x6c8] sm:$0xff] %v7093
        %7334 = vst [vmem:[#allocation2 + $0x6d0] sm:$0xff] %v7094
        %7335 = vst [vmem:[#allocation2 + $0x6d8] sm:$0xff] %v7095
        %7336 = vst [vmem:[#allocation2 + $0x6e0] sm:$0xff] %v7096
        %7337 = vst [vmem:[#allocation2 + $0x6e8] sm:$0xff] %v7097
        %7338 = vst [vmem:[#allocation2 + $0x6f0] sm:$0xff] %v7098
        %7339 = vst [vmem:[#allocation2 + $0x6f8] sm:$0xff] %v7099
        %7340 = vst [vmem:[#allocation2 + $0x700] sm:$0xff] %v7100
        %7341 = vst [vmem:[#allocation2 + $0x708] sm:$0xff] %v7101
        %7342 = vst [vmem:[#allocation2 + $0x710] sm:$0xff] %v7102
        %7343 = vst [vmem:[#allocation2 + $0x718] sm:$0xff] %v7103
        %7344 = vst [vmem:[#allocation2 + $0x720] sm:$0xff] %v7104
        %7345 = vst [vmem:[#allocation2 + $0x728] sm:$0xff] %v7105
        %7346 = vst [vmem:[#allocation2 + $0x730] sm:$0xff] %v7106
        %7347 = vst [vmem:[#allocation2 + $0x738] sm:$0xff] %v7107
        %7348 = vst [vmem:[#allocation2 + $0x740] sm:$0xff] %v7108
        %7349 = vst [vmem:[#allocation2 + $0x748] sm:$0xff] %v7109
        %7350 = vst [vmem:[#allocation2 + $0x750] sm:$0xff] %v7110
        %7351 = vst [vmem:[#allocation2 + $0x758] sm:$0xff] %v7111
        %7352 = vst [vmem:[#allocation2 + $0x760] sm:$0xff] %v7112
        %7353 = vst [vmem:[#allocation2 + $0x768] sm:$0xff] %v7113
        %7354 = vst [vmem:[#allocation2 + $0x770] sm:$0xff] %v7114
        %7355 = vst [vmem:[#allocation2 + $0x778] sm:$0xff] %v7115
        %p7356 = scmp.eq.s32.totalorder %s21, 1
        // Predicated region
        $region64: #{_aspp_forward_impl.1} parent=54 // pred_check
          %p7357 = pneg %p7356
        $region65: #{_aspp_forward_impl.1} parent=54 // pred_check_branch
          %7359 = sbr.rel (%p7357) target = $region67
        $region66: #{_aspp_forward_impl.1} parent=54 // pred_region
          %v7360 = vld [vmem:[#allocation2 + $0x70] sm:$0xff]
          %v7361 = vld [vmem:[#allocation2 + $0xe8] sm:$0xff]
          %v7362 = vld [vmem:[#allocation2 + $0x160] sm:$0xff]
          %v7363 = vld [vmem:[#allocation2 + $0x1d8] sm:$0xff]
          %v7364 = vld [vmem:[#allocation2 + $0x250] sm:$0xff]
          %v7365 = vld [vmem:[#allocation2 + $0x2c8] sm:$0xff]
          %v7366 = vld [vmem:[#allocation2 + $0x340] sm:$0xff]
          %v7367 = vld [vmem:[#allocation2 + $0x3b8] sm:$0xff]
          %v7368 = vld [vmem:[#allocation2 + $0x430] sm:$0xff]
          %v7369 = vld [vmem:[#allocation2 + $0x4a8] sm:$0xff]
          %v7370 = vld [vmem:[#allocation2 + $0x520] sm:$0xff]
          %v7371 = vld [vmem:[#allocation2 + $0x598] sm:$0xff]
          %v7372 = vld [vmem:[#allocation2 + $0x610] sm:$0xff]
          %v7373 = vld [vmem:[#allocation2 + $0x688] sm:$0xff]
          %v7374 = vld [vmem:[#allocation2 + $0x700] sm:$0xff]
          %v7375 = vld [vmem:[#allocation2 + $0x778] sm:$0xff]
          %vm7376 = vcmask 523264
          %v7377 = vsel %vm7376, %v7360, 0.0
          %v7378 = vsel %vm7376, %v7361, 0.0
          %v7379 = vadd.f32 %v7377, %v7378
          %v7380 = vsel %vm7376, %v7362, 0.0
          %v7381 = vadd.f32 %v7379, %v7380
          %v7382 = vsel %vm7376, %v7363, 0.0
          %v7383 = vadd.f32 %v7381, %v7382
          %v7384 = vsel %vm7376, %v7364, 0.0
          %v7385 = vadd.f32 %v7383, %v7384
          %v7386 = vsel %vm7376, %v7365, 0.0
          %v7387 = vadd.f32 %v7385, %v7386
          %v7388 = vsel %vm7376, %v7366, 0.0
          %v7389 = vadd.f32 %v7387, %v7388
          %v7390 = vsel %vm7376, %v7367, 0.0
          %v7391 = vadd.f32 %v7389, %v7390
          %v7392 = vrot.slane %v7391, 4
          %v7393 = vadd.f32 %v7391, %v7392
          %v7394 = vrot.slane %v7393, 2
          %v7395 = vadd.f32 %v7393, %v7394
          %v7396 = vrot.slane %v7395, 1
          %v7397 = vadd.f32 %v7395, %v7396
          %v7398 = vsel %vm7376, %v7368, 0.0
          %v7399 = vsel %vm7376, %v7369, 0.0
          %v7400 = vadd.f32 %v7398, %v7399
          %v7401 = vsel %vm7376, %v7370, 0.0
          %v7402 = vadd.f32 %v7400, %v7401
          %v7403 = vsel %vm7376, %v7371, 0.0
          %v7404 = vadd.f32 %v7402, %v7403
          %v7405 = vsel %vm7376, %v7372, 0.0
          %v7406 = vadd.f32 %v7404, %v7405
          %v7407 = vsel %vm7376, %v7373, 0.0
          %v7408 = vadd.f32 %v7406, %v7407
          %v7409 = vsel %vm7376, %v7374, 0.0
          %v7410 = vadd.f32 %v7408, %v7409
          %v7411 = vsel %vm7376, %v7375, 0.0
          %v7412 = vadd.f32 %v7410, %v7411
          %v7413 = vrot.slane %v7412, 4
          %v7414 = vadd.f32 %v7412, %v7413
          %v7415 = vrot.slane %v7414, 2
          %v7416 = vadd.f32 %v7414, %v7415
          %v7417 = vrot.slane %v7416, 1
          %v7418 = vadd.f32 %v7416, %v7417
          %v7419 = vrcp.pop 64.0
          %v7420 = vmul.f32 64.0, %v7419
          %v7421 = vsub.f32 1.0, %v7420
          %v7422 = vmul.f32 %v7419, %v7421
          %v7423 = vadd.f32 %v7419, %v7422
          %vm7424 = vweird.f32 %v7419
          %v7425 = vsel %vm7424, %v7419, %v7423
          %v7426 = vmul.f32 %v7397, %v7425
          %v7427 = vmul.f32 %v7418, %v7425
          %v7428 = vld [vmem:[%s3] sm:$0x1]
          %v7429 = vadd.f32 %v7426, %v7428
          %v7430 = vadd.f32 %v7427, %v7428
          %v7431 = vmax.f32 %v7429, 0.0
          %v7432 = vmax.f32 %v7430, 0.0
          %v7433 = vperm.slane %v7431, 0
          %v7434 = vperm.slane %v7432, 0
          %v7435 = vld [vmem:[#allocation2] sm:$0xff]
          %v7436 = vld [vmem:[#allocation2 + $0x78] sm:$0xff]
          %v7437 = vld [vmem:[#allocation2 + $0xf0] sm:$0xff]
          %v7438 = vld [vmem:[#allocation2 + $0x168] sm:$0xff]
          %v7439 = vld [vmem:[#allocation2 + $0x1e0] sm:$0xff]
          %v7440 = vld [vmem:[#allocation2 + $0x258] sm:$0xff]
          %v7441 = vld [vmem:[#allocation2 + $0x2d0] sm:$0xff]
          %v7442 = vld [vmem:[#allocation2 + $0x348] sm:$0xff]
          %v7443 = vld [vmem:[#allocation2 + $0x3c0] sm:$0xff]
          %v7444 = vld [vmem:[#allocation2 + $0x438] sm:$0xff]
          %v7445 = vld [vmem:[#allocation2 + $0x4b0] sm:$0xff]
          %v7446 = vld [vmem:[#allocation2 + $0x528] sm:$0xff]
          %v7447 = vld [vmem:[#allocation2 + $0x5a0] sm:$0xff]
          %v7448 = vld [vmem:[#allocation2 + $0x618] sm:$0xff]
          %v7449 = vld [vmem:[#allocation2 + $0x690] sm:$0xff]
          %v7450 = vld [vmem:[#allocation2 + $0x708] sm:$0xff]
          %v7451 = vld [vmem:[%s3 + $0x1] sm:$0x1]
          %v7452 = vperm.slane %v7451, 0
          %v7453 = vadd.f32 %v7435, %v7452
          %v7454 = vadd.f32 %v7436, %v7452
          %v7455 = vadd.f32 %v7437, %v7452
          %v7456 = vadd.f32 %v7438, %v7452
          %v7457 = vadd.f32 %v7439, %v7452
          %v7458 = vadd.f32 %v7440, %v7452
          %v7459 = vadd.f32 %v7441, %v7452
          %v7460 = vadd.f32 %v7442, %v7452
          %v7461 = vadd.f32 %v7443, %v7452
          %v7462 = vadd.f32 %v7444, %v7452
          %v7463 = vadd.f32 %v7445, %v7452
          %v7464 = vadd.f32 %v7446, %v7452
          %v7465 = vadd.f32 %v7447, %v7452
          %v7466 = vadd.f32 %v7448, %v7452
          %v7467 = vadd.f32 %v7449, %v7452
          %v7468 = vadd.f32 %v7450, %v7452
          %v7469 = vmax.f32 %v7453, 0.0
          %v7470 = vmax.f32 %v7454, 0.0
          %v7471 = vmax.f32 %v7455, 0.0
          %v7472 = vmax.f32 %v7456, 0.0
          %v7473 = vmax.f32 %v7457, 0.0
          %v7474 = vmax.f32 %v7458, 0.0
          %v7475 = vmax.f32 %v7459, 0.0
          %v7476 = vmax.f32 %v7460, 0.0
          %v7477 = vmax.f32 %v7461, 0.0
          %v7478 = vmax.f32 %v7462, 0.0
          %v7479 = vmax.f32 %v7463, 0.0
          %v7480 = vmax.f32 %v7464, 0.0
          %v7481 = vmax.f32 %v7465, 0.0
          %v7482 = vmax.f32 %v7466, 0.0
          %v7483 = vmax.f32 %v7467, 0.0
          %v7484 = vmax.f32 %v7468, 0.0
          %v7485 = vld [vmem:[#allocation2 + $0x8] sm:$0xff]
          %v7486 = vld [vmem:[#allocation2 + $0x80] sm:$0xff]
          %v7487 = vld [vmem:[#allocation2 + $0xf8] sm:$0xff]
          %v7488 = vld [vmem:[#allocation2 + $0x170] sm:$0xff]
          %v7489 = vld [vmem:[#allocation2 + $0x1e8] sm:$0xff]
          %v7490 = vld [vmem:[#allocation2 + $0x260] sm:$0xff]
          %v7491 = vld [vmem:[#allocation2 + $0x2d8] sm:$0xff]
          %v7492 = vld [vmem:[#allocation2 + $0x3c8] sm:$0xff]
          %v7493 = vld [vmem:[#allocation2 + $0x440] sm:$0xff]
          %v7494 = vld [vmem:[#allocation2 + $0x4b8] sm:$0xff]
          %v7495 = vld [vmem:[#allocation2 + $0x530] sm:$0xff]
          %v7496 = vld [vmem:[#allocation2 + $0x5a8] sm:$0xff]
          %v7497 = vld [vmem:[#allocation2 + $0x620] sm:$0xff]
          %v7498 = vld [vmem:[#allocation2 + $0x698] sm:$0xff]
          %7527 = vrot.lane.b32.xlu0 %v7435, 64
          %v7528 = vpop.permute.xlu0 %7527
          %7529 = vrot.lane.b32.xlu0 %v7485, 64
          %v7530 = vpop.permute.xlu0 %7529
          %7531 = vrot.lane.b32.xlu0 %v7436, 64
          %v7532 = vpop.permute.xlu0 %7531
          %7533 = vrot.lane.b32.xlu0 %v7486, 64
          %v7534 = vpop.permute.xlu0 %7533
          %7535 = vrot.lane.b32.xlu0 %v7437, 64
          %v7536 = vpop.permute.xlu0 %7535
          %7537 = vrot.lane.b32.xlu0 %v7487, 64
          %v7538 = vpop.permute.xlu0 %7537
          %7539 = vrot.lane.b32.xlu0 %v7438, 64
          %v7540 = vpop.permute.xlu0 %7539
          %7541 = vrot.lane.b32.xlu0 %v7488, 64
          %v7542 = vpop.permute.xlu0 %7541
          %7543 = vrot.lane.b32.xlu0 %v7439, 64
          %v7544 = vpop.permute.xlu0 %7543
          %7545 = vrot.lane.b32.xlu0 %v7489, 64
          %v7546 = vpop.permute.xlu0 %7545
          %7547 = vrot.lane.b32.xlu0 %v7440, 64
          %v7548 = vpop.permute.xlu0 %7547
          %7549 = vrot.lane.b32.xlu0 %v7490, 64
          %v7550 = vpop.permute.xlu0 %7549
          %7551 = vrot.lane.b32.xlu0 %v7441, 64
          %v7552 = vpop.permute.xlu0 %7551
          %7553 = vrot.lane.b32.xlu0 %v7491, 64
          %v7554 = vpop.permute.xlu0 %7553
          %7555 = vrot.lane.b32.xlu0 %v7443, 64
          %v7556 = vpop.permute.xlu0 %7555
          %7557 = vrot.lane.b32.xlu0 %v7492, 64
          %v7558 = vpop.permute.xlu0 %7557
          %7559 = vrot.lane.b32.xlu0 %v7444, 64
          %v7560 = vpop.permute.xlu0 %7559
          %7561 = vrot.lane.b32.xlu0 %v7493, 64
          %v7562 = vpop.permute.xlu0 %7561
          %7563 = vrot.lane.b32.xlu0 %v7445, 64
          %v7564 = vpop.permute.xlu0 %7563
          %7565 = vrot.lane.b32.xlu0 %v7494, 64
          %v7566 = vpop.permute.xlu0 %7565
          %7567 = vrot.lane.b32.xlu0 %v7446, 64
          %v7568 = vpop.permute.xlu0 %7567
          %7569 = vrot.lane.b32.xlu0 %v7495, 64
          %v7570 = vpop.permute.xlu0 %7569
          %7571 = vrot.lane.b32.xlu0 %v7447, 64
          %v7572 = vpop.permute.xlu0 %7571
          %7573 = vrot.lane.b32.xlu0 %v7496, 64
          %v7574 = vpop.permute.xlu0 %7573
          %7575 = vrot.lane.b32.xlu0 %v7448, 64
          %v7576 = vpop.permute.xlu0 %7575
          %7577 = vrot.lane.b32.xlu0 %v7497, 64
          %v7578 = vpop.permute.xlu0 %7577
          %7579 = vrot.lane.b32.xlu0 %v7449, 64
          %v7580 = vpop.permute.xlu0 %7579
          %7581 = vrot.lane.b32.xlu0 %v7498, 64
          %v7582 = vpop.permute.xlu0 %7581
          %v7583 = vsel %vm7376, %v7528, %v7530
          %v7584 = vsel %vm7376, %v7532, %v7534
          %v7585 = vsel %vm7376, %v7536, %v7538
          %v7586 = vsel %vm7376, %v7540, %v7542
          %v7587 = vsel %vm7376, %v7544, %v7546
          %v7588 = vsel %vm7376, %v7548, %v7550
          %v7589 = vsel %vm7376, %v7552, %v7554
          %v7590 = vsel %vm7376, %v7556, %v7558
          %v7591 = vsel %vm7376, %v7560, %v7562
          %v7592 = vsel %vm7376, %v7564, %v7566
          %v7593 = vsel %vm7376, %v7568, %v7570
          %v7594 = vsel %vm7376, %v7572, %v7574
          %v7595 = vsel %vm7376, %v7576, %v7578
          %v7596 = vsel %vm7376, %v7580, %v7582
          %v7625 = vld [vmem:[#allocation2 + $0x10] sm:$0xff]
          %v7626 = vld [vmem:[#allocation2 + $0x18] sm:$0xff]
          %v7627 = vld [vmem:[#allocation2 + $0x88] sm:$0xff]
          %v7628 = vld [vmem:[#allocation2 + $0x90] sm:$0xff]
          %v7629 = vld [vmem:[#allocation2 + $0x100] sm:$0xff]
          %v7630 = vld [vmem:[#allocation2 + $0x108] sm:$0xff]
          %v7631 = vld [vmem:[#allocation2 + $0x178] sm:$0xff]
          %v7632 = vld [vmem:[#allocation2 + $0x180] sm:$0xff]
          %v7633 = vld [vmem:[#allocation2 + $0x1f0] sm:$0xff]
          %v7634 = vld [vmem:[#allocation2 + $0x1f8] sm:$0xff]
          %v7635 = vld [vmem:[#allocation2 + $0x268] sm:$0xff]
          %v7636 = vld [vmem:[#allocation2 + $0x270] sm:$0xff]
          %v7637 = vld [vmem:[#allocation2 + $0x2e0] sm:$0xff]
          %v7638 = vld [vmem:[#allocation2 + $0x2e8] sm:$0xff]
          %v7639 = vld [vmem:[#allocation2 + $0x358] sm:$0xff]
          %v7640 = vld [vmem:[#allocation2 + $0x360] sm:$0xff]
          %v7641 = vld [vmem:[#allocation2 + $0x3d0] sm:$0xff]
          %v7642 = vld [vmem:[#allocation2 + $0x3d8] sm:$0xff]
          %v7643 = vld [vmem:[#allocation2 + $0x448] sm:$0xff]
          %v7644 = vld [vmem:[#allocation2 + $0x450] sm:$0xff]
          %v7645 = vld [vmem:[#allocation2 + $0x4c0] sm:$0xff]
          %v7646 = vld [vmem:[#allocation2 + $0x4c8] sm:$0xff]
          %v7647 = vld [vmem:[#allocation2 + $0x538] sm:$0xff]
          %v7648 = vld [vmem:[#allocation2 + $0x540] sm:$0xff]
          %v7649 = vld [vmem:[#allocation2 + $0x5b0] sm:$0xff]
          %v7650 = vld [vmem:[#allocation2 + $0x5b8] sm:$0xff]
          %v7651 = vld [vmem:[#allocation2 + $0x628] sm:$0xff]
          %v7652 = vld [vmem:[#allocation2 + $0x630] sm:$0xff]
          %v7653 = vld [vmem:[#allocation2 + $0x6a0] sm:$0xff]
          %v7654 = vld [vmem:[#allocation2 + $0x6a8] sm:$0xff]
          %v7655 = vld [vmem:[#allocation2 + $0x718] sm:$0xff]
          %v7656 = vld [vmem:[#allocation2 + $0x720] sm:$0xff]
          %v7657 = vadd.f32 %v7625, 0.0
          %v7658 = vadd.f32 %v7626, 0.0
          %v7659 = vadd.f32 %v7583, %v7627
          %v7660 = vadd.f32 %v7530, %v7628
          %v7661 = vadd.f32 %v7584, %v7629
          %v7662 = vadd.f32 %v7534, %v7630
          %v7663 = vadd.f32 %v7585, %v7631
          %v7664 = vadd.f32 %v7538, %v7632
          %v7665 = vadd.f32 %v7586, %v7633
          %v7666 = vadd.f32 %v7542, %v7634
          %v7667 = vadd.f32 %v7587, %v7635
          %v7668 = vadd.f32 %v7546, %v7636
          %v7669 = vadd.f32 %v7588, %v7637
          %v7670 = vadd.f32 %v7550, %v7638
          %v7671 = vadd.f32 %v7589, %v7639
          %v7672 = vadd.f32 %v7554, %v7640
          %v7673 = vadd.f32 %v7641, 0.0
          %v7674 = vadd.f32 %v7642, 0.0
          %v7675 = vadd.f32 %v7590, %v7643
          %v7676 = vadd.f32 %v7558, %v7644
          %v7677 = vadd.f32 %v7591, %v7645
          %v7678 = vadd.f32 %v7562, %v7646
          %v7679 = vadd.f32 %v7592, %v7647
          %v7680 = vadd.f32 %v7566, %v7648
          %v7681 = vadd.f32 %v7593, %v7649
          %v7682 = vadd.f32 %v7570, %v7650
          %v7683 = vadd.f32 %v7594, %v7651
          %v7684 = vadd.f32 %v7574, %v7652
          %v7685 = vadd.f32 %v7595, %v7653
          %v7686 = vadd.f32 %v7578, %v7654
          %v7687 = vadd.f32 %v7596, %v7655
          %v7688 = vadd.f32 %v7582, %v7656
          %v7689 = vld [vmem:[#allocation2 + $0x98] sm:$0xff]
          %v7690 = vld [vmem:[#allocation2 + $0x110] sm:$0xff]
          %v7691 = vld [vmem:[#allocation2 + $0x188] sm:$0xff]
          %v7692 = vld [vmem:[#allocation2 + $0x200] sm:$0xff]
          %v7693 = vld [vmem:[#allocation2 + $0x278] sm:$0xff]
          %v7694 = vld [vmem:[#allocation2 + $0x2f0] sm:$0xff]
          %v7695 = vld [vmem:[#allocation2 + $0x368] sm:$0xff]
          %v7696 = vld [vmem:[#allocation2 + $0x458] sm:$0xff]
          %v7697 = vld [vmem:[#allocation2 + $0x4d0] sm:$0xff]
          %v7698 = vld [vmem:[#allocation2 + $0x548] sm:$0xff]
          %v7699 = vld [vmem:[#allocation2 + $0x5c0] sm:$0xff]
          %v7700 = vld [vmem:[#allocation2 + $0x638] sm:$0xff]
          %v7701 = vld [vmem:[#allocation2 + $0x6b0] sm:$0xff]
          %v7702 = vld [vmem:[#allocation2 + $0x728] sm:$0xff]
          %7732 = vrot.lane.b32.xlu0 %v7628, 64
          %v7733 = vpop.permute.xlu0 %7732
          %7734 = vrot.lane.b32.xlu0 %v7689, 64
          %v7735 = vpop.permute.xlu0 %7734
          %7736 = vrot.lane.b32.xlu0 %v7630, 64
          %v7737 = vpop.permute.xlu0 %7736
          %7738 = vrot.lane.b32.xlu0 %v7690, 64
          %v7739 = vpop.permute.xlu0 %7738
          %7740 = vrot.lane.b32.xlu0 %v7632, 64
          %v7741 = vpop.permute.xlu0 %7740
          %7742 = vrot.lane.b32.xlu0 %v7691, 64
          %v7743 = vpop.permute.xlu0 %7742
          %7744 = vrot.lane.b32.xlu0 %v7634, 64
          %v7745 = vpop.permute.xlu0 %7744
          %7746 = vrot.lane.b32.xlu0 %v7692, 64
          %v7747 = vpop.permute.xlu0 %7746
          %7748 = vrot.lane.b32.xlu0 %v7636, 64
          %v7749 = vpop.permute.xlu0 %7748
          %7750 = vrot.lane.b32.xlu0 %v7693, 64
          %v7751 = vpop.permute.xlu0 %7750
          %7752 = vrot.lane.b32.xlu0 %v7638, 64
          %v7753 = vpop.permute.xlu0 %7752
          %7754 = vrot.lane.b32.xlu0 %v7694, 64
          %v7755 = vpop.permute.xlu0 %7754
          %7756 = vrot.lane.b32.xlu0 %v7640, 64
          %v7757 = vpop.permute.xlu0 %7756
          %7758 = vrot.lane.b32.xlu0 %v7695, 64
          %v7759 = vpop.permute.xlu0 %7758
          %7760 = vrot.lane.b32.xlu0 0.0, 64
          %v7761 = vpop.permute.xlu0 %7760
          %7762 = vrot.lane.b32.xlu0 %v7644, 64
          %v7763 = vpop.permute.xlu0 %7762
          %7764 = vrot.lane.b32.xlu0 %v7696, 64
          %v7765 = vpop.permute.xlu0 %7764
          %7766 = vrot.lane.b32.xlu0 %v7646, 64
          %v7767 = vpop.permute.xlu0 %7766
          %7768 = vrot.lane.b32.xlu0 %v7697, 64
          %v7769 = vpop.permute.xlu0 %7768
          %7770 = vrot.lane.b32.xlu0 %v7648, 64
          %v7771 = vpop.permute.xlu0 %7770
          %7772 = vrot.lane.b32.xlu0 %v7698, 64
          %v7773 = vpop.permute.xlu0 %7772
          %7774 = vrot.lane.b32.xlu0 %v7650, 64
          %v7775 = vpop.permute.xlu0 %7774
          %7776 = vrot.lane.b32.xlu0 %v7699, 64
          %v7777 = vpop.permute.xlu0 %7776
          %7778 = vrot.lane.b32.xlu0 %v7652, 64
          %v7779 = vpop.permute.xlu0 %7778
          %7780 = vrot.lane.b32.xlu0 %v7700, 64
          %v7781 = vpop.permute.xlu0 %7780
          %7782 = vrot.lane.b32.xlu0 %v7654, 64
          %v7783 = vpop.permute.xlu0 %7782
          %7784 = vrot.lane.b32.xlu0 %v7701, 64
          %v7785 = vpop.permute.xlu0 %7784
          %7786 = vrot.lane.b32.xlu0 %v7656, 64
          %v7787 = vpop.permute.xlu0 %7786
          %7788 = vrot.lane.b32.xlu0 %v7702, 64
          %v7789 = vpop.permute.xlu0 %7788
          %v7790 = vsel %vm7376, %v7733, %v7735
          %v7791 = vsel %vm7376, %v7737, %v7739
          %v7792 = vsel %vm7376, %v7741, %v7743
          %v7793 = vsel %vm7376, %v7745, %v7747
          %v7794 = vsel %vm7376, %v7749, %v7751
          %v7795 = vsel %vm7376, %v7753, %v7755
          %v7796 = vsel %vm7376, %v7757, %v7759
          %v7797 = vsel %vm7376, %v7763, %v7765
          %v7798 = vsel %vm7376, %v7767, %v7769
          %v7799 = vsel %vm7376, %v7771, %v7773
          %v7800 = vsel %vm7376, %v7775, %v7777
          %v7801 = vsel %vm7376, %v7779, %v7781
          %v7802 = vsel %vm7376, %v7783, %v7785
          %v7803 = vsel %vm7376, %v7787, %v7789
          %v7833 = vadd.f32 %v7657, %v7790
          %v7834 = vadd.f32 %v7658, %v7735
          %v7835 = vadd.f32 %v7659, %v7791
          %v7836 = vadd.f32 %v7660, %v7739
          %v7837 = vadd.f32 %v7661, %v7792
          %v7838 = vadd.f32 %v7662, %v7743
          %v7839 = vadd.f32 %v7663, %v7793
          %v7840 = vadd.f32 %v7664, %v7747
          %v7841 = vadd.f32 %v7665, %v7794
          %v7842 = vadd.f32 %v7666, %v7751
          %v7843 = vadd.f32 %v7667, %v7795
          %v7844 = vadd.f32 %v7668, %v7755
          %v7845 = vadd.f32 %v7669, %v7796
          %v7846 = vadd.f32 %v7670, %v7759
          %v7847 = vadd.f32 %v7671, %v7761
          %v7848 = vadd.f32 %v7672, %v7761
          %v7849 = vadd.f32 %v7673, %v7797
          %v7850 = vadd.f32 %v7674, %v7765
          %v7851 = vadd.f32 %v7675, %v7798
          %v7852 = vadd.f32 %v7676, %v7769
          %v7853 = vadd.f32 %v7677, %v7799
          %v7854 = vadd.f32 %v7678, %v7773
          %v7855 = vadd.f32 %v7679, %v7800
          %v7856 = vadd.f32 %v7680, %v7777
          %v7857 = vadd.f32 %v7681, %v7801
          %v7858 = vadd.f32 %v7682, %v7781
          %v7859 = vadd.f32 %v7683, %v7802
          %v7860 = vadd.f32 %v7684, %v7785
          %v7861 = vadd.f32 %v7685, %v7803
          %v7862 = vadd.f32 %v7686, %v7789
          %v7863 = vadd.f32 %v7687, %v7761
          %v7864 = vadd.f32 %v7688, %v7761
          %v7881 = vrot.slane %v7833, 7
          %v7882 = vrot.slane %v7835, 7
          %v7883 = vrot.slane %v7837, 7
          %v7884 = vrot.slane %v7839, 7
          %v7885 = vrot.slane %v7841, 7
          %v7886 = vrot.slane %v7843, 7
          %v7887 = vrot.slane %v7845, 7
          %v7888 = vrot.slane %v7847, 7
          %v7889 = vrot.slane %v7849, 7
          %v7890 = vrot.slane %v7851, 7
          %v7891 = vrot.slane %v7853, 7
          %v7892 = vrot.slane %v7855, 7
          %v7893 = vrot.slane %v7857, 7
          %v7894 = vrot.slane %v7859, 7
          %v7895 = vrot.slane %v7861, 7
          %v7896 = vrot.slane %v7863, 7
          %vm7913 = vcmask 1040384
          %v7914 = vsel %vm7913, 0.0, %v7881
          %v7915 = vsel %vm7913, 0.0, %v7882
          %v7916 = vsel %vm7913, 0.0, %v7883
          %v7917 = vsel %vm7913, 0.0, %v7884
          %v7918 = vsel %vm7913, 0.0, %v7885
          %v7919 = vsel %vm7913, 0.0, %v7886
          %v7920 = vsel %vm7913, 0.0, %v7887
          %v7921 = vsel %vm7913, 0.0, %v7888
          %v7922 = vsel %vm7913, 0.0, %v7889
          %v7923 = vsel %vm7913, 0.0, %v7890
          %v7924 = vsel %vm7913, 0.0, %v7891
          %v7925 = vsel %vm7913, 0.0, %v7892
          %v7926 = vsel %vm7913, 0.0, %v7893
          %v7927 = vsel %vm7913, 0.0, %v7894
          %v7928 = vsel %vm7913, 0.0, %v7895
          %v7929 = vsel %vm7913, 0.0, %v7896
          %7930 = vrot.lane.b32.xlu0 %v7833, 64
          %v7931 = vpop.permute.xlu0 %7930
          %7932 = vrot.lane.b32.xlu0 %v7835, 64
          %v7933 = vpop.permute.xlu0 %7932
          %7934 = vrot.lane.b32.xlu0 %v7837, 64
          %v7935 = vpop.permute.xlu0 %7934
          %7936 = vrot.lane.b32.xlu0 %v7839, 64
          %v7937 = vpop.permute.xlu0 %7936
          %7938 = vrot.lane.b32.xlu0 %v7841, 64
          %v7939 = vpop.permute.xlu0 %7938
          %7940 = vrot.lane.b32.xlu0 %v7843, 64
          %v7941 = vpop.permute.xlu0 %7940
          %7942 = vrot.lane.b32.xlu0 %v7845, 64
          %v7943 = vpop.permute.xlu0 %7942
          %7944 = vrot.lane.b32.xlu0 %v7847, 64
          %v7945 = vpop.permute.xlu0 %7944
          %7946 = vrot.lane.b32.xlu0 %v7849, 64
          %v7947 = vpop.permute.xlu0 %7946
          %7948 = vrot.lane.b32.xlu0 %v7851, 64
          %v7949 = vpop.permute.xlu0 %7948
          %7950 = vrot.lane.b32.xlu0 %v7853, 64
          %v7951 = vpop.permute.xlu0 %7950
          %7952 = vrot.lane.b32.xlu0 %v7855, 64
          %v7953 = vpop.permute.xlu0 %7952
          %7954 = vrot.lane.b32.xlu0 %v7857, 64
          %v7955 = vpop.permute.xlu0 %7954
          %7956 = vrot.lane.b32.xlu0 %v7859, 64
          %v7957 = vpop.permute.xlu0 %7956
          %7958 = vrot.lane.b32.xlu0 %v7861, 64
          %v7959 = vpop.permute.xlu0 %7958
          %7960 = vrot.lane.b32.xlu0 %v7863, 64
          %v7961 = vpop.permute.xlu0 %7960
          %v7978 = vadd.f32 %v7914, %v7931
          %v7979 = vadd.f32 %v7915, %v7933
          %v7980 = vadd.f32 %v7916, %v7935
          %v7981 = vadd.f32 %v7917, %v7937
          %v7982 = vadd.f32 %v7918, %v7939
          %v7983 = vadd.f32 %v7919, %v7941
          %v7984 = vadd.f32 %v7920, %v7943
          %v7985 = vadd.f32 %v7921, %v7945
          %v7986 = vadd.f32 %v7922, %v7947
          %v7987 = vadd.f32 %v7923, %v7949
          %v7988 = vadd.f32 %v7924, %v7951
          %v7989 = vadd.f32 %v7925, %v7953
          %v7990 = vadd.f32 %v7926, %v7955
          %v7991 = vadd.f32 %v7927, %v7957
          %v7992 = vadd.f32 %v7928, %v7959
          %v7993 = vadd.f32 %v7929, %v7961
          %v8010 = vrot.slane %v7834, 1
          %v8011 = vrot.slane %v7836, 1
          %v8012 = vrot.slane %v7838, 1
          %v8013 = vrot.slane %v7840, 1
          %v8014 = vrot.slane %v7842, 1
          %v8015 = vrot.slane %v7844, 1
          %v8016 = vrot.slane %v7846, 1
          %v8017 = vrot.slane %v7848, 1
          %v8018 = vrot.slane %v7850, 1
          %v8019 = vrot.slane %v7852, 1
          %v8020 = vrot.slane %v7854, 1
          %v8021 = vrot.slane %v7856, 1
          %v8022 = vrot.slane %v7858, 1
          %v8023 = vrot.slane %v7860, 1
          %v8024 = vrot.slane %v7862, 1
          %v8025 = vrot.slane %v7864, 1
          %vm8042 = vcmask 1046528
          %v8043 = vsel %vm8042, %v8010, 0.0
          %v8044 = vsel %vm8042, %v8011, 0.0
          %v8045 = vsel %vm8042, %v8012, 0.0
          %v8046 = vsel %vm8042, %v8013, 0.0
          %v8047 = vsel %vm8042, %v8014, 0.0
          %v8048 = vsel %vm8042, %v8015, 0.0
          %v8049 = vsel %vm8042, %v8016, 0.0
          %v8050 = vsel %vm8042, %v8017, 0.0
          %v8051 = vsel %vm8042, %v8018, 0.0
          %v8052 = vsel %vm8042, %v8019, 0.0
          %v8053 = vsel %vm8042, %v8020, 0.0
          %v8054 = vsel %vm8042, %v8021, 0.0
          %v8055 = vsel %vm8042, %v8022, 0.0
          %v8056 = vsel %vm8042, %v8023, 0.0
          %v8057 = vsel %vm8042, %v8024, 0.0
          %v8058 = vsel %vm8042, %v8025, 0.0
          %v8059 = vadd.f32 %v7978, %v8043
          %v8060 = vadd.f32 %v7979, %v8044
          %v8061 = vadd.f32 %v7980, %v8045
          %v8062 = vadd.f32 %v7981, %v8046
          %v8063 = vadd.f32 %v7982, %v8047
          %v8064 = vadd.f32 %v7983, %v8048
          %v8065 = vadd.f32 %v7984, %v8049
          %v8066 = vadd.f32 %v7985, %v8050
          %v8067 = vadd.f32 %v7986, %v8051
          %v8068 = vadd.f32 %v7987, %v8052
          %v8069 = vadd.f32 %v7988, %v8053
          %v8070 = vadd.f32 %v7989, %v8054
          %v8071 = vadd.f32 %v7990, %v8055
          %v8072 = vadd.f32 %v7991, %v8056
          %v8073 = vadd.f32 %v7992, %v8057
          %v8074 = vadd.f32 %v7993, %v8058
          %v8075 = vld [vmem:[%s3 + $0x2] sm:$0x1]
          %v8076 = vperm.slane %v8075, 0
          %v8077 = vadd.f32 %v8059, %v8076
          %v8078 = vadd.f32 %v8060, %v8076
          %v8079 = vadd.f32 %v8061, %v8076
          %v8080 = vadd.f32 %v8062, %v8076
          %v8081 = vadd.f32 %v8063, %v8076
          %v8082 = vadd.f32 %v8064, %v8076
          %v8083 = vadd.f32 %v8065, %v8076
          %v8084 = vadd.f32 %v8066, %v8076
          %v8085 = vadd.f32 %v8067, %v8076
          %v8086 = vadd.f32 %v8068, %v8076
          %v8087 = vadd.f32 %v8069, %v8076
          %v8088 = vadd.f32 %v8070, %v8076
          %v8089 = vadd.f32 %v8071, %v8076
          %v8090 = vadd.f32 %v8072, %v8076
          %v8091 = vadd.f32 %v8073, %v8076
          %v8092 = vadd.f32 %v8074, %v8076
          %v8093 = vmax.f32 %v8077, 0.0
          %v8094 = vmax.f32 %v8078, 0.0
          %v8095 = vmax.f32 %v8079, 0.0
          %v8096 = vmax.f32 %v8080, 0.0
          %v8097 = vmax.f32 %v8081, 0.0
          %v8098 = vmax.f32 %v8082, 0.0
          %v8099 = vmax.f32 %v8083, 0.0
          %v8100 = vmax.f32 %v8084, 0.0
          %v8101 = vmax.f32 %v8085, 0.0
          %v8102 = vmax.f32 %v8086, 0.0
          %v8103 = vmax.f32 %v8087, 0.0
          %v8104 = vmax.f32 %v8088, 0.0
          %v8105 = vmax.f32 %v8089, 0.0
          %v8106 = vmax.f32 %v8090, 0.0
          %v8107 = vmax.f32 %v8091, 0.0
          %v8108 = vmax.f32 %v8092, 0.0
          %v8109 = vld [vmem:[#allocation2 + $0x28] sm:$0xff]
          %v8110 = vld [vmem:[#allocation2 + $0x30] sm:$0xff]
          %v8111 = vld [vmem:[#allocation2 + $0xa0] sm:$0xff]
          %v8112 = vld [vmem:[#allocation2 + $0xa8] sm:$0xff]
          %v8113 = vld [vmem:[#allocation2 + $0x118] sm:$0xff]
          %v8114 = vld [vmem:[#allocation2 + $0x120] sm:$0xff]
          %v8115 = vld [vmem:[#allocation2 + $0x190] sm:$0xff]
          %v8116 = vld [vmem:[#allocation2 + $0x198] sm:$0xff]
          %v8117 = vld [vmem:[#allocation2 + $0x208] sm:$0xff]
          %v8118 = vld [vmem:[#allocation2 + $0x210] sm:$0xff]
          %v8119 = vld [vmem:[#allocation2 + $0x280] sm:$0xff]
          %v8120 = vld [vmem:[#allocation2 + $0x288] sm:$0xff]
          %v8121 = vld [vmem:[#allocation2 + $0x3e8] sm:$0xff]
          %v8122 = vld [vmem:[#allocation2 + $0x3f0] sm:$0xff]
          %v8123 = vld [vmem:[#allocation2 + $0x460] sm:$0xff]
          %v8124 = vld [vmem:[#allocation2 + $0x468] sm:$0xff]
          %v8125 = vld [vmem:[#allocation2 + $0x4d8] sm:$0xff]
          %v8126 = vld [vmem:[#allocation2 + $0x4e0] sm:$0xff]
          %v8127 = vld [vmem:[#allocation2 + $0x550] sm:$0xff]
          %v8128 = vld [vmem:[#allocation2 + $0x558] sm:$0xff]
          %v8129 = vld [vmem:[#allocation2 + $0x5c8] sm:$0xff]
          %v8130 = vld [vmem:[#allocation2 + $0x5d0] sm:$0xff]
          %v8131 = vld [vmem:[#allocation2 + $0x640] sm:$0xff]
          %v8132 = vld [vmem:[#allocation2 + $0x648] sm:$0xff]
          %v8133 = vld [vmem:[#allocation2 + $0x38] sm:$0xff]
          %v8134 = vld [vmem:[#allocation2 + $0xb0] sm:$0xff]
          %v8135 = vld [vmem:[#allocation2 + $0x128] sm:$0xff]
          %v8136 = vld [vmem:[#allocation2 + $0x1a0] sm:$0xff]
          %v8137 = vld [vmem:[#allocation2 + $0x218] sm:$0xff]
          %v8138 = vld [vmem:[#allocation2 + $0x290] sm:$0xff]
          %v8139 = vld [vmem:[#allocation2 + $0x300] sm:$0xff]
          %v8140 = vld [vmem:[#allocation2 + $0x308] sm:$0xff]
          %v8141 = vld [vmem:[#allocation2 + $0x378] sm:$0xff]
          %v8142 = vld [vmem:[#allocation2 + $0x380] sm:$0xff]
          %v8143 = vld [vmem:[#allocation2 + $0x3f8] sm:$0xff]
          %v8144 = vld [vmem:[#allocation2 + $0x470] sm:$0xff]
          %v8145 = vld [vmem:[#allocation2 + $0x4e8] sm:$0xff]
          %v8146 = vld [vmem:[#allocation2 + $0x560] sm:$0xff]
          %v8147 = vld [vmem:[#allocation2 + $0x5d8] sm:$0xff]
          %v8148 = vld [vmem:[#allocation2 + $0x650] sm:$0xff]
          %v8149 = vld [vmem:[#allocation2 + $0x6c0] sm:$0xff]
          %v8150 = vld [vmem:[#allocation2 + $0x6c8] sm:$0xff]
          %v8151 = vld [vmem:[#allocation2 + $0x738] sm:$0xff]
          %v8152 = vld [vmem:[#allocation2 + $0x740] sm:$0xff]
          %8185 = vrot.lane.b32.xlu0 %v8110, 64
          %v8186 = vpop.permute.xlu0 %8185
          %8187 = vrot.lane.b32.xlu0 %v8133, 64
          %v8188 = vpop.permute.xlu0 %8187
          %8189 = vrot.lane.b32.xlu0 %v8112, 64
          %v8190 = vpop.permute.xlu0 %8189
          %8191 = vrot.lane.b32.xlu0 %v8134, 64
          %v8192 = vpop.permute.xlu0 %8191
          %8193 = vrot.lane.b32.xlu0 %v8114, 64
          %v8194 = vpop.permute.xlu0 %8193
          %8195 = vrot.lane.b32.xlu0 %v8135, 64
          %v8196 = vpop.permute.xlu0 %8195
          %8197 = vrot.lane.b32.xlu0 %v8116, 64
          %v8198 = vpop.permute.xlu0 %8197
          %8199 = vrot.lane.b32.xlu0 %v8136, 64
          %v8200 = vpop.permute.xlu0 %8199
          %8201 = vrot.lane.b32.xlu0 %v8118, 64
          %v8202 = vpop.permute.xlu0 %8201
          %8203 = vrot.lane.b32.xlu0 %v8137, 64
          %v8204 = vpop.permute.xlu0 %8203
          %8205 = vrot.lane.b32.xlu0 %v8120, 64
          %v8206 = vpop.permute.xlu0 %8205
          %8207 = vrot.lane.b32.xlu0 %v8138, 64
          %v8208 = vpop.permute.xlu0 %8207
          %8209 = vrot.lane.b32.xlu0 %v8139, 64
          %v8210 = vpop.permute.xlu0 %8209
          %8211 = vrot.lane.b32.xlu0 %v8140, 64
          %v8212 = vpop.permute.xlu0 %8211
          %8213 = vrot.lane.b32.xlu0 %v8141, 64
          %v8214 = vpop.permute.xlu0 %8213
          %8215 = vrot.lane.b32.xlu0 %v8142, 64
          %v8216 = vpop.permute.xlu0 %8215
          %8217 = vrot.lane.b32.xlu0 %v8122, 64
          %v8218 = vpop.permute.xlu0 %8217
          %8219 = vrot.lane.b32.xlu0 %v8143, 64
          %v8220 = vpop.permute.xlu0 %8219
          %8221 = vrot.lane.b32.xlu0 %v8124, 64
          %v8222 = vpop.permute.xlu0 %8221
          %8223 = vrot.lane.b32.xlu0 %v8144, 64
          %v8224 = vpop.permute.xlu0 %8223
          %8225 = vrot.lane.b32.xlu0 %v8126, 64
          %v8226 = vpop.permute.xlu0 %8225
          %8227 = vrot.lane.b32.xlu0 %v8145, 64
          %v8228 = vpop.permute.xlu0 %8227
          %8229 = vrot.lane.b32.xlu0 %v8128, 64
          %v8230 = vpop.permute.xlu0 %8229
          %8231 = vrot.lane.b32.xlu0 %v8146, 64
          %v8232 = vpop.permute.xlu0 %8231
          %8233 = vrot.lane.b32.xlu0 %v8130, 64
          %v8234 = vpop.permute.xlu0 %8233
          %8235 = vrot.lane.b32.xlu0 %v8147, 64
          %v8236 = vpop.permute.xlu0 %8235
          %8237 = vrot.lane.b32.xlu0 %v8132, 64
          %v8238 = vpop.permute.xlu0 %8237
          %8239 = vrot.lane.b32.xlu0 %v8148, 64
          %v8240 = vpop.permute.xlu0 %8239
          %8241 = vrot.lane.b32.xlu0 %v8149, 64
          %v8242 = vpop.permute.xlu0 %8241
          %8243 = vrot.lane.b32.xlu0 %v8150, 64
          %v8244 = vpop.permute.xlu0 %8243
          %8245 = vrot.lane.b32.xlu0 %v8151, 64
          %v8246 = vpop.permute.xlu0 %8245
          %8247 = vrot.lane.b32.xlu0 %v8152, 64
          %v8248 = vpop.permute.xlu0 %8247
          %v8249 = vsel %vm7376, %v8186, %v8188
          %v8250 = vsel %vm7376, %v8190, %v8192
          %v8251 = vsel %vm7376, %v8194, %v8196
          %v8252 = vsel %vm7376, %v8198, %v8200
          %v8253 = vsel %vm7376, %v8202, %v8204
          %v8254 = vsel %vm7376, %v8206, %v8208
          %v8255 = vsel %vm7376, %v8210, %v8212
          %v8256 = vsel %vm7376, %v8214, %v8216
          %v8257 = vsel %vm7376, %v8218, %v8220
          %v8258 = vsel %vm7376, %v8222, %v8224
          %v8259 = vsel %vm7376, %v8226, %v8228
          %v8260 = vsel %vm7376, %v8230, %v8232
          %v8261 = vsel %vm7376, %v8234, %v8236
          %v8262 = vsel %vm7376, %v8238, %v8240
          %v8263 = vsel %vm7376, %v8242, %v8244
          %v8264 = vsel %vm7376, %v8246, %v8248
          %v8297 = vadd.f32 %v8249, 0.0
          %v8298 = vadd.f32 %v8188, 0.0
          %v8299 = vadd.f32 %v8250, 0.0
          %v8300 = vadd.f32 %v8192, 0.0
          %v8301 = vadd.f32 %v8109, %v8251
          %v8302 = vadd.f32 %v8110, %v8196
          %v8303 = vadd.f32 %v8111, %v8252
          %v8304 = vadd.f32 %v8112, %v8200
          %v8305 = vadd.f32 %v8113, %v8253
          %v8306 = vadd.f32 %v8114, %v8204
          %v8307 = vadd.f32 %v8115, %v8254
          %v8308 = vadd.f32 %v8116, %v8208
          %v8309 = vadd.f32 %v8117, %v8255
          %v8310 = vadd.f32 %v8118, %v8212
          %v8311 = vadd.f32 %v8119, %v8256
          %v8312 = vadd.f32 %v8120, %v8216
          %v8313 = vadd.f32 %v8257, 0.0
          %v8314 = vadd.f32 %v8220, 0.0
          %v8315 = vadd.f32 %v8258, 0.0
          %v8316 = vadd.f32 %v8224, 0.0
          %v8317 = vadd.f32 %v8121, %v8259
          %v8318 = vadd.f32 %v8122, %v8228
          %v8319 = vadd.f32 %v8123, %v8260
          %v8320 = vadd.f32 %v8124, %v8232
          %v8321 = vadd.f32 %v8125, %v8261
          %v8322 = vadd.f32 %v8126, %v8236
          %v8323 = vadd.f32 %v8127, %v8262
          %v8324 = vadd.f32 %v8128, %v8240
          %v8325 = vadd.f32 %v8129, %v8263
          %v8326 = vadd.f32 %v8130, %v8244
          %v8327 = vadd.f32 %v8131, %v8264
          %v8328 = vadd.f32 %v8132, %v8248
          %v8329 = vld [vmem:[#allocation2 + $0x130] sm:$0xff]
          %v8330 = vld [vmem:[#allocation2 + $0x138] sm:$0xff]
          %v8331 = vld [vmem:[#allocation2 + $0x1a8] sm:$0xff]
          %v8332 = vld [vmem:[#allocation2 + $0x1b0] sm:$0xff]
          %v8333 = vld [vmem:[#allocation2 + $0x220] sm:$0xff]
          %v8334 = vld [vmem:[#allocation2 + $0x228] sm:$0xff]
          %v8335 = vld [vmem:[#allocation2 + $0x298] sm:$0xff]
          %v8336 = vld [vmem:[#allocation2 + $0x2a0] sm:$0xff]
          %v8337 = vld [vmem:[#allocation2 + $0x310] sm:$0xff]
          %v8338 = vld [vmem:[#allocation2 + $0x318] sm:$0xff]
          %v8339 = vld [vmem:[#allocation2 + $0x388] sm:$0xff]
          %v8340 = vld [vmem:[#allocation2 + $0x390] sm:$0xff]
          %v8341 = vld [vmem:[#allocation2 + $0x4f0] sm:$0xff]
          %v8342 = vld [vmem:[#allocation2 + $0x4f8] sm:$0xff]
          %v8343 = vld [vmem:[#allocation2 + $0x568] sm:$0xff]
          %v8344 = vld [vmem:[#allocation2 + $0x570] sm:$0xff]
          %v8345 = vld [vmem:[#allocation2 + $0x5e0] sm:$0xff]
          %v8346 = vld [vmem:[#allocation2 + $0x5e8] sm:$0xff]
          %v8347 = vld [vmem:[#allocation2 + $0x658] sm:$0xff]
          %v8348 = vld [vmem:[#allocation2 + $0x660] sm:$0xff]
          %v8349 = vld [vmem:[#allocation2 + $0x6d0] sm:$0xff]
          %v8350 = vld [vmem:[#allocation2 + $0x6d8] sm:$0xff]
          %v8351 = vld [vmem:[#allocation2 + $0x748] sm:$0xff]
          %v8352 = vld [vmem:[#allocation2 + $0x750] sm:$0xff]
          %v8353 = vadd.f32 %v8297, %v8329
          %v8354 = vadd.f32 %v8298, %v8330
          %v8355 = vadd.f32 %v8299, %v8331
          %v8356 = vadd.f32 %v8300, %v8332
          %v8357 = vadd.f32 %v8301, %v8333
          %v8358 = vadd.f32 %v8302, %v8334
          %v8359 = vadd.f32 %v8303, %v8335
          %v8360 = vadd.f32 %v8304, %v8336
          %v8361 = vadd.f32 %v8305, %v8337
          %v8362 = vadd.f32 %v8306, %v8338
          %v8363 = vadd.f32 %v8307, %v8339
          %v8364 = vadd.f32 %v8308, %v8340
          %v8365 = vadd.f32 %v8309, 0.0
          %v8366 = vadd.f32 %v8310, 0.0
          %v8367 = vadd.f32 %v8311, 0.0
          %v8368 = vadd.f32 %v8312, 0.0
          %v8369 = vadd.f32 %v8313, %v8341
          %v8370 = vadd.f32 %v8314, %v8342
          %v8371 = vadd.f32 %v8315, %v8343
          %v8372 = vadd.f32 %v8316, %v8344
          %v8373 = vadd.f32 %v8317, %v8345
          %v8374 = vadd.f32 %v8318, %v8346
          %v8375 = vadd.f32 %v8319, %v8347
          %v8376 = vadd.f32 %v8320, %v8348
          %v8377 = vadd.f32 %v8321, %v8349
          %v8378 = vadd.f32 %v8322, %v8350
          %v8379 = vadd.f32 %v8323, %v8351
          %v8380 = vadd.f32 %v8324, %v8352
          %v8381 = vadd.f32 %v8325, 0.0
          %v8382 = vadd.f32 %v8326, 0.0
          %v8383 = vadd.f32 %v8327, 0.0
          %v8384 = vadd.f32 %v8328, 0.0
          %v8401 = vrot.slane %v8353, 6
          %v8402 = vrot.slane %v8355, 6
          %v8403 = vrot.slane %v8357, 6
          %v8404 = vrot.slane %v8359, 6
          %v8405 = vrot.slane %v8361, 6
          %v8406 = vrot.slane %v8363, 6
          %v8407 = vrot.slane %v8365, 6
          %v8408 = vrot.slane %v8367, 6
          %v8409 = vrot.slane %v8369, 6
          %v8410 = vrot.slane %v8371, 6
          %v8411 = vrot.slane %v8373, 6
          %v8412 = vrot.slane %v8375, 6
          %v8413 = vrot.slane %v8377, 6
          %v8414 = vrot.slane %v8379, 6
          %v8415 = vrot.slane %v8381, 6
          %v8416 = vrot.slane %v8383, 6
          %vm8433 = vcmask 1041408
          %v8434 = vsel %vm8433, 0.0, %v8401
          %v8435 = vsel %vm8433, 0.0, %v8402
          %v8436 = vsel %vm8433, 0.0, %v8403
          %v8437 = vsel %vm8433, 0.0, %v8404
          %v8438 = vsel %vm8433, 0.0, %v8405
          %v8439 = vsel %vm8433, 0.0, %v8406
          %v8440 = vsel %vm8433, 0.0, %v8407
          %v8441 = vsel %vm8433, 0.0, %v8408
          %v8442 = vsel %vm8433, 0.0, %v8409
          %v8443 = vsel %vm8433, 0.0, %v8410
          %v8444 = vsel %vm8433, 0.0, %v8411
          %v8445 = vsel %vm8433, 0.0, %v8412
          %v8446 = vsel %vm8433, 0.0, %v8413
          %v8447 = vsel %vm8433, 0.0, %v8414
          %v8448 = vsel %vm8433, 0.0, %v8415
          %v8449 = vsel %vm8433, 0.0, %v8416
          %8450 = vrot.lane.b32.xlu0 %v8353, 64
          %v8451 = vpop.permute.xlu0 %8450
          %8452 = vrot.lane.b32.xlu0 %v8355, 64
          %v8453 = vpop.permute.xlu0 %8452
          %8454 = vrot.lane.b32.xlu0 %v8357, 64
          %v8455 = vpop.permute.xlu0 %8454
          %8456 = vrot.lane.b32.xlu0 %v8359, 64
          %v8457 = vpop.permute.xlu0 %8456
          %8458 = vrot.lane.b32.xlu0 %v8361, 64
          %v8459 = vpop.permute.xlu0 %8458
          %8460 = vrot.lane.b32.xlu0 %v8363, 64
          %v8461 = vpop.permute.xlu0 %8460
          %8462 = vrot.lane.b32.xlu0 %v8365, 64
          %v8463 = vpop.permute.xlu0 %8462
          %8464 = vrot.lane.b32.xlu0 %v8367, 64
          %v8465 = vpop.permute.xlu0 %8464
          %8466 = vrot.lane.b32.xlu0 %v8369, 64
          %v8467 = vpop.permute.xlu0 %8466
          %8468 = vrot.lane.b32.xlu0 %v8371, 64
          %v8469 = vpop.permute.xlu0 %8468
          %8470 = vrot.lane.b32.xlu0 %v8373, 64
          %v8471 = vpop.permute.xlu0 %8470
          %8472 = vrot.lane.b32.xlu0 %v8375, 64
          %v8473 = vpop.permute.xlu0 %8472
          %8474 = vrot.lane.b32.xlu0 %v8377, 64
          %v8475 = vpop.permute.xlu0 %8474
          %8476 = vrot.lane.b32.xlu0 %v8379, 64
          %v8477 = vpop.permute.xlu0 %8476
          %8478 = vrot.lane.b32.xlu0 %v8381, 64
          %v8479 = vpop.permute.xlu0 %8478
          %8480 = vrot.lane.b32.xlu0 %v8383, 64
          %v8481 = vpop.permute.xlu0 %8480
          %v8498 = vadd.f32 %v8434, %v8451
          %v8499 = vadd.f32 %v8435, %v8453
          %v8500 = vadd.f32 %v8436, %v8455
          %v8501 = vadd.f32 %v8437, %v8457
          %v8502 = vadd.f32 %v8438, %v8459
          %v8503 = vadd.f32 %v8439, %v8461
          %v8504 = vadd.f32 %v8440, %v8463
          %v8505 = vadd.f32 %v8441, %v8465
          %v8506 = vadd.f32 %v8442, %v8467
          %v8507 = vadd.f32 %v8443, %v8469
          %v8508 = vadd.f32 %v8444, %v8471
          %v8509 = vadd.f32 %v8445, %v8473
          %v8510 = vadd.f32 %v8446, %v8475
          %v8511 = vadd.f32 %v8447, %v8477
          %v8512 = vadd.f32 %v8448, %v8479
          %v8513 = vadd.f32 %v8449, %v8481
          %v8530 = vrot.slane %v8354, 2
          %v8531 = vrot.slane %v8356, 2
          %v8532 = vrot.slane %v8358, 2
          %v8533 = vrot.slane %v8360, 2
          %v8534 = vrot.slane %v8362, 2
          %v8535 = vrot.slane %v8364, 2
          %v8536 = vrot.slane %v8366, 2
          %v8537 = vrot.slane %v8368, 2
          %v8538 = vrot.slane %v8370, 2
          %v8539 = vrot.slane %v8372, 2
          %v8540 = vrot.slane %v8374, 2
          %v8541 = vrot.slane %v8376, 2
          %v8542 = vrot.slane %v8378, 2
          %v8543 = vrot.slane %v8380, 2
          %v8544 = vrot.slane %v8382, 2
          %v8545 = vrot.slane %v8384, 2
          %vm8562 = vcmask 1045504
          %v8563 = vsel %vm8562, %v8530, 0.0
          %v8564 = vsel %vm8562, %v8531, 0.0
          %v8565 = vsel %vm8562, %v8532, 0.0
          %v8566 = vsel %vm8562, %v8533, 0.0
          %v8567 = vsel %vm8562, %v8534, 0.0
          %v8568 = vsel %vm8562, %v8535, 0.0
          %v8569 = vsel %vm8562, %v8536, 0.0
          %v8570 = vsel %vm8562, %v8537, 0.0
          %v8571 = vsel %vm8562, %v8538, 0.0
          %v8572 = vsel %vm8562, %v8539, 0.0
          %v8573 = vsel %vm8562, %v8540, 0.0
          %v8574 = vsel %vm8562, %v8541, 0.0
          %v8575 = vsel %vm8562, %v8542, 0.0
          %v8576 = vsel %vm8562, %v8543, 0.0
          %v8577 = vsel %vm8562, %v8544, 0.0
          %v8578 = vsel %vm8562, %v8545, 0.0
          %v8579 = vadd.f32 %v8498, %v8563
          %v8580 = vadd.f32 %v8499, %v8564
          %v8581 = vadd.f32 %v8500, %v8565
          %v8582 = vadd.f32 %v8501, %v8566
          %v8583 = vadd.f32 %v8502, %v8567
          %v8584 = vadd.f32 %v8503, %v8568
          %v8585 = vadd.f32 %v8504, %v8569
          %v8586 = vadd.f32 %v8505, %v8570
          %v8587 = vadd.f32 %v8506, %v8571
          %v8588 = vadd.f32 %v8507, %v8572
          %v8589 = vadd.f32 %v8508, %v8573
          %v8590 = vadd.f32 %v8509, %v8574
          %v8591 = vadd.f32 %v8510, %v8575
          %v8592 = vadd.f32 %v8511, %v8576
          %v8593 = vadd.f32 %v8512, %v8577
          %v8594 = vadd.f32 %v8513, %v8578
          %v8595 = vld [vmem:[%s3 + $0x3] sm:$0x1]
          %v8596 = vperm.slane %v8595, 0
          %v8597 = vadd.f32 %v8579, %v8596
          %v8598 = vadd.f32 %v8580, %v8596
          %v8599 = vadd.f32 %v8581, %v8596
          %v8600 = vadd.f32 %v8582, %v8596
          %v8601 = vadd.f32 %v8583, %v8596
          %v8602 = vadd.f32 %v8584, %v8596
          %v8603 = vadd.f32 %v8585, %v8596
          %v8604 = vadd.f32 %v8586, %v8596
          %v8605 = vadd.f32 %v8587, %v8596
          %v8606 = vadd.f32 %v8588, %v8596
          %v8607 = vadd.f32 %v8589, %v8596
          %v8608 = vadd.f32 %v8590, %v8596
          %v8609 = vadd.f32 %v8591, %v8596
          %v8610 = vadd.f32 %v8592, %v8596
          %v8611 = vadd.f32 %v8593, %v8596
          %v8612 = vadd.f32 %v8594, %v8596
          %v8613 = vmax.f32 %v8597, 0.0
          %v8614 = vmax.f32 %v8598, 0.0
          %v8615 = vmax.f32 %v8599, 0.0
          %v8616 = vmax.f32 %v8600, 0.0
          %v8617 = vmax.f32 %v8601, 0.0
          %v8618 = vmax.f32 %v8602, 0.0
          %v8619 = vmax.f32 %v8603, 0.0
          %v8620 = vmax.f32 %v8604, 0.0
          %v8621 = vmax.f32 %v8605, 0.0
          %v8622 = vmax.f32 %v8606, 0.0
          %v8623 = vmax.f32 %v8607, 0.0
          %v8624 = vmax.f32 %v8608, 0.0
          %v8625 = vmax.f32 %v8609, 0.0
          %v8626 = vmax.f32 %v8610, 0.0
          %v8627 = vmax.f32 %v8611, 0.0
          %v8628 = vmax.f32 %v8612, 0.0
          %v8629 = vld [vmem:[#allocation2 + $0x48] sm:$0xff]
          %v8630 = vld [vmem:[#allocation2 + $0x50] sm:$0xff]
          %v8631 = vld [vmem:[#allocation2 + $0xc0] sm:$0xff]
          %v8632 = vld [vmem:[#allocation2 + $0xc8] sm:$0xff]
          %v8633 = vld [vmem:[#allocation2 + $0x140] sm:$0xff]
          %v8634 = vld [vmem:[#allocation2 + $0x1b8] sm:$0xff]
          %v8635 = vld [vmem:[#allocation2 + $0x230] sm:$0xff]
          %v8636 = vld [vmem:[#allocation2 + $0x408] sm:$0xff]
          %v8637 = vld [vmem:[#allocation2 + $0x410] sm:$0xff]
          %v8638 = vld [vmem:[#allocation2 + $0x480] sm:$0xff]
          %v8639 = vld [vmem:[#allocation2 + $0x488] sm:$0xff]
          %v8640 = vld [vmem:[#allocation2 + $0x500] sm:$0xff]
          %v8641 = vld [vmem:[#allocation2 + $0x578] sm:$0xff]
          %v8642 = vld [vmem:[#allocation2 + $0x5f0] sm:$0xff]
          %8663 = vrot.lane.b32.xlu0 %v8629, 64
          %v8664 = vpop.permute.xlu0 %8663
          %8665 = vrot.lane.b32.xlu0 %v8630, 64
          %v8666 = vpop.permute.xlu0 %8665
          %8667 = vrot.lane.b32.xlu0 %v8631, 64
          %v8668 = vpop.permute.xlu0 %8667
          %8669 = vrot.lane.b32.xlu0 %v8632, 64
          %v8670 = vpop.permute.xlu0 %8669
          %8671 = vrot.lane.b32.xlu0 %v8330, 64
          %v8672 = vpop.permute.xlu0 %8671
          %8673 = vrot.lane.b32.xlu0 %v8633, 64
          %v8674 = vpop.permute.xlu0 %8673
          %8675 = vrot.lane.b32.xlu0 %v8332, 64
          %v8676 = vpop.permute.xlu0 %8675
          %8677 = vrot.lane.b32.xlu0 %v8634, 64
          %v8678 = vpop.permute.xlu0 %8677
          %8679 = vrot.lane.b32.xlu0 %v8334, 64
          %v8680 = vpop.permute.xlu0 %8679
          %8681 = vrot.lane.b32.xlu0 %v8635, 64
          %v8682 = vpop.permute.xlu0 %8681
          %8683 = vrot.lane.b32.xlu0 %v8636, 64
          %v8684 = vpop.permute.xlu0 %8683
          %8685 = vrot.lane.b32.xlu0 %v8637, 64
          %v8686 = vpop.permute.xlu0 %8685
          %8687 = vrot.lane.b32.xlu0 %v8638, 64
          %v8688 = vpop.permute.xlu0 %8687
          %8689 = vrot.lane.b32.xlu0 %v8639, 64
          %v8690 = vpop.permute.xlu0 %8689
          %8691 = vrot.lane.b32.xlu0 %v8342, 64
          %v8692 = vpop.permute.xlu0 %8691
          %8693 = vrot.lane.b32.xlu0 %v8640, 64
          %v8694 = vpop.permute.xlu0 %8693
          %8695 = vrot.lane.b32.xlu0 %v8344, 64
          %v8696 = vpop.permute.xlu0 %8695
          %8697 = vrot.lane.b32.xlu0 %v8641, 64
          %v8698 = vpop.permute.xlu0 %8697
          %8699 = vrot.lane.b32.xlu0 %v8346, 64
          %v8700 = vpop.permute.xlu0 %8699
          %8701 = vrot.lane.b32.xlu0 %v8642, 64
          %v8702 = vpop.permute.xlu0 %8701
          %v8703 = vsel %vm7376, %v8664, %v8666
          %v8704 = vsel %vm7376, %v8668, %v8670
          %v8705 = vsel %vm7376, %v8672, %v8674
          %v8706 = vsel %vm7376, %v8676, %v8678
          %v8707 = vsel %vm7376, %v8680, %v8682
          %v8708 = vsel %vm7376, %v8684, %v8686
          %v8709 = vsel %vm7376, %v8688, %v8690
          %v8710 = vsel %vm7376, %v8692, %v8694
          %v8711 = vsel %vm7376, %v8696, %v8698
          %v8712 = vsel %vm7376, %v8700, %v8702
          %v8733 = vld [vmem:[#allocation2 + $0x58] sm:$0xff]
          %v8734 = vld [vmem:[#allocation2 + $0x60] sm:$0xff]
          %v8735 = vld [vmem:[#allocation2 + $0xd0] sm:$0xff]
          %v8736 = vld [vmem:[#allocation2 + $0xd8] sm:$0xff]
          %v8737 = vld [vmem:[#allocation2 + $0x148] sm:$0xff]
          %v8738 = vld [vmem:[#allocation2 + $0x150] sm:$0xff]
          %v8739 = vld [vmem:[#allocation2 + $0x1c0] sm:$0xff]
          %v8740 = vld [vmem:[#allocation2 + $0x1c8] sm:$0xff]
          %v8741 = vld [vmem:[#allocation2 + $0x238] sm:$0xff]
          %v8742 = vld [vmem:[#allocation2 + $0x240] sm:$0xff]
          %v8743 = vld [vmem:[#allocation2 + $0x2b0] sm:$0xff]
          %v8744 = vld [vmem:[#allocation2 + $0x2b8] sm:$0xff]
          %v8745 = vld [vmem:[#allocation2 + $0x328] sm:$0xff]
          %v8746 = vld [vmem:[#allocation2 + $0x330] sm:$0xff]
          %v8747 = vld [vmem:[#allocation2 + $0x3a0] sm:$0xff]
          %v8748 = vld [vmem:[#allocation2 + $0x3a8] sm:$0xff]
          %v8749 = vld [vmem:[#allocation2 + $0x418] sm:$0xff]
          %v8750 = vld [vmem:[#allocation2 + $0x420] sm:$0xff]
          %v8751 = vld [vmem:[#allocation2 + $0x490] sm:$0xff]
          %v8752 = vld [vmem:[#allocation2 + $0x498] sm:$0xff]
          %v8753 = vld [vmem:[#allocation2 + $0x508] sm:$0xff]
          %v8754 = vld [vmem:[#allocation2 + $0x510] sm:$0xff]
          %v8755 = vld [vmem:[#allocation2 + $0x580] sm:$0xff]
          %v8756 = vld [vmem:[#allocation2 + $0x588] sm:$0xff]
          %v8757 = vld [vmem:[#allocation2 + $0x5f8] sm:$0xff]
          %v8758 = vld [vmem:[#allocation2 + $0x600] sm:$0xff]
          %v8759 = vld [vmem:[#allocation2 + $0x670] sm:$0xff]
          %v8760 = vld [vmem:[#allocation2 + $0x678] sm:$0xff]
          %v8761 = vld [vmem:[#allocation2 + $0x6e8] sm:$0xff]
          %v8762 = vld [vmem:[#allocation2 + $0x6f0] sm:$0xff]
          %v8763 = vld [vmem:[#allocation2 + $0x760] sm:$0xff]
          %v8764 = vld [vmem:[#allocation2 + $0x768] sm:$0xff]
          %v8765 = vadd.f32 %v8733, 0.0
          %v8766 = vadd.f32 %v8734, 0.0
          %v8767 = vadd.f32 %v8735, 0.0
          %v8768 = vadd.f32 %v8736, 0.0
          %v8769 = vadd.f32 %v8737, 0.0
          %v8770 = vadd.f32 %v8738, 0.0
          %v8771 = vadd.f32 %v8703, %v8739
          %v8772 = vadd.f32 %v8666, %v8740
          %v8773 = vadd.f32 %v8704, %v8741
          %v8774 = vadd.f32 %v8670, %v8742
          %v8775 = vadd.f32 %v8705, %v8743
          %v8776 = vadd.f32 %v8674, %v8744
          %v8777 = vadd.f32 %v8706, %v8745
          %v8778 = vadd.f32 %v8678, %v8746
          %v8779 = vadd.f32 %v8707, %v8747
          %v8780 = vadd.f32 %v8682, %v8748
          %v8781 = vadd.f32 %v8749, 0.0
          %v8782 = vadd.f32 %v8750, 0.0
          %v8783 = vadd.f32 %v8751, 0.0
          %v8784 = vadd.f32 %v8752, 0.0
          %v8785 = vadd.f32 %v8753, 0.0
          %v8786 = vadd.f32 %v8754, 0.0
          %v8787 = vadd.f32 %v8708, %v8755
          %v8788 = vadd.f32 %v8686, %v8756
          %v8789 = vadd.f32 %v8709, %v8757
          %v8790 = vadd.f32 %v8690, %v8758
          %v8791 = vadd.f32 %v8710, %v8759
          %v8792 = vadd.f32 %v8694, %v8760
          %v8793 = vadd.f32 %v8711, %v8761
          %v8794 = vadd.f32 %v8698, %v8762
          %v8795 = vadd.f32 %v8712, %v8763
          %v8796 = vadd.f32 %v8702, %v8764
          %v8797 = vld [vmem:[#allocation2 + $0x1d0] sm:$0xff]
          %v8798 = vld [vmem:[#allocation2 + $0x248] sm:$0xff]
          %v8799 = vld [vmem:[#allocation2 + $0x2c0] sm:$0xff]
          %v8800 = vld [vmem:[#allocation2 + $0x338] sm:$0xff]
          %v8801 = vld [vmem:[#allocation2 + $0x3b0] sm:$0xff]
          %v8802 = vld [vmem:[#allocation2 + $0x590] sm:$0xff]
          %v8803 = vld [vmem:[#allocation2 + $0x608] sm:$0xff]
          %v8804 = vld [vmem:[#allocation2 + $0x680] sm:$0xff]
          %v8805 = vld [vmem:[#allocation2 + $0x6f8] sm:$0xff]
          %v8806 = vld [vmem:[#allocation2 + $0x770] sm:$0xff]
          %8827 = vrot.lane.b32.xlu0 %v8740, 64
          %v8828 = vpop.permute.xlu0 %8827
          %8829 = vrot.lane.b32.xlu0 %v8797, 64
          %v8830 = vpop.permute.xlu0 %8829
          %8831 = vrot.lane.b32.xlu0 %v8742, 64
          %v8832 = vpop.permute.xlu0 %8831
          %8833 = vrot.lane.b32.xlu0 %v8798, 64
          %v8834 = vpop.permute.xlu0 %8833
          %8835 = vrot.lane.b32.xlu0 %v8744, 64
          %v8836 = vpop.permute.xlu0 %8835
          %8837 = vrot.lane.b32.xlu0 %v8799, 64
          %v8838 = vpop.permute.xlu0 %8837
          %8839 = vrot.lane.b32.xlu0 %v8746, 64
          %v8840 = vpop.permute.xlu0 %8839
          %8841 = vrot.lane.b32.xlu0 %v8800, 64
          %v8842 = vpop.permute.xlu0 %8841
          %8843 = vrot.lane.b32.xlu0 %v8748, 64
          %v8844 = vpop.permute.xlu0 %8843
          %8845 = vrot.lane.b32.xlu0 %v8801, 64
          %v8846 = vpop.permute.xlu0 %8845
          %8847 = vrot.lane.b32.xlu0 %v8756, 64
          %v8848 = vpop.permute.xlu0 %8847
          %8849 = vrot.lane.b32.xlu0 %v8802, 64
          %v8850 = vpop.permute.xlu0 %8849
          %8851 = vrot.lane.b32.xlu0 %v8758, 64
          %v8852 = vpop.permute.xlu0 %8851
          %8853 = vrot.lane.b32.xlu0 %v8803, 64
          %v8854 = vpop.permute.xlu0 %8853
          %8855 = vrot.lane.b32.xlu0 %v8760, 64
          %v8856 = vpop.permute.xlu0 %8855
          %8857 = vrot.lane.b32.xlu0 %v8804, 64
          %v8858 = vpop.permute.xlu0 %8857
          %8859 = vrot.lane.b32.xlu0 %v8762, 64
          %v8860 = vpop.permute.xlu0 %8859
          %8861 = vrot.lane.b32.xlu0 %v8805, 64
          %v8862 = vpop.permute.xlu0 %8861
          %8863 = vrot.lane.b32.xlu0 %v8764, 64
          %v8864 = vpop.permute.xlu0 %8863
          %8865 = vrot.lane.b32.xlu0 %v8806, 64
          %v8866 = vpop.permute.xlu0 %8865
          %v8867 = vsel %vm7376, %v8828, %v8830
          %v8868 = vsel %vm7376, %v8832, %v8834
          %v8869 = vsel %vm7376, %v8836, %v8838
          %v8870 = vsel %vm7376, %v8840, %v8842
          %v8871 = vsel %vm7376, %v8844, %v8846
          %v8872 = vsel %vm7376, %v8848, %v8850
          %v8873 = vsel %vm7376, %v8852, %v8854
          %v8874 = vsel %vm7376, %v8856, %v8858
          %v8875 = vsel %vm7376, %v8860, %v8862
          %v8876 = vsel %vm7376, %v8864, %v8866
          %v8897 = vadd.f32 %v8765, %v8867
          %v8898 = vadd.f32 %v8766, %v8830
          %v8899 = vadd.f32 %v8767, %v8868
          %v8900 = vadd.f32 %v8768, %v8834
          %v8901 = vadd.f32 %v8769, %v8869
          %v8902 = vadd.f32 %v8770, %v8838
          %v8903 = vadd.f32 %v8771, %v8870
          %v8904 = vadd.f32 %v8772, %v8842
          %v8905 = vadd.f32 %v8773, %v8871
          %v8906 = vadd.f32 %v8774, %v8846
          %v8907 = vadd.f32 %v8775, %v7761
          %v8908 = vadd.f32 %v8776, %v7761
          %v8909 = vadd.f32 %v8777, %v7761
          %v8910 = vadd.f32 %v8778, %v7761
          %v8911 = vadd.f32 %v8779, %v7761
          %v8912 = vadd.f32 %v8780, %v7761
          %v8913 = vadd.f32 %v8781, %v8872
          %v8914 = vadd.f32 %v8782, %v8850
          %v8915 = vadd.f32 %v8783, %v8873
          %v8916 = vadd.f32 %v8784, %v8854
          %v8917 = vadd.f32 %v8785, %v8874
          %v8918 = vadd.f32 %v8786, %v8858
          %v8919 = vadd.f32 %v8787, %v8875
          %v8920 = vadd.f32 %v8788, %v8862
          %v8921 = vadd.f32 %v8789, %v8876
          %v8922 = vadd.f32 %v8790, %v8866
          %v8923 = vadd.f32 %v8791, %v7761
          %v8924 = vadd.f32 %v8792, %v7761
          %v8925 = vadd.f32 %v8793, %v7761
          %v8926 = vadd.f32 %v8794, %v7761
          %v8927 = vadd.f32 %v8795, %v7761
          %v8928 = vadd.f32 %v8796, %v7761
          %v8945 = vrot.slane %v8897, 5
          %v8946 = vrot.slane %v8899, 5
          %v8947 = vrot.slane %v8901, 5
          %v8948 = vrot.slane %v8903, 5
          %v8949 = vrot.slane %v8905, 5
          %v8950 = vrot.slane %v8907, 5
          %v8951 = vrot.slane %v8909, 5
          %v8952 = vrot.slane %v8911, 5
          %v8953 = vrot.slane %v8913, 5
          %v8954 = vrot.slane %v8915, 5
          %v8955 = vrot.slane %v8917, 5
          %v8956 = vrot.slane %v8919, 5
          %v8957 = vrot.slane %v8921, 5
          %v8958 = vrot.slane %v8923, 5
          %v8959 = vrot.slane %v8925, 5
          %v8960 = vrot.slane %v8927, 5
          %vm8977 = vcmask 1042432
          %v8978 = vsel %vm8977, 0.0, %v8945
          %v8979 = vsel %vm8977, 0.0, %v8946
          %v8980 = vsel %vm8977, 0.0, %v8947
          %v8981 = vsel %vm8977, 0.0, %v8948
          %v8982 = vsel %vm8977, 0.0, %v8949
          %v8983 = vsel %vm8977, 0.0, %v8950
          %v8984 = vsel %vm8977, 0.0, %v8951
          %v8985 = vsel %vm8977, 0.0, %v8952
          %v8986 = vsel %vm8977, 0.0, %v8953
          %v8987 = vsel %vm8977, 0.0, %v8954
          %v8988 = vsel %vm8977, 0.0, %v8955
          %v8989 = vsel %vm8977, 0.0, %v8956
          %v8990 = vsel %vm8977, 0.0, %v8957
          %v8991 = vsel %vm8977, 0.0, %v8958
          %v8992 = vsel %vm8977, 0.0, %v8959
          %v8993 = vsel %vm8977, 0.0, %v8960
          %8994 = vrot.lane.b32.xlu0 %v8897, 64
          %v8995 = vpop.permute.xlu0 %8994
          %8996 = vrot.lane.b32.xlu0 %v8899, 64
          %v8997 = vpop.permute.xlu0 %8996
          %8998 = vrot.lane.b32.xlu0 %v8901, 64
          %v8999 = vpop.permute.xlu0 %8998
          %9000 = vrot.lane.b32.xlu0 %v8903, 64
          %v9001 = vpop.permute.xlu0 %9000
          %9002 = vrot.lane.b32.xlu0 %v8905, 64
          %v9003 = vpop.permute.xlu0 %9002
          %9004 = vrot.lane.b32.xlu0 %v8907, 64
          %v9005 = vpop.permute.xlu0 %9004
          %9006 = vrot.lane.b32.xlu0 %v8909, 64
          %v9007 = vpop.permute.xlu0 %9006
          %9008 = vrot.lane.b32.xlu0 %v8911, 64
          %v9009 = vpop.permute.xlu0 %9008
          %9010 = vrot.lane.b32.xlu0 %v8913, 64
          %v9011 = vpop.permute.xlu0 %9010
          %9012 = vrot.lane.b32.xlu0 %v8915, 64
          %v9013 = vpop.permute.xlu0 %9012
          %9014 = vrot.lane.b32.xlu0 %v8917, 64
          %v9015 = vpop.permute.xlu0 %9014
          %9016 = vrot.lane.b32.xlu0 %v8919, 64
          %v9017 = vpop.permute.xlu0 %9016
          %9018 = vrot.lane.b32.xlu0 %v8921, 64
          %v9019 = vpop.permute.xlu0 %9018
          %9020 = vrot.lane.b32.xlu0 %v8923, 64
          %v9021 = vpop.permute.xlu0 %9020
          %9022 = vrot.lane.b32.xlu0 %v8925, 64
          %v9023 = vpop.permute.xlu0 %9022
          %9024 = vrot.lane.b32.xlu0 %v8927, 64
          %v9025 = vpop.permute.xlu0 %9024
          %v9042 = vadd.f32 %v8978, %v8995
          %v9043 = vadd.f32 %v8979, %v8997
          %v9044 = vadd.f32 %v8980, %v8999
          %v9045 = vadd.f32 %v8981, %v9001
          %v9046 = vadd.f32 %v8982, %v9003
          %v9047 = vadd.f32 %v8983, %v9005
          %v9048 = vadd.f32 %v8984, %v9007
          %v9049 = vadd.f32 %v8985, %v9009
          %v9050 = vadd.f32 %v8986, %v9011
          %v9051 = vadd.f32 %v8987, %v9013
          %v9052 = vadd.f32 %v8988, %v9015
          %v9053 = vadd.f32 %v8989, %v9017
          %v9054 = vadd.f32 %v8990, %v9019
          %v9055 = vadd.f32 %v8991, %v9021
          %v9056 = vadd.f32 %v8992, %v9023
          %v9057 = vadd.f32 %v8993, %v9025
          %v9074 = vrot.slane %v8898, 3
          %v9075 = vrot.slane %v8900, 3
          %v9076 = vrot.slane %v8902, 3
          %v9077 = vrot.slane %v8904, 3
          %v9078 = vrot.slane %v8906, 3
          %v9079 = vrot.slane %v8908, 3
          %v9080 = vrot.slane %v8910, 3
          %v9081 = vrot.slane %v8912, 3
          %v9082 = vrot.slane %v8914, 3
          %v9083 = vrot.slane %v8916, 3
          %v9084 = vrot.slane %v8918, 3
          %v9085 = vrot.slane %v8920, 3
          %v9086 = vrot.slane %v8922, 3
          %v9087 = vrot.slane %v8924, 3
          %v9088 = vrot.slane %v8926, 3
          %v9089 = vrot.slane %v8928, 3
          %vm9106 = vcmask 1044480
          %v9107 = vsel %vm9106, %v9074, 0.0
          %v9108 = vsel %vm9106, %v9075, 0.0
          %v9109 = vsel %vm9106, %v9076, 0.0
          %v9110 = vsel %vm9106, %v9077, 0.0
          %v9111 = vsel %vm9106, %v9078, 0.0
          %v9112 = vsel %vm9106, %v9079, 0.0
          %v9113 = vsel %vm9106, %v9080, 0.0
          %v9114 = vsel %vm9106, %v9081, 0.0
          %v9115 = vsel %vm9106, %v9082, 0.0
          %v9116 = vsel %vm9106, %v9083, 0.0
          %v9117 = vsel %vm9106, %v9084, 0.0
          %v9118 = vsel %vm9106, %v9085, 0.0
          %v9119 = vsel %vm9106, %v9086, 0.0
          %v9120 = vsel %vm9106, %v9087, 0.0
          %v9121 = vsel %vm9106, %v9088, 0.0
          %v9122 = vsel %vm9106, %v9089, 0.0
          %v9123 = vadd.f32 %v9042, %v9107
          %v9124 = vadd.f32 %v9043, %v9108
          %v9125 = vadd.f32 %v9044, %v9109
          %v9126 = vadd.f32 %v9045, %v9110
          %v9127 = vadd.f32 %v9046, %v9111
          %v9128 = vadd.f32 %v9047, %v9112
          %v9129 = vadd.f32 %v9048, %v9113
          %v9130 = vadd.f32 %v9049, %v9114
          %v9131 = vadd.f32 %v9050, %v9115
          %v9132 = vadd.f32 %v9051, %v9116
          %v9133 = vadd.f32 %v9052, %v9117
          %v9134 = vadd.f32 %v9053, %v9118
          %v9135 = vadd.f32 %v9054, %v9119
          %v9136 = vadd.f32 %v9055, %v9120
          %v9137 = vadd.f32 %v9056, %v9121
          %v9138 = vadd.f32 %v9057, %v9122
          %v9139 = vld [vmem:[%s3 + $0x4] sm:$0x1]
          %v9140 = vperm.slane %v9139, 0
          %v9141 = vadd.f32 %v9123, %v9140
          %v9142 = vadd.f32 %v9124, %v9140
          %v9143 = vadd.f32 %v9125, %v9140
          %v9144 = vadd.f32 %v9126, %v9140
          %v9145 = vadd.f32 %v9127, %v9140
          %v9146 = vadd.f32 %v9128, %v9140
          %v9147 = vadd.f32 %v9129, %v9140
          %v9148 = vadd.f32 %v9130, %v9140
          %v9149 = vadd.f32 %v9131, %v9140
          %v9150 = vadd.f32 %v9132, %v9140
          %v9151 = vadd.f32 %v9133, %v9140
          %v9152 = vadd.f32 %v9134, %v9140
          %v9153 = vadd.f32 %v9135, %v9140
          %v9154 = vadd.f32 %v9136, %v9140
          %v9155 = vadd.f32 %v9137, %v9140
          %v9156 = vadd.f32 %v9138, %v9140
          %v9157 = vmax.f32 %v9141, 0.0
          %v9158 = vmax.f32 %v9142, 0.0
          %v9159 = vmax.f32 %v9143, 0.0
          %v9160 = vmax.f32 %v9144, 0.0
          %v9161 = vmax.f32 %v9145, 0.0
          %v9162 = vmax.f32 %v9146, 0.0
          %v9163 = vmax.f32 %v9147, 0.0
          %v9164 = vmax.f32 %v9148, 0.0
          %v9165 = vmax.f32 %v9149, 0.0
          %v9166 = vmax.f32 %v9150, 0.0
          %v9167 = vmax.f32 %v9151, 0.0
          %v9168 = vmax.f32 %v9152, 0.0
          %v9169 = vmax.f32 %v9153, 0.0
          %v9170 = vmax.f32 %v9154, 0.0
          %v9171 = vmax.f32 %v9155, 0.0
          %v9172 = vmax.f32 %v9156, 0.0
          %9189 = vrot.lane.b32.xlu0 %v7469, 64
          %v9190 = vpop.permute.xlu0 %9189
          %9191 = vrot.lane.b32.xlu0 %v7470, 64
          %v9192 = vpop.permute.xlu0 %9191
          %9193 = vrot.lane.b32.xlu0 %v7471, 64
          %v9194 = vpop.permute.xlu0 %9193
          %9195 = vrot.lane.b32.xlu0 %v7472, 64
          %v9196 = vpop.permute.xlu0 %9195
          %9197 = vrot.lane.b32.xlu0 %v7473, 64
          %v9198 = vpop.permute.xlu0 %9197
          %9199 = vrot.lane.b32.xlu0 %v7474, 64
          %v9200 = vpop.permute.xlu0 %9199
          %9201 = vrot.lane.b32.xlu0 %v7475, 64
          %v9202 = vpop.permute.xlu0 %9201
          %9203 = vrot.lane.b32.xlu0 %v7476, 64
          %v9204 = vpop.permute.xlu0 %9203
          %9205 = vrot.lane.b32.xlu0 %v7477, 64
          %v9206 = vpop.permute.xlu0 %9205
          %9207 = vrot.lane.b32.xlu0 %v7478, 64
          %v9208 = vpop.permute.xlu0 %9207
          %9209 = vrot.lane.b32.xlu0 %v7479, 64
          %v9210 = vpop.permute.xlu0 %9209
          %9211 = vrot.lane.b32.xlu0 %v7480, 64
          %v9212 = vpop.permute.xlu0 %9211
          %9213 = vrot.lane.b32.xlu0 %v7481, 64
          %v9214 = vpop.permute.xlu0 %9213
          %9215 = vrot.lane.b32.xlu0 %v7482, 64
          %v9216 = vpop.permute.xlu0 %9215
          %9217 = vrot.lane.b32.xlu0 %v7483, 64
          %v9218 = vpop.permute.xlu0 %9217
          %9219 = vrot.lane.b32.xlu0 %v7484, 64
          %v9220 = vpop.permute.xlu0 %9219
          %9253 = vrot.lane.b32.xlu0 %v8613, 64
          %v9254 = vpop.permute.xlu0 %9253
          %9255 = vrot.lane.b32.xlu0 %v8614, 64
          %v9256 = vpop.permute.xlu0 %9255
          %9257 = vrot.lane.b32.xlu0 %v8615, 64
          %v9258 = vpop.permute.xlu0 %9257
          %9259 = vrot.lane.b32.xlu0 %v8616, 64
          %v9260 = vpop.permute.xlu0 %9259
          %9261 = vrot.lane.b32.xlu0 %v8617, 64
          %v9262 = vpop.permute.xlu0 %9261
          %9263 = vrot.lane.b32.xlu0 %v8618, 64
          %v9264 = vpop.permute.xlu0 %9263
          %9265 = vrot.lane.b32.xlu0 %v8619, 64
          %v9266 = vpop.permute.xlu0 %9265
          %9267 = vrot.lane.b32.xlu0 %v8620, 64
          %v9268 = vpop.permute.xlu0 %9267
          %9269 = vrot.lane.b32.xlu0 %v8621, 64
          %v9270 = vpop.permute.xlu0 %9269
          %9271 = vrot.lane.b32.xlu0 %v8622, 64
          %v9272 = vpop.permute.xlu0 %9271
          %9273 = vrot.lane.b32.xlu0 %v8623, 64
          %v9274 = vpop.permute.xlu0 %9273
          %9275 = vrot.lane.b32.xlu0 %v8624, 64
          %v9276 = vpop.permute.xlu0 %9275
          %9277 = vrot.lane.b32.xlu0 %v8625, 64
          %v9278 = vpop.permute.xlu0 %9277
          %9279 = vrot.lane.b32.xlu0 %v8626, 64
          %v9280 = vpop.permute.xlu0 %9279
          %9281 = vrot.lane.b32.xlu0 %v8627, 64
          %v9282 = vpop.permute.xlu0 %9281
          %9283 = vrot.lane.b32.xlu0 %v8628, 64
          %v9284 = vpop.permute.xlu0 %9283
          %v9301 = vsel %vm7376, %v7433, %v9190
          %v9302 = vsel %vm7376, %v7433, %v9192
          %v9303 = vsel %vm7376, %v7433, %v9194
          %v9304 = vsel %vm7376, %v7433, %v9196
          %v9305 = vsel %vm7376, %v7433, %v9198
          %v9306 = vsel %vm7376, %v7433, %v9200
          %v9307 = vsel %vm7376, %v7433, %v9202
          %v9308 = vsel %vm7376, %v7433, %v9204
          %v9309 = vsel %vm7376, %v7434, %v9206
          %v9310 = vsel %vm7376, %v7434, %v9208
          %v9311 = vsel %vm7376, %v7434, %v9210
          %v9312 = vsel %vm7376, %v7434, %v9212
          %v9313 = vsel %vm7376, %v7434, %v9214
          %v9314 = vsel %vm7376, %v7434, %v9216
          %v9315 = vsel %vm7376, %v7434, %v9218
          %v9316 = vsel %vm7376, %v7434, %v9220
          %v9317 = vsel %vm7376, %v8093, %v9254
          %v9318 = vsel %vm7376, %v8094, %v9256
          %v9319 = vsel %vm7376, %v8095, %v9258
          %v9320 = vsel %vm7376, %v8096, %v9260
          %v9321 = vsel %vm7376, %v8097, %v9262
          %v9322 = vsel %vm7376, %v8098, %v9264
          %v9323 = vsel %vm7376, %v8099, %v9266
          %v9324 = vsel %vm7376, %v8100, %v9268
          %v9325 = vsel %vm7376, %v8101, %v9270
          %v9326 = vsel %vm7376, %v8102, %v9272
          %v9327 = vsel %vm7376, %v8103, %v9274
          %v9328 = vsel %vm7376, %v8104, %v9276
          %v9329 = vsel %vm7376, %v8105, %v9278
          %v9330 = vsel %vm7376, %v8106, %v9280
          %v9331 = vsel %vm7376, %v8107, %v9282
          %v9332 = vsel %vm7376, %v8108, %v9284
          %v9333 = vsel %vm7376, %v9157, 0.0
          %v9334 = vsel %vm7376, %v9158, 0.0
          %v9335 = vsel %vm7376, %v9159, 0.0
          %v9336 = vsel %vm7376, %v9160, 0.0
          %v9337 = vsel %vm7376, %v9161, 0.0
          %v9338 = vsel %vm7376, %v9162, 0.0
          %v9339 = vsel %vm7376, %v9163, 0.0
          %v9340 = vsel %vm7376, %v9164, 0.0
          %v9341 = vsel %vm7376, %v9165, 0.0
          %v9342 = vsel %vm7376, %v9166, 0.0
          %v9343 = vsel %vm7376, %v9167, 0.0
          %v9344 = vsel %vm7376, %v9168, 0.0
          %v9345 = vsel %vm7376, %v9169, 0.0
          %v9346 = vsel %vm7376, %v9170, 0.0
          %v9347 = vsel %vm7376, %v9171, 0.0
          %v9348 = vsel %vm7376, %v9172, 0.0
          %v9349 = vpack.c.bf16 %v9302, %v9301
          %v9350 = vpack.c.bf16 %v9318, %v9317
          %v9351 = vpack.c.bf16 %v9334, %v9333
          %v9352 = vpack.c.bf16 %v9304, %v9303
          %v9353 = vpack.c.bf16 %v9320, %v9319
          %v9354 = vpack.c.bf16 %v9336, %v9335
          %v9355 = vpack.c.bf16 %v9306, %v9305
          %v9356 = vpack.c.bf16 %v9322, %v9321
          %v9357 = vpack.c.bf16 %v9338, %v9337
          %v9358 = vpack.c.bf16 %v9308, %v9307
          %v9359 = vpack.c.bf16 %v9324, %v9323
          %v9360 = vpack.c.bf16 %v9340, %v9339
          %v9361 = vpack.c.bf16 %v9310, %v9309
          %v9362 = vpack.c.bf16 %v9326, %v9325
          %v9363 = vpack.c.bf16 %v9342, %v9341
          %v9364 = vpack.c.bf16 %v9312, %v9311
          %v9365 = vpack.c.bf16 %v9328, %v9327
          %v9366 = vpack.c.bf16 %v9344, %v9343
          %v9367 = vpack.c.bf16 %v9314, %v9313
          %v9368 = vpack.c.bf16 %v9330, %v9329
          %v9369 = vpack.c.bf16 %v9346, %v9345
          %v9370 = vpack.c.bf16 %v9316, %v9315
          %v9371 = vpack.c.bf16 %v9332, %v9331
          %v9372 = vpack.c.bf16 %v9348, %v9347
          %v9373 = vld [vmem:[%s2] sm:$0xff]
          %v9374 = vld [vmem:[%s2 + $0x8] sm:$0xff]
          %v9375 = vld [vmem:[%s2 + $0x10] sm:$0xf]
          %v9376 = vld [vmem:[%s2 + $0x14] sm:$0xff]
          %v9377 = vld [vmem:[%s2 + $0x1c] sm:$0xff]
          %v9378 = vld [vmem:[%s2 + $0x24] sm:$0xf]
          %v9379 = vld [vmem:[%s2 + $0x28] sm:$0xff]
          %v9380 = vld [vmem:[%s2 + $0x30] sm:$0xff]
          %v9381 = vld [vmem:[%s2 + $0x38] sm:$0xf]
          %v9382 = vld [vmem:[%s2 + $0x3c] sm:$0xff]
          %v9383 = vld [vmem:[%s2 + $0x44] sm:$0xff]
          %v9384 = vld [vmem:[%s2 + $0x4c] sm:$0xf]
          %v9385 = vld [vmem:[%s2 + $0x50] sm:$0xff]
          %v9386 = vld [vmem:[%s2 + $0x58] sm:$0xff]
          %v9387 = vld [vmem:[%s2 + $0x60] sm:$0xf]
          %v9388 = vld [vmem:[%s2 + $0x64] sm:$0xff]
          %v9389 = vld [vmem:[%s2 + $0x6c] sm:$0xff]
          %v9390 = vld [vmem:[%s2 + $0x74] sm:$0xf]
          %v9391 = vld [vmem:[%s2 + $0x78] sm:$0xff]
          %v9392 = vld [vmem:[%s2 + $0x80] sm:$0xff]
          %v9393 = vld [vmem:[%s2 + $0x88] sm:$0xf]
          %v9394 = vld [vmem:[%s2 + $0x8c] sm:$0xff]
          %v9395 = vld [vmem:[%s2 + $0x94] sm:$0xff]
          %v9396 = vld [vmem:[%s2 + $0x9c] sm:$0xf]
          %v9397 = vld [vmem:[%s2 + $0xa0] sm:$0xff]
          %v9398 = vld [vmem:[%s2 + $0xa8] sm:$0xff]
          %v9399 = vld [vmem:[%s2 + $0xb0] sm:$0xf]
          %v9400 = vld [vmem:[%s2 + $0xb4] sm:$0xff]
          %v9401 = vld [vmem:[%s2 + $0xbc] sm:$0xff]
          %v9402 = vld [vmem:[%s2 + $0xc4] sm:$0xf]
          %v9403 = vld [vmem:[%s2 + $0xc8] sm:$0xff]
          %v9404 = vld [vmem:[%s2 + $0xd0] sm:$0xff]
          %v9405 = vld [vmem:[%s2 + $0xd8] sm:$0xf]
          %v9406 = vld [vmem:[%s2 + $0xdc] sm:$0xff]
          %v9407 = vld [vmem:[%s2 + $0xe4] sm:$0xff]
          %v9408 = vld [vmem:[%s2 + $0xec] sm:$0xf]
          %v9409 = vld [vmem:[%s2 + $0xf0] sm:$0xff]
          %v9410 = vld [vmem:[%s2 + $0xf8] sm:$0xff]
          %v9411 = vld [vmem:[%s2 + $0x100] sm:$0xf]
          %v9412 = vld [vmem:[%s2 + $0x104] sm:$0xff]
          %v9413 = vld [vmem:[%s2 + $0x10c] sm:$0xff]
          %v9414 = vld [vmem:[%s2 + $0x114] sm:$0xf]
          %v9415 = vld [vmem:[%s2 + $0x118] sm:$0xff]
          %v9416 = vld [vmem:[%s2 + $0x120] sm:$0xff]
          %v9417 = vld [vmem:[%s2 + $0x128] sm:$0xf]
          %v9418 = vld [vmem:[%s2 + $0x12c] sm:$0xff]
          %v9419 = vld [vmem:[%s2 + $0x134] sm:$0xff]
          %v9420 = vld [vmem:[%s2 + $0x13c] sm:$0xf]
          %v9421 = vld [vmem:[%s2 + $0x140] sm:$0xff]
          %v9422 = vld [vmem:[%s2 + $0x148] sm:$0xff]
          %v9423 = vld [vmem:[%s2 + $0x150] sm:$0xf]
          %v9424 = vld [vmem:[%s2 + $0x154] sm:$0xff]
          %v9425 = vld [vmem:[%s2 + $0x15c] sm:$0xff]
          %v9426 = vld [vmem:[%s2 + $0x164] sm:$0xf]
          %v9427 = vld [vmem:[%s2 + $0x168] sm:$0xff]
          %v9428 = vld [vmem:[%s2 + $0x170] sm:$0xff]
          %v9429 = vld [vmem:[%s2 + $0x178] sm:$0xf]
          %v9430 = vld [vmem:[%s2 + $0x17c] sm:$0xff]
          %v9431 = vld [vmem:[%s2 + $0x184] sm:$0xff]
          %v9432 = vld [vmem:[%s2 + $0x18c] sm:$0xf]
          %v9433 = vld [vmem:[%s2 + $0x190] sm:$0xff]
          %v9434 = vld [vmem:[%s2 + $0x198] sm:$0xff]
          %v9435 = vld [vmem:[%s2 + $0x1a0] sm:$0xf]
          %v9436 = vld [vmem:[%s2 + $0x1a4] sm:$0xff]
          %v9437 = vld [vmem:[%s2 + $0x1ac] sm:$0xff]
          %v9438 = vld [vmem:[%s2 + $0x1b4] sm:$0xf]
          %v9439 = vld [vmem:[%s2 + $0x1b8] sm:$0xff]
          %v9440 = vld [vmem:[%s2 + $0x1c0] sm:$0xff]
          %v9441 = vld [vmem:[%s2 + $0x1c8] sm:$0xf]
          %v9442 = vld [vmem:[%s2 + $0x1cc] sm:$0xff]
          %v9443 = vld [vmem:[%s2 + $0x1d4] sm:$0xff]
          %v9444 = vld [vmem:[%s2 + $0x1dc] sm:$0xf]
          %v9445 = vld [vmem:[%s2 + $0x1e0] sm:$0xff]
          %v9446 = vld [vmem:[%s2 + $0x1e8] sm:$0xff]
          %v9447 = vld [vmem:[%s2 + $0x1f0] sm:$0xf]
          %v9448 = vld [vmem:[%s2 + $0x1f4] sm:$0xff]
          %v9449 = vld [vmem:[%s2 + $0x1fc] sm:$0xff]
          %v9450 = vld [vmem:[%s2 + $0x204] sm:$0xf]
          %v9451 = vld [vmem:[%s2 + $0x208] sm:$0xff]
          %v9452 = vld [vmem:[%s2 + $0x210] sm:$0xff]
          %v9453 = vld [vmem:[%s2 + $0x218] sm:$0xf]
          %v9454 = vld [vmem:[%s2 + $0x21c] sm:$0xff]
          %v9455 = vld [vmem:[%s2 + $0x224] sm:$0xff]
          %v9456 = vld [vmem:[%s2 + $0x22c] sm:$0xf]
          %v9457 = vld [vmem:[%s2 + $0x230] sm:$0xff]
          %v9458 = vld [vmem:[%s2 + $0x238] sm:$0xff]
          %v9459 = vld [vmem:[%s2 + $0x240] sm:$0xf]
          %v9460 = vld [vmem:[%s2 + $0x244] sm:$0xff]
          %v9461 = vld [vmem:[%s2 + $0x24c] sm:$0xff]
          %v9462 = vld [vmem:[%s2 + $0x254] sm:$0xf]
          %v9463 = vld [vmem:[%s2 + $0x258] sm:$0xff]
          %v9464 = vld [vmem:[%s2 + $0x260] sm:$0xff]
          %v9465 = vld [vmem:[%s2 + $0x268] sm:$0xf]
          %v9466 = vld [vmem:[%s2 + $0x26c] sm:$0xff]
          %v9467 = vld [vmem:[%s2 + $0x274] sm:$0xff]
          %v9468 = vld [vmem:[%s2 + $0x27c] sm:$0xf]
          %v9469 = vld [vmem:[%s2 + $0x280] sm:$0xff]
          %v9470 = vld [vmem:[%s2 + $0x288] sm:$0xff]
          %v9471 = vld [vmem:[%s2 + $0x290] sm:$0xf]
          %v9472 = vld [vmem:[%s2 + $0x294] sm:$0xff]
          %v9473 = vld [vmem:[%s2 + $0x29c] sm:$0xff]
          %v9474 = vld [vmem:[%s2 + $0x2a4] sm:$0xf]
          %v9475 = vld [vmem:[%s2 + $0x2a8] sm:$0xff]
          %v9476 = vld [vmem:[%s2 + $0x2b0] sm:$0xff]
          %v9477 = vld [vmem:[%s2 + $0x2b8] sm:$0xf]
          %v9478 = vld [vmem:[%s2 + $0x2bc] sm:$0xff]
          %v9479 = vld [vmem:[%s2 + $0x2c4] sm:$0xff]
          %v9480 = vld [vmem:[%s2 + $0x2cc] sm:$0xf]
          %v9481 = vld [vmem:[%s2 + $0x2d0] sm:$0xff]
          %v9482 = vld [vmem:[%s2 + $0x2d8] sm:$0xff]
          %v9483 = vld [vmem:[%s2 + $0x2e0] sm:$0xf]
          %v9484 = vld [vmem:[%s2 + $0x2e4] sm:$0xff]
          %v9485 = vld [vmem:[%s2 + $0x2ec] sm:$0xff]
          %v9486 = vld [vmem:[%s2 + $0x2f4] sm:$0xf]
          %v9487 = vld [vmem:[%s2 + $0x2f8] sm:$0xff]
          %v9488 = vld [vmem:[%s2 + $0x300] sm:$0xff]
          %v9489 = vld [vmem:[%s2 + $0x308] sm:$0xf]
          %v9490 = vld [vmem:[%s2 + $0x30c] sm:$0xff]
          %v9491 = vld [vmem:[%s2 + $0x314] sm:$0xff]
          %v9492 = vld [vmem:[%s2 + $0x31c] sm:$0xf]
          %v9493 = vld [vmem:[%s2 + $0x320] sm:$0xff]
          %v9494 = vld [vmem:[%s2 + $0x328] sm:$0xff]
          %v9495 = vld [vmem:[%s2 + $0x330] sm:$0xf]
          %v9496 = vld [vmem:[%s2 + $0x334] sm:$0xff]
          %v9497 = vld [vmem:[%s2 + $0x33c] sm:$0xff]
          %v9498 = vld [vmem:[%s2 + $0x344] sm:$0xf]
          %v9499 = vld [vmem:[%s2 + $0x348] sm:$0xff]
          %v9500 = vld [vmem:[%s2 + $0x350] sm:$0xff]
          %v9501 = vld [vmem:[%s2 + $0x358] sm:$0xf]
          %v9502 = vld [vmem:[%s2 + $0x35c] sm:$0xff]
          %v9503 = vld [vmem:[%s2 + $0x364] sm:$0xff]
          %v9504 = vld [vmem:[%s2 + $0x36c] sm:$0xf]
          %v9505 = vld [vmem:[%s2 + $0x370] sm:$0xff]
          %v9506 = vld [vmem:[%s2 + $0x378] sm:$0xff]
          %v9507 = vld [vmem:[%s2 + $0x380] sm:$0xf]
          %v9508 = vld [vmem:[%s2 + $0x384] sm:$0xff]
          %v9509 = vld [vmem:[%s2 + $0x38c] sm:$0xff]
          %v9510 = vld [vmem:[%s2 + $0x394] sm:$0xf]
          %v9511 = vld [vmem:[%s2 + $0x398] sm:$0xff]
          %v9512 = vld [vmem:[%s2 + $0x3a0] sm:$0xff]
          %v9513 = vld [vmem:[%s2 + $0x3a8] sm:$0xf]
          %v9514 = vld [vmem:[%s2 + $0x3ac] sm:$0xff]
          %v9515 = vld [vmem:[%s2 + $0x3b4] sm:$0xff]
          %v9516 = vld [vmem:[%s2 + $0x3bc] sm:$0xf]
          %v9661 = vunpack.c.l.b16 %v9373
          %v9662 = vunpack.c.h.b16 %v9373
          %v9663 = vunpack.c.l.b16 %v9374
          %v9664 = vunpack.c.h.b16 %v9374
          %v9665 = vunpack.c.l.b16 %v9375
          %v9666 = vunpack.c.l.b16 %v9376
          %v9667 = vunpack.c.h.b16 %v9376
          %v9668 = vunpack.c.l.b16 %v9377
          %v9669 = vunpack.c.h.b16 %v9377
          %v9670 = vunpack.c.l.b16 %v9378
          %v9671 = vunpack.c.l.b16 %v9379
          %v9672 = vunpack.c.h.b16 %v9379
          %v9673 = vunpack.c.l.b16 %v9380
          %v9674 = vunpack.c.h.b16 %v9380
          %v9675 = vunpack.c.l.b16 %v9381
          %v9676 = vunpack.c.l.b16 %v9382
          %v9677 = vunpack.c.h.b16 %v9382
          %v9678 = vunpack.c.l.b16 %v9383
          %v9679 = vunpack.c.h.b16 %v9383
          %v9680 = vunpack.c.l.b16 %v9384
          %v9681 = vunpack.c.l.b16 %v9385
          %v9682 = vunpack.c.h.b16 %v9385
          %v9683 = vunpack.c.l.b16 %v9386
          %v9684 = vunpack.c.h.b16 %v9386
          %v9685 = vunpack.c.l.b16 %v9387
          %v9686 = vunpack.c.l.b16 %v9388
          %v9687 = vunpack.c.h.b16 %v9388
          %v9688 = vunpack.c.l.b16 %v9389
          %v9689 = vunpack.c.h.b16 %v9389
          %v9690 = vunpack.c.l.b16 %v9390
          %v9691 = vunpack.c.l.b16 %v9391
          %v9692 = vunpack.c.h.b16 %v9391
          %v9693 = vunpack.c.l.b16 %v9392
          %v9694 = vunpack.c.h.b16 %v9392
          %v9695 = vunpack.c.l.b16 %v9393
          %v9696 = vunpack.c.l.b16 %v9394
          %v9697 = vunpack.c.h.b16 %v9394
          %v9698 = vunpack.c.l.b16 %v9395
          %v9699 = vunpack.c.h.b16 %v9395
          %v9700 = vunpack.c.l.b16 %v9396
          %v9701 = vunpack.c.l.b16 %v9397
          %v9702 = vunpack.c.h.b16 %v9397
          %v9703 = vunpack.c.l.b16 %v9398
          %v9704 = vunpack.c.h.b16 %v9398
          %v9705 = vunpack.c.l.b16 %v9399
          %v9706 = vunpack.c.l.b16 %v9400
          %v9707 = vunpack.c.h.b16 %v9400
          %v9708 = vunpack.c.l.b16 %v9401
          %v9709 = vunpack.c.h.b16 %v9401
          %v9710 = vunpack.c.l.b16 %v9402
          %v9711 = vunpack.c.l.b16 %v9403
          %v9712 = vunpack.c.h.b16 %v9403
          %v9713 = vunpack.c.l.b16 %v9404
          %v9714 = vunpack.c.h.b16 %v9404
          %v9715 = vunpack.c.l.b16 %v9405
          %v9716 = vunpack.c.l.b16 %v9406
          %v9717 = vunpack.c.h.b16 %v9406
          %v9718 = vunpack.c.l.b16 %v9407
          %v9719 = vunpack.c.h.b16 %v9407
          %v9720 = vunpack.c.l.b16 %v9408
          %v9721 = vunpack.c.l.b16 %v9409
          %v9722 = vunpack.c.h.b16 %v9409
          %v9723 = vunpack.c.l.b16 %v9410
          %v9724 = vunpack.c.h.b16 %v9410
          %v9725 = vunpack.c.l.b16 %v9411
          %v9726 = vunpack.c.l.b16 %v9412
          %v9727 = vunpack.c.h.b16 %v9412
          %v9728 = vunpack.c.l.b16 %v9413
          %v9729 = vunpack.c.h.b16 %v9413
          %v9730 = vunpack.c.l.b16 %v9414
          %v9731 = vunpack.c.l.b16 %v9415
          %v9732 = vunpack.c.h.b16 %v9415
          %v9733 = vunpack.c.l.b16 %v9416
          %v9734 = vunpack.c.h.b16 %v9416
          %v9735 = vunpack.c.l.b16 %v9417
          %v9736 = vunpack.c.l.b16 %v9418
          %v9737 = vunpack.c.h.b16 %v9418
          %v9738 = vunpack.c.l.b16 %v9419
          %v9739 = vunpack.c.h.b16 %v9419
          %v9740 = vunpack.c.l.b16 %v9420
          %v9741 = vunpack.c.l.b16 %v9421
          %v9742 = vunpack.c.h.b16 %v9421
          %v9743 = vunpack.c.l.b16 %v9422
          %v9744 = vunpack.c.h.b16 %v9422
          %v9745 = vunpack.c.l.b16 %v9423
          %v9746 = vunpack.c.l.b16 %v9424
          %v9747 = vunpack.c.h.b16 %v9424
          %v9748 = vunpack.c.l.b16 %v9425
          %v9749 = vunpack.c.h.b16 %v9425
          %v9750 = vunpack.c.l.b16 %v9426
          %v9751 = vunpack.c.l.b16 %v9427
          %v9752 = vunpack.c.h.b16 %v9427
          %v9753 = vunpack.c.l.b16 %v9428
          %v9754 = vunpack.c.h.b16 %v9428
          %v9755 = vunpack.c.l.b16 %v9429
          %v9756 = vunpack.c.l.b16 %v9430
          %v9757 = vunpack.c.h.b16 %v9430
          %v9758 = vunpack.c.l.b16 %v9431
          %v9759 = vunpack.c.h.b16 %v9431
          %v9760 = vunpack.c.l.b16 %v9432
          %v9761 = vunpack.c.l.b16 %v9433
          %v9762 = vunpack.c.h.b16 %v9433
          %v9763 = vunpack.c.l.b16 %v9434
          %v9764 = vunpack.c.h.b16 %v9434
          %v9765 = vunpack.c.l.b16 %v9435
          %v9766 = vunpack.c.l.b16 %v9436
          %v9767 = vunpack.c.h.b16 %v9436
          %v9768 = vunpack.c.l.b16 %v9437
          %v9769 = vunpack.c.h.b16 %v9437
          %v9770 = vunpack.c.l.b16 %v9438
          %v9771 = vunpack.c.l.b16 %v9439
          %v9772 = vunpack.c.h.b16 %v9439
          %v9773 = vunpack.c.l.b16 %v9440
          %v9774 = vunpack.c.h.b16 %v9440
          %v9775 = vunpack.c.l.b16 %v9441
          %v9776 = vunpack.c.l.b16 %v9442
          %v9777 = vunpack.c.h.b16 %v9442
          %v9778 = vunpack.c.l.b16 %v9443
          %v9779 = vunpack.c.h.b16 %v9443
          %v9780 = vunpack.c.l.b16 %v9444
          %v9781 = vunpack.c.l.b16 %v9445
          %v9782 = vunpack.c.h.b16 %v9445
          %v9783 = vunpack.c.l.b16 %v9446
          %v9784 = vunpack.c.h.b16 %v9446
          %v9785 = vunpack.c.l.b16 %v9447
          %v9786 = vunpack.c.l.b16 %v9448
          %v9787 = vunpack.c.h.b16 %v9448
          %v9788 = vunpack.c.l.b16 %v9449
          %v9789 = vunpack.c.h.b16 %v9449
          %v9790 = vunpack.c.l.b16 %v9450
          %v9791 = vunpack.c.l.b16 %v9451
          %v9792 = vunpack.c.h.b16 %v9451
          %v9793 = vunpack.c.l.b16 %v9452
          %v9794 = vunpack.c.h.b16 %v9452
          %v9795 = vunpack.c.l.b16 %v9453
          %v9796 = vunpack.c.l.b16 %v9454
          %v9797 = vunpack.c.h.b16 %v9454
          %v9798 = vunpack.c.l.b16 %v9455
          %v9799 = vunpack.c.h.b16 %v9455
          %v9800 = vunpack.c.l.b16 %v9456
          %v9801 = vunpack.c.l.b16 %v9457
          %v9802 = vunpack.c.h.b16 %v9457
          %v9803 = vunpack.c.l.b16 %v9458
          %v9804 = vunpack.c.h.b16 %v9458
          %v9805 = vunpack.c.l.b16 %v9459
          %v9806 = vunpack.c.l.b16 %v9460
          %v9807 = vunpack.c.h.b16 %v9460
          %v9808 = vunpack.c.l.b16 %v9461
          %v9809 = vunpack.c.h.b16 %v9461
          %v9810 = vunpack.c.l.b16 %v9462
          %v9811 = vunpack.c.l.b16 %v9463
          %v9812 = vunpack.c.h.b16 %v9463
          %v9813 = vunpack.c.l.b16 %v9464
          %v9814 = vunpack.c.h.b16 %v9464
          %v9815 = vunpack.c.l.b16 %v9465
          %v9816 = vunpack.c.l.b16 %v9466
          %v9817 = vunpack.c.h.b16 %v9466
          %v9818 = vunpack.c.l.b16 %v9467
          %v9819 = vunpack.c.h.b16 %v9467
          %v9820 = vunpack.c.l.b16 %v9468
          %v9821 = vunpack.c.l.b16 %v9469
          %v9822 = vunpack.c.h.b16 %v9469
          %v9823 = vunpack.c.l.b16 %v9470
          %v9824 = vunpack.c.h.b16 %v9470
          %v9825 = vunpack.c.l.b16 %v9471
          %v9826 = vunpack.c.l.b16 %v9472
          %v9827 = vunpack.c.h.b16 %v9472
          %v9828 = vunpack.c.l.b16 %v9473
          %v9829 = vunpack.c.h.b16 %v9473
          %v9830 = vunpack.c.l.b16 %v9474
          %v9831 = vunpack.c.l.b16 %v9475
          %v9832 = vunpack.c.h.b16 %v9475
          %v9833 = vunpack.c.l.b16 %v9476
          %v9834 = vunpack.c.h.b16 %v9476
          %v9835 = vunpack.c.l.b16 %v9477
          %v9836 = vunpack.c.l.b16 %v9478
          %v9837 = vunpack.c.h.b16 %v9478
          %v9838 = vunpack.c.l.b16 %v9479
          %v9839 = vunpack.c.h.b16 %v9479
          %v9840 = vunpack.c.l.b16 %v9480
          %v9841 = vunpack.c.l.b16 %v9481
          %v9842 = vunpack.c.h.b16 %v9481
          %v9843 = vunpack.c.l.b16 %v9482
          %v9844 = vunpack.c.h.b16 %v9482
          %v9845 = vunpack.c.l.b16 %v9483
          %v9846 = vunpack.c.l.b16 %v9484
          %v9847 = vunpack.c.h.b16 %v9484
          %v9848 = vunpack.c.l.b16 %v9485
          %v9849 = vunpack.c.h.b16 %v9485
          %v9850 = vunpack.c.l.b16 %v9486
          %v9851 = vunpack.c.l.b16 %v9487
          %v9852 = vunpack.c.h.b16 %v9487
          %v9853 = vunpack.c.l.b16 %v9488
          %v9854 = vunpack.c.h.b16 %v9488
          %v9855 = vunpack.c.l.b16 %v9489
          %v9856 = vunpack.c.l.b16 %v9490
          %v9857 = vunpack.c.h.b16 %v9490
          %v9858 = vunpack.c.l.b16 %v9491
          %v9859 = vunpack.c.h.b16 %v9491
          %v9860 = vunpack.c.l.b16 %v9492
          %v9861 = vunpack.c.l.b16 %v9493
          %v9862 = vunpack.c.h.b16 %v9493
          %v9863 = vunpack.c.l.b16 %v9494
          %v9864 = vunpack.c.h.b16 %v9494
          %v9865 = vunpack.c.l.b16 %v9495
          %v9866 = vunpack.c.l.b16 %v9496
          %v9867 = vunpack.c.h.b16 %v9496
          %v9868 = vunpack.c.l.b16 %v9497
          %v9869 = vunpack.c.h.b16 %v9497
          %v9870 = vunpack.c.l.b16 %v9498
          %v9871 = vunpack.c.l.b16 %v9499
          %v9872 = vunpack.c.h.b16 %v9499
          %v9873 = vunpack.c.l.b16 %v9500
          %v9874 = vunpack.c.h.b16 %v9500
          %v9875 = vunpack.c.l.b16 %v9501
          %v9876 = vunpack.c.l.b16 %v9502
          %v9877 = vunpack.c.h.b16 %v9502
          %v9878 = vunpack.c.l.b16 %v9503
          %v9879 = vunpack.c.h.b16 %v9503
          %v9880 = vunpack.c.l.b16 %v9504
          %v9881 = vunpack.c.l.b16 %v9505
          %v9882 = vunpack.c.h.b16 %v9505
          %v9883 = vunpack.c.l.b16 %v9506
          %v9884 = vunpack.c.h.b16 %v9506
          %v9885 = vunpack.c.l.b16 %v9507
          %v9886 = vunpack.c.l.b16 %v9508
          %v9887 = vunpack.c.h.b16 %v9508
          %v9888 = vunpack.c.l.b16 %v9509
          %v9889 = vunpack.c.h.b16 %v9509
          %v9890 = vunpack.c.l.b16 %v9510
          %v9891 = vunpack.c.l.b16 %v9511
          %v9892 = vunpack.c.h.b16 %v9511
          %v9893 = vunpack.c.l.b16 %v9512
          %v9894 = vunpack.c.h.b16 %v9512
          %v9895 = vunpack.c.l.b16 %v9513
          %v9896 = vunpack.c.l.b16 %v9514
          %v9897 = vunpack.c.h.b16 %v9514
          %v9898 = vunpack.c.l.b16 %v9515
          %v9899 = vunpack.c.h.b16 %v9515
          %v9900 = vunpack.c.l.b16 %v9516
          %v9901 = vpack.c.b16 %v9666, %v9661
          %v9902 = vpack.c.b16 %v9667, %v9662
          %v9903 = vpack.c.b16 %v9668, %v9663
          %v9904 = vpack.c.b16 %v9669, %v9664
          %v9905 = vpack.c.b16 %v9670, %v9665
          %v9906 = vpack.c.b16 %v9676, %v9671
          %v9907 = vpack.c.b16 %v9677, %v9672
          %v9908 = vpack.c.b16 %v9678, %v9673
          %v9909 = vpack.c.b16 %v9679, %v9674
          %v9910 = vpack.c.b16 %v9680, %v9675
          %v9911 = vpack.c.b16 %v9686, %v9681
          %v9912 = vpack.c.b16 %v9687, %v9682
          %v9913 = vpack.c.b16 %v9688, %v9683
          %v9914 = vpack.c.b16 %v9689, %v9684
          %v9915 = vpack.c.b16 %v9690, %v9685
          %v9916 = vpack.c.b16 %v9696, %v9691
          %v9917 = vpack.c.b16 %v9697, %v9692
          %v9918 = vpack.c.b16 %v9698, %v9693
          %v9919 = vpack.c.b16 %v9699, %v9694
          %v9920 = vpack.c.b16 %v9700, %v9695
          %v9921 = vpack.c.b16 %v9706, %v9701
          %v9922 = vpack.c.b16 %v9707, %v9702
          %v9923 = vpack.c.b16 %v9708, %v9703
          %v9924 = vpack.c.b16 %v9709, %v9704
          %v9925 = vpack.c.b16 %v9710, %v9705
          %v9926 = vpack.c.b16 %v9716, %v9711
          %v9927 = vpack.c.b16 %v9717, %v9712
          %v9928 = vpack.c.b16 %v9718, %v9713
          %v9929 = vpack.c.b16 %v9719, %v9714
          %v9930 = vpack.c.b16 %v9720, %v9715
          %v9931 = vpack.c.b16 %v9726, %v9721
          %v9932 = vpack.c.b16 %v9727, %v9722
          %v9933 = vpack.c.b16 %v9728, %v9723
          %v9934 = vpack.c.b16 %v9729, %v9724
          %v9935 = vpack.c.b16 %v9730, %v9725
          %v9936 = vpack.c.b16 %v9736, %v9731
          %v9937 = vpack.c.b16 %v9737, %v9732
          %v9938 = vpack.c.b16 %v9738, %v9733
          %v9939 = vpack.c.b16 %v9739, %v9734
          %v9940 = vpack.c.b16 %v9740, %v9735
          %v9941 = vpack.c.b16 %v9746, %v9741
          %v9942 = vpack.c.b16 %v9747, %v9742
          %v9943 = vpack.c.b16 %v9748, %v9743
          %v9944 = vpack.c.b16 %v9749, %v9744
          %v9945 = vpack.c.b16 %v9750, %v9745
          %v9946 = vpack.c.b16 %v9756, %v9751
          %v9947 = vpack.c.b16 %v9757, %v9752
          %v9948 = vpack.c.b16 %v9758, %v9753
          %v9949 = vpack.c.b16 %v9759, %v9754
          %v9950 = vpack.c.b16 %v9760, %v9755
          %v9951 = vpack.c.b16 %v9766, %v9761
          %v9952 = vpack.c.b16 %v9767, %v9762
          %v9953 = vpack.c.b16 %v9768, %v9763
          %v9954 = vpack.c.b16 %v9769, %v9764
          %v9955 = vpack.c.b16 %v9770, %v9765
          %v9956 = vpack.c.b16 %v9776, %v9771
          %v9957 = vpack.c.b16 %v9777, %v9772
          %v9958 = vpack.c.b16 %v9778, %v9773
          %v9959 = vpack.c.b16 %v9779, %v9774
          %v9960 = vpack.c.b16 %v9780, %v9775
          %v9961 = vpack.c.b16 %v9786, %v9781
          %v9962 = vpack.c.b16 %v9787, %v9782
          %v9963 = vpack.c.b16 %v9788, %v9783
          %v9964 = vpack.c.b16 %v9789, %v9784
          %v9965 = vpack.c.b16 %v9790, %v9785
          %v9966 = vpack.c.b16 %v9796, %v9791
          %v9967 = vpack.c.b16 %v9797, %v9792
          %v9968 = vpack.c.b16 %v9798, %v9793
          %v9969 = vpack.c.b16 %v9799, %v9794
          %v9970 = vpack.c.b16 %v9800, %v9795
          %v9971 = vpack.c.b16 %v9806, %v9801
          %v9972 = vpack.c.b16 %v9807, %v9802
          %v9973 = vpack.c.b16 %v9808, %v9803
          %v9974 = vpack.c.b16 %v9809, %v9804
          %v9975 = vpack.c.b16 %v9810, %v9805
          %v9976 = vpack.c.b16 %v9816, %v9811
          %v9977 = vpack.c.b16 %v9817, %v9812
          %v9978 = vpack.c.b16 %v9818, %v9813
          %v9979 = vpack.c.b16 %v9819, %v9814
          %v9980 = vpack.c.b16 %v9820, %v9815
          %v9981 = vpack.c.b16 %v9826, %v9821
          %v9982 = vpack.c.b16 %v9827, %v9822
          %v9983 = vpack.c.b16 %v9828, %v9823
          %v9984 = vpack.c.b16 %v9829, %v9824
          %v9985 = vpack.c.b16 %v9830, %v9825
          %v9986 = vpack.c.b16 %v9836, %v9831
          %v9987 = vpack.c.b16 %v9837, %v9832
          %v9988 = vpack.c.b16 %v9838, %v9833
          %v9989 = vpack.c.b16 %v9839, %v9834
          %v9990 = vpack.c.b16 %v9840, %v9835
          %v9991 = vpack.c.b16 %v9846, %v9841
          %v9992 = vpack.c.b16 %v9847, %v9842
          %v9993 = vpack.c.b16 %v9848, %v9843
          %v9994 = vpack.c.b16 %v9849, %v9844
          %v9995 = vpack.c.b16 %v9850, %v9845
          %v9996 = vpack.c.b16 %v9856, %v9851
          %v9997 = vpack.c.b16 %v9857, %v9852
          %v9998 = vpack.c.b16 %v9858, %v9853
          %v9999 = vpack.c.b16 %v9859, %v9854
          %v10000 = vpack.c.b16 %v9860, %v9855
          %v10001 = vpack.c.b16 %v9866, %v9861
          %v10002 = vpack.c.b16 %v9867, %v9862
          %v10003 = vpack.c.b16 %v9868, %v9863
          %v10004 = vpack.c.b16 %v9869, %v9864
          %v10005 = vpack.c.b16 %v9870, %v9865
          %v10006 = vpack.c.b16 %v9876, %v9871
          %v10007 = vpack.c.b16 %v9877, %v9872
          %v10008 = vpack.c.b16 %v9878, %v9873
          %v10009 = vpack.c.b16 %v9879, %v9874
          %v10010 = vpack.c.b16 %v9880, %v9875
          %v10011 = vpack.c.b16 %v9886, %v9881
          %v10012 = vpack.c.b16 %v9887, %v9882
          %v10013 = vpack.c.b16 %v9888, %v9883
          %v10014 = vpack.c.b16 %v9889, %v9884
          %v10015 = vpack.c.b16 %v9890, %v9885
          %v10016 = vpack.c.b16 %v9896, %v9891
          %v10017 = vpack.c.b16 %v9897, %v9892
          %v10018 = vpack.c.b16 %v9898, %v9893
          %v10019 = vpack.c.b16 %v9899, %v9894
          %v10020 = vpack.c.b16 %v9900, %v9895
          %10141 = vmatpush.bf16.msra.mxu0 %v9936
          %10142 = vmatpush.bf16.msra.mxu0 %v9931
          %10143 = vmatpush.bf16.msra.mxu0 %v9926
          %10144 = vmatpush.bf16.msra.mxu0 %v9921
          %10145 = vmatpush.bf16.msra.mxu0 %v9916
          %10146 = vmatpush.bf16.msra.mxu0 %v9911
          %10147 = vmatpush.bf16.msra.mxu0 %v9906
          %10148 = vmatpush.bf16.msra.mxu0 %v9901
          %10149 = vmatmul.bf16.gmra.mxu0 %v9349
          %v10150 = vpop.f32.mrf.mxu0
          %v10151 = vadd.f32 0.0, %v10150
          %v10152 = vpop.f32.mrf.mxu0
          %v10153 = vadd.f32 0.0, %v10152
          %10154 = vmatmul.bf16.gmra.mxu0 %v9352
          %v10155 = vpop.f32.mrf.mxu0
          %v10156 = vadd.f32 0.0, %v10155
          %v10157 = vpop.f32.mrf.mxu0
          %v10158 = vadd.f32 0.0, %v10157
          %10159 = vmatmul.bf16.gmra.mxu0 %v9355
          %v10160 = vpop.f32.mrf.mxu0
          %v10161 = vadd.f32 0.0, %v10160
          %v10162 = vpop.f32.mrf.mxu0
          %v10163 = vadd.f32 0.0, %v10162
          %10164 = vmatmul.bf16.gmra.mxu0 %v9358
          %v10165 = vpop.f32.mrf.mxu0
          %v10166 = vadd.f32 0.0, %v10165
          %v10167 = vpop.f32.mrf.mxu0
          %10168 = vmatmul.bf16.gmra.mxu0 %v9361
          %v10169 = vpop.f32.mrf.mxu0
          %v10170 = vadd.f32 0.0, %v10169
          %v10171 = vpop.f32.mrf.mxu0
          %v10172 = vadd.f32 0.0, %v10171
          %10173 = vmatmul.bf16.gmra.mxu0 %v9364
          %v10174 = vpop.f32.mrf.mxu0
          %v10175 = vadd.f32 0.0, %v10174
          %v10176 = vpop.f32.mrf.mxu0
          %v10177 = vadd.f32 0.0, %v10176
          %10178 = vmatmul.bf16.gmra.mxu0 %v9367
          %v10179 = vpop.f32.mrf.mxu0
          %v10180 = vadd.f32 0.0, %v10179
          %v10181 = vpop.f32.mrf.mxu0
          %v10182 = vadd.f32 0.0, %v10181
          %10183 = vmatmul.bf16.gmra.mxu0 %v9370
          %v10184 = vpop.f32.mrf.mxu0
          %v10185 = vadd.f32 0.0, %v10184
          %v10186 = vpop.f32.mrf.mxu0
          %10187 = vdwg.mxu0
          %10188 = vmatpush.bf16.msra.mxu0 %v9976
          %10189 = vmatpush.bf16.msra.mxu0 %v9971
          %10190 = vmatpush.bf16.msra.mxu0 %v9966
          %10191 = vmatpush.bf16.msra.mxu0 %v9961
          %10192 = vmatpush.bf16.msra.mxu0 %v9956
          %10193 = vmatpush.bf16.msra.mxu0 %v9951
          %10194 = vmatpush.bf16.msra.mxu0 %v9946
          %10195 = vmatpush.bf16.msra.mxu0 %v9941
          %10196 = vmatmul.bf16.gmra.mxu0 %v9350
          %v10197 = vpop.f32.mrf.mxu0
          %v10198 = vadd.f32 %v10151, %v10197
          %v10199 = vpop.f32.mrf.mxu0
          %v10200 = vadd.f32 %v10153, %v10199
          %10201 = vmatmul.bf16.gmra.mxu0 %v9353
          %v10202 = vpop.f32.mrf.mxu0
          %v10203 = vadd.f32 %v10156, %v10202
          %v10204 = vpop.f32.mrf.mxu0
          %v10205 = vadd.f32 %v10158, %v10204
          %10206 = vmatmul.bf16.gmra.mxu0 %v9356
          %v10207 = vpop.f32.mrf.mxu0
          %v10208 = vadd.f32 %v10161, %v10207
          %v10209 = vpop.f32.mrf.mxu0
          %v10210 = vadd.f32 %v10163, %v10209
          %10211 = vmatmul.bf16.gmra.mxu0 %v9359
          %v10212 = vpop.f32.mrf.mxu0
          %v10213 = vadd.f32 %v10166, %v10212
          %v10214 = vpop.f32.mrf.mxu0
          %10215 = vmatmul.bf16.gmra.mxu0 %v9362
          %v10216 = vpop.f32.mrf.mxu0
          %v10217 = vadd.f32 %v10170, %v10216
          %v10218 = vpop.f32.mrf.mxu0
          %v10219 = vadd.f32 %v10172, %v10218
          %10220 = vmatmul.bf16.gmra.mxu0 %v9365
          %v10221 = vpop.f32.mrf.mxu0
          %v10222 = vadd.f32 %v10175, %v10221
          %v10223 = vpop.f32.mrf.mxu0
          %v10224 = vadd.f32 %v10177, %v10223
          %10225 = vmatmul.bf16.gmra.mxu0 %v9368
          %v10226 = vpop.f32.mrf.mxu0
          %v10227 = vadd.f32 %v10180, %v10226
          %v10228 = vpop.f32.mrf.mxu0
          %v10229 = vadd.f32 %v10182, %v10228
          %10230 = vmatmul.bf16.gmra.mxu0 %v9371
          %v10231 = vpop.f32.mrf.mxu0
          %v10232 = vadd.f32 %v10185, %v10231
          %v10233 = vpop.f32.mrf.mxu0
          %10234 = vdwg.mxu0
          %10235 = vmatpush.bf16.msra.mxu0 %v10016
          %10236 = vmatpush.bf16.msra.mxu0 %v10011
          %10237 = vmatpush.bf16.msra.mxu0 %v10006
          %10238 = vmatpush.bf16.msra.mxu0 %v10001
          %10239 = vmatpush.bf16.msra.mxu0 %v9996
          %10240 = vmatpush.bf16.msra.mxu0 %v9991
          %10241 = vmatpush.bf16.msra.mxu0 %v9986
          %10242 = vmatpush.bf16.msra.mxu0 %v9981
          %10243 = vmatmul.bf16.gmra.mxu0 %v9351
          %v10244 = vpop.f32.mrf.mxu0
          %v10245 = vadd.f32 %v10198, %v10244
          %v10246 = vpop.f32.mrf.mxu0
          %v10247 = vadd.f32 %v10200, %v10246
          %10248 = vmatmul.bf16.gmra.mxu0 %v9354
          %v10249 = vpop.f32.mrf.mxu0
          %v10250 = vadd.f32 %v10203, %v10249
          %v10251 = vpop.f32.mrf.mxu0
          %v10252 = vadd.f32 %v10205, %v10251
          %10253 = vmatmul.bf16.gmra.mxu0 %v9357
          %v10254 = vpop.f32.mrf.mxu0
          %v10255 = vadd.f32 %v10208, %v10254
          %v10256 = vpop.f32.mrf.mxu0
          %v10257 = vadd.f32 %v10210, %v10256
          %10258 = vmatmul.bf16.gmra.mxu0 %v9360
          %v10259 = vpop.f32.mrf.mxu0
          %v10260 = vadd.f32 %v10213, %v10259
          %v10261 = vpop.f32.mrf.mxu0
          %10262 = vmatmul.bf16.gmra.mxu0 %v9363
          %v10263 = vpop.f32.mrf.mxu0
          %v10264 = vadd.f32 %v10217, %v10263
          %v10265 = vpop.f32.mrf.mxu0
          %v10266 = vadd.f32 %v10219, %v10265
          %10267 = vmatmul.bf16.gmra.mxu0 %v9366
          %v10268 = vpop.f32.mrf.mxu0
          %v10269 = vadd.f32 %v10222, %v10268
          %v10270 = vpop.f32.mrf.mxu0
          %v10271 = vadd.f32 %v10224, %v10270
          %10272 = vmatmul.bf16.gmra.mxu0 %v9369
          %v10273 = vpop.f32.mrf.mxu0
          %v10274 = vadd.f32 %v10227, %v10273
          %v10275 = vpop.f32.mrf.mxu0
          %v10276 = vadd.f32 %v10229, %v10275
          %10277 = vmatmul.bf16.gmra.mxu0 %v9372
          %v10278 = vpop.f32.mrf.mxu0
          %v10279 = vadd.f32 %v10232, %v10278
          %v10280 = vpop.f32.mrf.mxu0
          %10281 = vdwg.mxu0
          %10282 = vmatpush.bf16.msra.mxu0 %v9937
          %10283 = vmatpush.bf16.msra.mxu0 %v9932
          %10284 = vmatpush.bf16.msra.mxu0 %v9927
          %10285 = vmatpush.bf16.msra.mxu0 %v9922
          %10286 = vmatpush.bf16.msra.mxu0 %v9917
          %10287 = vmatpush.bf16.msra.mxu0 %v9912
          %10288 = vmatpush.bf16.msra.mxu0 %v9907
          %10289 = vmatpush.bf16.msra.mxu0 %v9902
          %10290 = vmatmul.bf16.gmra.mxu0 %v9349
          %v10291 = vpop.f32.mrf.mxu0
          %v10292 = vadd.f32 0.0, %v10291
          %v10293 = vpop.f32.mrf.mxu0
          %v10294 = vadd.f32 0.0, %v10293
          %10295 = vmatmul.bf16.gmra.mxu0 %v9352
          %v10296 = vpop.f32.mrf.mxu0
          %v10297 = vadd.f32 0.0, %v10296
          %v10298 = vpop.f32.mrf.mxu0
          %v10299 = vadd.f32 0.0, %v10298
          %10300 = vmatmul.bf16.gmra.mxu0 %v9355
          %v10301 = vpop.f32.mrf.mxu0
          %v10302 = vadd.f32 0.0, %v10301
          %v10303 = vpop.f32.mrf.mxu0
          %v10304 = vadd.f32 0.0, %v10303
          %10305 = vmatmul.bf16.gmra.mxu0 %v9358
          %v10306 = vpop.f32.mrf.mxu0
          %v10307 = vadd.f32 0.0, %v10306
          %v10308 = vpop.f32.mrf.mxu0
          %v10309 = vadd.f32 0.0, %v10308
          %10310 = vmatmul.bf16.gmra.mxu0 %v9361
          %v10311 = vpop.f32.mrf.mxu0
          %v10312 = vadd.f32 0.0, %v10311
          %v10313 = vpop.f32.mrf.mxu0
          %v10314 = vadd.f32 0.0, %v10313
          %10315 = vmatmul.bf16.gmra.mxu0 %v9364
          %v10316 = vpop.f32.mrf.mxu0
          %v10317 = vadd.f32 0.0, %v10316
          %v10318 = vpop.f32.mrf.mxu0
          %v10319 = vadd.f32 0.0, %v10318
          %10320 = vmatmul.bf16.gmra.mxu0 %v9367
          %v10321 = vpop.f32.mrf.mxu0
          %v10322 = vadd.f32 0.0, %v10321
          %v10323 = vpop.f32.mrf.mxu0
          %v10324 = vadd.f32 0.0, %v10323
          %10325 = vmatmul.bf16.gmra.mxu0 %v9370
          %v10326 = vpop.f32.mrf.mxu0
          %v10327 = vadd.f32 0.0, %v10326
          %v10328 = vpop.f32.mrf.mxu0
          %v10329 = vadd.f32 0.0, %v10328
          %10330 = vdwg.mxu0
          %10331 = vmatpush.bf16.msra.mxu0 %v9977
          %10332 = vmatpush.bf16.msra.mxu0 %v9972
          %10333 = vmatpush.bf16.msra.mxu0 %v9967
          %10334 = vmatpush.bf16.msra.mxu0 %v9962
          %10335 = vmatpush.bf16.msra.mxu0 %v9957
          %10336 = vmatpush.bf16.msra.mxu0 %v9952
          %10337 = vmatpush.bf16.msra.mxu0 %v9947
          %10338 = vmatpush.bf16.msra.mxu0 %v9942
          %10339 = vmatmul.bf16.gmra.mxu0 %v9350
          %v10340 = vpop.f32.mrf.mxu0
          %v10341 = vadd.f32 %v10292, %v10340
          %v10342 = vpop.f32.mrf.mxu0
          %v10343 = vadd.f32 %v10294, %v10342
          %10344 = vmatmul.bf16.gmra.mxu0 %v9353
          %v10345 = vpop.f32.mrf.mxu0
          %v10346 = vadd.f32 %v10297, %v10345
          %v10347 = vpop.f32.mrf.mxu0
          %v10348 = vadd.f32 %v10299, %v10347
          %10349 = vmatmul.bf16.gmra.mxu0 %v9356
          %v10350 = vpop.f32.mrf.mxu0
          %v10351 = vadd.f32 %v10302, %v10350
          %v10352 = vpop.f32.mrf.mxu0
          %v10353 = vadd.f32 %v10304, %v10352
          %10354 = vmatmul.bf16.gmra.mxu0 %v9359
          %v10355 = vpop.f32.mrf.mxu0
          %v10356 = vadd.f32 %v10307, %v10355
          %v10357 = vpop.f32.mrf.mxu0
          %v10358 = vadd.f32 %v10309, %v10357
          %10359 = vmatmul.bf16.gmra.mxu0 %v9362
          %v10360 = vpop.f32.mrf.mxu0
          %v10361 = vadd.f32 %v10312, %v10360
          %v10362 = vpop.f32.mrf.mxu0
          %v10363 = vadd.f32 %v10314, %v10362
          %10364 = vmatmul.bf16.gmra.mxu0 %v9365
          %v10365 = vpop.f32.mrf.mxu0
          %v10366 = vadd.f32 %v10317, %v10365
          %v10367 = vpop.f32.mrf.mxu0
          %v10368 = vadd.f32 %v10319, %v10367
          %10369 = vmatmul.bf16.gmra.mxu0 %v9368
          %v10370 = vpop.f32.mrf.mxu0
          %v10371 = vadd.f32 %v10322, %v10370
          %v10372 = vpop.f32.mrf.mxu0
          %v10373 = vadd.f32 %v10324, %v10372
          %10374 = vmatmul.bf16.gmra.mxu0 %v9371
          %v10375 = vpop.f32.mrf.mxu0
          %v10376 = vadd.f32 %v10327, %v10375
          %v10377 = vpop.f32.mrf.mxu0
          %v10378 = vadd.f32 %v10329, %v10377
          %10379 = vdwg.mxu0
          %10380 = vmatpush.bf16.msra.mxu0 %v10017
          %10381 = vmatpush.bf16.msra.mxu0 %v10012
          %10382 = vmatpush.bf16.msra.mxu0 %v10007
          %10383 = vmatpush.bf16.msra.mxu0 %v10002
          %10384 = vmatpush.bf16.msra.mxu0 %v9997
          %10385 = vmatpush.bf16.msra.mxu0 %v9992
          %10386 = vmatpush.bf16.msra.mxu0 %v9987
          %10387 = vmatpush.bf16.msra.mxu0 %v9982
          %10388 = vmatmul.bf16.gmra.mxu0 %v9351
          %v10389 = vpop.f32.mrf.mxu0
          %v10390 = vadd.f32 %v10341, %v10389
          %v10391 = vpop.f32.mrf.mxu0
          %v10392 = vadd.f32 %v10343, %v10391
          %10393 = vmatmul.bf16.gmra.mxu0 %v9354
          %v10394 = vpop.f32.mrf.mxu0
          %v10395 = vadd.f32 %v10346, %v10394
          %v10396 = vpop.f32.mrf.mxu0
          %v10397 = vadd.f32 %v10348, %v10396
          %10398 = vmatmul.bf16.gmra.mxu0 %v9357
          %v10399 = vpop.f32.mrf.mxu0
          %v10400 = vadd.f32 %v10351, %v10399
          %v10401 = vpop.f32.mrf.mxu0
          %v10402 = vadd.f32 %v10353, %v10401
          %10403 = vmatmul.bf16.gmra.mxu0 %v9360
          %v10404 = vpop.f32.mrf.mxu0
          %v10405 = vadd.f32 %v10356, %v10404
          %v10406 = vpop.f32.mrf.mxu0
          %v10407 = vadd.f32 %v10358, %v10406
          %10408 = vmatmul.bf16.gmra.mxu0 %v9363
          %v10409 = vpop.f32.mrf.mxu0
          %v10410 = vadd.f32 %v10361, %v10409
          %v10411 = vpop.f32.mrf.mxu0
          %v10412 = vadd.f32 %v10363, %v10411
          %10413 = vmatmul.bf16.gmra.mxu0 %v9366
          %v10414 = vpop.f32.mrf.mxu0
          %v10415 = vadd.f32 %v10366, %v10414
          %v10416 = vpop.f32.mrf.mxu0
          %v10417 = vadd.f32 %v10368, %v10416
          %10418 = vmatmul.bf16.gmra.mxu0 %v9369
          %v10419 = vpop.f32.mrf.mxu0
          %v10420 = vadd.f32 %v10371, %v10419
          %v10421 = vpop.f32.mrf.mxu0
          %v10422 = vadd.f32 %v10373, %v10421
          %10423 = vmatmul.bf16.gmra.mxu0 %v9372
          %v10424 = vpop.f32.mrf.mxu0
          %v10425 = vadd.f32 %v10376, %v10424
          %v10426 = vpop.f32.mrf.mxu0
          %v10427 = vadd.f32 %v10378, %v10426
          %10428 = vdwg.mxu0
          %10429 = vmatpush.bf16.msra.mxu0 %v9938
          %10430 = vmatpush.bf16.msra.mxu0 %v9933
          %10431 = vmatpush.bf16.msra.mxu0 %v9928
          %10432 = vmatpush.bf16.msra.mxu0 %v9923
          %10433 = vmatpush.bf16.msra.mxu0 %v9918
          %10434 = vmatpush.bf16.msra.mxu0 %v9913
          %10435 = vmatpush.bf16.msra.mxu0 %v9908
          %10436 = vmatpush.bf16.msra.mxu0 %v9903
          %10437 = vmatmul.bf16.gmra.mxu0 %v9349
          %v10438 = vpop.f32.mrf.mxu0
          %v10439 = vadd.f32 0.0, %v10438
          %v10440 = vpop.f32.mrf.mxu0
          %v10441 = vadd.f32 0.0, %v10440
          %10442 = vmatmul.bf16.gmra.mxu0 %v9352
          %v10443 = vpop.f32.mrf.mxu0
          %v10444 = vadd.f32 0.0, %v10443
          %v10445 = vpop.f32.mrf.mxu0
          %v10446 = vadd.f32 0.0, %v10445
          %10447 = vmatmul.bf16.gmra.mxu0 %v9355
          %v10448 = vpop.f32.mrf.mxu0
          %v10449 = vadd.f32 0.0, %v10448
          %v10450 = vpop.f32.mrf.mxu0
          %v10451 = vadd.f32 0.0, %v10450
          %10452 = vmatmul.bf16.gmra.mxu0 %v9358
          %v10453 = vpop.f32.mrf.mxu0
          %v10454 = vadd.f32 0.0, %v10453
          %v10455 = vpop.f32.mrf.mxu0
          %v10456 = vadd.f32 0.0, %v10455
          %10457 = vmatmul.bf16.gmra.mxu0 %v9361
          %v10458 = vpop.f32.mrf.mxu0
          %v10459 = vadd.f32 0.0, %v10458
          %v10460 = vpop.f32.mrf.mxu0
          %v10461 = vadd.f32 0.0, %v10460
          %10462 = vmatmul.bf16.gmra.mxu0 %v9364
          %v10463 = vpop.f32.mrf.mxu0
          %v10464 = vadd.f32 0.0, %v10463
          %v10465 = vpop.f32.mrf.mxu0
          %v10466 = vadd.f32 0.0, %v10465
          %10467 = vmatmul.bf16.gmra.mxu0 %v9367
          %v10468 = vpop.f32.mrf.mxu0
          %v10469 = vadd.f32 0.0, %v10468
          %v10470 = vpop.f32.mrf.mxu0
          %v10471 = vadd.f32 0.0, %v10470
          %10472 = vmatmul.bf16.gmra.mxu0 %v9370
          %v10473 = vpop.f32.mrf.mxu0
          %v10474 = vadd.f32 0.0, %v10473
          %v10475 = vpop.f32.mrf.mxu0
          %v10476 = vadd.f32 0.0, %v10475
          %10477 = vdwg.mxu0
          %10478 = vmatpush.bf16.msra.mxu0 %v9978
          %10479 = vmatpush.bf16.msra.mxu0 %v9973
          %10480 = vmatpush.bf16.msra.mxu0 %v9968
          %10481 = vmatpush.bf16.msra.mxu0 %v9963
          %10482 = vmatpush.bf16.msra.mxu0 %v9958
          %10483 = vmatpush.bf16.msra.mxu0 %v9953
          %10484 = vmatpush.bf16.msra.mxu0 %v9948
          %10485 = vmatpush.bf16.msra.mxu0 %v9943
          %10486 = vmatmul.bf16.gmra.mxu0 %v9350
          %v10487 = vpop.f32.mrf.mxu0
          %v10488 = vadd.f32 %v10439, %v10487
          %v10489 = vpop.f32.mrf.mxu0
          %v10490 = vadd.f32 %v10441, %v10489
          %10491 = vmatmul.bf16.gmra.mxu0 %v9353
          %v10492 = vpop.f32.mrf.mxu0
          %v10493 = vadd.f32 %v10444, %v10492
          %v10494 = vpop.f32.mrf.mxu0
          %v10495 = vadd.f32 %v10446, %v10494
          %10496 = vmatmul.bf16.gmra.mxu0 %v9356
          %v10497 = vpop.f32.mrf.mxu0
          %v10498 = vadd.f32 %v10449, %v10497
          %v10499 = vpop.f32.mrf.mxu0
          %v10500 = vadd.f32 %v10451, %v10499
          %10501 = vmatmul.bf16.gmra.mxu0 %v9359
          %v10502 = vpop.f32.mrf.mxu0
          %v10503 = vadd.f32 %v10454, %v10502
          %v10504 = vpop.f32.mrf.mxu0
          %v10505 = vadd.f32 %v10456, %v10504
          %10506 = vmatmul.bf16.gmra.mxu0 %v9362
          %v10507 = vpop.f32.mrf.mxu0
          %v10508 = vadd.f32 %v10459, %v10507
          %v10509 = vpop.f32.mrf.mxu0
          %v10510 = vadd.f32 %v10461, %v10509
          %10511 = vmatmul.bf16.gmra.mxu0 %v9365
          %v10512 = vpop.f32.mrf.mxu0
          %v10513 = vadd.f32 %v10464, %v10512
          %v10514 = vpop.f32.mrf.mxu0
          %v10515 = vadd.f32 %v10466, %v10514
          %10516 = vmatmul.bf16.gmra.mxu0 %v9368
          %v10517 = vpop.f32.mrf.mxu0
          %v10518 = vadd.f32 %v10469, %v10517
          %v10519 = vpop.f32.mrf.mxu0
          %v10520 = vadd.f32 %v10471, %v10519
          %10521 = vmatmul.bf16.gmra.mxu0 %v9371
          %v10522 = vpop.f32.mrf.mxu0
          %v10523 = vadd.f32 %v10474, %v10522
          %v10524 = vpop.f32.mrf.mxu0
          %v10525 = vadd.f32 %v10476, %v10524
          %10526 = vdwg.mxu0
          %10527 = vmatpush.bf16.msra.mxu0 %v10018
          %10528 = vmatpush.bf16.msra.mxu0 %v10013
          %10529 = vmatpush.bf16.msra.mxu0 %v10008
          %10530 = vmatpush.bf16.msra.mxu0 %v10003
          %10531 = vmatpush.bf16.msra.mxu0 %v9998
          %10532 = vmatpush.bf16.msra.mxu0 %v9993
          %10533 = vmatpush.bf16.msra.mxu0 %v9988
          %10534 = vmatpush.bf16.msra.mxu0 %v9983
          %10535 = vmatmul.bf16.gmra.mxu0 %v9351
          %v10536 = vpop.f32.mrf.mxu0
          %v10537 = vadd.f32 %v10488, %v10536
          %v10538 = vpop.f32.mrf.mxu0
          %v10539 = vadd.f32 %v10490, %v10538
          %10540 = vmatmul.bf16.gmra.mxu0 %v9354
          %v10541 = vpop.f32.mrf.mxu0
          %v10542 = vadd.f32 %v10493, %v10541
          %v10543 = vpop.f32.mrf.mxu0
          %v10544 = vadd.f32 %v10495, %v10543
          %10545 = vmatmul.bf16.gmra.mxu0 %v9357
          %v10546 = vpop.f32.mrf.mxu0
          %v10547 = vadd.f32 %v10498, %v10546
          %v10548 = vpop.f32.mrf.mxu0
          %v10549 = vadd.f32 %v10500, %v10548
          %10550 = vmatmul.bf16.gmra.mxu0 %v9360
          %v10551 = vpop.f32.mrf.mxu0
          %v10552 = vadd.f32 %v10503, %v10551
          %v10553 = vpop.f32.mrf.mxu0
          %v10554 = vadd.f32 %v10505, %v10553
          %10555 = vmatmul.bf16.gmra.mxu0 %v9363
          %v10556 = vpop.f32.mrf.mxu0
          %v10557 = vadd.f32 %v10508, %v10556
          %v10558 = vpop.f32.mrf.mxu0
          %v10559 = vadd.f32 %v10510, %v10558
          %10560 = vmatmul.bf16.gmra.mxu0 %v9366
          %v10561 = vpop.f32.mrf.mxu0
          %v10562 = vadd.f32 %v10513, %v10561
          %v10563 = vpop.f32.mrf.mxu0
          %v10564 = vadd.f32 %v10515, %v10563
          %10565 = vmatmul.bf16.gmra.mxu0 %v9369
          %v10566 = vpop.f32.mrf.mxu0
          %v10567 = vadd.f32 %v10518, %v10566
          %v10568 = vpop.f32.mrf.mxu0
          %v10569 = vadd.f32 %v10520, %v10568
          %10570 = vmatmul.bf16.gmra.mxu0 %v9372
          %v10571 = vpop.f32.mrf.mxu0
          %v10572 = vadd.f32 %v10523, %v10571
          %v10573 = vpop.f32.mrf.mxu0
          %v10574 = vadd.f32 %v10525, %v10573
          %10575 = vdwg.mxu0
          %10576 = vmatpush.bf16.msra.mxu0 %v9939
          %10577 = vmatpush.bf16.msra.mxu0 %v9934
          %10578 = vmatpush.bf16.msra.mxu0 %v9929
          %10579 = vmatpush.bf16.msra.mxu0 %v9924
          %10580 = vmatpush.bf16.msra.mxu0 %v9919
          %10581 = vmatpush.bf16.msra.mxu0 %v9914
          %10582 = vmatpush.bf16.msra.mxu0 %v9909
          %10583 = vmatpush.bf16.msra.mxu0 %v9904
          %10584 = vmatmul.bf16.gmra.mxu0 %v9349
          %v10585 = vpop.f32.mrf.mxu0
          %v10586 = vpop.f32.mrf.mxu0
          %v10587 = vadd.f32 0.0, %v10586
          %10588 = vmatmul.bf16.gmra.mxu0 %v9352
          %v10589 = vpop.f32.mrf.mxu0
          %v10590 = vadd.f32 0.0, %v10589
          %v10591 = vpop.f32.mrf.mxu0
          %v10592 = vadd.f32 0.0, %v10591
          %10593 = vmatmul.bf16.gmra.mxu0 %v9355
          %v10594 = vpop.f32.mrf.mxu0
          %v10595 = vadd.f32 0.0, %v10594
          %v10596 = vpop.f32.mrf.mxu0
          %v10597 = vadd.f32 0.0, %v10596
          %10598 = vmatmul.bf16.gmra.mxu0 %v9358
          %v10599 = vpop.f32.mrf.mxu0
          %v10600 = vadd.f32 0.0, %v10599
          %v10601 = vpop.f32.mrf.mxu0
          %v10602 = vadd.f32 0.0, %v10601
          %10603 = vmatmul.bf16.gmra.mxu0 %v9361
          %v10604 = vpop.f32.mrf.mxu0
          %v10605 = vpop.f32.mrf.mxu0
          %v10606 = vadd.f32 0.0, %v10605
          %10607 = vmatmul.bf16.gmra.mxu0 %v9364
          %v10608 = vpop.f32.mrf.mxu0
          %v10609 = vadd.f32 0.0, %v10608
          %v10610 = vpop.f32.mrf.mxu0
          %v10611 = vadd.f32 0.0, %v10610
          %10612 = vmatmul.bf16.gmra.mxu0 %v9367
          %v10613 = vpop.f32.mrf.mxu0
          %v10614 = vadd.f32 0.0, %v10613
          %v10615 = vpop.f32.mrf.mxu0
          %v10616 = vadd.f32 0.0, %v10615
          %10617 = vmatmul.bf16.gmra.mxu0 %v9370
          %v10618 = vpop.f32.mrf.mxu0
          %v10619 = vadd.f32 0.0, %v10618
          %v10620 = vpop.f32.mrf.mxu0
          %v10621 = vadd.f32 0.0, %v10620
          %10622 = vdwg.mxu0
          %10623 = vmatpush.bf16.msra.mxu0 %v9979
          %10624 = vmatpush.bf16.msra.mxu0 %v9974
          %10625 = vmatpush.bf16.msra.mxu0 %v9969
          %10626 = vmatpush.bf16.msra.mxu0 %v9964
          %10627 = vmatpush.bf16.msra.mxu0 %v9959
          %10628 = vmatpush.bf16.msra.mxu0 %v9954
          %10629 = vmatpush.bf16.msra.mxu0 %v9949
          %10630 = vmatpush.bf16.msra.mxu0 %v9944
          %10631 = vmatmul.bf16.gmra.mxu0 %v9350
          %v10632 = vpop.f32.mrf.mxu0
          %v10633 = vpop.f32.mrf.mxu0
          %v10634 = vadd.f32 %v10587, %v10633
          %10635 = vmatmul.bf16.gmra.mxu0 %v9353
          %v10636 = vpop.f32.mrf.mxu0
          %v10637 = vadd.f32 %v10590, %v10636
          %v10638 = vpop.f32.mrf.mxu0
          %v10639 = vadd.f32 %v10592, %v10638
          %10640 = vmatmul.bf16.gmra.mxu0 %v9356
          %v10641 = vpop.f32.mrf.mxu0
          %v10642 = vadd.f32 %v10595, %v10641
          %v10643 = vpop.f32.mrf.mxu0
          %v10644 = vadd.f32 %v10597, %v10643
          %10645 = vmatmul.bf16.gmra.mxu0 %v9359
          %v10646 = vpop.f32.mrf.mxu0
          %v10647 = vadd.f32 %v10600, %v10646
          %v10648 = vpop.f32.mrf.mxu0
          %v10649 = vadd.f32 %v10602, %v10648
          %10650 = vmatmul.bf16.gmra.mxu0 %v9362
          %v10651 = vpop.f32.mrf.mxu0
          %v10652 = vpop.f32.mrf.mxu0
          %v10653 = vadd.f32 %v10606, %v10652
          %10654 = vmatmul.bf16.gmra.mxu0 %v9365
          %v10655 = vpop.f32.mrf.mxu0
          %v10656 = vadd.f32 %v10609, %v10655
          %v10657 = vpop.f32.mrf.mxu0
          %v10658 = vadd.f32 %v10611, %v10657
          %10659 = vmatmul.bf16.gmra.mxu0 %v9368
          %v10660 = vpop.f32.mrf.mxu0
          %v10661 = vadd.f32 %v10614, %v10660
          %v10662 = vpop.f32.mrf.mxu0
          %v10663 = vadd.f32 %v10616, %v10662
          %10664 = vmatmul.bf16.gmra.mxu0 %v9371
          %v10665 = vpop.f32.mrf.mxu0
          %v10666 = vadd.f32 %v10619, %v10665
          %v10667 = vpop.f32.mrf.mxu0
          %v10668 = vadd.f32 %v10621, %v10667
          %10669 = vdwg.mxu0
          %10670 = vmatpush.bf16.msra.mxu0 %v10019
          %10671 = vmatpush.bf16.msra.mxu0 %v10014
          %10672 = vmatpush.bf16.msra.mxu0 %v10009
          %10673 = vmatpush.bf16.msra.mxu0 %v10004
          %10674 = vmatpush.bf16.msra.mxu0 %v9999
          %10675 = vmatpush.bf16.msra.mxu0 %v9994
          %10676 = vmatpush.bf16.msra.mxu0 %v9989
          %10677 = vmatpush.bf16.msra.mxu0 %v9984
          %10678 = vmatmul.bf16.gmra.mxu0 %v9351
          %v10679 = vpop.f32.mrf.mxu0
          %v10680 = vpop.f32.mrf.mxu0
          %v10681 = vadd.f32 %v10634, %v10680
          %10682 = vmatmul.bf16.gmra.mxu0 %v9354
          %v10683 = vpop.f32.mrf.mxu0
          %v10684 = vadd.f32 %v10637, %v10683
          %v10685 = vpop.f32.mrf.mxu0
          %v10686 = vadd.f32 %v10639, %v10685
          %10687 = vmatmul.bf16.gmra.mxu0 %v9357
          %v10688 = vpop.f32.mrf.mxu0
          %v10689 = vadd.f32 %v10642, %v10688
          %v10690 = vpop.f32.mrf.mxu0
          %v10691 = vadd.f32 %v10644, %v10690
          %10692 = vmatmul.bf16.gmra.mxu0 %v9360
          %v10693 = vpop.f32.mrf.mxu0
          %v10694 = vadd.f32 %v10647, %v10693
          %v10695 = vpop.f32.mrf.mxu0
          %v10696 = vadd.f32 %v10649, %v10695
          %10697 = vmatmul.bf16.gmra.mxu0 %v9363
          %v10698 = vpop.f32.mrf.mxu0
          %v10699 = vpop.f32.mrf.mxu0
          %v10700 = vadd.f32 %v10653, %v10699
          %10701 = vmatmul.bf16.gmra.mxu0 %v9366
          %v10702 = vpop.f32.mrf.mxu0
          %v10703 = vadd.f32 %v10656, %v10702
          %v10704 = vpop.f32.mrf.mxu0
          %v10705 = vadd.f32 %v10658, %v10704
          %10706 = vmatmul.bf16.gmra.mxu0 %v9369
          %v10707 = vpop.f32.mrf.mxu0
          %v10708 = vadd.f32 %v10661, %v10707
          %v10709 = vpop.f32.mrf.mxu0
          %v10710 = vadd.f32 %v10663, %v10709
          %10711 = vmatmul.bf16.gmra.mxu0 %v9372
          %v10712 = vpop.f32.mrf.mxu0
          %v10713 = vadd.f32 %v10666, %v10712
          %v10714 = vpop.f32.mrf.mxu0
          %v10715 = vadd.f32 %v10668, %v10714
          %10716 = vdwg.mxu0
          %10717 = vmatpush.bf16.msra.mxu0 %v9940
          %10718 = vmatpush.bf16.msra.mxu0 %v9935
          %10719 = vmatpush.bf16.msra.mxu0 %v9930
          %10720 = vmatpush.bf16.msra.mxu0 %v9925
          %10721 = vmatpush.bf16.msra.mxu0 %v9920
          %10722 = vmatpush.bf16.msra.mxu0 %v9915
          %10723 = vmatpush.bf16.msra.mxu0 %v9910
          %10724 = vmatpush.bf16.msra.mxu0 %v9905
          %10725 = vmatmul.bf16.gmra.mxu0 %v9349
          %v10726 = vpop.f32.mrf.mxu0
          %v10727 = vpop.f32.mrf.mxu0
          %v10728 = vadd.f32 0.0, %v10727
          %10729 = vmatmul.bf16.gmra.mxu0 %v9352
          %v10730 = vpop.f32.mrf.mxu0
          %v10731 = vadd.f32 0.0, %v10730
          %v10732 = vpop.f32.mrf.mxu0
          %v10733 = vadd.f32 0.0, %v10732
          %10734 = vmatmul.bf16.gmra.mxu0 %v9355
          %v10735 = vpop.f32.mrf.mxu0
          %v10736 = vadd.f32 0.0, %v10735
          %v10737 = vpop.f32.mrf.mxu0
          %v10738 = vadd.f32 0.0, %v10737
          %10739 = vmatmul.bf16.gmra.mxu0 %v9358
          %v10740 = vpop.f32.mrf.mxu0
          %v10741 = vadd.f32 0.0, %v10740
          %v10742 = vpop.f32.mrf.mxu0
          %v10743 = vadd.f32 0.0, %v10742
          %10744 = vmatmul.bf16.gmra.mxu0 %v9361
          %v10745 = vpop.f32.mrf.mxu0
          %v10746 = vpop.f32.mrf.mxu0
          %v10747 = vadd.f32 0.0, %v10746
          %10748 = vmatmul.bf16.gmra.mxu0 %v9364
          %v10749 = vpop.f32.mrf.mxu0
          %v10750 = vadd.f32 0.0, %v10749
          %v10751 = vpop.f32.mrf.mxu0
          %v10752 = vadd.f32 0.0, %v10751
          %10753 = vmatmul.bf16.gmra.mxu0 %v9367
          %v10754 = vpop.f32.mrf.mxu0
          %v10755 = vadd.f32 0.0, %v10754
          %v10756 = vpop.f32.mrf.mxu0
          %v10757 = vadd.f32 0.0, %v10756
          %10758 = vmatmul.bf16.gmra.mxu0 %v9370
          %v10759 = vpop.f32.mrf.mxu0
          %v10760 = vadd.f32 0.0, %v10759
          %v10761 = vpop.f32.mrf.mxu0
          %v10762 = vadd.f32 0.0, %v10761
          %10763 = vdwg.mxu0
          %10764 = vmatpush.bf16.msra.mxu0 %v9980
          %10765 = vmatpush.bf16.msra.mxu0 %v9975
          %10766 = vmatpush.bf16.msra.mxu0 %v9970
          %10767 = vmatpush.bf16.msra.mxu0 %v9965
          %10768 = vmatpush.bf16.msra.mxu0 %v9960
          %10769 = vmatpush.bf16.msra.mxu0 %v9955
          %10770 = vmatpush.bf16.msra.mxu0 %v9950
          %10771 = vmatpush.bf16.msra.mxu0 %v9945
          %10772 = vmatmul.bf16.gmra.mxu0 %v9350
          %v10773 = vpop.f32.mrf.mxu0
          %v10774 = vpop.f32.mrf.mxu0
          %v10775 = vadd.f32 %v10728, %v10774
          %10776 = vmatmul.bf16.gmra.mxu0 %v9353
          %v10777 = vpop.f32.mrf.mxu0
          %v10778 = vadd.f32 %v10731, %v10777
          %v10779 = vpop.f32.mrf.mxu0
          %v10780 = vadd.f32 %v10733, %v10779
          %10781 = vmatmul.bf16.gmra.mxu0 %v9356
          %v10782 = vpop.f32.mrf.mxu0
          %v10783 = vadd.f32 %v10736, %v10782
          %v10784 = vpop.f32.mrf.mxu0
          %v10785 = vadd.f32 %v10738, %v10784
          %10786 = vmatmul.bf16.gmra.mxu0 %v9359
          %v10787 = vpop.f32.mrf.mxu0
          %v10788 = vadd.f32 %v10741, %v10787
          %v10789 = vpop.f32.mrf.mxu0
          %v10790 = vadd.f32 %v10743, %v10789
          %10791 = vmatmul.bf16.gmra.mxu0 %v9362
          %v10792 = vpop.f32.mrf.mxu0
          %v10793 = vpop.f32.mrf.mxu0
          %v10794 = vadd.f32 %v10747, %v10793
          %10795 = vmatmul.bf16.gmra.mxu0 %v9365
          %v10796 = vpop.f32.mrf.mxu0
          %v10797 = vadd.f32 %v10750, %v10796
          %v10798 = vpop.f32.mrf.mxu0
          %v10799 = vadd.f32 %v10752, %v10798
          %10800 = vmatmul.bf16.gmra.mxu0 %v9368
          %v10801 = vpop.f32.mrf.mxu0
          %v10802 = vadd.f32 %v10755, %v10801
          %v10803 = vpop.f32.mrf.mxu0
          %v10804 = vadd.f32 %v10757, %v10803
          %10805 = vmatmul.bf16.gmra.mxu0 %v9371
          %v10806 = vpop.f32.mrf.mxu0
          %v10807 = vadd.f32 %v10760, %v10806
          %v10808 = vpop.f32.mrf.mxu0
          %v10809 = vadd.f32 %v10762, %v10808
          %10810 = vdwg.mxu0
          %10811 = vmatpush.bf16.msra.mxu0 %v10020
          %10812 = vmatpush.bf16.msra.mxu0 %v10015
          %10813 = vmatpush.bf16.msra.mxu0 %v10010
          %10814 = vmatpush.bf16.msra.mxu0 %v10005
          %10815 = vmatpush.bf16.msra.mxu0 %v10000
          %10816 = vmatpush.bf16.msra.mxu0 %v9995
          %10817 = vmatpush.bf16.msra.mxu0 %v9990
          %10818 = vmatpush.bf16.msra.mxu0 %v9985
          %10819 = vmatmul.bf16.gmra.mxu0 %v9351
          %v10820 = vpop.f32.mrf.mxu0
          %v10821 = vpop.f32.mrf.mxu0
          %v10822 = vadd.f32 %v10775, %v10821
          %10823 = vmatmul.bf16.gmra.mxu0 %v9354
          %v10824 = vpop.f32.mrf.mxu0
          %v10825 = vadd.f32 %v10778, %v10824
          %v10826 = vpop.f32.mrf.mxu0
          %v10827 = vadd.f32 %v10780, %v10826
          %10828 = vmatmul.bf16.gmra.mxu0 %v9357
          %v10829 = vpop.f32.mrf.mxu0
          %v10830 = vadd.f32 %v10783, %v10829
          %v10831 = vpop.f32.mrf.mxu0
          %v10832 = vadd.f32 %v10785, %v10831
          %10833 = vmatmul.bf16.gmra.mxu0 %v9360
          %v10834 = vpop.f32.mrf.mxu0
          %v10835 = vadd.f32 %v10788, %v10834
          %v10836 = vpop.f32.mrf.mxu0
          %v10837 = vadd.f32 %v10790, %v10836
          %10838 = vmatmul.bf16.gmra.mxu0 %v9363
          %v10839 = vpop.f32.mrf.mxu0
          %v10840 = vpop.f32.mrf.mxu0
          %v10841 = vadd.f32 %v10794, %v10840
          %10842 = vmatmul.bf16.gmra.mxu0 %v9366
          %v10843 = vpop.f32.mrf.mxu0
          %v10844 = vadd.f32 %v10797, %v10843
          %v10845 = vpop.f32.mrf.mxu0
          %v10846 = vadd.f32 %v10799, %v10845
          %10847 = vmatmul.bf16.gmra.mxu0 %v9369
          %v10848 = vpop.f32.mrf.mxu0
          %v10849 = vadd.f32 %v10802, %v10848
          %v10850 = vpop.f32.mrf.mxu0
          %v10851 = vadd.f32 %v10804, %v10850
          %10852 = vmatmul.bf16.gmra.mxu0 %v9372
          %v10853 = vpop.f32.mrf.mxu0
          %v10854 = vadd.f32 %v10807, %v10853
          %v10855 = vpop.f32.mrf.mxu0
          %v10856 = vadd.f32 %v10809, %v10855
          %10857 = vdwg.mxu0
          %10890 = vrot.lane.b32.xlu0 %v10390, 64
          %v10891 = vpop.permute.xlu0 %10890
          %10892 = vrot.lane.b32.xlu0 %v10537, 64
          %v10893 = vpop.permute.xlu0 %10892
          %10894 = vrot.lane.b32.xlu0 %v10392, 64
          %v10895 = vpop.permute.xlu0 %10894
          %10896 = vrot.lane.b32.xlu0 %v10539, 64
          %v10897 = vpop.permute.xlu0 %10896
          %10898 = vrot.lane.b32.xlu0 %v10395, 64
          %v10899 = vpop.permute.xlu0 %10898
          %10900 = vrot.lane.b32.xlu0 %v10542, 64
          %v10901 = vpop.permute.xlu0 %10900
          %10902 = vrot.lane.b32.xlu0 %v10397, 64
          %v10903 = vpop.permute.xlu0 %10902
          %10904 = vrot.lane.b32.xlu0 %v10544, 64
          %v10905 = vpop.permute.xlu0 %10904
          %10906 = vrot.lane.b32.xlu0 %v10400, 64
          %v10907 = vpop.permute.xlu0 %10906
          %10908 = vrot.lane.b32.xlu0 %v10547, 64
          %v10909 = vpop.permute.xlu0 %10908
          %10910 = vrot.lane.b32.xlu0 %v10402, 64
          %v10911 = vpop.permute.xlu0 %10910
          %10912 = vrot.lane.b32.xlu0 %v10549, 64
          %v10913 = vpop.permute.xlu0 %10912
          %10914 = vrot.lane.b32.xlu0 %v10405, 64
          %v10915 = vpop.permute.xlu0 %10914
          %10916 = vrot.lane.b32.xlu0 %v10552, 64
          %v10917 = vpop.permute.xlu0 %10916
          %10918 = vrot.lane.b32.xlu0 %v10407, 64
          %v10919 = vpop.permute.xlu0 %10918
          %10920 = vrot.lane.b32.xlu0 %v10554, 64
          %v10921 = vpop.permute.xlu0 %10920
          %10922 = vrot.lane.b32.xlu0 %v10410, 64
          %v10923 = vpop.permute.xlu0 %10922
          %10924 = vrot.lane.b32.xlu0 %v10557, 64
          %v10925 = vpop.permute.xlu0 %10924
          %10926 = vrot.lane.b32.xlu0 %v10412, 64
          %v10927 = vpop.permute.xlu0 %10926
          %10928 = vrot.lane.b32.xlu0 %v10559, 64
          %v10929 = vpop.permute.xlu0 %10928
          %10930 = vrot.lane.b32.xlu0 %v10415, 64
          %v10931 = vpop.permute.xlu0 %10930
          %10932 = vrot.lane.b32.xlu0 %v10562, 64
          %v10933 = vpop.permute.xlu0 %10932
          %10934 = vrot.lane.b32.xlu0 %v10417, 64
          %v10935 = vpop.permute.xlu0 %10934
          %10936 = vrot.lane.b32.xlu0 %v10564, 64
          %v10937 = vpop.permute.xlu0 %10936
          %10938 = vrot.lane.b32.xlu0 %v10420, 64
          %v10939 = vpop.permute.xlu0 %10938
          %10940 = vrot.lane.b32.xlu0 %v10567, 64
          %v10941 = vpop.permute.xlu0 %10940
          %10942 = vrot.lane.b32.xlu0 %v10422, 64
          %v10943 = vpop.permute.xlu0 %10942
          %10944 = vrot.lane.b32.xlu0 %v10569, 64
          %v10945 = vpop.permute.xlu0 %10944
          %10946 = vrot.lane.b32.xlu0 %v10425, 64
          %v10947 = vpop.permute.xlu0 %10946
          %10948 = vrot.lane.b32.xlu0 %v10572, 64
          %v10949 = vpop.permute.xlu0 %10948
          %10950 = vrot.lane.b32.xlu0 %v10427, 64
          %v10951 = vpop.permute.xlu0 %10950
          %10952 = vrot.lane.b32.xlu0 %v10574, 64
          %v10953 = vpop.permute.xlu0 %10952
          %v10954 = vsel %vm7376, %v10891, %v10893
          %v10955 = vsel %vm7376, %v10895, %v10897
          %v10956 = vsel %vm7376, %v10899, %v10901
          %v10957 = vsel %vm7376, %v10903, %v10905
          %v10958 = vsel %vm7376, %v10907, %v10909
          %v10959 = vsel %vm7376, %v10911, %v10913
          %v10960 = vsel %vm7376, %v10915, %v10917
          %v10961 = vsel %vm7376, %v10919, %v10921
          %v10962 = vsel %vm7376, %v10923, %v10925
          %v10963 = vsel %vm7376, %v10927, %v10929
          %v10964 = vsel %vm7376, %v10931, %v10933
          %v10965 = vsel %vm7376, %v10935, %v10937
          %v10966 = vsel %vm7376, %v10939, %v10941
          %v10967 = vsel %vm7376, %v10943, %v10945
          %v10968 = vsel %vm7376, %v10947, %v10949
          %v10969 = vsel %vm7376, %v10951, %v10953
          %v11002 = vadd.f32 %v10954, 0.0
          %v11003 = vadd.f32 %v10893, 0.0
          %v11004 = vadd.f32 %v10245, %v10955
          %v11005 = vadd.f32 %v10390, %v10897
          %v11006 = vadd.f32 %v10247, %v10956
          %v11007 = vadd.f32 %v10392, %v10901
          %v11008 = vadd.f32 %v10250, %v10957
          %v11009 = vadd.f32 %v10395, %v10905
          %v11010 = vadd.f32 %v10252, %v10958
          %v11011 = vadd.f32 %v10397, %v10909
          %v11012 = vadd.f32 %v10255, %v10959
          %v11013 = vadd.f32 %v10400, %v10913
          %v11014 = vadd.f32 %v10257, %v10960
          %v11015 = vadd.f32 %v10402, %v10917
          %v11016 = vadd.f32 %v10260, %v10961
          %v11017 = vadd.f32 %v10405, %v10921
          %v11018 = vadd.f32 %v10962, 0.0
          %v11019 = vadd.f32 %v10925, 0.0
          %v11020 = vadd.f32 %v10264, %v10963
          %v11021 = vadd.f32 %v10410, %v10929
          %v11022 = vadd.f32 %v10266, %v10964
          %v11023 = vadd.f32 %v10412, %v10933
          %v11024 = vadd.f32 %v10269, %v10965
          %v11025 = vadd.f32 %v10415, %v10937
          %v11026 = vadd.f32 %v10271, %v10966
          %v11027 = vadd.f32 %v10417, %v10941
          %v11028 = vadd.f32 %v10274, %v10967
          %v11029 = vadd.f32 %v10420, %v10945
          %v11030 = vadd.f32 %v10276, %v10968
          %v11031 = vadd.f32 %v10422, %v10949
          %v11032 = vadd.f32 %v10279, %v10969
          %v11033 = vadd.f32 %v10425, %v10953
          %v11034 = vadd.f32 %v11002, %v10681
          %v11035 = vadd.f32 %v11003, %v10822
          %v11036 = vadd.f32 %v11004, %v10684
          %v11037 = vadd.f32 %v11005, %v10825
          %v11038 = vadd.f32 %v11006, %v10686
          %v11039 = vadd.f32 %v11007, %v10827
          %v11040 = vadd.f32 %v11008, %v10689
          %v11041 = vadd.f32 %v11009, %v10830
          %v11042 = vadd.f32 %v11010, %v10691
          %v11043 = vadd.f32 %v11011, %v10832
          %v11044 = vadd.f32 %v11012, %v10694
          %v11045 = vadd.f32 %v11013, %v10835
          %v11046 = vadd.f32 %v11014, %v10696
          %v11047 = vadd.f32 %v11015, %v10837
          %v11048 = vadd.f32 %v11016, 0.0
          %v11049 = vadd.f32 %v11017, 0.0
          %v11050 = vadd.f32 %v11018, %v10700
          %v11051 = vadd.f32 %v11019, %v10841
          %v11052 = vadd.f32 %v11020, %v10703
          %v11053 = vadd.f32 %v11021, %v10844
          %v11054 = vadd.f32 %v11022, %v10705
          %v11055 = vadd.f32 %v11023, %v10846
          %v11056 = vadd.f32 %v11024, %v10708
          %v11057 = vadd.f32 %v11025, %v10849
          %v11058 = vadd.f32 %v11026, %v10710
          %v11059 = vadd.f32 %v11027, %v10851
          %v11060 = vadd.f32 %v11028, %v10713
          %v11061 = vadd.f32 %v11029, %v10854
          %v11062 = vadd.f32 %v11030, %v10715
          %v11063 = vadd.f32 %v11031, %v10856
          %v11064 = vadd.f32 %v11032, 0.0
          %v11065 = vadd.f32 %v11033, 0.0
          %v11082 = vrot.slane %v11034, 7
          %v11083 = vrot.slane %v11036, 7
          %v11084 = vrot.slane %v11038, 7
          %v11085 = vrot.slane %v11040, 7
          %v11086 = vrot.slane %v11042, 7
          %v11087 = vrot.slane %v11044, 7
          %v11088 = vrot.slane %v11046, 7
          %v11089 = vrot.slane %v11048, 7
          %v11090 = vrot.slane %v11050, 7
          %v11091 = vrot.slane %v11052, 7
          %v11092 = vrot.slane %v11054, 7
          %v11093 = vrot.slane %v11056, 7
          %v11094 = vrot.slane %v11058, 7
          %v11095 = vrot.slane %v11060, 7
          %v11096 = vrot.slane %v11062, 7
          %v11097 = vrot.slane %v11064, 7
          %v11114 = vsel %vm7913, 0.0, %v11082
          %v11115 = vsel %vm7913, 0.0, %v11083
          %v11116 = vsel %vm7913, 0.0, %v11084
          %v11117 = vsel %vm7913, 0.0, %v11085
          %v11118 = vsel %vm7913, 0.0, %v11086
          %v11119 = vsel %vm7913, 0.0, %v11087
          %v11120 = vsel %vm7913, 0.0, %v11088
          %v11121 = vsel %vm7913, 0.0, %v11089
          %v11122 = vsel %vm7913, 0.0, %v11090
          %v11123 = vsel %vm7913, 0.0, %v11091
          %v11124 = vsel %vm7913, 0.0, %v11092
          %v11125 = vsel %vm7913, 0.0, %v11093
          %v11126 = vsel %vm7913, 0.0, %v11094
          %v11127 = vsel %vm7913, 0.0, %v11095
          %v11128 = vsel %vm7913, 0.0, %v11096
          %v11129 = vsel %vm7913, 0.0, %v11097
          %11130 = vrot.lane.b32.xlu0 %v11034, 64
          %v11131 = vpop.permute.xlu0 %11130
          %11132 = vrot.lane.b32.xlu0 %v11036, 64
          %v11133 = vpop.permute.xlu0 %11132
          %11134 = vrot.lane.b32.xlu0 %v11038, 64
          %v11135 = vpop.permute.xlu0 %11134
          %11136 = vrot.lane.b32.xlu0 %v11040, 64
          %v11137 = vpop.permute.xlu0 %11136
          %11138 = vrot.lane.b32.xlu0 %v11042, 64
          %v11139 = vpop.permute.xlu0 %11138
          %11140 = vrot.lane.b32.xlu0 %v11044, 64
          %v11141 = vpop.permute.xlu0 %11140
          %11142 = vrot.lane.b32.xlu0 %v11046, 64
          %v11143 = vpop.permute.xlu0 %11142
          %11144 = vrot.lane.b32.xlu0 %v11048, 64
          %v11145 = vpop.permute.xlu0 %11144
          %11146 = vrot.lane.b32.xlu0 %v11050, 64
          %v11147 = vpop.permute.xlu0 %11146
          %11148 = vrot.lane.b32.xlu0 %v11052, 64
          %v11149 = vpop.permute.xlu0 %11148
          %11150 = vrot.lane.b32.xlu0 %v11054, 64
          %v11151 = vpop.permute.xlu0 %11150
          %11152 = vrot.lane.b32.xlu0 %v11056, 64
          %v11153 = vpop.permute.xlu0 %11152
          %11154 = vrot.lane.b32.xlu0 %v11058, 64
          %v11155 = vpop.permute.xlu0 %11154
          %11156 = vrot.lane.b32.xlu0 %v11060, 64
          %v11157 = vpop.permute.xlu0 %11156
          %11158 = vrot.lane.b32.xlu0 %v11062, 64
          %v11159 = vpop.permute.xlu0 %11158
          %11160 = vrot.lane.b32.xlu0 %v11064, 64
          %v11161 = vpop.permute.xlu0 %11160
          %v11178 = vadd.f32 %v11114, %v11131
          %v11179 = vadd.f32 %v11115, %v11133
          %v11180 = vadd.f32 %v11116, %v11135
          %v11181 = vadd.f32 %v11117, %v11137
          %v11182 = vadd.f32 %v11118, %v11139
          %v11183 = vadd.f32 %v11119, %v11141
          %v11184 = vadd.f32 %v11120, %v11143
          %v11185 = vadd.f32 %v11121, %v11145
          %v11186 = vadd.f32 %v11122, %v11147
          %v11187 = vadd.f32 %v11123, %v11149
          %v11188 = vadd.f32 %v11124, %v11151
          %v11189 = vadd.f32 %v11125, %v11153
          %v11190 = vadd.f32 %v11126, %v11155
          %v11191 = vadd.f32 %v11127, %v11157
          %v11192 = vadd.f32 %v11128, %v11159
          %v11193 = vadd.f32 %v11129, %v11161
          %v11210 = vrot.slane %v11035, 1
          %v11211 = vrot.slane %v11037, 1
          %v11212 = vrot.slane %v11039, 1
          %v11213 = vrot.slane %v11041, 1
          %v11214 = vrot.slane %v11043, 1
          %v11215 = vrot.slane %v11045, 1
          %v11216 = vrot.slane %v11047, 1
          %v11217 = vrot.slane %v11049, 1
          %v11218 = vrot.slane %v11051, 1
          %v11219 = vrot.slane %v11053, 1
          %v11220 = vrot.slane %v11055, 1
          %v11221 = vrot.slane %v11057, 1
          %v11222 = vrot.slane %v11059, 1
          %v11223 = vrot.slane %v11061, 1
          %v11224 = vrot.slane %v11063, 1
          %v11225 = vrot.slane %v11065, 1
          %v11242 = vsel %vm8042, %v11210, 0.0
          %v11243 = vsel %vm8042, %v11211, 0.0
          %v11244 = vsel %vm8042, %v11212, 0.0
          %v11245 = vsel %vm8042, %v11213, 0.0
          %v11246 = vsel %vm8042, %v11214, 0.0
          %v11247 = vsel %vm8042, %v11215, 0.0
          %v11248 = vsel %vm8042, %v11216, 0.0
          %v11249 = vsel %vm8042, %v11217, 0.0
          %v11250 = vsel %vm8042, %v11218, 0.0
          %v11251 = vsel %vm8042, %v11219, 0.0
          %v11252 = vsel %vm8042, %v11220, 0.0
          %v11253 = vsel %vm8042, %v11221, 0.0
          %v11254 = vsel %vm8042, %v11222, 0.0
          %v11255 = vsel %vm8042, %v11223, 0.0
          %v11256 = vsel %vm8042, %v11224, 0.0
          %v11257 = vsel %vm8042, %v11225, 0.0
          %v11258 = vadd.f32 %v11178, %v11242
          %v11259 = vadd.f32 %v11179, %v11243
          %v11260 = vadd.f32 %v11180, %v11244
          %v11261 = vadd.f32 %v11181, %v11245
          %v11262 = vadd.f32 %v11182, %v11246
          %v11263 = vadd.f32 %v11183, %v11247
          %v11264 = vadd.f32 %v11184, %v11248
          %v11265 = vadd.f32 %v11185, %v11249
          %v11266 = vadd.f32 %v11186, %v11250
          %v11267 = vadd.f32 %v11187, %v11251
          %v11268 = vadd.f32 %v11188, %v11252
          %v11269 = vadd.f32 %v11189, %v11253
          %v11270 = vadd.f32 %v11190, %v11254
          %v11271 = vadd.f32 %v11191, %v11255
          %v11272 = vadd.f32 %v11192, %v11256
          %v11273 = vadd.f32 %v11193, %v11257
          %v11274 = vld [vmem:[%s3 + $0x5] sm:$0x1]
          %v11275 = vperm.slane %v11274, 0
          %v11276 = vadd.f32 %v11258, %v11275
          %v11277 = vadd.f32 %v11259, %v11275
          %v11278 = vadd.f32 %v11260, %v11275
          %v11279 = vadd.f32 %v11261, %v11275
          %v11280 = vadd.f32 %v11262, %v11275
          %v11281 = vadd.f32 %v11263, %v11275
          %v11282 = vadd.f32 %v11264, %v11275
          %v11283 = vadd.f32 %v11265, %v11275
          %v11284 = vadd.f32 %v11266, %v11275
          %v11285 = vadd.f32 %v11267, %v11275
          %v11286 = vadd.f32 %v11268, %v11275
          %v11287 = vadd.f32 %v11269, %v11275
          %v11288 = vadd.f32 %v11270, %v11275
          %v11289 = vadd.f32 %v11271, %v11275
          %v11290 = vadd.f32 %v11272, %v11275
          %v11291 = vadd.f32 %v11273, %v11275
          %11292 = vst.msk [vmem:[#allocation4] sm:$0xff] %vm7376, %v11276
          %11293 = vst.msk [vmem:[#allocation4 + $0x8] sm:$0xff] %vm7376, %v11277
          %11294 = vst.msk [vmem:[#allocation4 + $0x10] sm:$0xff] %vm7376, %v11278
          %11295 = vst.msk [vmem:[#allocation4 + $0x18] sm:$0xff] %vm7376, %v11279
          %11296 = vst.msk [vmem:[#allocation4 + $0x20] sm:$0xff] %vm7376, %v11280
          %11297 = vst.msk [vmem:[#allocation4 + $0x28] sm:$0xff] %vm7376, %v11281
          %11298 = vst.msk [vmem:[#allocation4 + $0x30] sm:$0xff] %vm7376, %v11282
          %11299 = vst.msk [vmem:[#allocation4 + $0x38] sm:$0xff] %vm7376, %v11283
          %11300 = vst.msk [vmem:[#allocation4 + $0x40] sm:$0xff] %vm7376, %v11284
          %11301 = vst.msk [vmem:[#allocation4 + $0x48] sm:$0xff] %vm7376, %v11285
          %11302 = vst.msk [vmem:[#allocation4 + $0x50] sm:$0xff] %vm7376, %v11286
          %11303 = vst.msk [vmem:[#allocation4 + $0x58] sm:$0xff] %vm7376, %v11287
          %11304 = vst.msk [vmem:[#allocation4 + $0x60] sm:$0xff] %vm7376, %v11288
          %11305 = vst.msk [vmem:[#allocation4 + $0x68] sm:$0xff] %vm7376, %v11289
          %11306 = vst.msk [vmem:[#allocation4 + $0x70] sm:$0xff] %vm7376, %v11290
          %11307 = vst.msk [vmem:[#allocation4 + $0x78] sm:$0xff] %vm7376, %v11291
        $region67: #{_aspp_forward_impl.1} parent=54 // pred_fallthru
          _
        // Predicated region
        $region68: #{_aspp_forward_impl.1} parent=54 // pred_check
          %p11308 = pneg %p142
        $region69: #{_aspp_forward_impl.1} parent=54 // pred_check_branch
          %11310 = sbr.rel (%p11308) target = $region71
        $region70: #{_aspp_forward_impl.1} parent=54 // pred_region
          %s11311 = smul.u32 2, %s20
          %11313 = vsyncadd [#allocation5], 0
          %s11314 = smul.addr %s11311, 8
          %s11315 = smul.addr %s11314, 8
          %s11316 = scalar_lea.hbm %s4, %s11315
          %s11317 = sshll.u32 [#allocation4], 4
          %s11318 = int_to_ptr.vmem [resolvable:$true] %s11317
          %s11319 = sshll.u32 %s11316, 4
          %s11320 = int_to_ptr.hbm [resolvable:$true] %s11319
          %11325 = dma.vmem_to_hbm [thread:$0]  %s11318, 2048, %s11320, [#allocation5], 128, 128, 8
        $region71: #{_aspp_forward_impl.1} parent=54 // pred_fallthru
          _
        // Predicated region
        $region72: #{_aspp_forward_impl.1} parent=54 // pred_check
          %p11326 = pneg %p142
        $region73: #{_aspp_forward_impl.1} parent=54 // pred_check_branch
          %11328 = sbr.rel (%p11326) target = $region75
        $region74: #{_aspp_forward_impl.1} parent=54 // pred_region
          %11330 = dma.done [#allocation5], 2048
        $region75: #{_aspp_forward_impl.1} parent=54 // pred_fallthru
          _
      $region55: #{_aspp_forward_impl.1} parent=5 // pred_fallthru
        _
      %p11331 = scmp.le.s32.totalorder 2, %s11
      // Predicated region
      $region76: #{_aspp_forward_impl.1} parent=5 // pred_check
        %p11332 = pneg %p11331
      $region77: #{_aspp_forward_impl.1} parent=5 // pred_check_branch
        %11334 = sbr.rel (%p11332) target = $region79
      $region78: #{_aspp_forward_impl.1} parent=5 // pred_region
        %s11335 = ssub.s32 %s11, 2
      $region79: #{_aspp_forward_impl.1} parent=5 // pred_fallthru
        _
    $region6: #{_aspp_forward_impl.1} parent=1 // loop_footer
      %s15 = sadd.s32 1, %s11
    $region7: #{_aspp_forward_impl.1} parent=1 // loop_footer_branch
      %10 = sbr.rel target = $region3
    $region8: #{_aspp_forward_impl.1} parent=1 // loop_exit
      _
    %11336 = vsyncpa [#allocation5], 1
    %s11337 = scalar_lea.sflag [#allocation5], 1
    %11338 = vsyncpa %s11337, 1

</llo_original>
